<compile_context>
chip_gen: v7x
topology: tpu7x:2x2x1
jax: 0.10.0
libtpu: 0.0.40
codegen_flags: <defaults>
</compile_context>

<pallas_src>
import functools

import jax
import jax.numpy as jnp
from jax.experimental import pallas as pl
from jax.experimental.pallas import tpu as pltpu

D_IN, D_H, D_OUT = 512, 1024, 784
D_OUT_PAD = 896  # 7 * 128: lane-dense output width (zero-padded columns)


def _round_up(x, m):
    return ((x + m - 1) // m) * m


def _choose_batch_tile(B):
    """Pick bt in {128,256,512}: prefer >=2 grid steps (two v7x TCs), then
    minimal padded-row waste, then fewer (bigger) steps."""
    B = max(B, 1)
    if B <= 128:
        return 128
    best_key, best_bt = None, 128
    for bt in (128, 256, 512):
        b_pad = _round_up(B, bt)
        steps = b_pad // bt
        key = (steps < 2, b_pad - B, steps)
        if best_key is None or key < best_key:
            best_key, best_bt = key, bt
    return best_bt


def gen_mlp_kernel(x_ref, w1_ref, b1_ref, w2_ref, b2_ref, w3_ref, b3_ref, o_ref):
    # x arrives f32 from HBM; cast to bf16 on-tile for the MXU (VPU cast).
    x = x_ref[...].astype(jnp.bfloat16)
    # Layer 1: Linear(512 -> 1024) + ReLU  (bf16 MXU matmul, f32 accumulate)
    h = jnp.dot(x, w1_ref[...], preferred_element_type=jnp.float32)
    h = jnp.maximum(h + b1_ref[...], 0.0).astype(jnp.bfloat16)
    # Layer 2: Linear(1024 -> 1024) + ReLU
    h = jnp.dot(h, w2_ref[...], preferred_element_type=jnp.float32)
    h = jnp.maximum(h + b2_ref[...], 0.0).astype(jnp.bfloat16)
    # Layer 3: Linear(1024 -> 896 [padded]), no activation
    o = jnp.dot(h, w3_ref[...], preferred_element_type=jnp.float32)
    o_ref[...] = (o + b3_ref[...]).astype(o_ref.dtype)


def prepare_gen_params(w1, b1, w2, b2, w3, b3):
    """One-time param prep (call ONCE, not per forward): cast weights to bf16
    and pre-pad W3/b3 to the lane-dense 896-wide output layout."""
    w1_b = w1.astype(jnp.bfloat16)
    w2_b = w2.astype(jnp.bfloat16)
    w3_b = jnp.zeros((D_H, D_OUT_PAD), jnp.bfloat16).at[:, :D_OUT].set(
        w3.astype(jnp.bfloat16))
    b1_p = jnp.asarray(b1, jnp.float32).reshape(1, D_H)
    b2_p = jnp.asarray(b2, jnp.float32).reshape(1, D_H)
    b3_p = jnp.zeros((1, D_OUT_PAD), jnp.float32).at[:, :D_OUT].set(
        jnp.asarray(b3, jnp.float32).reshape(1, D_OUT))
    return w1_b, b1_p, w2_b, b2_p, w3_b, b3_p


@jax.jit
def gen_model_forward(x, w1_b, b1_p, w2_b, b2_p, w3_b, b3_p):
    """x: (B, 512) f32 noise -> (B, 784) f32 (Gen_model forward).

    Expects params already prepared by prepare_gen_params (bf16 weights,
    padded W3/b3)."""
    B = x.shape[0]
    bt = _choose_batch_tile(B)
    B_pad = _round_up(max(B, 1), bt)
    grid = (B_pad // bt,)

    # Only pad rows when the batch doesn't divide the tile (no bf16 copy of x;
    # the kernel casts on-tile).
    if B_pad != B:
        x_in = jnp.zeros((B_pad, D_IN), x.dtype).at[:B].set(x)
    else:
        x_in = x

    flops = 2 * B_pad * (D_IN * D_H + D_H * D_H + D_H * D_OUT_PAD)
    bytes_accessed = (
        B_pad * D_IN * 4                                              # x (f32)
        + w1_b.size * 2 + w2_b.size * 2 + w3_b.size * 2               # bf16 weights
        + b1_p.size * 4 + b2_p.size * 4 + b3_p.size * 4               # f32 biases
        + B_pad * D_OUT_PAD * 4                                       # f32 output
    )

    # Grid-invariant (resident) operands: single-buffered, never re-fetched.
    resident = functools.partial(pl.BlockSpec, index_map=lambda i: (0, 0),
                                 pipeline_mode=pl.Buffered(1))

    out = pl.pallas_call(
        gen_mlp_kernel,
        out_shape=jax.ShapeDtypeStruct((B_pad, D_OUT_PAD), jnp.float32),
        grid_spec=pltpu.PrefetchScalarGridSpec(
            num_scalar_prefetch=0,
            grid=grid,
            in_specs=[
                pl.BlockSpec((bt, D_IN), lambda i: (i, 0)),  # x tile (f32, pipelined)
                resident((D_IN, D_H)),                       # W1 (resident)
                resident((1, D_H)),                          # b1
                resident((D_H, D_H)),                        # W2 (resident)
                resident((1, D_H)),                          # b2
                resident((D_H, D_OUT_PAD)),                  # W3 (padded, resident)
                resident((1, D_OUT_PAD)),                    # b3 (padded)
            ],
            out_specs=pl.BlockSpec((bt, D_OUT_PAD), lambda i: (i, 0)),
        ),
        compiler_params=pltpu.CompilerParams(
            dimension_semantics=("parallel",),
            vmem_limit_bytes=48 * 1024 * 1024,  # headroom; < 64 MiB v7x VMEM
        ),
        cost_estimate=pl.CostEstimate(
            flops=flops, transcendentals=0, bytes_accessed=bytes_accessed),
    )(x_in, w1_b, b1_p, w2_b, b2_p, w3_b, b3_p)

    # TODO(synk): consumers that tolerate the 896-wide padded layout could take
    # `out` directly and skip this slice's extra read+write of the output.
    return out[:B, :D_OUT]


def init_params(key):
    """Deterministic init mimicking nn.Linear's uniform(+-1/sqrt(fan_in))."""
    ks = jax.random.split(key, 6)

    def linear(kw, kb, fan_in, fan_out):
        bound = 1.0 / jnp.sqrt(fan_in)
        w = jax.random.uniform(kw, (fan_in, fan_out), jnp.float32, -bound, bound)
        b = jax.random.uniform(kb, (1, fan_out), jnp.float32, -bound, bound)
        return w, b

    w1, b1 = linear(ks[0], ks[1], D_IN, D_H)
    w2, b2 = linear(ks[2], ks[3], D_H, D_H)
    w3, b3 = linear(ks[4], ks[5], D_H, D_OUT)
    return w1, b1, w2, b2, w3, b3


if __name__ == "__main__":
    key = jax.random.PRNGKey(0)
    k_noise, k_params = jax.random.split(key)

    batch_size = 8  # small demo batch; wrapper pads the tail tile to 128 rows
    # Equivalent of torch.randn(size=(batch_size, 512)) inside forward().
    x = jax.random.normal(k_noise, (batch_size, D_IN), dtype=jnp.float32)

    w1, b1, w2, b2, w3, b3 = init_params(k_params)
    prepared = prepare_gen_params(w1, b1, w2, b2, w3, b3)  # one-time prep

    out = gen_model_forward(x, *prepared)
    out = jax.block_until_ready(out)

    # Pure-JAX reference of the same bf16-matmul / f32-accumulate math.
    xb = x.astype(jnp.bfloat16)
    h = jnp.maximum(
        jnp.dot(xb, w1.astype(jnp.bfloat16), preferred_element_type=jnp.float32)
        + b1, 0.0)
    h = jnp.maximum(
        jnp.dot(h.astype(jnp.bfloat16), w2.astype(jnp.bfloat16),
                preferred_element_type=jnp.float32) + b2, 0.0)
    ref = jnp.dot(h.astype(jnp.bfloat16), w3.astype(jnp.bfloat16),
                  preferred_element_type=jnp.float32) + b3

    assert out.shape == (batch_size, D_OUT)
    assert jnp.allclose(out, ref, atol=2e-2, rtol=2e-2), (
        float(jnp.max(jnp.abs(out - ref))))

    print("KERNEL_OK")
</pallas_src>

<mosaic_0001>
module attributes {stable_mosaic.version = 11 : i64} {
  func.func @gen_mlp_kernel(%arg0: i32, %arg1: memref<128x512xf32, #tpu.memory_space<vmem>>, %arg2: memref<512x1024xbf16, #tpu.memory_space<vmem>>, %arg3: memref<1x1024xf32, #tpu.memory_space<vmem>>, %arg4: memref<1024x1024xbf16, #tpu.memory_space<vmem>>, %arg5: memref<1x1024xf32, #tpu.memory_space<vmem>>, %arg6: memref<1024x896xbf16, #tpu.memory_space<vmem>>, %arg7: memref<1x896xf32, #tpu.memory_space<vmem>>, %arg8: memref<128x896xf32, #tpu.memory_space<vmem>>) attributes {dimension_semantics = [#tpu.dimension_semantics<parallel>], iteration_bounds = array<i64: 1>, scalar_prefetch = 0 : i64, scratch_operands = 0 : i64, tpu.core_type = #tpu.core_type<tc>, window_params = [{transform_indices = @transform_0, window_bounds = array<i64: 128, 512>}, {pipeline_mode = #tpu.pipeline_mode<synchronous>, transform_indices = @transform_1, window_bounds = array<i64: 512, 1024>}, {pipeline_mode = #tpu.pipeline_mode<synchronous>, transform_indices = @transform_2, window_bounds = array<i64: 1, 1024>}, {pipeline_mode = #tpu.pipeline_mode<synchronous>, transform_indices = @transform_3, window_bounds = array<i64: 1024, 1024>}, {pipeline_mode = #tpu.pipeline_mode<synchronous>, transform_indices = @transform_4, window_bounds = array<i64: 1, 1024>}, {pipeline_mode = #tpu.pipeline_mode<synchronous>, transform_indices = @transform_5, window_bounds = array<i64: 1024, 896>}, {pipeline_mode = #tpu.pipeline_mode<synchronous>, transform_indices = @transform_6, window_bounds = array<i64: 1, 896>}, {transform_indices = @transform_7, window_bounds = array<i64: 128, 896>}]} {
    %c0 = arith.constant 0 : index
    %c0_0 = arith.constant 0 : index
    %0 = vector.load %arg1[%c0, %c0_0] : memref<128x512xf32, #tpu.memory_space<vmem>>, vector<128x512xf32>
    %1 = arith.truncf %0 : vector<128x512xf32> to vector<128x512xbf16>
    %c0_1 = arith.constant 0 : index
    %c0_2 = arith.constant 0 : index
    %2 = vector.load %arg2[%c0_1, %c0_2] : memref<512x1024xbf16, #tpu.memory_space<vmem>>, vector<512x1024xbf16>
    %cst = arith.constant dense<0.000000e+00> : vector<128x1024xf32>
    %3 = tpu.matmul %1, %2, %cst {dimension_numbers = #tpu.dot_dimension_numbers<[1], [0], [0], [1], [0, 0, 1, 1], [], []>} : vector<128x512xbf16>, vector<512x1024xbf16>, vector<128x1024xf32> -> vector<128x1024xf32>
    %c0_3 = arith.constant 0 : index
    %c0_4 = arith.constant 0 : index
    %4 = vector.load %arg3[%c0_3, %c0_4] : memref<1x1024xf32, #tpu.memory_space<vmem>>, vector<1x1024xf32>
    %5 = vector.broadcast %4 : vector<1x1024xf32> to vector<128x1024xf32>
    %6 = arith.addf %3, %5 : vector<128x1024xf32>
    %cst_5 = arith.constant 0.000000e+00 : f32
    %7 = vector.broadcast %cst_5 : f32 to vector<128x1024xf32>
    %8 = arith.maximumf %6, %7 : vector<128x1024xf32>
    %9 = arith.truncf %8 : vector<128x1024xf32> to vector<128x1024xbf16>
    %c0_6 = arith.constant 0 : index
    %c0_7 = arith.constant 0 : index
    %10 = vector.load %arg4[%c0_6, %c0_7] : memref<1024x1024xbf16, #tpu.memory_space<vmem>>, vector<1024x1024xbf16>
    %cst_8 = arith.constant dense<0.000000e+00> : vector<128x1024xf32>
    %11 = tpu.matmul %9, %10, %cst_8 {dimension_numbers = #tpu.dot_dimension_numbers<[1], [0], [0], [1], [0, 0, 1, 1], [], []>} : vector<128x1024xbf16>, vector<1024x1024xbf16>, vector<128x1024xf32> -> vector<128x1024xf32>
    %c0_9 = arith.constant 0 : index
    %c0_10 = arith.constant 0 : index
    %12 = vector.load %arg5[%c0_9, %c0_10] : memref<1x1024xf32, #tpu.memory_space<vmem>>, vector<1x1024xf32>
    %13 = vector.broadcast %12 : vector<1x1024xf32> to vector<128x1024xf32>
    %14 = arith.addf %11, %13 : vector<128x1024xf32>
    %cst_11 = arith.constant 0.000000e+00 : f32
    %15 = vector.broadcast %cst_11 : f32 to vector<128x1024xf32>
    %16 = arith.maximumf %14, %15 : vector<128x1024xf32>
    %17 = arith.truncf %16 : vector<128x1024xf32> to vector<128x1024xbf16>
    %c0_12 = arith.constant 0 : index
    %c0_13 = arith.constant 0 : index
    %18 = vector.load %arg6[%c0_12, %c0_13] : memref<1024x896xbf16, #tpu.memory_space<vmem>>, vector<1024x896xbf16>
    %cst_14 = arith.constant dense<0.000000e+00> : vector<128x896xf32>
    %19 = tpu.matmul %17, %18, %cst_14 {dimension_numbers = #tpu.dot_dimension_numbers<[1], [0], [0], [1], [0, 0, 1, 1], [], []>} : vector<128x1024xbf16>, vector<1024x896xbf16>, vector<128x896xf32> -> vector<128x896xf32>
    %c0_15 = arith.constant 0 : index
    %c0_16 = arith.constant 0 : index
    %20 = vector.load %arg7[%c0_15, %c0_16] : memref<1x896xf32, #tpu.memory_space<vmem>>, vector<1x896xf32>
    %21 = vector.broadcast %20 : vector<1x896xf32> to vector<128x896xf32>
    %22 = arith.addf %19, %21 : vector<128x896xf32>
    %c0_17 = arith.constant 0 : index
    %c0_18 = arith.constant 0 : index
    %23 = vector.load %arg8[%c0_17, %c0_18] : memref<128x896xf32, #tpu.memory_space<vmem>>, vector<128x896xf32>
    tpu.vector_store %arg8[%c0_17, %c0_18], %22 {strides = array<i32>} : memref<128x896xf32, #tpu.memory_space<vmem>>, vector<128x896xf32>,
    return
  }
  func.func @transform_0(%arg0: i32) -> (i32, i32) {
    %c0_i32 = arith.constant 0 : i32
    %c0_i32_0 = arith.constant 0 : i32
    return %arg0, %c0_i32 : i32, i32
  }
  func.func @transform_1(%arg0: i32) -> (i32, i32) {
    %c0_i32 = arith.constant 0 : i32
    %c0_i32_0 = arith.constant 0 : i32
    %c0_i32_1 = arith.constant 0 : i32
    return %c0_i32, %c0_i32_0 : i32, i32
  }
  func.func @transform_2(%arg0: i32) -> (i32, i32) {
    %c0_i32 = arith.constant 0 : i32
    %c0_i32_0 = arith.constant 0 : i32
    %c0_i32_1 = arith.constant 0 : i32
    return %c0_i32, %c0_i32_0 : i32, i32
  }
  func.func @transform_3(%arg0: i32) -> (i32, i32) {
    %c0_i32 = arith.constant 0 : i32
    %c0_i32_0 = arith.constant 0 : i32
    %c0_i32_1 = arith.constant 0 : i32
    return %c0_i32, %c0_i32_0 : i32, i32
  }
  func.func @transform_4(%arg0: i32) -> (i32, i32) {
    %c0_i32 = arith.constant 0 : i32
    %c0_i32_0 = arith.constant 0 : i32
    %c0_i32_1 = arith.constant 0 : i32
    return %c0_i32, %c0_i32_0 : i32, i32
  }
  func.func @transform_5(%arg0: i32) -> (i32, i32) {
    %c0_i32 = arith.constant 0 : i32
    %c0_i32_0 = arith.constant 0 : i32
    %c0_i32_1 = arith.constant 0 : i32
    return %c0_i32, %c0_i32_0 : i32, i32
  }
  func.func @transform_6(%arg0: i32) -> (i32, i32) {
    %c0_i32 = arith.constant 0 : i32
    %c0_i32_0 = arith.constant 0 : i32
    %c0_i32_1 = arith.constant 0 : i32
    return %c0_i32, %c0_i32_0 : i32, i32
  }
  func.func @transform_7(%arg0: i32) -> (i32, i32) {
    %c0_i32 = arith.constant 0 : i32
    %c0_i32_0 = arith.constant 0 : i32
    return %arg0, %c0_i32 : i32, i32
  }
}

</mosaic_0001>

<llo_original>
// kernel: gen_model_forward.1
$region0: #{gen_model_forward.1}
  #allocation0 [shape = 'u32[]', space=smem, size = 0x4, offset = 0x4, fixed_abs, tag = 'smem constant byte address 0x4 - core index']
  #allocation1 [shape = 'u32[144,128]{1,0:T(1,128)}', space=vmem, size = 0x12000, scoped, tag = 'internal scratch']
  %s0 = inlined_call_operand.vmem [shape: f32[128,512], index: 0, kind: input, shape index: {}]
  %s1 = inlined_call_operand.hbm [shape: bf16[512,1024], index: 1, kind: input, shape index: {}]
  %s2 = inlined_call_operand.hbm [shape: f32[1,1024], index: 2, kind: input, shape index: {}]
  %s3 = inlined_call_operand.hbm [shape: bf16[1024,1024], index: 3, kind: input, shape index: {}]
  %s4 = inlined_call_operand.hbm [shape: f32[1,1024], index: 4, kind: input, shape index: {}]
  %s5 = inlined_call_operand.hbm [shape: bf16[1024,896], index: 5, kind: input, shape index: {}]
  %s6 = inlined_call_operand.hbm [shape: f32[1,896], index: 6, kind: input, shape index: {}]
  %s7 = inlined_call_operand.vmem [shape: f32[128,896], index: 7, kind: output, shape index: {}]
  %s8 = sld [smem:[#allocation0]]
  $region62: #{gen_model_forward.1} parent=0
    _
  %s10 = ssub.s32 1, %s8
  %s11 = scalar_select 0, %s10, %s8
  $region1: #{gen_model_forward.1} parent=0
    #allocation2 [shape = 'u8[1048576]{0}', space=vmem, size = 0x100000, scoped, tag = 'input window, operand 1, single buffered']
    #allocation3 [shape = 's32[1]{0}', space=sflag, size = 0x4, scoped, tag = 'scoped memory for gen_model_forward.1']
    #allocation4 [shape = 'u8[4096]{0}', space=vmem, size = 0x1000, scoped, tag = 'input window, operand 2, single buffered']
    #allocation5 [shape = 's32[1]{0}', space=sflag, size = 0x4, scoped, tag = 'scoped memory for gen_model_forward.1']
    #allocation6 [shape = 'u8[2097152]{0}', space=vmem, size = 0x200000, scoped, tag = 'input window, operand 3, single buffered']
    #allocation7 [shape = 'u8[4096]{0}', space=vmem, size = 0x1000, scoped, tag = 'input window, operand 4, single buffered']
    #allocation8 [shape = 's32[1]{0}', space=sflag, size = 0x4, scoped, tag = 'scoped memory for gen_model_forward.1']
    #allocation9 [shape = 'u8[1835008]{0}', space=vmem, size = 0x1c0000, scoped, tag = 'input window, operand 5, single buffered']
    #allocation10 [shape = 'u8[3584]{0}', space=vmem, size = 0x1000, scoped, tag = 'input window, operand 6, single buffered']
    #allocation11 [shape = 's32[1]{0}', space=sflag, size = 0x4, scoped, tag = 'scoped memory for gen_model_forward.1']
    %12 = vsyncpa [#allocation3], 0
    %13 = vsyncpa [#allocation5], 0
    %14 = vsyncpa [#allocation8], 0
    %15 = vsyncpa [#allocation11], 0
    // Predicated region
    $region2: #{gen_model_forward.1} parent=1 // pred_check
      _
    $region3: #{gen_model_forward.1} parent=1 // pred_check_branch
      %17 = sbr.rel (0) target = $region5
    $region4: #{gen_model_forward.1} parent=1 // pred_region
      _
    $region5: #{gen_model_forward.1} parent=1 // pred_fallthru
      _
    // Predicated region
    $region6: #{gen_model_forward.1} parent=1 // pred_check
      _
    $region7: #{gen_model_forward.1} parent=1 // pred_check_branch
      %19 = sbr.rel (0) target = $region9
    $region8: #{gen_model_forward.1} parent=1 // pred_region
      %s21 = ssub.s32 32768, 32768
      %22 = vsyncadd [#allocation3], %s21
      %s23 = sshll.u32 [#allocation2], 4
      %s24 = int_to_ptr.vmem [resolvable:$true] %s23
      %29 = dma.hbm_to_vmem [thread:$0]  %s1, 32768, %s24, [#allocation3], 512, 512, 32
    $region9: #{gen_model_forward.1} parent=1 // pred_fallthru
      _
    // Predicated region
    $region10: #{gen_model_forward.1} parent=1 // pred_check
      _
    $region11: #{gen_model_forward.1} parent=1 // pred_check_branch
      %31 = sbr.rel (0) target = $region13
    $region12: #{gen_model_forward.1} parent=1 // pred_region
      %s33 = ssub.s32 128, 128
      %34 = vsyncadd [#allocation5], %s33
      %s36 = sshll.u32 [#allocation4], 4
      %s37 = int_to_ptr.vmem [resolvable:$true] %s36
      %39 = dma.hbm_to_vmem [thread:$0]  %s2, 128, %s37, [#allocation5]
    $region13: #{gen_model_forward.1} parent=1 // pred_fallthru
      _
    // Predicated region
    $region14: #{gen_model_forward.1} parent=1 // pred_check
      _
    $region15: #{gen_model_forward.1} parent=1 // pred_check_branch
      %41 = sbr.rel (0) target = $region17
    $region16: #{gen_model_forward.1} parent=1 // pred_region
      %s43 = ssub.s32 65536, 65536
      %44 = vsyncadd [#allocation5], %s43
      %s45 = sshll.u32 [#allocation6], 4
      %s46 = int_to_ptr.vmem [resolvable:$true] %s45
      %51 = dma.hbm_to_vmem [thread:$0]  %s3, 65536, %s46, [#allocation5], 512, 512, 32
    $region17: #{gen_model_forward.1} parent=1 // pred_fallthru
      _
    // Predicated region
    $region18: #{gen_model_forward.1} parent=1 // pred_check
      _
    $region19: #{gen_model_forward.1} parent=1 // pred_check_branch
      %53 = sbr.rel (0) target = $region21
    $region20: #{gen_model_forward.1} parent=1 // pred_region
      %s55 = ssub.s32 128, 128
      %56 = vsyncadd [#allocation8], %s55
      %s58 = sshll.u32 [#allocation7], 4
      %s59 = int_to_ptr.vmem [resolvable:$true] %s58
      %61 = dma.hbm_to_vmem [thread:$0]  %s4, 128, %s59, [#allocation8]
    $region21: #{gen_model_forward.1} parent=1 // pred_fallthru
      _
    // Predicated region
    $region22: #{gen_model_forward.1} parent=1 // pred_check
      _
    $region23: #{gen_model_forward.1} parent=1 // pred_check_branch
      %63 = sbr.rel (0) target = $region25
    $region24: #{gen_model_forward.1} parent=1 // pred_region
      %s65 = ssub.s32 57344, 57344
      %66 = vsyncadd [#allocation8], %s65
      %s67 = sshll.u32 [#allocation9], 4
      %s68 = int_to_ptr.vmem [resolvable:$true] %s67
      %73 = dma.hbm_to_vmem [thread:$0]  %s5, 57344, %s68, [#allocation8], 448, 448, 28
    $region25: #{gen_model_forward.1} parent=1 // pred_fallthru
      _
    // Predicated region
    $region26: #{gen_model_forward.1} parent=1 // pred_check
      _
    $region27: #{gen_model_forward.1} parent=1 // pred_check_branch
      %75 = sbr.rel (0) target = $region29
    $region28: #{gen_model_forward.1} parent=1 // pred_region
      %s77 = ssub.s32 112, 112
      %78 = vsyncadd [#allocation11], %s77
      %s80 = sshll.u32 [#allocation10], 4
      %s81 = int_to_ptr.vmem [resolvable:$true] %s80
      %83 = dma.hbm_to_vmem [thread:$0]  %s6, 112, %s81, [#allocation11]
    $region29: #{gen_model_forward.1} parent=1 // pred_fallthru
      _
    // Predicated region
    $region30: #{gen_model_forward.1} parent=1 // pred_check
      _
    $region31: #{gen_model_forward.1} parent=1 // pred_check_branch
      %85 = sbr.rel (0) target = $region33
    $region32: #{gen_model_forward.1} parent=1 // pred_region
      %86 = dma.done [#allocation3], 32768
    $region33: #{gen_model_forward.1} parent=1 // pred_fallthru
      _
    // Predicated region
    $region34: #{gen_model_forward.1} parent=1 // pred_check
      _
    $region35: #{gen_model_forward.1} parent=1 // pred_check_branch
      %88 = sbr.rel (0) target = $region37
    $region36: #{gen_model_forward.1} parent=1 // pred_region
      %89 = dma.done [#allocation5], 128
    $region37: #{gen_model_forward.1} parent=1 // pred_fallthru
      _
    // Predicated region
    $region38: #{gen_model_forward.1} parent=1 // pred_check
      _
    $region39: #{gen_model_forward.1} parent=1 // pred_check_branch
      %91 = sbr.rel (0) target = $region41
    $region40: #{gen_model_forward.1} parent=1 // pred_region
      %92 = dma.done [#allocation5], 65536
    $region41: #{gen_model_forward.1} parent=1 // pred_fallthru
      _
    // Predicated region
    $region42: #{gen_model_forward.1} parent=1 // pred_check
      _
    $region43: #{gen_model_forward.1} parent=1 // pred_check_branch
      %94 = sbr.rel (0) target = $region45
    $region44: #{gen_model_forward.1} parent=1 // pred_region
      %95 = dma.done [#allocation8], 128
    $region45: #{gen_model_forward.1} parent=1 // pred_fallthru
      _
    // Predicated region
    $region46: #{gen_model_forward.1} parent=1 // pred_check
      _
    $region47: #{gen_model_forward.1} parent=1 // pred_check_branch
      %97 = sbr.rel (0) target = $region49
    $region48: #{gen_model_forward.1} parent=1 // pred_region
      %98 = dma.done [#allocation8], 57344
    $region49: #{gen_model_forward.1} parent=1 // pred_fallthru
      _
    // Predicated region
    $region50: #{gen_model_forward.1} parent=1 // pred_check
      _
    $region51: #{gen_model_forward.1} parent=1 // pred_check_branch
      %100 = sbr.rel (0) target = $region53
    $region52: #{gen_model_forward.1} parent=1 // pred_region
      %101 = dma.done [#allocation11], 112
    $region53: #{gen_model_forward.1} parent=1 // pred_fallthru
      _
    %v103 = vld [vmem:[%s0] sm:$0xff]
    %v104 = vld [vmem:[%s0 + $0x8] sm:$0xff]
    %v105 = vld [vmem:[%s0 + $0x10] sm:$0xff]
    %v106 = vld [vmem:[%s0 + $0x18] sm:$0xff]
    %v107 = vld [vmem:[%s0 + $0x20] sm:$0xff]
    %v108 = vld [vmem:[%s0 + $0x28] sm:$0xff]
    %v109 = vld [vmem:[%s0 + $0x30] sm:$0xff]
    %v110 = vld [vmem:[%s0 + $0x38] sm:$0xff]
    %v111 = vld [vmem:[%s0 + $0x40] sm:$0xff]
    %v112 = vld [vmem:[%s0 + $0x48] sm:$0xff]
    %v113 = vld [vmem:[%s0 + $0x50] sm:$0xff]
    %v114 = vld [vmem:[%s0 + $0x58] sm:$0xff]
    %v115 = vld [vmem:[%s0 + $0x60] sm:$0xff]
    %v116 = vld [vmem:[%s0 + $0x68] sm:$0xff]
    %v117 = vld [vmem:[%s0 + $0x70] sm:$0xff]
    %v118 = vld [vmem:[%s0 + $0x78] sm:$0xff]
    %v119 = vld [vmem:[%s0 + $0x80] sm:$0xff]
    %v120 = vld [vmem:[%s0 + $0x88] sm:$0xff]
    %v121 = vld [vmem:[%s0 + $0x90] sm:$0xff]
    %v122 = vld [vmem:[%s0 + $0x98] sm:$0xff]
    %v123 = vld [vmem:[%s0 + $0xa0] sm:$0xff]
    %v124 = vld [vmem:[%s0 + $0xa8] sm:$0xff]
    %v125 = vld [vmem:[%s0 + $0xb0] sm:$0xff]
    %v126 = vld [vmem:[%s0 + $0xb8] sm:$0xff]
    %v127 = vld [vmem:[%s0 + $0xc0] sm:$0xff]
    %v128 = vld [vmem:[%s0 + $0xc8] sm:$0xff]
    %v129 = vld [vmem:[%s0 + $0xd0] sm:$0xff]
    %v130 = vld [vmem:[%s0 + $0xd8] sm:$0xff]
    %v131 = vld [vmem:[%s0 + $0xe0] sm:$0xff]
    %v132 = vld [vmem:[%s0 + $0xe8] sm:$0xff]
    %v133 = vld [vmem:[%s0 + $0xf0] sm:$0xff]
    %v134 = vld [vmem:[%s0 + $0xf8] sm:$0xff]
    %v135 = vld [vmem:[%s0 + $0x100] sm:$0xff]
    %v136 = vld [vmem:[%s0 + $0x108] sm:$0xff]
    %v137 = vld [vmem:[%s0 + $0x110] sm:$0xff]
    %v138 = vld [vmem:[%s0 + $0x118] sm:$0xff]
    %v139 = vld [vmem:[%s0 + $0x120] sm:$0xff]
    %v140 = vld [vmem:[%s0 + $0x128] sm:$0xff]
    %v141 = vld [vmem:[%s0 + $0x130] sm:$0xff]
    %v142 = vld [vmem:[%s0 + $0x138] sm:$0xff]
    %v143 = vld [vmem:[%s0 + $0x140] sm:$0xff]
    %v144 = vld [vmem:[%s0 + $0x148] sm:$0xff]
    %v145 = vld [vmem:[%s0 + $0x150] sm:$0xff]
    %v146 = vld [vmem:[%s0 + $0x158] sm:$0xff]
    %v147 = vld [vmem:[%s0 + $0x160] sm:$0xff]
    %v148 = vld [vmem:[%s0 + $0x168] sm:$0xff]
    %v149 = vld [vmem:[%s0 + $0x170] sm:$0xff]
    %v150 = vld [vmem:[%s0 + $0x178] sm:$0xff]
    %v151 = vld [vmem:[%s0 + $0x180] sm:$0xff]
    %v152 = vld [vmem:[%s0 + $0x188] sm:$0xff]
    %v153 = vld [vmem:[%s0 + $0x190] sm:$0xff]
    %v154 = vld [vmem:[%s0 + $0x198] sm:$0xff]
    %v155 = vld [vmem:[%s0 + $0x1a0] sm:$0xff]
    %v156 = vld [vmem:[%s0 + $0x1a8] sm:$0xff]
    %v157 = vld [vmem:[%s0 + $0x1b0] sm:$0xff]
    %v158 = vld [vmem:[%s0 + $0x1b8] sm:$0xff]
    %v159 = vld [vmem:[%s0 + $0x1c0] sm:$0xff]
    %v160 = vld [vmem:[%s0 + $0x1c8] sm:$0xff]
    %v161 = vld [vmem:[%s0 + $0x1d0] sm:$0xff]
    %v162 = vld [vmem:[%s0 + $0x1d8] sm:$0xff]
    %v163 = vld [vmem:[%s0 + $0x1e0] sm:$0xff]
    %v164 = vld [vmem:[%s0 + $0x1e8] sm:$0xff]
    %v165 = vld [vmem:[%s0 + $0x1f0] sm:$0xff]
    %v166 = vld [vmem:[%s0 + $0x1f8] sm:$0xff]
    %v167 = vpack.c.bf16 %v107, %v103
    %v168 = vpack.c.bf16 %v108, %v104
    %v169 = vpack.c.bf16 %v109, %v105
    %v170 = vpack.c.bf16 %v110, %v106
    %v171 = vpack.c.bf16 %v115, %v111
    %v172 = vpack.c.bf16 %v116, %v112
    %v173 = vpack.c.bf16 %v117, %v113
    %v174 = vpack.c.bf16 %v118, %v114
    %v175 = vpack.c.bf16 %v123, %v119
    %v176 = vpack.c.bf16 %v124, %v120
    %v177 = vpack.c.bf16 %v125, %v121
    %v178 = vpack.c.bf16 %v126, %v122
    %v179 = vpack.c.bf16 %v131, %v127
    %v180 = vpack.c.bf16 %v132, %v128
    %v181 = vpack.c.bf16 %v133, %v129
    %v182 = vpack.c.bf16 %v134, %v130
    %v183 = vpack.c.bf16 %v139, %v135
    %v184 = vpack.c.bf16 %v140, %v136
    %v185 = vpack.c.bf16 %v141, %v137
    %v186 = vpack.c.bf16 %v142, %v138
    %v187 = vpack.c.bf16 %v147, %v143
    %v188 = vpack.c.bf16 %v148, %v144
    %v189 = vpack.c.bf16 %v149, %v145
    %v190 = vpack.c.bf16 %v150, %v146
    %v191 = vpack.c.bf16 %v155, %v151
    %v192 = vpack.c.bf16 %v156, %v152
    %v193 = vpack.c.bf16 %v157, %v153
    %v194 = vpack.c.bf16 %v158, %v154
    %v195 = vpack.c.bf16 %v163, %v159
    %v196 = vpack.c.bf16 %v164, %v160
    %v197 = vpack.c.bf16 %v165, %v161
    %v198 = vpack.c.bf16 %v166, %v162
    %v199 = vld [vmem:[#allocation2] sm:$0xff]
    %v200 = vld [vmem:[#allocation2 + $0x8] sm:$0xff]
    %v201 = vld [vmem:[#allocation2 + $0x10] sm:$0xff]
    %v202 = vld [vmem:[#allocation2 + $0x18] sm:$0xff]
    %v203 = vld [vmem:[#allocation2 + $0x20] sm:$0xff]
    %v204 = vld [vmem:[#allocation2 + $0x28] sm:$0xff]
    %v205 = vld [vmem:[#allocation2 + $0x30] sm:$0xff]
    %v206 = vld [vmem:[#allocation2 + $0x38] sm:$0xff]
    %v207 = vld [vmem:[#allocation2 + $0x40] sm:$0xff]
    %v208 = vld [vmem:[#allocation2 + $0x48] sm:$0xff]
    %v209 = vld [vmem:[#allocation2 + $0x50] sm:$0xff]
    %v210 = vld [vmem:[#allocation2 + $0x58] sm:$0xff]
    %v211 = vld [vmem:[#allocation2 + $0x60] sm:$0xff]
    %v212 = vld [vmem:[#allocation2 + $0x68] sm:$0xff]
    %v213 = vld [vmem:[#allocation2 + $0x70] sm:$0xff]
    %v214 = vld [vmem:[#allocation2 + $0x78] sm:$0xff]
    %v215 = vld [vmem:[#allocation2 + $0x80] sm:$0xff]
    %v216 = vld [vmem:[#allocation2 + $0x88] sm:$0xff]
    %v217 = vld [vmem:[#allocation2 + $0x90] sm:$0xff]
    %v218 = vld [vmem:[#allocation2 + $0x98] sm:$0xff]
    %v219 = vld [vmem:[#allocation2 + $0xa0] sm:$0xff]
    %v220 = vld [vmem:[#allocation2 + $0xa8] sm:$0xff]
    %v221 = vld [vmem:[#allocation2 + $0xb0] sm:$0xff]
    %v222 = vld [vmem:[#allocation2 + $0xb8] sm:$0xff]
    %v223 = vld [vmem:[#allocation2 + $0xc0] sm:$0xff]
    %v224 = vld [vmem:[#allocation2 + $0xc8] sm:$0xff]
    %v225 = vld [vmem:[#allocation2 + $0xd0] sm:$0xff]
    %v226 = vld [vmem:[#allocation2 + $0xd8] sm:$0xff]
    %v227 = vld [vmem:[#allocation2 + $0xe0] sm:$0xff]
    %v228 = vld [vmem:[#allocation2 + $0xe8] sm:$0xff]
    %v229 = vld [vmem:[#allocation2 + $0xf0] sm:$0xff]
    %v230 = vld [vmem:[#allocation2 + $0xf8] sm:$0xff]
    %v231 = vld [vmem:[#allocation2 + $0x100] sm:$0xff]
    %v232 = vld [vmem:[#allocation2 + $0x108] sm:$0xff]
    %v233 = vld [vmem:[#allocation2 + $0x110] sm:$0xff]
    %v234 = vld [vmem:[#allocation2 + $0x118] sm:$0xff]
    %v235 = vld [vmem:[#allocation2 + $0x120] sm:$0xff]
    %v236 = vld [vmem:[#allocation2 + $0x128] sm:$0xff]
    %v237 = vld [vmem:[#allocation2 + $0x130] sm:$0xff]
    %v238 = vld [vmem:[#allocation2 + $0x138] sm:$0xff]
    %v239 = vld [vmem:[#allocation2 + $0x140] sm:$0xff]
    %v240 = vld [vmem:[#allocation2 + $0x148] sm:$0xff]
    %v241 = vld [vmem:[#allocation2 + $0x150] sm:$0xff]
    %v242 = vld [vmem:[#allocation2 + $0x158] sm:$0xff]
    %v243 = vld [vmem:[#allocation2 + $0x160] sm:$0xff]
    %v244 = vld [vmem:[#allocation2 + $0x168] sm:$0xff]
    %v245 = vld [vmem:[#allocation2 + $0x170] sm:$0xff]
    %v246 = vld [vmem:[#allocation2 + $0x178] sm:$0xff]
    %v247 = vld [vmem:[#allocation2 + $0x180] sm:$0xff]
    %v248 = vld [vmem:[#allocation2 + $0x188] sm:$0xff]
    %v249 = vld [vmem:[#allocation2 + $0x190] sm:$0xff]
    %v250 = vld [vmem:[#allocation2 + $0x198] sm:$0xff]
    %v251 = vld [vmem:[#allocation2 + $0x1a0] sm:$0xff]
    %v252 = vld [vmem:[#allocation2 + $0x1a8] sm:$0xff]
    %v253 = vld [vmem:[#allocation2 + $0x1b0] sm:$0xff]
    %v254 = vld [vmem:[#allocation2 + $0x1b8] sm:$0xff]
    %v255 = vld [vmem:[#allocation2 + $0x1c0] sm:$0xff]
    %v256 = vld [vmem:[#allocation2 + $0x1c8] sm:$0xff]
    %v257 = vld [vmem:[#allocation2 + $0x1d0] sm:$0xff]
    %v258 = vld [vmem:[#allocation2 + $0x1d8] sm:$0xff]
    %v259 = vld [vmem:[#allocation2 + $0x1e0] sm:$0xff]
    %v260 = vld [vmem:[#allocation2 + $0x1e8] sm:$0xff]
    %v261 = vld [vmem:[#allocation2 + $0x1f0] sm:$0xff]
    %v262 = vld [vmem:[#allocation2 + $0x1f8] sm:$0xff]
    %v263 = vld [vmem:[#allocation2 + $0x200] sm:$0xff]
    %v264 = vld [vmem:[#allocation2 + $0x208] sm:$0xff]
    %v265 = vld [vmem:[#allocation2 + $0x210] sm:$0xff]
    %v266 = vld [vmem:[#allocation2 + $0x218] sm:$0xff]
    %v267 = vld [vmem:[#allocation2 + $0x220] sm:$0xff]
    %v268 = vld [vmem:[#allocation2 + $0x228] sm:$0xff]
    %v269 = vld [vmem:[#allocation2 + $0x230] sm:$0xff]
    %v270 = vld [vmem:[#allocation2 + $0x238] sm:$0xff]
    %v271 = vld [vmem:[#allocation2 + $0x240] sm:$0xff]
    %v272 = vld [vmem:[#allocation2 + $0x248] sm:$0xff]
    %v273 = vld [vmem:[#allocation2 + $0x250] sm:$0xff]
    %v274 = vld [vmem:[#allocation2 + $0x258] sm:$0xff]
    %v275 = vld [vmem:[#allocation2 + $0x260] sm:$0xff]
    %v276 = vld [vmem:[#allocation2 + $0x268] sm:$0xff]
    %v277 = vld [vmem:[#allocation2 + $0x270] sm:$0xff]
    %v278 = vld [vmem:[#allocation2 + $0x278] sm:$0xff]
    %v279 = vld [vmem:[#allocation2 + $0x280] sm:$0xff]
    %v280 = vld [vmem:[#allocation2 + $0x288] sm:$0xff]
    %v281 = vld [vmem:[#allocation2 + $0x290] sm:$0xff]
    %v282 = vld [vmem:[#allocation2 + $0x298] sm:$0xff]
    %v283 = vld [vmem:[#allocation2 + $0x2a0] sm:$0xff]
    %v284 = vld [vmem:[#allocation2 + $0x2a8] sm:$0xff]
    %v285 = vld [vmem:[#allocation2 + $0x2b0] sm:$0xff]
    %v286 = vld [vmem:[#allocation2 + $0x2b8] sm:$0xff]
    %v287 = vld [vmem:[#allocation2 + $0x2c0] sm:$0xff]
    %v288 = vld [vmem:[#allocation2 + $0x2c8] sm:$0xff]
    %v289 = vld [vmem:[#allocation2 + $0x2d0] sm:$0xff]
    %v290 = vld [vmem:[#allocation2 + $0x2d8] sm:$0xff]
    %v291 = vld [vmem:[#allocation2 + $0x2e0] sm:$0xff]
    %v292 = vld [vmem:[#allocation2 + $0x2e8] sm:$0xff]
    %v293 = vld [vmem:[#allocation2 + $0x2f0] sm:$0xff]
    %v294 = vld [vmem:[#allocation2 + $0x2f8] sm:$0xff]
    %v295 = vld [vmem:[#allocation2 + $0x300] sm:$0xff]
    %v296 = vld [vmem:[#allocation2 + $0x308] sm:$0xff]
    %v297 = vld [vmem:[#allocation2 + $0x310] sm:$0xff]
    %v298 = vld [vmem:[#allocation2 + $0x318] sm:$0xff]
    %v299 = vld [vmem:[#allocation2 + $0x320] sm:$0xff]
    %v300 = vld [vmem:[#allocation2 + $0x328] sm:$0xff]
    %v301 = vld [vmem:[#allocation2 + $0x330] sm:$0xff]
    %v302 = vld [vmem:[#allocation2 + $0x338] sm:$0xff]
    %v303 = vld [vmem:[#allocation2 + $0x340] sm:$0xff]
    %v304 = vld [vmem:[#allocation2 + $0x348] sm:$0xff]
    %v305 = vld [vmem:[#allocation2 + $0x350] sm:$0xff]
    %v306 = vld [vmem:[#allocation2 + $0x358] sm:$0xff]
    %v307 = vld [vmem:[#allocation2 + $0x360] sm:$0xff]
    %v308 = vld [vmem:[#allocation2 + $0x368] sm:$0xff]
    %v309 = vld [vmem:[#allocation2 + $0x370] sm:$0xff]
    %v310 = vld [vmem:[#allocation2 + $0x378] sm:$0xff]
    %v311 = vld [vmem:[#allocation2 + $0x380] sm:$0xff]
    %v312 = vld [vmem:[#allocation2 + $0x388] sm:$0xff]
    %v313 = vld [vmem:[#allocation2 + $0x390] sm:$0xff]
    %v314 = vld [vmem:[#allocation2 + $0x398] sm:$0xff]
    %v315 = vld [vmem:[#allocation2 + $0x3a0] sm:$0xff]
    %v316 = vld [vmem:[#allocation2 + $0x3a8] sm:$0xff]
    %v317 = vld [vmem:[#allocation2 + $0x3b0] sm:$0xff]
    %v318 = vld [vmem:[#allocation2 + $0x3b8] sm:$0xff]
    %v319 = vld [vmem:[#allocation2 + $0x3c0] sm:$0xff]
    %v320 = vld [vmem:[#allocation2 + $0x3c8] sm:$0xff]
    %v321 = vld [vmem:[#allocation2 + $0x3d0] sm:$0xff]
    %v322 = vld [vmem:[#allocation2 + $0x3d8] sm:$0xff]
    %v323 = vld [vmem:[#allocation2 + $0x3e0] sm:$0xff]
    %v324 = vld [vmem:[#allocation2 + $0x3e8] sm:$0xff]
    %v325 = vld [vmem:[#allocation2 + $0x3f0] sm:$0xff]
    %v326 = vld [vmem:[#allocation2 + $0x3f8] sm:$0xff]
    %v327 = vld [vmem:[#allocation2 + $0x400] sm:$0xff]
    %v328 = vld [vmem:[#allocation2 + $0x408] sm:$0xff]
    %v329 = vld [vmem:[#allocation2 + $0x410] sm:$0xff]
    %v330 = vld [vmem:[#allocation2 + $0x418] sm:$0xff]
    %v331 = vld [vmem:[#allocation2 + $0x420] sm:$0xff]
    %v332 = vld [vmem:[#allocation2 + $0x428] sm:$0xff]
    %v333 = vld [vmem:[#allocation2 + $0x430] sm:$0xff]
    %v334 = vld [vmem:[#allocation2 + $0x438] sm:$0xff]
    %v335 = vld [vmem:[#allocation2 + $0x440] sm:$0xff]
    %v336 = vld [vmem:[#allocation2 + $0x448] sm:$0xff]
    %v337 = vld [vmem:[#allocation2 + $0x450] sm:$0xff]
    %v338 = vld [vmem:[#allocation2 + $0x458] sm:$0xff]
    %v339 = vld [vmem:[#allocation2 + $0x460] sm:$0xff]
    %v340 = vld [vmem:[#allocation2 + $0x468] sm:$0xff]
    %v341 = vld [vmem:[#allocation2 + $0x470] sm:$0xff]
    %v342 = vld [vmem:[#allocation2 + $0x478] sm:$0xff]
    %v343 = vld [vmem:[#allocation2 + $0x480] sm:$0xff]
    %v344 = vld [vmem:[#allocation2 + $0x488] sm:$0xff]
    %v345 = vld [vmem:[#allocation2 + $0x490] sm:$0xff]
    %v346 = vld [vmem:[#allocation2 + $0x498] sm:$0xff]
    %v347 = vld [vmem:[#allocation2 + $0x4a0] sm:$0xff]
    %v348 = vld [vmem:[#allocation2 + $0x4a8] sm:$0xff]
    %v349 = vld [vmem:[#allocation2 + $0x4b0] sm:$0xff]
    %v350 = vld [vmem:[#allocation2 + $0x4b8] sm:$0xff]
    %v351 = vld [vmem:[#allocation2 + $0x4c0] sm:$0xff]
    %v352 = vld [vmem:[#allocation2 + $0x4c8] sm:$0xff]
    %v353 = vld [vmem:[#allocation2 + $0x4d0] sm:$0xff]
    %v354 = vld [vmem:[#allocation2 + $0x4d8] sm:$0xff]
    %v355 = vld [vmem:[#allocation2 + $0x4e0] sm:$0xff]
    %v356 = vld [vmem:[#allocation2 + $0x4e8] sm:$0xff]
    %v357 = vld [vmem:[#allocation2 + $0x4f0] sm:$0xff]
    %v358 = vld [vmem:[#allocation2 + $0x4f8] sm:$0xff]
    %v359 = vld [vmem:[#allocation2 + $0x500] sm:$0xff]
    %v360 = vld [vmem:[#allocation2 + $0x508] sm:$0xff]
    %v361 = vld [vmem:[#allocation2 + $0x510] sm:$0xff]
    %v362 = vld [vmem:[#allocation2 + $0x518] sm:$0xff]
    %v363 = vld [vmem:[#allocation2 + $0x520] sm:$0xff]
    %v364 = vld [vmem:[#allocation2 + $0x528] sm:$0xff]
    %v365 = vld [vmem:[#allocation2 + $0x530] sm:$0xff]
    %v366 = vld [vmem:[#allocation2 + $0x538] sm:$0xff]
    %v367 = vld [vmem:[#allocation2 + $0x540] sm:$0xff]
    %v368 = vld [vmem:[#allocation2 + $0x548] sm:$0xff]
    %v369 = vld [vmem:[#allocation2 + $0x550] sm:$0xff]
    %v370 = vld [vmem:[#allocation2 + $0x558] sm:$0xff]
    %v371 = vld [vmem:[#allocation2 + $0x560] sm:$0xff]
    %v372 = vld [vmem:[#allocation2 + $0x568] sm:$0xff]
    %v373 = vld [vmem:[#allocation2 + $0x570] sm:$0xff]
    %v374 = vld [vmem:[#allocation2 + $0x578] sm:$0xff]
    %v375 = vld [vmem:[#allocation2 + $0x580] sm:$0xff]
    %v376 = vld [vmem:[#allocation2 + $0x588] sm:$0xff]
    %v377 = vld [vmem:[#allocation2 + $0x590] sm:$0xff]
    %v378 = vld [vmem:[#allocation2 + $0x598] sm:$0xff]
    %v379 = vld [vmem:[#allocation2 + $0x5a0] sm:$0xff]
    %v380 = vld [vmem:[#allocation2 + $0x5a8] sm:$0xff]
    %v381 = vld [vmem:[#allocation2 + $0x5b0] sm:$0xff]
    %v382 = vld [vmem:[#allocation2 + $0x5b8] sm:$0xff]
    %v383 = vld [vmem:[#allocation2 + $0x5c0] sm:$0xff]
    %v384 = vld [vmem:[#allocation2 + $0x5c8] sm:$0xff]
    %v385 = vld [vmem:[#allocation2 + $0x5d0] sm:$0xff]
    %v386 = vld [vmem:[#allocation2 + $0x5d8] sm:$0xff]
    %v387 = vld [vmem:[#allocation2 + $0x5e0] sm:$0xff]
    %v388 = vld [vmem:[#allocation2 + $0x5e8] sm:$0xff]
    %v389 = vld [vmem:[#allocation2 + $0x5f0] sm:$0xff]
    %v390 = vld [vmem:[#allocation2 + $0x5f8] sm:$0xff]
    %v391 = vld [vmem:[#allocation2 + $0x600] sm:$0xff]
    %v392 = vld [vmem:[#allocation2 + $0x608] sm:$0xff]
    %v393 = vld [vmem:[#allocation2 + $0x610] sm:$0xff]
    %v394 = vld [vmem:[#allocation2 + $0x618] sm:$0xff]
    %v395 = vld [vmem:[#allocation2 + $0x620] sm:$0xff]
    %v396 = vld [vmem:[#allocation2 + $0x628] sm:$0xff]
    %v397 = vld [vmem:[#allocation2 + $0x630] sm:$0xff]
    %v398 = vld [vmem:[#allocation2 + $0x638] sm:$0xff]
    %v399 = vld [vmem:[#allocation2 + $0x640] sm:$0xff]
    %v400 = vld [vmem:[#allocation2 + $0x648] sm:$0xff]
    %v401 = vld [vmem:[#allocation2 + $0x650] sm:$0xff]
    %v402 = vld [vmem:[#allocation2 + $0x658] sm:$0xff]
    %v403 = vld [vmem:[#allocation2 + $0x660] sm:$0xff]
    %v404 = vld [vmem:[#allocation2 + $0x668] sm:$0xff]
    %v405 = vld [vmem:[#allocation2 + $0x670] sm:$0xff]
    %v406 = vld [vmem:[#allocation2 + $0x678] sm:$0xff]
    %v407 = vld [vmem:[#allocation2 + $0x680] sm:$0xff]
    %v408 = vld [vmem:[#allocation2 + $0x688] sm:$0xff]
    %v409 = vld [vmem:[#allocation2 + $0x690] sm:$0xff]
    %v410 = vld [vmem:[#allocation2 + $0x698] sm:$0xff]
    %v411 = vld [vmem:[#allocation2 + $0x6a0] sm:$0xff]
    %v412 = vld [vmem:[#allocation2 + $0x6a8] sm:$0xff]
    %v413 = vld [vmem:[#allocation2 + $0x6b0] sm:$0xff]
    %v414 = vld [vmem:[#allocation2 + $0x6b8] sm:$0xff]
    %v415 = vld [vmem:[#allocation2 + $0x6c0] sm:$0xff]
    %v416 = vld [vmem:[#allocation2 + $0x6c8] sm:$0xff]
    %v417 = vld [vmem:[#allocation2 + $0x6d0] sm:$0xff]
    %v418 = vld [vmem:[#allocation2 + $0x6d8] sm:$0xff]
    %v419 = vld [vmem:[#allocation2 + $0x6e0] sm:$0xff]
    %v420 = vld [vmem:[#allocation2 + $0x6e8] sm:$0xff]
    %v421 = vld [vmem:[#allocation2 + $0x6f0] sm:$0xff]
    %v422 = vld [vmem:[#allocation2 + $0x6f8] sm:$0xff]
    %v423 = vld [vmem:[#allocation2 + $0x700] sm:$0xff]
    %v424 = vld [vmem:[#allocation2 + $0x708] sm:$0xff]
    %v425 = vld [vmem:[#allocation2 + $0x710] sm:$0xff]
    %v426 = vld [vmem:[#allocation2 + $0x718] sm:$0xff]
    %v427 = vld [vmem:[#allocation2 + $0x720] sm:$0xff]
    %v428 = vld [vmem:[#allocation2 + $0x728] sm:$0xff]
    %v429 = vld [vmem:[#allocation2 + $0x730] sm:$0xff]
    %v430 = vld [vmem:[#allocation2 + $0x738] sm:$0xff]
    %v431 = vld [vmem:[#allocation2 + $0x740] sm:$0xff]
    %v432 = vld [vmem:[#allocation2 + $0x748] sm:$0xff]
    %v433 = vld [vmem:[#allocation2 + $0x750] sm:$0xff]
    %v434 = vld [vmem:[#allocation2 + $0x758] sm:$0xff]
    %v435 = vld [vmem:[#allocation2 + $0x760] sm:$0xff]
    %v436 = vld [vmem:[#allocation2 + $0x768] sm:$0xff]
    %v437 = vld [vmem:[#allocation2 + $0x770] sm:$0xff]
    %v438 = vld [vmem:[#allocation2 + $0x778] sm:$0xff]
    %v439 = vld [vmem:[#allocation2 + $0x780] sm:$0xff]
    %v440 = vld [vmem:[#allocation2 + $0x788] sm:$0xff]
    %v441 = vld [vmem:[#allocation2 + $0x790] sm:$0xff]
    %v442 = vld [vmem:[#allocation2 + $0x798] sm:$0xff]
    %v443 = vld [vmem:[#allocation2 + $0x7a0] sm:$0xff]
    %v444 = vld [vmem:[#allocation2 + $0x7a8] sm:$0xff]
    %v445 = vld [vmem:[#allocation2 + $0x7b0] sm:$0xff]
    %v446 = vld [vmem:[#allocation2 + $0x7b8] sm:$0xff]
    %v447 = vld [vmem:[#allocation2 + $0x7c0] sm:$0xff]
    %v448 = vld [vmem:[#allocation2 + $0x7c8] sm:$0xff]
    %v449 = vld [vmem:[#allocation2 + $0x7d0] sm:$0xff]
    %v450 = vld [vmem:[#allocation2 + $0x7d8] sm:$0xff]
    %v451 = vld [vmem:[#allocation2 + $0x7e0] sm:$0xff]
    %v452 = vld [vmem:[#allocation2 + $0x7e8] sm:$0xff]
    %v453 = vld [vmem:[#allocation2 + $0x7f0] sm:$0xff]
    %v454 = vld [vmem:[#allocation2 + $0x7f8] sm:$0xff]
    %v455 = vld [vmem:[#allocation4] sm:$0xff]
    %v457 = vlaneseq
    %v458 = vshrl.u32 %v457, 7
    %v459 = vsub.s32 0, %v458
    %v460 = vrot.slane %v455, %v459
    %v461 = vlaneseq
    %v462 = vshrl.u32 %v461, 7
    %v463 = vsub.s32 1, %v462
    %v464 = vrot.slane %v455, %v463
    %v465 = vlaneseq
    %v466 = vshrl.u32 %v465, 7
    %v467 = vsub.s32 2, %v466
    %v468 = vrot.slane %v455, %v467
    %v469 = vlaneseq
    %v470 = vshrl.u32 %v469, 7
    %v471 = vsub.s32 3, %v470
    %v472 = vrot.slane %v455, %v471
    %v473 = vlaneseq
    %v474 = vshrl.u32 %v473, 7
    %v475 = vsub.s32 4, %v474
    %v476 = vrot.slane %v455, %v475
    %v477 = vlaneseq
    %v478 = vshrl.u32 %v477, 7
    %v479 = vsub.s32 5, %v478
    %v480 = vrot.slane %v455, %v479
    %v481 = vlaneseq
    %v482 = vshrl.u32 %v481, 7
    %v483 = vsub.s32 6, %v482
    %v484 = vrot.slane %v455, %v483
    %v485 = vlaneseq
    %v486 = vshrl.u32 %v485, 7
    %v487 = vsub.s32 7, %v486
    %v488 = vrot.slane %v455, %v487
    %v753 = vunpack.c.l.b16 %v199
    %v754 = vunpack.c.h.b16 %v199
    %v755 = vunpack.c.l.b16 %v200
    %v756 = vunpack.c.h.b16 %v200
    %v757 = vunpack.c.l.b16 %v201
    %v758 = vunpack.c.h.b16 %v201
    %v759 = vunpack.c.l.b16 %v202
    %v760 = vunpack.c.h.b16 %v202
    %v761 = vunpack.c.l.b16 %v203
    %v762 = vunpack.c.h.b16 %v203
    %v763 = vunpack.c.l.b16 %v204
    %v764 = vunpack.c.h.b16 %v204
    %v765 = vunpack.c.l.b16 %v205
    %v766 = vunpack.c.h.b16 %v205
    %v767 = vunpack.c.l.b16 %v206
    %v768 = vunpack.c.h.b16 %v206
    %v769 = vunpack.c.l.b16 %v207
    %v770 = vunpack.c.h.b16 %v207
    %v771 = vunpack.c.l.b16 %v208
    %v772 = vunpack.c.h.b16 %v208
    %v773 = vunpack.c.l.b16 %v209
    %v774 = vunpack.c.h.b16 %v209
    %v775 = vunpack.c.l.b16 %v210
    %v776 = vunpack.c.h.b16 %v210
    %v777 = vunpack.c.l.b16 %v211
    %v778 = vunpack.c.h.b16 %v211
    %v779 = vunpack.c.l.b16 %v212
    %v780 = vunpack.c.h.b16 %v212
    %v781 = vunpack.c.l.b16 %v213
    %v782 = vunpack.c.h.b16 %v213
    %v783 = vunpack.c.l.b16 %v214
    %v784 = vunpack.c.h.b16 %v214
    %v785 = vunpack.c.l.b16 %v215
    %v786 = vunpack.c.h.b16 %v215
    %v787 = vunpack.c.l.b16 %v216
    %v788 = vunpack.c.h.b16 %v216
    %v789 = vunpack.c.l.b16 %v217
    %v790 = vunpack.c.h.b16 %v217
    %v791 = vunpack.c.l.b16 %v218
    %v792 = vunpack.c.h.b16 %v218
    %v793 = vunpack.c.l.b16 %v219
    %v794 = vunpack.c.h.b16 %v219
    %v795 = vunpack.c.l.b16 %v220
    %v796 = vunpack.c.h.b16 %v220
    %v797 = vunpack.c.l.b16 %v221
    %v798 = vunpack.c.h.b16 %v221
    %v799 = vunpack.c.l.b16 %v222
    %v800 = vunpack.c.h.b16 %v222
    %v801 = vunpack.c.l.b16 %v223
    %v802 = vunpack.c.h.b16 %v223
    %v803 = vunpack.c.l.b16 %v224
    %v804 = vunpack.c.h.b16 %v224
    %v805 = vunpack.c.l.b16 %v225
    %v806 = vunpack.c.h.b16 %v225
    %v807 = vunpack.c.l.b16 %v226
    %v808 = vunpack.c.h.b16 %v226
    %v809 = vunpack.c.l.b16 %v227
    %v810 = vunpack.c.h.b16 %v227
    %v811 = vunpack.c.l.b16 %v228
    %v812 = vunpack.c.h.b16 %v228
    %v813 = vunpack.c.l.b16 %v229
    %v814 = vunpack.c.h.b16 %v229
    %v815 = vunpack.c.l.b16 %v230
    %v816 = vunpack.c.h.b16 %v230
    %v817 = vunpack.c.l.b16 %v231
    %v818 = vunpack.c.h.b16 %v231
    %v819 = vunpack.c.l.b16 %v232
    %v820 = vunpack.c.h.b16 %v232
    %v821 = vunpack.c.l.b16 %v233
    %v822 = vunpack.c.h.b16 %v233
    %v823 = vunpack.c.l.b16 %v234
    %v824 = vunpack.c.h.b16 %v234
    %v825 = vunpack.c.l.b16 %v235
    %v826 = vunpack.c.h.b16 %v235
    %v827 = vunpack.c.l.b16 %v236
    %v828 = vunpack.c.h.b16 %v236
    %v829 = vunpack.c.l.b16 %v237
    %v830 = vunpack.c.h.b16 %v237
    %v831 = vunpack.c.l.b16 %v238
    %v832 = vunpack.c.h.b16 %v238
    %v833 = vunpack.c.l.b16 %v239
    %v834 = vunpack.c.h.b16 %v239
    %v835 = vunpack.c.l.b16 %v240
    %v836 = vunpack.c.h.b16 %v240
    %v837 = vunpack.c.l.b16 %v241
    %v838 = vunpack.c.h.b16 %v241
    %v839 = vunpack.c.l.b16 %v242
    %v840 = vunpack.c.h.b16 %v242
    %v841 = vunpack.c.l.b16 %v243
    %v842 = vunpack.c.h.b16 %v243
    %v843 = vunpack.c.l.b16 %v244
    %v844 = vunpack.c.h.b16 %v244
    %v845 = vunpack.c.l.b16 %v245
    %v846 = vunpack.c.h.b16 %v245
    %v847 = vunpack.c.l.b16 %v246
    %v848 = vunpack.c.h.b16 %v246
    %v849 = vunpack.c.l.b16 %v247
    %v850 = vunpack.c.h.b16 %v247
    %v851 = vunpack.c.l.b16 %v248
    %v852 = vunpack.c.h.b16 %v248
    %v853 = vunpack.c.l.b16 %v249
    %v854 = vunpack.c.h.b16 %v249
    %v855 = vunpack.c.l.b16 %v250
    %v856 = vunpack.c.h.b16 %v250
    %v857 = vunpack.c.l.b16 %v251
    %v858 = vunpack.c.h.b16 %v251
    %v859 = vunpack.c.l.b16 %v252
    %v860 = vunpack.c.h.b16 %v252
    %v861 = vunpack.c.l.b16 %v253
    %v862 = vunpack.c.h.b16 %v253
    %v863 = vunpack.c.l.b16 %v254
    %v864 = vunpack.c.h.b16 %v254
    %v865 = vunpack.c.l.b16 %v255
    %v866 = vunpack.c.h.b16 %v255
    %v867 = vunpack.c.l.b16 %v256
    %v868 = vunpack.c.h.b16 %v256
    %v869 = vunpack.c.l.b16 %v257
    %v870 = vunpack.c.h.b16 %v257
    %v871 = vunpack.c.l.b16 %v258
    %v872 = vunpack.c.h.b16 %v258
    %v873 = vunpack.c.l.b16 %v259
    %v874 = vunpack.c.h.b16 %v259
    %v875 = vunpack.c.l.b16 %v260
    %v876 = vunpack.c.h.b16 %v260
    %v877 = vunpack.c.l.b16 %v261
    %v878 = vunpack.c.h.b16 %v261
    %v879 = vunpack.c.l.b16 %v262
    %v880 = vunpack.c.h.b16 %v262
    %v881 = vunpack.c.l.b16 %v263
    %v882 = vunpack.c.h.b16 %v263
    %v883 = vunpack.c.l.b16 %v264
    %v884 = vunpack.c.h.b16 %v264
    %v885 = vunpack.c.l.b16 %v265
    %v886 = vunpack.c.h.b16 %v265
    %v887 = vunpack.c.l.b16 %v266
    %v888 = vunpack.c.h.b16 %v266
    %v889 = vunpack.c.l.b16 %v267
    %v890 = vunpack.c.h.b16 %v267
    %v891 = vunpack.c.l.b16 %v268
    %v892 = vunpack.c.h.b16 %v268
    %v893 = vunpack.c.l.b16 %v269
    %v894 = vunpack.c.h.b16 %v269
    %v895 = vunpack.c.l.b16 %v270
    %v896 = vunpack.c.h.b16 %v270
    %v897 = vunpack.c.l.b16 %v271
    %v898 = vunpack.c.h.b16 %v271
    %v899 = vunpack.c.l.b16 %v272
    %v900 = vunpack.c.h.b16 %v272
    %v901 = vunpack.c.l.b16 %v273
    %v902 = vunpack.c.h.b16 %v273
    %v903 = vunpack.c.l.b16 %v274
    %v904 = vunpack.c.h.b16 %v274
    %v905 = vunpack.c.l.b16 %v275
    %v906 = vunpack.c.h.b16 %v275
    %v907 = vunpack.c.l.b16 %v276
    %v908 = vunpack.c.h.b16 %v276
    %v909 = vunpack.c.l.b16 %v277
    %v910 = vunpack.c.h.b16 %v277
    %v911 = vunpack.c.l.b16 %v278
    %v912 = vunpack.c.h.b16 %v278
    %v913 = vunpack.c.l.b16 %v279
    %v914 = vunpack.c.h.b16 %v279
    %v915 = vunpack.c.l.b16 %v280
    %v916 = vunpack.c.h.b16 %v280
    %v917 = vunpack.c.l.b16 %v281
    %v918 = vunpack.c.h.b16 %v281
    %v919 = vunpack.c.l.b16 %v282
    %v920 = vunpack.c.h.b16 %v282
    %v921 = vunpack.c.l.b16 %v283
    %v922 = vunpack.c.h.b16 %v283
    %v923 = vunpack.c.l.b16 %v284
    %v924 = vunpack.c.h.b16 %v284
    %v925 = vunpack.c.l.b16 %v285
    %v926 = vunpack.c.h.b16 %v285
    %v927 = vunpack.c.l.b16 %v286
    %v928 = vunpack.c.h.b16 %v286
    %v929 = vunpack.c.l.b16 %v287
    %v930 = vunpack.c.h.b16 %v287
    %v931 = vunpack.c.l.b16 %v288
    %v932 = vunpack.c.h.b16 %v288
    %v933 = vunpack.c.l.b16 %v289
    %v934 = vunpack.c.h.b16 %v289
    %v935 = vunpack.c.l.b16 %v290
    %v936 = vunpack.c.h.b16 %v290
    %v937 = vunpack.c.l.b16 %v291
    %v938 = vunpack.c.h.b16 %v291
    %v939 = vunpack.c.l.b16 %v292
    %v940 = vunpack.c.h.b16 %v292
    %v941 = vunpack.c.l.b16 %v293
    %v942 = vunpack.c.h.b16 %v293
    %v943 = vunpack.c.l.b16 %v294
    %v944 = vunpack.c.h.b16 %v294
    %v945 = vunpack.c.l.b16 %v295
    %v946 = vunpack.c.h.b16 %v295
    %v947 = vunpack.c.l.b16 %v296
    %v948 = vunpack.c.h.b16 %v296
    %v949 = vunpack.c.l.b16 %v297
    %v950 = vunpack.c.h.b16 %v297
    %v951 = vunpack.c.l.b16 %v298
    %v952 = vunpack.c.h.b16 %v298
    %v953 = vunpack.c.l.b16 %v299
    %v954 = vunpack.c.h.b16 %v299
    %v955 = vunpack.c.l.b16 %v300
    %v956 = vunpack.c.h.b16 %v300
    %v957 = vunpack.c.l.b16 %v301
    %v958 = vunpack.c.h.b16 %v301
    %v959 = vunpack.c.l.b16 %v302
    %v960 = vunpack.c.h.b16 %v302
    %v961 = vunpack.c.l.b16 %v303
    %v962 = vunpack.c.h.b16 %v303
    %v963 = vunpack.c.l.b16 %v304
    %v964 = vunpack.c.h.b16 %v304
    %v965 = vunpack.c.l.b16 %v305
    %v966 = vunpack.c.h.b16 %v305
    %v967 = vunpack.c.l.b16 %v306
    %v968 = vunpack.c.h.b16 %v306
    %v969 = vunpack.c.l.b16 %v307
    %v970 = vunpack.c.h.b16 %v307
    %v971 = vunpack.c.l.b16 %v308
    %v972 = vunpack.c.h.b16 %v308
    %v973 = vunpack.c.l.b16 %v309
    %v974 = vunpack.c.h.b16 %v309
    %v975 = vunpack.c.l.b16 %v310
    %v976 = vunpack.c.h.b16 %v310
    %v977 = vunpack.c.l.b16 %v311
    %v978 = vunpack.c.h.b16 %v311
    %v979 = vunpack.c.l.b16 %v312
    %v980 = vunpack.c.h.b16 %v312
    %v981 = vunpack.c.l.b16 %v313
    %v982 = vunpack.c.h.b16 %v313
    %v983 = vunpack.c.l.b16 %v314
    %v984 = vunpack.c.h.b16 %v314
    %v985 = vunpack.c.l.b16 %v315
    %v986 = vunpack.c.h.b16 %v315
    %v987 = vunpack.c.l.b16 %v316
    %v988 = vunpack.c.h.b16 %v316
    %v989 = vunpack.c.l.b16 %v317
    %v990 = vunpack.c.h.b16 %v317
    %v991 = vunpack.c.l.b16 %v318
    %v992 = vunpack.c.h.b16 %v318
    %v993 = vunpack.c.l.b16 %v319
    %v994 = vunpack.c.h.b16 %v319
    %v995 = vunpack.c.l.b16 %v320
    %v996 = vunpack.c.h.b16 %v320
    %v997 = vunpack.c.l.b16 %v321
    %v998 = vunpack.c.h.b16 %v321
    %v999 = vunpack.c.l.b16 %v322
    %v1000 = vunpack.c.h.b16 %v322
    %v1001 = vunpack.c.l.b16 %v323
    %v1002 = vunpack.c.h.b16 %v323
    %v1003 = vunpack.c.l.b16 %v324
    %v1004 = vunpack.c.h.b16 %v324
    %v1005 = vunpack.c.l.b16 %v325
    %v1006 = vunpack.c.h.b16 %v325
    %v1007 = vunpack.c.l.b16 %v326
    %v1008 = vunpack.c.h.b16 %v326
    %v1009 = vunpack.c.l.b16 %v327
    %v1010 = vunpack.c.h.b16 %v327
    %v1011 = vunpack.c.l.b16 %v328
    %v1012 = vunpack.c.h.b16 %v328
    %v1013 = vunpack.c.l.b16 %v329
    %v1014 = vunpack.c.h.b16 %v329
    %v1015 = vunpack.c.l.b16 %v330
    %v1016 = vunpack.c.h.b16 %v330
    %v1017 = vunpack.c.l.b16 %v331
    %v1018 = vunpack.c.h.b16 %v331
    %v1019 = vunpack.c.l.b16 %v332
    %v1020 = vunpack.c.h.b16 %v332
    %v1021 = vunpack.c.l.b16 %v333
    %v1022 = vunpack.c.h.b16 %v333
    %v1023 = vunpack.c.l.b16 %v334
    %v1024 = vunpack.c.h.b16 %v334
    %v1025 = vunpack.c.l.b16 %v335
    %v1026 = vunpack.c.h.b16 %v335
    %v1027 = vunpack.c.l.b16 %v336
    %v1028 = vunpack.c.h.b16 %v336
    %v1029 = vunpack.c.l.b16 %v337
    %v1030 = vunpack.c.h.b16 %v337
    %v1031 = vunpack.c.l.b16 %v338
    %v1032 = vunpack.c.h.b16 %v338
    %v1033 = vunpack.c.l.b16 %v339
    %v1034 = vunpack.c.h.b16 %v339
    %v1035 = vunpack.c.l.b16 %v340
    %v1036 = vunpack.c.h.b16 %v340
    %v1037 = vunpack.c.l.b16 %v341
    %v1038 = vunpack.c.h.b16 %v341
    %v1039 = vunpack.c.l.b16 %v342
    %v1040 = vunpack.c.h.b16 %v342
    %v1041 = vunpack.c.l.b16 %v343
    %v1042 = vunpack.c.h.b16 %v343
    %v1043 = vunpack.c.l.b16 %v344
    %v1044 = vunpack.c.h.b16 %v344
    %v1045 = vunpack.c.l.b16 %v345
    %v1046 = vunpack.c.h.b16 %v345
    %v1047 = vunpack.c.l.b16 %v346
    %v1048 = vunpack.c.h.b16 %v346
    %v1049 = vunpack.c.l.b16 %v347
    %v1050 = vunpack.c.h.b16 %v347
    %v1051 = vunpack.c.l.b16 %v348
    %v1052 = vunpack.c.h.b16 %v348
    %v1053 = vunpack.c.l.b16 %v349
    %v1054 = vunpack.c.h.b16 %v349
    %v1055 = vunpack.c.l.b16 %v350
    %v1056 = vunpack.c.h.b16 %v350
    %v1057 = vunpack.c.l.b16 %v351
    %v1058 = vunpack.c.h.b16 %v351
    %v1059 = vunpack.c.l.b16 %v352
    %v1060 = vunpack.c.h.b16 %v352
    %v1061 = vunpack.c.l.b16 %v353
    %v1062 = vunpack.c.h.b16 %v353
    %v1063 = vunpack.c.l.b16 %v354
    %v1064 = vunpack.c.h.b16 %v354
    %v1065 = vunpack.c.l.b16 %v355
    %v1066 = vunpack.c.h.b16 %v355
    %v1067 = vunpack.c.l.b16 %v356
    %v1068 = vunpack.c.h.b16 %v356
    %v1069 = vunpack.c.l.b16 %v357
    %v1070 = vunpack.c.h.b16 %v357
    %v1071 = vunpack.c.l.b16 %v358
    %v1072 = vunpack.c.h.b16 %v358
    %v1073 = vunpack.c.l.b16 %v359
    %v1074 = vunpack.c.h.b16 %v359
    %v1075 = vunpack.c.l.b16 %v360
    %v1076 = vunpack.c.h.b16 %v360
    %v1077 = vunpack.c.l.b16 %v361
    %v1078 = vunpack.c.h.b16 %v361
    %v1079 = vunpack.c.l.b16 %v362
    %v1080 = vunpack.c.h.b16 %v362
    %v1081 = vunpack.c.l.b16 %v363
    %v1082 = vunpack.c.h.b16 %v363
    %v1083 = vunpack.c.l.b16 %v364
    %v1084 = vunpack.c.h.b16 %v364
    %v1085 = vunpack.c.l.b16 %v365
    %v1086 = vunpack.c.h.b16 %v365
    %v1087 = vunpack.c.l.b16 %v366
    %v1088 = vunpack.c.h.b16 %v366
    %v1089 = vunpack.c.l.b16 %v367
    %v1090 = vunpack.c.h.b16 %v367
    %v1091 = vunpack.c.l.b16 %v368
    %v1092 = vunpack.c.h.b16 %v368
    %v1093 = vunpack.c.l.b16 %v369
    %v1094 = vunpack.c.h.b16 %v369
    %v1095 = vunpack.c.l.b16 %v370
    %v1096 = vunpack.c.h.b16 %v370
    %v1097 = vunpack.c.l.b16 %v371
    %v1098 = vunpack.c.h.b16 %v371
    %v1099 = vunpack.c.l.b16 %v372
    %v1100 = vunpack.c.h.b16 %v372
    %v1101 = vunpack.c.l.b16 %v373
    %v1102 = vunpack.c.h.b16 %v373
    %v1103 = vunpack.c.l.b16 %v374
    %v1104 = vunpack.c.h.b16 %v374
    %v1105 = vunpack.c.l.b16 %v375
    %v1106 = vunpack.c.h.b16 %v375
    %v1107 = vunpack.c.l.b16 %v376
    %v1108 = vunpack.c.h.b16 %v376
    %v1109 = vunpack.c.l.b16 %v377
    %v1110 = vunpack.c.h.b16 %v377
    %v1111 = vunpack.c.l.b16 %v378
    %v1112 = vunpack.c.h.b16 %v378
    %v1113 = vunpack.c.l.b16 %v379
    %v1114 = vunpack.c.h.b16 %v379
    %v1115 = vunpack.c.l.b16 %v380
    %v1116 = vunpack.c.h.b16 %v380
    %v1117 = vunpack.c.l.b16 %v381
    %v1118 = vunpack.c.h.b16 %v381
    %v1119 = vunpack.c.l.b16 %v382
    %v1120 = vunpack.c.h.b16 %v382
    %v1121 = vunpack.c.l.b16 %v383
    %v1122 = vunpack.c.h.b16 %v383
    %v1123 = vunpack.c.l.b16 %v384
    %v1124 = vunpack.c.h.b16 %v384
    %v1125 = vunpack.c.l.b16 %v385
    %v1126 = vunpack.c.h.b16 %v385
    %v1127 = vunpack.c.l.b16 %v386
    %v1128 = vunpack.c.h.b16 %v386
    %v1129 = vunpack.c.l.b16 %v387
    %v1130 = vunpack.c.h.b16 %v387
    %v1131 = vunpack.c.l.b16 %v388
    %v1132 = vunpack.c.h.b16 %v388
    %v1133 = vunpack.c.l.b16 %v389
    %v1134 = vunpack.c.h.b16 %v389
    %v1135 = vunpack.c.l.b16 %v390
    %v1136 = vunpack.c.h.b16 %v390
    %v1137 = vunpack.c.l.b16 %v391
    %v1138 = vunpack.c.h.b16 %v391
    %v1139 = vunpack.c.l.b16 %v392
    %v1140 = vunpack.c.h.b16 %v392
    %v1141 = vunpack.c.l.b16 %v393
    %v1142 = vunpack.c.h.b16 %v393
    %v1143 = vunpack.c.l.b16 %v394
    %v1144 = vunpack.c.h.b16 %v394
    %v1145 = vunpack.c.l.b16 %v395
    %v1146 = vunpack.c.h.b16 %v395
    %v1147 = vunpack.c.l.b16 %v396
    %v1148 = vunpack.c.h.b16 %v396
    %v1149 = vunpack.c.l.b16 %v397
    %v1150 = vunpack.c.h.b16 %v397
    %v1151 = vunpack.c.l.b16 %v398
    %v1152 = vunpack.c.h.b16 %v398
    %v1153 = vunpack.c.l.b16 %v399
    %v1154 = vunpack.c.h.b16 %v399
    %v1155 = vunpack.c.l.b16 %v400
    %v1156 = vunpack.c.h.b16 %v400
    %v1157 = vunpack.c.l.b16 %v401
    %v1158 = vunpack.c.h.b16 %v401
    %v1159 = vunpack.c.l.b16 %v402
    %v1160 = vunpack.c.h.b16 %v402
    %v1161 = vunpack.c.l.b16 %v403
    %v1162 = vunpack.c.h.b16 %v403
    %v1163 = vunpack.c.l.b16 %v404
    %v1164 = vunpack.c.h.b16 %v404
    %v1165 = vunpack.c.l.b16 %v405
    %v1166 = vunpack.c.h.b16 %v405
    %v1167 = vunpack.c.l.b16 %v406
    %v1168 = vunpack.c.h.b16 %v406
    %v1169 = vunpack.c.l.b16 %v407
    %v1170 = vunpack.c.h.b16 %v407
    %v1171 = vunpack.c.l.b16 %v408
    %v1172 = vunpack.c.h.b16 %v408
    %v1173 = vunpack.c.l.b16 %v409
    %v1174 = vunpack.c.h.b16 %v409
    %v1175 = vunpack.c.l.b16 %v410
    %v1176 = vunpack.c.h.b16 %v410
    %v1177 = vunpack.c.l.b16 %v411
    %v1178 = vunpack.c.h.b16 %v411
    %v1179 = vunpack.c.l.b16 %v412
    %v1180 = vunpack.c.h.b16 %v412
    %v1181 = vunpack.c.l.b16 %v413
    %v1182 = vunpack.c.h.b16 %v413
    %v1183 = vunpack.c.l.b16 %v414
    %v1184 = vunpack.c.h.b16 %v414
    %v1185 = vunpack.c.l.b16 %v415
    %v1186 = vunpack.c.h.b16 %v415
    %v1187 = vunpack.c.l.b16 %v416
    %v1188 = vunpack.c.h.b16 %v416
    %v1189 = vunpack.c.l.b16 %v417
    %v1190 = vunpack.c.h.b16 %v417
    %v1191 = vunpack.c.l.b16 %v418
    %v1192 = vunpack.c.h.b16 %v418
    %v1193 = vunpack.c.l.b16 %v419
    %v1194 = vunpack.c.h.b16 %v419
    %v1195 = vunpack.c.l.b16 %v420
    %v1196 = vunpack.c.h.b16 %v420
    %v1197 = vunpack.c.l.b16 %v421
    %v1198 = vunpack.c.h.b16 %v421
    %v1199 = vunpack.c.l.b16 %v422
    %v1200 = vunpack.c.h.b16 %v422
    %v1201 = vunpack.c.l.b16 %v423
    %v1202 = vunpack.c.h.b16 %v423
    %v1203 = vunpack.c.l.b16 %v424
    %v1204 = vunpack.c.h.b16 %v424
    %v1205 = vunpack.c.l.b16 %v425
    %v1206 = vunpack.c.h.b16 %v425
    %v1207 = vunpack.c.l.b16 %v426
    %v1208 = vunpack.c.h.b16 %v426
    %v1209 = vunpack.c.l.b16 %v427
    %v1210 = vunpack.c.h.b16 %v427
    %v1211 = vunpack.c.l.b16 %v428
    %v1212 = vunpack.c.h.b16 %v428
    %v1213 = vunpack.c.l.b16 %v429
    %v1214 = vunpack.c.h.b16 %v429
    %v1215 = vunpack.c.l.b16 %v430
    %v1216 = vunpack.c.h.b16 %v430
    %v1217 = vunpack.c.l.b16 %v431
    %v1218 = vunpack.c.h.b16 %v431
    %v1219 = vunpack.c.l.b16 %v432
    %v1220 = vunpack.c.h.b16 %v432
    %v1221 = vunpack.c.l.b16 %v433
    %v1222 = vunpack.c.h.b16 %v433
    %v1223 = vunpack.c.l.b16 %v434
    %v1224 = vunpack.c.h.b16 %v434
    %v1225 = vunpack.c.l.b16 %v435
    %v1226 = vunpack.c.h.b16 %v435
    %v1227 = vunpack.c.l.b16 %v436
    %v1228 = vunpack.c.h.b16 %v436
    %v1229 = vunpack.c.l.b16 %v437
    %v1230 = vunpack.c.h.b16 %v437
    %v1231 = vunpack.c.l.b16 %v438
    %v1232 = vunpack.c.h.b16 %v438
    %v1233 = vunpack.c.l.b16 %v439
    %v1234 = vunpack.c.h.b16 %v439
    %v1235 = vunpack.c.l.b16 %v440
    %v1236 = vunpack.c.h.b16 %v440
    %v1237 = vunpack.c.l.b16 %v441
    %v1238 = vunpack.c.h.b16 %v441
    %v1239 = vunpack.c.l.b16 %v442
    %v1240 = vunpack.c.h.b16 %v442
    %v1241 = vunpack.c.l.b16 %v443
    %v1242 = vunpack.c.h.b16 %v443
    %v1243 = vunpack.c.l.b16 %v444
    %v1244 = vunpack.c.h.b16 %v444
    %v1245 = vunpack.c.l.b16 %v445
    %v1246 = vunpack.c.h.b16 %v445
    %v1247 = vunpack.c.l.b16 %v446
    %v1248 = vunpack.c.h.b16 %v446
    %v1249 = vunpack.c.l.b16 %v447
    %v1250 = vunpack.c.h.b16 %v447
    %v1251 = vunpack.c.l.b16 %v448
    %v1252 = vunpack.c.h.b16 %v448
    %v1253 = vunpack.c.l.b16 %v449
    %v1254 = vunpack.c.h.b16 %v449
    %v1255 = vunpack.c.l.b16 %v450
    %v1256 = vunpack.c.h.b16 %v450
    %v1257 = vunpack.c.l.b16 %v451
    %v1258 = vunpack.c.h.b16 %v451
    %v1259 = vunpack.c.l.b16 %v452
    %v1260 = vunpack.c.h.b16 %v452
    %v1261 = vunpack.c.l.b16 %v453
    %v1262 = vunpack.c.h.b16 %v453
    %v1263 = vunpack.c.l.b16 %v454
    %v1264 = vunpack.c.h.b16 %v454
    %v1265 = vpack.c.b16 %v761, %v753
    %v1266 = vpack.c.b16 %v762, %v754
    %v1267 = vpack.c.b16 %v763, %v755
    %v1268 = vpack.c.b16 %v764, %v756
    %v1269 = vpack.c.b16 %v765, %v757
    %v1270 = vpack.c.b16 %v766, %v758
    %v1271 = vpack.c.b16 %v767, %v759
    %v1272 = vpack.c.b16 %v768, %v760
    %v1273 = vpack.c.b16 %v777, %v769
    %v1274 = vpack.c.b16 %v778, %v770
    %v1275 = vpack.c.b16 %v779, %v771
    %v1276 = vpack.c.b16 %v780, %v772
    %v1277 = vpack.c.b16 %v781, %v773
    %v1278 = vpack.c.b16 %v782, %v774
    %v1279 = vpack.c.b16 %v783, %v775
    %v1280 = vpack.c.b16 %v784, %v776
    %v1281 = vpack.c.b16 %v793, %v785
    %v1282 = vpack.c.b16 %v794, %v786
    %v1283 = vpack.c.b16 %v795, %v787
    %v1284 = vpack.c.b16 %v796, %v788
    %v1285 = vpack.c.b16 %v797, %v789
    %v1286 = vpack.c.b16 %v798, %v790
    %v1287 = vpack.c.b16 %v799, %v791
    %v1288 = vpack.c.b16 %v800, %v792
    %v1289 = vpack.c.b16 %v809, %v801
    %v1290 = vpack.c.b16 %v810, %v802
    %v1291 = vpack.c.b16 %v811, %v803
    %v1292 = vpack.c.b16 %v812, %v804
    %v1293 = vpack.c.b16 %v813, %v805
    %v1294 = vpack.c.b16 %v814, %v806
    %v1295 = vpack.c.b16 %v815, %v807
    %v1296 = vpack.c.b16 %v816, %v808
    %v1297 = vpack.c.b16 %v825, %v817
    %v1298 = vpack.c.b16 %v826, %v818
    %v1299 = vpack.c.b16 %v827, %v819
    %v1300 = vpack.c.b16 %v828, %v820
    %v1301 = vpack.c.b16 %v829, %v821
    %v1302 = vpack.c.b16 %v830, %v822
    %v1303 = vpack.c.b16 %v831, %v823
    %v1304 = vpack.c.b16 %v832, %v824
    %v1305 = vpack.c.b16 %v841, %v833
    %v1306 = vpack.c.b16 %v842, %v834
    %v1307 = vpack.c.b16 %v843, %v835
    %v1308 = vpack.c.b16 %v844, %v836
    %v1309 = vpack.c.b16 %v845, %v837
    %v1310 = vpack.c.b16 %v846, %v838
    %v1311 = vpack.c.b16 %v847, %v839
    %v1312 = vpack.c.b16 %v848, %v840
    %v1313 = vpack.c.b16 %v857, %v849
    %v1314 = vpack.c.b16 %v858, %v850
    %v1315 = vpack.c.b16 %v859, %v851
    %v1316 = vpack.c.b16 %v860, %v852
    %v1317 = vpack.c.b16 %v861, %v853
    %v1318 = vpack.c.b16 %v862, %v854
    %v1319 = vpack.c.b16 %v863, %v855
    %v1320 = vpack.c.b16 %v864, %v856
    %v1321 = vpack.c.b16 %v873, %v865
    %v1322 = vpack.c.b16 %v874, %v866
    %v1323 = vpack.c.b16 %v875, %v867
    %v1324 = vpack.c.b16 %v876, %v868
    %v1325 = vpack.c.b16 %v877, %v869
    %v1326 = vpack.c.b16 %v878, %v870
    %v1327 = vpack.c.b16 %v879, %v871
    %v1328 = vpack.c.b16 %v880, %v872
    %v1329 = vpack.c.b16 %v889, %v881
    %v1330 = vpack.c.b16 %v890, %v882
    %v1331 = vpack.c.b16 %v891, %v883
    %v1332 = vpack.c.b16 %v892, %v884
    %v1333 = vpack.c.b16 %v893, %v885
    %v1334 = vpack.c.b16 %v894, %v886
    %v1335 = vpack.c.b16 %v895, %v887
    %v1336 = vpack.c.b16 %v896, %v888
    %v1337 = vpack.c.b16 %v905, %v897
    %v1338 = vpack.c.b16 %v906, %v898
    %v1339 = vpack.c.b16 %v907, %v899
    %v1340 = vpack.c.b16 %v908, %v900
    %v1341 = vpack.c.b16 %v909, %v901
    %v1342 = vpack.c.b16 %v910, %v902
    %v1343 = vpack.c.b16 %v911, %v903
    %v1344 = vpack.c.b16 %v912, %v904
    %v1345 = vpack.c.b16 %v921, %v913
    %v1346 = vpack.c.b16 %v922, %v914
    %v1347 = vpack.c.b16 %v923, %v915
    %v1348 = vpack.c.b16 %v924, %v916
    %v1349 = vpack.c.b16 %v925, %v917
    %v1350 = vpack.c.b16 %v926, %v918
    %v1351 = vpack.c.b16 %v927, %v919
    %v1352 = vpack.c.b16 %v928, %v920
    %v1353 = vpack.c.b16 %v937, %v929
    %v1354 = vpack.c.b16 %v938, %v930
    %v1355 = vpack.c.b16 %v939, %v931
    %v1356 = vpack.c.b16 %v940, %v932
    %v1357 = vpack.c.b16 %v941, %v933
    %v1358 = vpack.c.b16 %v942, %v934
    %v1359 = vpack.c.b16 %v943, %v935
    %v1360 = vpack.c.b16 %v944, %v936
    %v1361 = vpack.c.b16 %v953, %v945
    %v1362 = vpack.c.b16 %v954, %v946
    %v1363 = vpack.c.b16 %v955, %v947
    %v1364 = vpack.c.b16 %v956, %v948
    %v1365 = vpack.c.b16 %v957, %v949
    %v1366 = vpack.c.b16 %v958, %v950
    %v1367 = vpack.c.b16 %v959, %v951
    %v1368 = vpack.c.b16 %v960, %v952
    %v1369 = vpack.c.b16 %v969, %v961
    %v1370 = vpack.c.b16 %v970, %v962
    %v1371 = vpack.c.b16 %v971, %v963
    %v1372 = vpack.c.b16 %v972, %v964
    %v1373 = vpack.c.b16 %v973, %v965
    %v1374 = vpack.c.b16 %v974, %v966
    %v1375 = vpack.c.b16 %v975, %v967
    %v1376 = vpack.c.b16 %v976, %v968
    %v1377 = vpack.c.b16 %v985, %v977
    %v1378 = vpack.c.b16 %v986, %v978
    %v1379 = vpack.c.b16 %v987, %v979
    %v1380 = vpack.c.b16 %v988, %v980
    %v1381 = vpack.c.b16 %v989, %v981
    %v1382 = vpack.c.b16 %v990, %v982
    %v1383 = vpack.c.b16 %v991, %v983
    %v1384 = vpack.c.b16 %v992, %v984
    %v1385 = vpack.c.b16 %v1001, %v993
    %v1386 = vpack.c.b16 %v1002, %v994
    %v1387 = vpack.c.b16 %v1003, %v995
    %v1388 = vpack.c.b16 %v1004, %v996
    %v1389 = vpack.c.b16 %v1005, %v997
    %v1390 = vpack.c.b16 %v1006, %v998
    %v1391 = vpack.c.b16 %v1007, %v999
    %v1392 = vpack.c.b16 %v1008, %v1000
    %v1393 = vpack.c.b16 %v1017, %v1009
    %v1394 = vpack.c.b16 %v1018, %v1010
    %v1395 = vpack.c.b16 %v1019, %v1011
    %v1396 = vpack.c.b16 %v1020, %v1012
    %v1397 = vpack.c.b16 %v1021, %v1013
    %v1398 = vpack.c.b16 %v1022, %v1014
    %v1399 = vpack.c.b16 %v1023, %v1015
    %v1400 = vpack.c.b16 %v1024, %v1016
    %v1401 = vpack.c.b16 %v1033, %v1025
    %v1402 = vpack.c.b16 %v1034, %v1026
    %v1403 = vpack.c.b16 %v1035, %v1027
    %v1404 = vpack.c.b16 %v1036, %v1028
    %v1405 = vpack.c.b16 %v1037, %v1029
    %v1406 = vpack.c.b16 %v1038, %v1030
    %v1407 = vpack.c.b16 %v1039, %v1031
    %v1408 = vpack.c.b16 %v1040, %v1032
    %v1409 = vpack.c.b16 %v1049, %v1041
    %v1410 = vpack.c.b16 %v1050, %v1042
    %v1411 = vpack.c.b16 %v1051, %v1043
    %v1412 = vpack.c.b16 %v1052, %v1044
    %v1413 = vpack.c.b16 %v1053, %v1045
    %v1414 = vpack.c.b16 %v1054, %v1046
    %v1415 = vpack.c.b16 %v1055, %v1047
    %v1416 = vpack.c.b16 %v1056, %v1048
    %v1417 = vpack.c.b16 %v1065, %v1057
    %v1418 = vpack.c.b16 %v1066, %v1058
    %v1419 = vpack.c.b16 %v1067, %v1059
    %v1420 = vpack.c.b16 %v1068, %v1060
    %v1421 = vpack.c.b16 %v1069, %v1061
    %v1422 = vpack.c.b16 %v1070, %v1062
    %v1423 = vpack.c.b16 %v1071, %v1063
    %v1424 = vpack.c.b16 %v1072, %v1064
    %v1425 = vpack.c.b16 %v1081, %v1073
    %v1426 = vpack.c.b16 %v1082, %v1074
    %v1427 = vpack.c.b16 %v1083, %v1075
    %v1428 = vpack.c.b16 %v1084, %v1076
    %v1429 = vpack.c.b16 %v1085, %v1077
    %v1430 = vpack.c.b16 %v1086, %v1078
    %v1431 = vpack.c.b16 %v1087, %v1079
    %v1432 = vpack.c.b16 %v1088, %v1080
    %v1433 = vpack.c.b16 %v1097, %v1089
    %v1434 = vpack.c.b16 %v1098, %v1090
    %v1435 = vpack.c.b16 %v1099, %v1091
    %v1436 = vpack.c.b16 %v1100, %v1092
    %v1437 = vpack.c.b16 %v1101, %v1093
    %v1438 = vpack.c.b16 %v1102, %v1094
    %v1439 = vpack.c.b16 %v1103, %v1095
    %v1440 = vpack.c.b16 %v1104, %v1096
    %v1441 = vpack.c.b16 %v1113, %v1105
    %v1442 = vpack.c.b16 %v1114, %v1106
    %v1443 = vpack.c.b16 %v1115, %v1107
    %v1444 = vpack.c.b16 %v1116, %v1108
    %v1445 = vpack.c.b16 %v1117, %v1109
    %v1446 = vpack.c.b16 %v1118, %v1110
    %v1447 = vpack.c.b16 %v1119, %v1111
    %v1448 = vpack.c.b16 %v1120, %v1112
    %v1449 = vpack.c.b16 %v1129, %v1121
    %v1450 = vpack.c.b16 %v1130, %v1122
    %v1451 = vpack.c.b16 %v1131, %v1123
    %v1452 = vpack.c.b16 %v1132, %v1124
    %v1453 = vpack.c.b16 %v1133, %v1125
    %v1454 = vpack.c.b16 %v1134, %v1126
    %v1455 = vpack.c.b16 %v1135, %v1127
    %v1456 = vpack.c.b16 %v1136, %v1128
    %v1457 = vpack.c.b16 %v1145, %v1137
    %v1458 = vpack.c.b16 %v1146, %v1138
    %v1459 = vpack.c.b16 %v1147, %v1139
    %v1460 = vpack.c.b16 %v1148, %v1140
    %v1461 = vpack.c.b16 %v1149, %v1141
    %v1462 = vpack.c.b16 %v1150, %v1142
    %v1463 = vpack.c.b16 %v1151, %v1143
    %v1464 = vpack.c.b16 %v1152, %v1144
    %v1465 = vpack.c.b16 %v1161, %v1153
    %v1466 = vpack.c.b16 %v1162, %v1154
    %v1467 = vpack.c.b16 %v1163, %v1155
    %v1468 = vpack.c.b16 %v1164, %v1156
    %v1469 = vpack.c.b16 %v1165, %v1157
    %v1470 = vpack.c.b16 %v1166, %v1158
    %v1471 = vpack.c.b16 %v1167, %v1159
    %v1472 = vpack.c.b16 %v1168, %v1160
    %v1473 = vpack.c.b16 %v1177, %v1169
    %v1474 = vpack.c.b16 %v1178, %v1170
    %v1475 = vpack.c.b16 %v1179, %v1171
    %v1476 = vpack.c.b16 %v1180, %v1172
    %v1477 = vpack.c.b16 %v1181, %v1173
    %v1478 = vpack.c.b16 %v1182, %v1174
    %v1479 = vpack.c.b16 %v1183, %v1175
    %v1480 = vpack.c.b16 %v1184, %v1176
    %v1481 = vpack.c.b16 %v1193, %v1185
    %v1482 = vpack.c.b16 %v1194, %v1186
    %v1483 = vpack.c.b16 %v1195, %v1187
    %v1484 = vpack.c.b16 %v1196, %v1188
    %v1485 = vpack.c.b16 %v1197, %v1189
    %v1486 = vpack.c.b16 %v1198, %v1190
    %v1487 = vpack.c.b16 %v1199, %v1191
    %v1488 = vpack.c.b16 %v1200, %v1192
    %v1489 = vpack.c.b16 %v1209, %v1201
    %v1490 = vpack.c.b16 %v1210, %v1202
    %v1491 = vpack.c.b16 %v1211, %v1203
    %v1492 = vpack.c.b16 %v1212, %v1204
    %v1493 = vpack.c.b16 %v1213, %v1205
    %v1494 = vpack.c.b16 %v1214, %v1206
    %v1495 = vpack.c.b16 %v1215, %v1207
    %v1496 = vpack.c.b16 %v1216, %v1208
    %v1497 = vpack.c.b16 %v1225, %v1217
    %v1498 = vpack.c.b16 %v1226, %v1218
    %v1499 = vpack.c.b16 %v1227, %v1219
    %v1500 = vpack.c.b16 %v1228, %v1220
    %v1501 = vpack.c.b16 %v1229, %v1221
    %v1502 = vpack.c.b16 %v1230, %v1222
    %v1503 = vpack.c.b16 %v1231, %v1223
    %v1504 = vpack.c.b16 %v1232, %v1224
    %v1505 = vpack.c.b16 %v1241, %v1233
    %v1506 = vpack.c.b16 %v1242, %v1234
    %v1507 = vpack.c.b16 %v1243, %v1235
    %v1508 = vpack.c.b16 %v1244, %v1236
    %v1509 = vpack.c.b16 %v1245, %v1237
    %v1510 = vpack.c.b16 %v1246, %v1238
    %v1511 = vpack.c.b16 %v1247, %v1239
    %v1512 = vpack.c.b16 %v1248, %v1240
    %v1513 = vpack.c.b16 %v1257, %v1249
    %v1514 = vpack.c.b16 %v1258, %v1250
    %v1515 = vpack.c.b16 %v1259, %v1251
    %v1516 = vpack.c.b16 %v1260, %v1252
    %v1517 = vpack.c.b16 %v1261, %v1253
    %v1518 = vpack.c.b16 %v1262, %v1254
    %v1519 = vpack.c.b16 %v1263, %v1255
    %v1520 = vpack.c.b16 %v1264, %v1256
    %1777 = vmatprep.subr.bf16.mxu0 %v1266
    %1778 = vmatpush1.bf16.msra.mxu0 %v1265
    %1779 = vmatprep.subr.bf16.mxu0 %v1274
    %1780 = vmatpush1.bf16.msra.mxu0 %v1273
    %1781 = vmatprep.subr.bf16.mxu0 %v1282
    %1782 = vmatpush1.bf16.msra.mxu0 %v1281
    %1783 = vmatprep.subr.bf16.mxu0 %v1290
    %1784 = vmatpush1.bf16.msra.mxu0 %v1289
    %1785 = vmatprep.subr.bf16.mxu0 %v1298
    %1786 = vmatpush1.bf16.msra.mxu0 %v1297
    %1787 = vmatprep.subr.bf16.mxu0 %v1306
    %1788 = vmatpush1.bf16.msra.mxu0 %v1305
    %1789 = vmatprep.subr.bf16.mxu0 %v1314
    %1790 = vmatpush1.bf16.msra.mxu0 %v1313
    %1791 = vmatprep.subr.bf16.mxu0 %v1322
    %1792 = vmatpush1.bf16.msra.mxu0 %v1321
    %1793 = vmatprep.subr.bf16.mxu0 %v1330
    %1794 = vmatpush1.bf16.msra.mxu0 %v1329
    %1795 = vmatprep.subr.bf16.mxu0 %v1338
    %1796 = vmatpush1.bf16.msra.mxu0 %v1337
    %1797 = vmatprep.subr.bf16.mxu0 %v1346
    %1798 = vmatpush1.bf16.msra.mxu0 %v1345
    %1799 = vmatprep.subr.bf16.mxu0 %v1354
    %1800 = vmatpush1.bf16.msra.mxu0 %v1353
    %1801 = vmatprep.subr.bf16.mxu0 %v1362
    %1802 = vmatpush1.bf16.msra.mxu0 %v1361
    %1803 = vmatprep.subr.bf16.mxu0 %v1370
    %1804 = vmatpush1.bf16.msra.mxu0 %v1369
    %1805 = vmatprep.subr.bf16.mxu0 %v1378
    %1806 = vmatpush1.bf16.msra.mxu0 %v1377
    %1807 = vmatprep.subr.bf16.mxu0 %v1386
    %1808 = vmatpush1.bf16.msra.mxu0 %v1385
    %1809 = vmatprep.mubr.bf16.mxu0 %v168
    %1810 = vmatmul.mubr.bf16.gmra.mrb[0].mxu0 %v167
    %v1811 = vpop.f32.mrb[0].mxu0
    %v1812 = vadd.f32 %v460, %v1811
    %v1813 = vpop.f32.mrb[0].mxu0
    %v1814 = vadd.f32 %v464, %v1813
    %v1815 = vpop.f32.mrb[0].mxu0
    %v1816 = vadd.f32 %v460, %v1815
    %v1817 = vpop.f32.mrb[0].mxu0
    %v1818 = vadd.f32 %v464, %v1817
    %1819 = vmatprep.mubr.bf16.mxu0 %v172
    %1820 = vmatmul.mubr.bf16.gmra.mrb[0].mxu0 %v171
    %v1821 = vpop.f32.mrb[0].mxu0
    %v1822 = vadd.f32 %v460, %v1821
    %v1823 = vpop.f32.mrb[0].mxu0
    %v1824 = vadd.f32 %v464, %v1823
    %v1825 = vpop.f32.mrb[0].mxu0
    %v1826 = vadd.f32 %v460, %v1825
    %v1827 = vpop.f32.mrb[0].mxu0
    %v1828 = vadd.f32 %v464, %v1827
    %1829 = vmatprep.mubr.bf16.mxu0 %v176
    %1830 = vmatmul.mubr.bf16.gmra.mrb[0].mxu0 %v175
    %v1831 = vpop.f32.mrb[0].mxu0
    %v1832 = vadd.f32 %v460, %v1831
    %v1833 = vpop.f32.mrb[0].mxu0
    %v1834 = vadd.f32 %v464, %v1833
    %v1835 = vpop.f32.mrb[0].mxu0
    %v1836 = vadd.f32 %v460, %v1835
    %v1837 = vpop.f32.mrb[0].mxu0
    %v1838 = vadd.f32 %v464, %v1837
    %1839 = vmatprep.mubr.bf16.mxu0 %v180
    %1840 = vmatmul.mubr.bf16.gmra.mrb[0].mxu0 %v179
    %v1841 = vpop.f32.mrb[0].mxu0
    %v1842 = vadd.f32 %v460, %v1841
    %v1843 = vpop.f32.mrb[0].mxu0
    %v1844 = vadd.f32 %v464, %v1843
    %v1845 = vpop.f32.mrb[0].mxu0
    %v1846 = vadd.f32 %v460, %v1845
    %v1847 = vpop.f32.mrb[0].mxu0
    %v1848 = vadd.f32 %v464, %v1847
    %1849 = vmatprep.mubr.bf16.mxu0 %v184
    %1850 = vmatmul.mubr.bf16.gmra.mrb[0].mxu0 %v183
    %v1851 = vpop.f32.mrb[0].mxu0
    %v1852 = vadd.f32 %v460, %v1851
    %v1853 = vpop.f32.mrb[0].mxu0
    %v1854 = vadd.f32 %v464, %v1853
    %v1855 = vpop.f32.mrb[0].mxu0
    %v1856 = vadd.f32 %v460, %v1855
    %v1857 = vpop.f32.mrb[0].mxu0
    %v1858 = vadd.f32 %v464, %v1857
    %1859 = vmatprep.mubr.bf16.mxu0 %v188
    %1860 = vmatmul.mubr.bf16.gmra.mrb[0].mxu0 %v187
    %v1861 = vpop.f32.mrb[0].mxu0
    %v1862 = vadd.f32 %v460, %v1861
    %v1863 = vpop.f32.mrb[0].mxu0
    %v1864 = vadd.f32 %v464, %v1863
    %v1865 = vpop.f32.mrb[0].mxu0
    %v1866 = vadd.f32 %v460, %v1865
    %v1867 = vpop.f32.mrb[0].mxu0
    %v1868 = vadd.f32 %v464, %v1867
    %1869 = vmatprep.mubr.bf16.mxu0 %v192
    %1870 = vmatmul.mubr.bf16.gmra.mrb[0].mxu0 %v191
    %v1871 = vpop.f32.mrb[0].mxu0
    %v1872 = vadd.f32 %v460, %v1871
    %v1873 = vpop.f32.mrb[0].mxu0
    %v1874 = vadd.f32 %v464, %v1873
    %v1875 = vpop.f32.mrb[0].mxu0
    %v1876 = vadd.f32 %v460, %v1875
    %v1877 = vpop.f32.mrb[0].mxu0
    %v1878 = vadd.f32 %v464, %v1877
    %1879 = vmatprep.mubr.bf16.mxu0 %v196
    %1880 = vmatmul.mubr.bf16.gmra.mrb[0].mxu0 %v195
    %v1881 = vpop.f32.mrb[0].mxu0
    %v1882 = vadd.f32 %v460, %v1881
    %v1883 = vpop.f32.mrb[0].mxu0
    %v1884 = vadd.f32 %v464, %v1883
    %v1885 = vpop.f32.mrb[0].mxu0
    %v1886 = vadd.f32 %v460, %v1885
    %v1887 = vpop.f32.mrb[0].mxu0
    %v1888 = vadd.f32 %v464, %v1887
    %1889 = vdwg.mxu0
    %1890 = vmatprep.subr.bf16.mxu0 %v1394
    %1891 = vmatpush1.bf16.msra.mxu0 %v1393
    %1892 = vmatprep.subr.bf16.mxu0 %v1402
    %1893 = vmatpush1.bf16.msra.mxu0 %v1401
    %1894 = vmatprep.subr.bf16.mxu0 %v1410
    %1895 = vmatpush1.bf16.msra.mxu0 %v1409
    %1896 = vmatprep.subr.bf16.mxu0 %v1418
    %1897 = vmatpush1.bf16.msra.mxu0 %v1417
    %1898 = vmatprep.subr.bf16.mxu0 %v1426
    %1899 = vmatpush1.bf16.msra.mxu0 %v1425
    %1900 = vmatprep.subr.bf16.mxu0 %v1434
    %1901 = vmatpush1.bf16.msra.mxu0 %v1433
    %1902 = vmatprep.subr.bf16.mxu0 %v1442
    %1903 = vmatpush1.bf16.msra.mxu0 %v1441
    %1904 = vmatprep.subr.bf16.mxu0 %v1450
    %1905 = vmatpush1.bf16.msra.mxu0 %v1449
    %1906 = vmatprep.subr.bf16.mxu0 %v1458
    %1907 = vmatpush1.bf16.msra.mxu0 %v1457
    %1908 = vmatprep.subr.bf16.mxu0 %v1466
    %1909 = vmatpush1.bf16.msra.mxu0 %v1465
    %1910 = vmatprep.subr.bf16.mxu0 %v1474
    %1911 = vmatpush1.bf16.msra.mxu0 %v1473
    %1912 = vmatprep.subr.bf16.mxu0 %v1482
    %1913 = vmatpush1.bf16.msra.mxu0 %v1481
    %1914 = vmatprep.subr.bf16.mxu0 %v1490
    %1915 = vmatpush1.bf16.msra.mxu0 %v1489
    %1916 = vmatprep.subr.bf16.mxu0 %v1498
    %1917 = vmatpush1.bf16.msra.mxu0 %v1497
    %1918 = vmatprep.subr.bf16.mxu0 %v1506
    %1919 = vmatpush1.bf16.msra.mxu0 %v1505
    %1920 = vmatprep.subr.bf16.mxu0 %v1514
    %1921 = vmatpush1.bf16.msra.mxu0 %v1513
    %1922 = vmatprep.mubr.bf16.mxu0 %v170
    %1923 = vmatmul.mubr.bf16.gmra.mrb[0].mxu0 %v169
    %v1924 = vpop.f32.mrb[0].mxu0
    %v1925 = vadd.f32 %v1812, %v1924
    %v1926 = vpop.f32.mrb[0].mxu0
    %v1927 = vadd.f32 %v1814, %v1926
    %v1928 = vpop.f32.mrb[0].mxu0
    %v1929 = vadd.f32 %v1816, %v1928
    %v1930 = vpop.f32.mrb[0].mxu0
    %v1931 = vadd.f32 %v1818, %v1930
    %1932 = vmatprep.mubr.bf16.mxu0 %v174
    %1933 = vmatmul.mubr.bf16.gmra.mrb[0].mxu0 %v173
    %v1934 = vpop.f32.mrb[0].mxu0
    %v1935 = vadd.f32 %v1822, %v1934
    %v1936 = vpop.f32.mrb[0].mxu0
    %v1937 = vadd.f32 %v1824, %v1936
    %v1938 = vpop.f32.mrb[0].mxu0
    %v1939 = vadd.f32 %v1826, %v1938
    %v1940 = vpop.f32.mrb[0].mxu0
    %v1941 = vadd.f32 %v1828, %v1940
    %1942 = vmatprep.mubr.bf16.mxu0 %v178
    %1943 = vmatmul.mubr.bf16.gmra.mrb[0].mxu0 %v177
    %v1944 = vpop.f32.mrb[0].mxu0
    %v1945 = vadd.f32 %v1832, %v1944
    %v1946 = vpop.f32.mrb[0].mxu0
    %v1947 = vadd.f32 %v1834, %v1946
    %v1948 = vpop.f32.mrb[0].mxu0
    %v1949 = vadd.f32 %v1836, %v1948
    %v1950 = vpop.f32.mrb[0].mxu0
    %v1951 = vadd.f32 %v1838, %v1950
    %1952 = vmatprep.mubr.bf16.mxu0 %v182
    %1953 = vmatmul.mubr.bf16.gmra.mrb[0].mxu0 %v181
    %v1954 = vpop.f32.mrb[0].mxu0
    %v1955 = vadd.f32 %v1842, %v1954
    %v1956 = vpop.f32.mrb[0].mxu0
    %v1957 = vadd.f32 %v1844, %v1956
    %v1958 = vpop.f32.mrb[0].mxu0
    %v1959 = vadd.f32 %v1846, %v1958
    %v1960 = vpop.f32.mrb[0].mxu0
    %v1961 = vadd.f32 %v1848, %v1960
    %1962 = vmatprep.mubr.bf16.mxu0 %v186
    %1963 = vmatmul.mubr.bf16.gmra.mrb[0].mxu0 %v185
    %v1964 = vpop.f32.mrb[0].mxu0
    %v1965 = vadd.f32 %v1852, %v1964
    %v1966 = vpop.f32.mrb[0].mxu0
    %v1967 = vadd.f32 %v1854, %v1966
    %v1968 = vpop.f32.mrb[0].mxu0
    %v1969 = vadd.f32 %v1856, %v1968
    %v1970 = vpop.f32.mrb[0].mxu0
    %v1971 = vadd.f32 %v1858, %v1970
    %1972 = vmatprep.mubr.bf16.mxu0 %v190
    %1973 = vmatmul.mubr.bf16.gmra.mrb[0].mxu0 %v189
    %v1974 = vpop.f32.mrb[0].mxu0
    %v1975 = vadd.f32 %v1862, %v1974
    %v1976 = vpop.f32.mrb[0].mxu0
    %v1977 = vadd.f32 %v1864, %v1976
    %v1978 = vpop.f32.mrb[0].mxu0
    %v1979 = vadd.f32 %v1866, %v1978
    %v1980 = vpop.f32.mrb[0].mxu0
    %v1981 = vadd.f32 %v1868, %v1980
    %1982 = vmatprep.mubr.bf16.mxu0 %v194
    %1983 = vmatmul.mubr.bf16.gmra.mrb[0].mxu0 %v193
    %v1984 = vpop.f32.mrb[0].mxu0
    %v1985 = vadd.f32 %v1872, %v1984
    %v1986 = vpop.f32.mrb[0].mxu0
    %v1987 = vadd.f32 %v1874, %v1986
    %v1988 = vpop.f32.mrb[0].mxu0
    %v1989 = vadd.f32 %v1876, %v1988
    %v1990 = vpop.f32.mrb[0].mxu0
    %v1991 = vadd.f32 %v1878, %v1990
    %1992 = vmatprep.mubr.bf16.mxu0 %v198
    %1993 = vmatmul.mubr.bf16.gmra.mrb[0].mxu0 %v197
    %v1994 = vpop.f32.mrb[0].mxu0
    %v1995 = vadd.f32 %v1882, %v1994
    %v1996 = vpop.f32.mrb[0].mxu0
    %v1997 = vadd.f32 %v1884, %v1996
    %v1998 = vpop.f32.mrb[0].mxu0
    %v1999 = vadd.f32 %v1886, %v1998
    %v2000 = vpop.f32.mrb[0].mxu0
    %v2001 = vadd.f32 %v1888, %v2000
    %2002 = vdwg.mxu0
    %2003 = vmatprep.subr.bf16.mxu0 %v1268
    %2004 = vmatpush1.bf16.msra.mxu0 %v1267
    %2005 = vmatprep.subr.bf16.mxu0 %v1276
    %2006 = vmatpush1.bf16.msra.mxu0 %v1275
    %2007 = vmatprep.subr.bf16.mxu0 %v1284
    %2008 = vmatpush1.bf16.msra.mxu0 %v1283
    %2009 = vmatprep.subr.bf16.mxu0 %v1292
    %2010 = vmatpush1.bf16.msra.mxu0 %v1291
    %2011 = vmatprep.subr.bf16.mxu0 %v1300
    %2012 = vmatpush1.bf16.msra.mxu0 %v1299
    %2013 = vmatprep.subr.bf16.mxu0 %v1308
    %2014 = vmatpush1.bf16.msra.mxu0 %v1307
    %2015 = vmatprep.subr.bf16.mxu0 %v1316
    %2016 = vmatpush1.bf16.msra.mxu0 %v1315
    %2017 = vmatprep.subr.bf16.mxu0 %v1324
    %2018 = vmatpush1.bf16.msra.mxu0 %v1323
    %2019 = vmatprep.subr.bf16.mxu0 %v1332
    %2020 = vmatpush1.bf16.msra.mxu0 %v1331
    %2021 = vmatprep.subr.bf16.mxu0 %v1340
    %2022 = vmatpush1.bf16.msra.mxu0 %v1339
    %2023 = vmatprep.subr.bf16.mxu0 %v1348
    %2024 = vmatpush1.bf16.msra.mxu0 %v1347
    %2025 = vmatprep.subr.bf16.mxu0 %v1356
    %2026 = vmatpush1.bf16.msra.mxu0 %v1355
    %2027 = vmatprep.subr.bf16.mxu0 %v1364
    %2028 = vmatpush1.bf16.msra.mxu0 %v1363
    %2029 = vmatprep.subr.bf16.mxu0 %v1372
    %2030 = vmatpush1.bf16.msra.mxu0 %v1371
    %2031 = vmatprep.subr.bf16.mxu0 %v1380
    %2032 = vmatpush1.bf16.msra.mxu0 %v1379
    %2033 = vmatprep.subr.bf16.mxu0 %v1388
    %2034 = vmatpush1.bf16.msra.mxu0 %v1387
    %2035 = vmatprep.mubr.bf16.mxu0 %v168
    %2036 = vmatmul.mubr.bf16.gmra.mrb[0].mxu0 %v167
    %v2037 = vpop.f32.mrb[0].mxu0
    %v2038 = vadd.f32 %v468, %v2037
    %v2039 = vpop.f32.mrb[0].mxu0
    %v2040 = vadd.f32 %v472, %v2039
    %v2041 = vpop.f32.mrb[0].mxu0
    %v2042 = vadd.f32 %v468, %v2041
    %v2043 = vpop.f32.mrb[0].mxu0
    %v2044 = vadd.f32 %v472, %v2043
    %2045 = vmatprep.mubr.bf16.mxu0 %v172
    %2046 = vmatmul.mubr.bf16.gmra.mrb[0].mxu0 %v171
    %v2047 = vpop.f32.mrb[0].mxu0
    %v2048 = vadd.f32 %v468, %v2047
    %v2049 = vpop.f32.mrb[0].mxu0
    %v2050 = vadd.f32 %v472, %v2049
    %v2051 = vpop.f32.mrb[0].mxu0
    %v2052 = vadd.f32 %v468, %v2051
    %v2053 = vpop.f32.mrb[0].mxu0
    %v2054 = vadd.f32 %v472, %v2053
    %2055 = vmatprep.mubr.bf16.mxu0 %v176
    %2056 = vmatmul.mubr.bf16.gmra.mrb[0].mxu0 %v175
    %v2057 = vpop.f32.mrb[0].mxu0
    %v2058 = vadd.f32 %v468, %v2057
    %v2059 = vpop.f32.mrb[0].mxu0
    %v2060 = vadd.f32 %v472, %v2059
    %v2061 = vpop.f32.mrb[0].mxu0
    %v2062 = vadd.f32 %v468, %v2061
    %v2063 = vpop.f32.mrb[0].mxu0
    %v2064 = vadd.f32 %v472, %v2063
    %2065 = vmatprep.mubr.bf16.mxu0 %v180
    %2066 = vmatmul.mubr.bf16.gmra.mrb[0].mxu0 %v179
    %v2067 = vpop.f32.mrb[0].mxu0
    %v2068 = vadd.f32 %v468, %v2067
    %v2069 = vpop.f32.mrb[0].mxu0
    %v2070 = vadd.f32 %v472, %v2069
    %v2071 = vpop.f32.mrb[0].mxu0
    %v2072 = vadd.f32 %v468, %v2071
    %v2073 = vpop.f32.mrb[0].mxu0
    %v2074 = vadd.f32 %v472, %v2073
    %2075 = vmatprep.mubr.bf16.mxu0 %v184
    %2076 = vmatmul.mubr.bf16.gmra.mrb[0].mxu0 %v183
    %v2077 = vpop.f32.mrb[0].mxu0
    %v2078 = vadd.f32 %v468, %v2077
    %v2079 = vpop.f32.mrb[0].mxu0
    %v2080 = vadd.f32 %v472, %v2079
    %v2081 = vpop.f32.mrb[0].mxu0
    %v2082 = vadd.f32 %v468, %v2081
    %v2083 = vpop.f32.mrb[0].mxu0
    %v2084 = vadd.f32 %v472, %v2083
    %2085 = vmatprep.mubr.bf16.mxu0 %v188
    %2086 = vmatmul.mubr.bf16.gmra.mrb[0].mxu0 %v187
    %v2087 = vpop.f32.mrb[0].mxu0
    %v2088 = vadd.f32 %v468, %v2087
    %v2089 = vpop.f32.mrb[0].mxu0
    %v2090 = vadd.f32 %v472, %v2089
    %v2091 = vpop.f32.mrb[0].mxu0
    %v2092 = vadd.f32 %v468, %v2091
    %v2093 = vpop.f32.mrb[0].mxu0
    %v2094 = vadd.f32 %v472, %v2093
    %2095 = vmatprep.mubr.bf16.mxu0 %v192
    %2096 = vmatmul.mubr.bf16.gmra.mrb[0].mxu0 %v191
    %v2097 = vpop.f32.mrb[0].mxu0
    %v2098 = vadd.f32 %v468, %v2097
    %v2099 = vpop.f32.mrb[0].mxu0
    %v2100 = vadd.f32 %v472, %v2099
    %v2101 = vpop.f32.mrb[0].mxu0
    %v2102 = vadd.f32 %v468, %v2101
    %v2103 = vpop.f32.mrb[0].mxu0
    %v2104 = vadd.f32 %v472, %v2103
    %2105 = vmatprep.mubr.bf16.mxu0 %v196
    %2106 = vmatmul.mubr.bf16.gmra.mrb[0].mxu0 %v195
    %v2107 = vpop.f32.mrb[0].mxu0
    %v2108 = vadd.f32 %v468, %v2107
    %v2109 = vpop.f32.mrb[0].mxu0
    %v2110 = vadd.f32 %v472, %v2109
    %v2111 = vpop.f32.mrb[0].mxu0
    %v2112 = vadd.f32 %v468, %v2111
    %v2113 = vpop.f32.mrb[0].mxu0
    %v2114 = vadd.f32 %v472, %v2113
    %2115 = vdwg.mxu0
    %2116 = vmatprep.subr.bf16.mxu0 %v1396
    %2117 = vmatpush1.bf16.msra.mxu0 %v1395
    %2118 = vmatprep.subr.bf16.mxu0 %v1404
    %2119 = vmatpush1.bf16.msra.mxu0 %v1403
    %2120 = vmatprep.subr.bf16.mxu0 %v1412
    %2121 = vmatpush1.bf16.msra.mxu0 %v1411
    %2122 = vmatprep.subr.bf16.mxu0 %v1420
    %2123 = vmatpush1.bf16.msra.mxu0 %v1419
    %2124 = vmatprep.subr.bf16.mxu0 %v1428
    %2125 = vmatpush1.bf16.msra.mxu0 %v1427
    %2126 = vmatprep.subr.bf16.mxu0 %v1436
    %2127 = vmatpush1.bf16.msra.mxu0 %v1435
    %2128 = vmatprep.subr.bf16.mxu0 %v1444
    %2129 = vmatpush1.bf16.msra.mxu0 %v1443
    %2130 = vmatprep.subr.bf16.mxu0 %v1452
    %2131 = vmatpush1.bf16.msra.mxu0 %v1451
    %2132 = vmatprep.subr.bf16.mxu0 %v1460
    %2133 = vmatpush1.bf16.msra.mxu0 %v1459
    %2134 = vmatprep.subr.bf16.mxu0 %v1468
    %2135 = vmatpush1.bf16.msra.mxu0 %v1467
    %2136 = vmatprep.subr.bf16.mxu0 %v1476
    %2137 = vmatpush1.bf16.msra.mxu0 %v1475
    %2138 = vmatprep.subr.bf16.mxu0 %v1484
    %2139 = vmatpush1.bf16.msra.mxu0 %v1483
    %2140 = vmatprep.subr.bf16.mxu0 %v1492
    %2141 = vmatpush1.bf16.msra.mxu0 %v1491
    %2142 = vmatprep.subr.bf16.mxu0 %v1500
    %2143 = vmatpush1.bf16.msra.mxu0 %v1499
    %2144 = vmatprep.subr.bf16.mxu0 %v1508
    %2145 = vmatpush1.bf16.msra.mxu0 %v1507
    %2146 = vmatprep.subr.bf16.mxu0 %v1516
    %2147 = vmatpush1.bf16.msra.mxu0 %v1515
    %2148 = vmatprep.mubr.bf16.mxu0 %v170
    %2149 = vmatmul.mubr.bf16.gmra.mrb[0].mxu0 %v169
    %v2150 = vpop.f32.mrb[0].mxu0
    %v2151 = vadd.f32 %v2038, %v2150
    %v2152 = vpop.f32.mrb[0].mxu0
    %v2153 = vadd.f32 %v2040, %v2152
    %v2154 = vpop.f32.mrb[0].mxu0
    %v2155 = vadd.f32 %v2042, %v2154
    %v2156 = vpop.f32.mrb[0].mxu0
    %v2157 = vadd.f32 %v2044, %v2156
    %2158 = vmatprep.mubr.bf16.mxu0 %v174
    %2159 = vmatmul.mubr.bf16.gmra.mrb[0].mxu0 %v173
    %v2160 = vpop.f32.mrb[0].mxu0
    %v2161 = vadd.f32 %v2048, %v2160
    %v2162 = vpop.f32.mrb[0].mxu0
    %v2163 = vadd.f32 %v2050, %v2162
    %v2164 = vpop.f32.mrb[0].mxu0
    %v2165 = vadd.f32 %v2052, %v2164
    %v2166 = vpop.f32.mrb[0].mxu0
    %v2167 = vadd.f32 %v2054, %v2166
    %2168 = vmatprep.mubr.bf16.mxu0 %v178
    %2169 = vmatmul.mubr.bf16.gmra.mrb[0].mxu0 %v177
    %v2170 = vpop.f32.mrb[0].mxu0
    %v2171 = vadd.f32 %v2058, %v2170
    %v2172 = vpop.f32.mrb[0].mxu0
    %v2173 = vadd.f32 %v2060, %v2172
    %v2174 = vpop.f32.mrb[0].mxu0
    %v2175 = vadd.f32 %v2062, %v2174
    %v2176 = vpop.f32.mrb[0].mxu0
    %v2177 = vadd.f32 %v2064, %v2176
    %2178 = vmatprep.mubr.bf16.mxu0 %v182
    %2179 = vmatmul.mubr.bf16.gmra.mrb[0].mxu0 %v181
    %v2180 = vpop.f32.mrb[0].mxu0
    %v2181 = vadd.f32 %v2068, %v2180
    %v2182 = vpop.f32.mrb[0].mxu0
    %v2183 = vadd.f32 %v2070, %v2182
    %v2184 = vpop.f32.mrb[0].mxu0
    %v2185 = vadd.f32 %v2072, %v2184
    %v2186 = vpop.f32.mrb[0].mxu0
    %v2187 = vadd.f32 %v2074, %v2186
    %2188 = vmatprep.mubr.bf16.mxu0 %v186
    %2189 = vmatmul.mubr.bf16.gmra.mrb[0].mxu0 %v185
    %v2190 = vpop.f32.mrb[0].mxu0
    %v2191 = vadd.f32 %v2078, %v2190
    %v2192 = vpop.f32.mrb[0].mxu0
    %v2193 = vadd.f32 %v2080, %v2192
    %v2194 = vpop.f32.mrb[0].mxu0
    %v2195 = vadd.f32 %v2082, %v2194
    %v2196 = vpop.f32.mrb[0].mxu0
    %v2197 = vadd.f32 %v2084, %v2196
    %2198 = vmatprep.mubr.bf16.mxu0 %v190
    %2199 = vmatmul.mubr.bf16.gmra.mrb[0].mxu0 %v189
    %v2200 = vpop.f32.mrb[0].mxu0
    %v2201 = vadd.f32 %v2088, %v2200
    %v2202 = vpop.f32.mrb[0].mxu0
    %v2203 = vadd.f32 %v2090, %v2202
    %v2204 = vpop.f32.mrb[0].mxu0
    %v2205 = vadd.f32 %v2092, %v2204
    %v2206 = vpop.f32.mrb[0].mxu0
    %v2207 = vadd.f32 %v2094, %v2206
    %2208 = vmatprep.mubr.bf16.mxu0 %v194
    %2209 = vmatmul.mubr.bf16.gmra.mrb[0].mxu0 %v193
    %v2210 = vpop.f32.mrb[0].mxu0
    %v2211 = vadd.f32 %v2098, %v2210
    %v2212 = vpop.f32.mrb[0].mxu0
    %v2213 = vadd.f32 %v2100, %v2212
    %v2214 = vpop.f32.mrb[0].mxu0
    %v2215 = vadd.f32 %v2102, %v2214
    %v2216 = vpop.f32.mrb[0].mxu0
    %v2217 = vadd.f32 %v2104, %v2216
    %2218 = vmatprep.mubr.bf16.mxu0 %v198
    %2219 = vmatmul.mubr.bf16.gmra.mrb[0].mxu0 %v197
    %v2220 = vpop.f32.mrb[0].mxu0
    %v2221 = vadd.f32 %v2108, %v2220
    %v2222 = vpop.f32.mrb[0].mxu0
    %v2223 = vadd.f32 %v2110, %v2222
    %v2224 = vpop.f32.mrb[0].mxu0
    %v2225 = vadd.f32 %v2112, %v2224
    %v2226 = vpop.f32.mrb[0].mxu0
    %v2227 = vadd.f32 %v2114, %v2226
    %2228 = vdwg.mxu0
    %2229 = vmatprep.subr.bf16.mxu0 %v1270
    %2230 = vmatpush1.bf16.msra.mxu0 %v1269
    %2231 = vmatprep.subr.bf16.mxu0 %v1278
    %2232 = vmatpush1.bf16.msra.mxu0 %v1277
    %2233 = vmatprep.subr.bf16.mxu0 %v1286
    %2234 = vmatpush1.bf16.msra.mxu0 %v1285
    %2235 = vmatprep.subr.bf16.mxu0 %v1294
    %2236 = vmatpush1.bf16.msra.mxu0 %v1293
    %2237 = vmatprep.subr.bf16.mxu0 %v1302
    %2238 = vmatpush1.bf16.msra.mxu0 %v1301
    %2239 = vmatprep.subr.bf16.mxu0 %v1310
    %2240 = vmatpush1.bf16.msra.mxu0 %v1309
    %2241 = vmatprep.subr.bf16.mxu0 %v1318
    %2242 = vmatpush1.bf16.msra.mxu0 %v1317
    %2243 = vmatprep.subr.bf16.mxu0 %v1326
    %2244 = vmatpush1.bf16.msra.mxu0 %v1325
    %2245 = vmatprep.subr.bf16.mxu0 %v1334
    %2246 = vmatpush1.bf16.msra.mxu0 %v1333
    %2247 = vmatprep.subr.bf16.mxu0 %v1342
    %2248 = vmatpush1.bf16.msra.mxu0 %v1341
    %2249 = vmatprep.subr.bf16.mxu0 %v1350
    %2250 = vmatpush1.bf16.msra.mxu0 %v1349
    %2251 = vmatprep.subr.bf16.mxu0 %v1358
    %2252 = vmatpush1.bf16.msra.mxu0 %v1357
    %2253 = vmatprep.subr.bf16.mxu0 %v1366
    %2254 = vmatpush1.bf16.msra.mxu0 %v1365
    %2255 = vmatprep.subr.bf16.mxu0 %v1374
    %2256 = vmatpush1.bf16.msra.mxu0 %v1373
    %2257 = vmatprep.subr.bf16.mxu0 %v1382
    %2258 = vmatpush1.bf16.msra.mxu0 %v1381
    %2259 = vmatprep.subr.bf16.mxu0 %v1390
    %2260 = vmatpush1.bf16.msra.mxu0 %v1389
    %2261 = vmatprep.mubr.bf16.mxu0 %v168
    %2262 = vmatmul.mubr.bf16.gmra.mrb[0].mxu0 %v167
    %v2263 = vpop.f32.mrb[0].mxu0
    %v2264 = vadd.f32 %v476, %v2263
    %v2265 = vpop.f32.mrb[0].mxu0
    %v2266 = vadd.f32 %v480, %v2265
    %v2267 = vpop.f32.mrb[0].mxu0
    %v2268 = vadd.f32 %v476, %v2267
    %v2269 = vpop.f32.mrb[0].mxu0
    %v2270 = vadd.f32 %v480, %v2269
    %2271 = vmatprep.mubr.bf16.mxu0 %v172
    %2272 = vmatmul.mubr.bf16.gmra.mrb[0].mxu0 %v171
    %v2273 = vpop.f32.mrb[0].mxu0
    %v2274 = vadd.f32 %v476, %v2273
    %v2275 = vpop.f32.mrb[0].mxu0
    %v2276 = vadd.f32 %v480, %v2275
    %v2277 = vpop.f32.mrb[0].mxu0
    %v2278 = vadd.f32 %v476, %v2277
    %v2279 = vpop.f32.mrb[0].mxu0
    %v2280 = vadd.f32 %v480, %v2279
    %2281 = vmatprep.mubr.bf16.mxu0 %v176
    %2282 = vmatmul.mubr.bf16.gmra.mrb[0].mxu0 %v175
    %v2283 = vpop.f32.mrb[0].mxu0
    %v2284 = vadd.f32 %v476, %v2283
    %v2285 = vpop.f32.mrb[0].mxu0
    %v2286 = vadd.f32 %v480, %v2285
    %v2287 = vpop.f32.mrb[0].mxu0
    %v2288 = vadd.f32 %v476, %v2287
    %v2289 = vpop.f32.mrb[0].mxu0
    %v2290 = vadd.f32 %v480, %v2289
    %2291 = vmatprep.mubr.bf16.mxu0 %v180
    %2292 = vmatmul.mubr.bf16.gmra.mrb[0].mxu0 %v179
    %v2293 = vpop.f32.mrb[0].mxu0
    %v2294 = vadd.f32 %v476, %v2293
    %v2295 = vpop.f32.mrb[0].mxu0
    %v2296 = vadd.f32 %v480, %v2295
    %v2297 = vpop.f32.mrb[0].mxu0
    %v2298 = vadd.f32 %v476, %v2297
    %v2299 = vpop.f32.mrb[0].mxu0
    %v2300 = vadd.f32 %v480, %v2299
    %2301 = vmatprep.mubr.bf16.mxu0 %v184
    %2302 = vmatmul.mubr.bf16.gmra.mrb[0].mxu0 %v183
    %v2303 = vpop.f32.mrb[0].mxu0
    %v2304 = vadd.f32 %v476, %v2303
    %v2305 = vpop.f32.mrb[0].mxu0
    %v2306 = vadd.f32 %v480, %v2305
    %v2307 = vpop.f32.mrb[0].mxu0
    %v2308 = vadd.f32 %v476, %v2307
    %v2309 = vpop.f32.mrb[0].mxu0
    %v2310 = vadd.f32 %v480, %v2309
    %2311 = vmatprep.mubr.bf16.mxu0 %v188
    %2312 = vmatmul.mubr.bf16.gmra.mrb[0].mxu0 %v187
    %v2313 = vpop.f32.mrb[0].mxu0
    %v2314 = vadd.f32 %v476, %v2313
    %v2315 = vpop.f32.mrb[0].mxu0
    %v2316 = vadd.f32 %v480, %v2315
    %v2317 = vpop.f32.mrb[0].mxu0
    %v2318 = vadd.f32 %v476, %v2317
    %v2319 = vpop.f32.mrb[0].mxu0
    %v2320 = vadd.f32 %v480, %v2319
    %2321 = vmatprep.mubr.bf16.mxu0 %v192
    %2322 = vmatmul.mubr.bf16.gmra.mrb[0].mxu0 %v191
    %v2323 = vpop.f32.mrb[0].mxu0
    %v2324 = vadd.f32 %v476, %v2323
    %v2325 = vpop.f32.mrb[0].mxu0
    %v2326 = vadd.f32 %v480, %v2325
    %v2327 = vpop.f32.mrb[0].mxu0
    %v2328 = vadd.f32 %v476, %v2327
    %v2329 = vpop.f32.mrb[0].mxu0
    %v2330 = vadd.f32 %v480, %v2329
    %2331 = vmatprep.mubr.bf16.mxu0 %v196
    %2332 = vmatmul.mubr.bf16.gmra.mrb[0].mxu0 %v195
    %v2333 = vpop.f32.mrb[0].mxu0
    %v2334 = vadd.f32 %v476, %v2333
    %v2335 = vpop.f32.mrb[0].mxu0
    %v2336 = vadd.f32 %v480, %v2335
    %v2337 = vpop.f32.mrb[0].mxu0
    %v2338 = vadd.f32 %v476, %v2337
    %v2339 = vpop.f32.mrb[0].mxu0
    %v2340 = vadd.f32 %v480, %v2339
    %2341 = vdwg.mxu0
    %2342 = vmatprep.subr.bf16.mxu0 %v1398
    %2343 = vmatpush1.bf16.msra.mxu0 %v1397
    %2344 = vmatprep.subr.bf16.mxu0 %v1406
    %2345 = vmatpush1.bf16.msra.mxu0 %v1405
    %2346 = vmatprep.subr.bf16.mxu0 %v1414
    %2347 = vmatpush1.bf16.msra.mxu0 %v1413
    %2348 = vmatprep.subr.bf16.mxu0 %v1422
    %2349 = vmatpush1.bf16.msra.mxu0 %v1421
    %2350 = vmatprep.subr.bf16.mxu0 %v1430
    %2351 = vmatpush1.bf16.msra.mxu0 %v1429
    %2352 = vmatprep.subr.bf16.mxu0 %v1438
    %2353 = vmatpush1.bf16.msra.mxu0 %v1437
    %2354 = vmatprep.subr.bf16.mxu0 %v1446
    %2355 = vmatpush1.bf16.msra.mxu0 %v1445
    %2356 = vmatprep.subr.bf16.mxu0 %v1454
    %2357 = vmatpush1.bf16.msra.mxu0 %v1453
    %2358 = vmatprep.subr.bf16.mxu0 %v1462
    %2359 = vmatpush1.bf16.msra.mxu0 %v1461
    %2360 = vmatprep.subr.bf16.mxu0 %v1470
    %2361 = vmatpush1.bf16.msra.mxu0 %v1469
    %2362 = vmatprep.subr.bf16.mxu0 %v1478
    %2363 = vmatpush1.bf16.msra.mxu0 %v1477
    %2364 = vmatprep.subr.bf16.mxu0 %v1486
    %2365 = vmatpush1.bf16.msra.mxu0 %v1485
    %2366 = vmatprep.subr.bf16.mxu0 %v1494
    %2367 = vmatpush1.bf16.msra.mxu0 %v1493
    %2368 = vmatprep.subr.bf16.mxu0 %v1502
    %2369 = vmatpush1.bf16.msra.mxu0 %v1501
    %2370 = vmatprep.subr.bf16.mxu0 %v1510
    %2371 = vmatpush1.bf16.msra.mxu0 %v1509
    %2372 = vmatprep.subr.bf16.mxu0 %v1518
    %2373 = vmatpush1.bf16.msra.mxu0 %v1517
    %2374 = vmatprep.mubr.bf16.mxu0 %v170
    %2375 = vmatmul.mubr.bf16.gmra.mrb[0].mxu0 %v169
    %v2376 = vpop.f32.mrb[0].mxu0
    %v2377 = vadd.f32 %v2264, %v2376
    %v2378 = vpop.f32.mrb[0].mxu0
    %v2379 = vadd.f32 %v2266, %v2378
    %v2380 = vpop.f32.mrb[0].mxu0
    %v2381 = vadd.f32 %v2268, %v2380
    %v2382 = vpop.f32.mrb[0].mxu0
    %v2383 = vadd.f32 %v2270, %v2382
    %2384 = vmatprep.mubr.bf16.mxu0 %v174
    %2385 = vmatmul.mubr.bf16.gmra.mrb[0].mxu0 %v173
    %v2386 = vpop.f32.mrb[0].mxu0
    %v2387 = vadd.f32 %v2274, %v2386
    %v2388 = vpop.f32.mrb[0].mxu0
    %v2389 = vadd.f32 %v2276, %v2388
    %v2390 = vpop.f32.mrb[0].mxu0
    %v2391 = vadd.f32 %v2278, %v2390
    %v2392 = vpop.f32.mrb[0].mxu0
    %v2393 = vadd.f32 %v2280, %v2392
    %2394 = vmatprep.mubr.bf16.mxu0 %v178
    %2395 = vmatmul.mubr.bf16.gmra.mrb[0].mxu0 %v177
    %v2396 = vpop.f32.mrb[0].mxu0
    %v2397 = vadd.f32 %v2284, %v2396
    %v2398 = vpop.f32.mrb[0].mxu0
    %v2399 = vadd.f32 %v2286, %v2398
    %v2400 = vpop.f32.mrb[0].mxu0
    %v2401 = vadd.f32 %v2288, %v2400
    %v2402 = vpop.f32.mrb[0].mxu0
    %v2403 = vadd.f32 %v2290, %v2402
    %2404 = vmatprep.mubr.bf16.mxu0 %v182
    %2405 = vmatmul.mubr.bf16.gmra.mrb[0].mxu0 %v181
    %v2406 = vpop.f32.mrb[0].mxu0
    %v2407 = vadd.f32 %v2294, %v2406
    %v2408 = vpop.f32.mrb[0].mxu0
    %v2409 = vadd.f32 %v2296, %v2408
    %v2410 = vpop.f32.mrb[0].mxu0
    %v2411 = vadd.f32 %v2298, %v2410
    %v2412 = vpop.f32.mrb[0].mxu0
    %v2413 = vadd.f32 %v2300, %v2412
    %2414 = vmatprep.mubr.bf16.mxu0 %v186
    %2415 = vmatmul.mubr.bf16.gmra.mrb[0].mxu0 %v185
    %v2416 = vpop.f32.mrb[0].mxu0
    %v2417 = vadd.f32 %v2304, %v2416
    %v2418 = vpop.f32.mrb[0].mxu0
    %v2419 = vadd.f32 %v2306, %v2418
    %v2420 = vpop.f32.mrb[0].mxu0
    %v2421 = vadd.f32 %v2308, %v2420
    %v2422 = vpop.f32.mrb[0].mxu0
    %v2423 = vadd.f32 %v2310, %v2422
    %2424 = vmatprep.mubr.bf16.mxu0 %v190
    %2425 = vmatmul.mubr.bf16.gmra.mrb[0].mxu0 %v189
    %v2426 = vpop.f32.mrb[0].mxu0
    %v2427 = vadd.f32 %v2314, %v2426
    %v2428 = vpop.f32.mrb[0].mxu0
    %v2429 = vadd.f32 %v2316, %v2428
    %v2430 = vpop.f32.mrb[0].mxu0
    %v2431 = vadd.f32 %v2318, %v2430
    %v2432 = vpop.f32.mrb[0].mxu0
    %v2433 = vadd.f32 %v2320, %v2432
    %2434 = vmatprep.mubr.bf16.mxu0 %v194
    %2435 = vmatmul.mubr.bf16.gmra.mrb[0].mxu0 %v193
    %v2436 = vpop.f32.mrb[0].mxu0
    %v2437 = vadd.f32 %v2324, %v2436
    %v2438 = vpop.f32.mrb[0].mxu0
    %v2439 = vadd.f32 %v2326, %v2438
    %v2440 = vpop.f32.mrb[0].mxu0
    %v2441 = vadd.f32 %v2328, %v2440
    %v2442 = vpop.f32.mrb[0].mxu0
    %v2443 = vadd.f32 %v2330, %v2442
    %2444 = vmatprep.mubr.bf16.mxu0 %v198
    %2445 = vmatmul.mubr.bf16.gmra.mrb[0].mxu0 %v197
    %v2446 = vpop.f32.mrb[0].mxu0
    %v2447 = vadd.f32 %v2334, %v2446
    %v2448 = vpop.f32.mrb[0].mxu0
    %v2449 = vadd.f32 %v2336, %v2448
    %v2450 = vpop.f32.mrb[0].mxu0
    %v2451 = vadd.f32 %v2338, %v2450
    %v2452 = vpop.f32.mrb[0].mxu0
    %v2453 = vadd.f32 %v2340, %v2452
    %2454 = vdwg.mxu0
    %2455 = vmatprep.subr.bf16.mxu0 %v1272
    %2456 = vmatpush1.bf16.msra.mxu0 %v1271
    %2457 = vmatprep.subr.bf16.mxu0 %v1280
    %2458 = vmatpush1.bf16.msra.mxu0 %v1279
    %2459 = vmatprep.subr.bf16.mxu0 %v1288
    %2460 = vmatpush1.bf16.msra.mxu0 %v1287
    %2461 = vmatprep.subr.bf16.mxu0 %v1296
    %2462 = vmatpush1.bf16.msra.mxu0 %v1295
    %2463 = vmatprep.subr.bf16.mxu0 %v1304
    %2464 = vmatpush1.bf16.msra.mxu0 %v1303
    %2465 = vmatprep.subr.bf16.mxu0 %v1312
    %2466 = vmatpush1.bf16.msra.mxu0 %v1311
    %2467 = vmatprep.subr.bf16.mxu0 %v1320
    %2468 = vmatpush1.bf16.msra.mxu0 %v1319
    %2469 = vmatprep.subr.bf16.mxu0 %v1328
    %2470 = vmatpush1.bf16.msra.mxu0 %v1327
    %2471 = vmatprep.subr.bf16.mxu0 %v1336
    %2472 = vmatpush1.bf16.msra.mxu0 %v1335
    %2473 = vmatprep.subr.bf16.mxu0 %v1344
    %2474 = vmatpush1.bf16.msra.mxu0 %v1343
    %2475 = vmatprep.subr.bf16.mxu0 %v1352
    %2476 = vmatpush1.bf16.msra.mxu0 %v1351
    %2477 = vmatprep.subr.bf16.mxu0 %v1360
    %2478 = vmatpush1.bf16.msra.mxu0 %v1359
    %2479 = vmatprep.subr.bf16.mxu0 %v1368
    %2480 = vmatpush1.bf16.msra.mxu0 %v1367
    %2481 = vmatprep.subr.bf16.mxu0 %v1376
    %2482 = vmatpush1.bf16.msra.mxu0 %v1375
    %2483 = vmatprep.subr.bf16.mxu0 %v1384
    %2484 = vmatpush1.bf16.msra.mxu0 %v1383
    %2485 = vmatprep.subr.bf16.mxu0 %v1392
    %2486 = vmatpush1.bf16.msra.mxu0 %v1391
    %2487 = vmatprep.mubr.bf16.mxu0 %v168
    %2488 = vmatmul.mubr.bf16.gmra.mrb[0].mxu0 %v167
    %v2489 = vpop.f32.mrb[0].mxu0
    %v2490 = vadd.f32 %v484, %v2489
    %v2491 = vpop.f32.mrb[0].mxu0
    %v2492 = vadd.f32 %v488, %v2491
    %v2493 = vpop.f32.mrb[0].mxu0
    %v2494 = vadd.f32 %v484, %v2493
    %v2495 = vpop.f32.mrb[0].mxu0
    %v2496 = vadd.f32 %v488, %v2495
    %2497 = vmatprep.mubr.bf16.mxu0 %v172
    %2498 = vmatmul.mubr.bf16.gmra.mrb[0].mxu0 %v171
    %v2499 = vpop.f32.mrb[0].mxu0
    %v2500 = vadd.f32 %v484, %v2499
    %v2501 = vpop.f32.mrb[0].mxu0
    %v2502 = vadd.f32 %v488, %v2501
    %v2503 = vpop.f32.mrb[0].mxu0
    %v2504 = vadd.f32 %v484, %v2503
    %v2505 = vpop.f32.mrb[0].mxu0
    %v2506 = vadd.f32 %v488, %v2505
    %2507 = vmatprep.mubr.bf16.mxu0 %v176
    %2508 = vmatmul.mubr.bf16.gmra.mrb[0].mxu0 %v175
    %v2509 = vpop.f32.mrb[0].mxu0
    %v2510 = vadd.f32 %v484, %v2509
    %v2511 = vpop.f32.mrb[0].mxu0
    %v2512 = vadd.f32 %v488, %v2511
    %v2513 = vpop.f32.mrb[0].mxu0
    %v2514 = vadd.f32 %v484, %v2513
    %v2515 = vpop.f32.mrb[0].mxu0
    %v2516 = vadd.f32 %v488, %v2515
    %2517 = vmatprep.mubr.bf16.mxu0 %v180
    %2518 = vmatmul.mubr.bf16.gmra.mrb[0].mxu0 %v179
    %v2519 = vpop.f32.mrb[0].mxu0
    %v2520 = vadd.f32 %v484, %v2519
    %v2521 = vpop.f32.mrb[0].mxu0
    %v2522 = vadd.f32 %v488, %v2521
    %v2523 = vpop.f32.mrb[0].mxu0
    %v2524 = vadd.f32 %v484, %v2523
    %v2525 = vpop.f32.mrb[0].mxu0
    %v2526 = vadd.f32 %v488, %v2525
    %2527 = vmatprep.mubr.bf16.mxu0 %v184
    %2528 = vmatmul.mubr.bf16.gmra.mrb[0].mxu0 %v183
    %v2529 = vpop.f32.mrb[0].mxu0
    %v2530 = vadd.f32 %v484, %v2529
    %v2531 = vpop.f32.mrb[0].mxu0
    %v2532 = vadd.f32 %v488, %v2531
    %v2533 = vpop.f32.mrb[0].mxu0
    %v2534 = vadd.f32 %v484, %v2533
    %v2535 = vpop.f32.mrb[0].mxu0
    %v2536 = vadd.f32 %v488, %v2535
    %2537 = vmatprep.mubr.bf16.mxu0 %v188
    %2538 = vmatmul.mubr.bf16.gmra.mrb[0].mxu0 %v187
    %v2539 = vpop.f32.mrb[0].mxu0
    %v2540 = vadd.f32 %v484, %v2539
    %v2541 = vpop.f32.mrb[0].mxu0
    %v2542 = vadd.f32 %v488, %v2541
    %v2543 = vpop.f32.mrb[0].mxu0
    %v2544 = vadd.f32 %v484, %v2543
    %v2545 = vpop.f32.mrb[0].mxu0
    %v2546 = vadd.f32 %v488, %v2545
    %2547 = vmatprep.mubr.bf16.mxu0 %v192
    %2548 = vmatmul.mubr.bf16.gmra.mrb[0].mxu0 %v191
    %v2549 = vpop.f32.mrb[0].mxu0
    %v2550 = vadd.f32 %v484, %v2549
    %v2551 = vpop.f32.mrb[0].mxu0
    %v2552 = vadd.f32 %v488, %v2551
    %v2553 = vpop.f32.mrb[0].mxu0
    %v2554 = vadd.f32 %v484, %v2553
    %v2555 = vpop.f32.mrb[0].mxu0
    %v2556 = vadd.f32 %v488, %v2555
    %2557 = vmatprep.mubr.bf16.mxu0 %v196
    %2558 = vmatmul.mubr.bf16.gmra.mrb[0].mxu0 %v195
    %v2559 = vpop.f32.mrb[0].mxu0
    %v2560 = vadd.f32 %v484, %v2559
    %v2561 = vpop.f32.mrb[0].mxu0
    %v2562 = vadd.f32 %v488, %v2561
    %v2563 = vpop.f32.mrb[0].mxu0
    %v2564 = vadd.f32 %v484, %v2563
    %v2565 = vpop.f32.mrb[0].mxu0
    %v2566 = vadd.f32 %v488, %v2565
    %2567 = vdwg.mxu0
    %2568 = vmatprep.subr.bf16.mxu0 %v1400
    %2569 = vmatpush1.bf16.msra.mxu0 %v1399
    %2570 = vmatprep.subr.bf16.mxu0 %v1408
    %2571 = vmatpush1.bf16.msra.mxu0 %v1407
    %2572 = vmatprep.subr.bf16.mxu0 %v1416
    %2573 = vmatpush1.bf16.msra.mxu0 %v1415
    %2574 = vmatprep.subr.bf16.mxu0 %v1424
    %2575 = vmatpush1.bf16.msra.mxu0 %v1423
    %2576 = vmatprep.subr.bf16.mxu0 %v1432
    %2577 = vmatpush1.bf16.msra.mxu0 %v1431
    %2578 = vmatprep.subr.bf16.mxu0 %v1440
    %2579 = vmatpush1.bf16.msra.mxu0 %v1439
    %2580 = vmatprep.subr.bf16.mxu0 %v1448
    %2581 = vmatpush1.bf16.msra.mxu0 %v1447
    %2582 = vmatprep.subr.bf16.mxu0 %v1456
    %2583 = vmatpush1.bf16.msra.mxu0 %v1455
    %2584 = vmatprep.subr.bf16.mxu0 %v1464
    %2585 = vmatpush1.bf16.msra.mxu0 %v1463
    %2586 = vmatprep.subr.bf16.mxu0 %v1472
    %2587 = vmatpush1.bf16.msra.mxu0 %v1471
    %2588 = vmatprep.subr.bf16.mxu0 %v1480
    %2589 = vmatpush1.bf16.msra.mxu0 %v1479
    %2590 = vmatprep.subr.bf16.mxu0 %v1488
    %2591 = vmatpush1.bf16.msra.mxu0 %v1487
    %2592 = vmatprep.subr.bf16.mxu0 %v1496
    %2593 = vmatpush1.bf16.msra.mxu0 %v1495
    %2594 = vmatprep.subr.bf16.mxu0 %v1504
    %2595 = vmatpush1.bf16.msra.mxu0 %v1503
    %2596 = vmatprep.subr.bf16.mxu0 %v1512
    %2597 = vmatpush1.bf16.msra.mxu0 %v1511
    %2598 = vmatprep.subr.bf16.mxu0 %v1520
    %2599 = vmatpush1.bf16.msra.mxu0 %v1519
    %2600 = vmatprep.mubr.bf16.mxu0 %v170
    %2601 = vmatmul.mubr.bf16.gmra.mrb[0].mxu0 %v169
    %v2602 = vpop.f32.mrb[0].mxu0
    %v2603 = vadd.f32 %v2490, %v2602
    %v2604 = vpop.f32.mrb[0].mxu0
    %v2605 = vadd.f32 %v2492, %v2604
    %v2606 = vpop.f32.mrb[0].mxu0
    %v2607 = vadd.f32 %v2494, %v2606
    %v2608 = vpop.f32.mrb[0].mxu0
    %v2609 = vadd.f32 %v2496, %v2608
    %2610 = vmatprep.mubr.bf16.mxu0 %v174
    %2611 = vmatmul.mubr.bf16.gmra.mrb[0].mxu0 %v173
    %v2612 = vpop.f32.mrb[0].mxu0
    %v2613 = vadd.f32 %v2500, %v2612
    %v2614 = vpop.f32.mrb[0].mxu0
    %v2615 = vadd.f32 %v2502, %v2614
    %v2616 = vpop.f32.mrb[0].mxu0
    %v2617 = vadd.f32 %v2504, %v2616
    %v2618 = vpop.f32.mrb[0].mxu0
    %v2619 = vadd.f32 %v2506, %v2618
    %2620 = vmatprep.mubr.bf16.mxu0 %v178
    %2621 = vmatmul.mubr.bf16.gmra.mrb[0].mxu0 %v177
    %v2622 = vpop.f32.mrb[0].mxu0
    %v2623 = vadd.f32 %v2510, %v2622
    %v2624 = vpop.f32.mrb[0].mxu0
    %v2625 = vadd.f32 %v2512, %v2624
    %v2626 = vpop.f32.mrb[0].mxu0
    %v2627 = vadd.f32 %v2514, %v2626
    %v2628 = vpop.f32.mrb[0].mxu0
    %v2629 = vadd.f32 %v2516, %v2628
    %2630 = vmatprep.mubr.bf16.mxu0 %v182
    %2631 = vmatmul.mubr.bf16.gmra.mrb[0].mxu0 %v181
    %v2632 = vpop.f32.mrb[0].mxu0
    %v2633 = vadd.f32 %v2520, %v2632
    %v2634 = vpop.f32.mrb[0].mxu0
    %v2635 = vadd.f32 %v2522, %v2634
    %v2636 = vpop.f32.mrb[0].mxu0
    %v2637 = vadd.f32 %v2524, %v2636
    %v2638 = vpop.f32.mrb[0].mxu0
    %v2639 = vadd.f32 %v2526, %v2638
    %2640 = vmatprep.mubr.bf16.mxu0 %v186
    %2641 = vmatmul.mubr.bf16.gmra.mrb[0].mxu0 %v185
    %v2642 = vpop.f32.mrb[0].mxu0
    %v2643 = vadd.f32 %v2530, %v2642
    %v2644 = vpop.f32.mrb[0].mxu0
    %v2645 = vadd.f32 %v2532, %v2644
    %v2646 = vpop.f32.mrb[0].mxu0
    %v2647 = vadd.f32 %v2534, %v2646
    %v2648 = vpop.f32.mrb[0].mxu0
    %v2649 = vadd.f32 %v2536, %v2648
    %2650 = vmatprep.mubr.bf16.mxu0 %v190
    %2651 = vmatmul.mubr.bf16.gmra.mrb[0].mxu0 %v189
    %v2652 = vpop.f32.mrb[0].mxu0
    %v2653 = vadd.f32 %v2540, %v2652
    %v2654 = vpop.f32.mrb[0].mxu0
    %v2655 = vadd.f32 %v2542, %v2654
    %v2656 = vpop.f32.mrb[0].mxu0
    %v2657 = vadd.f32 %v2544, %v2656
    %v2658 = vpop.f32.mrb[0].mxu0
    %v2659 = vadd.f32 %v2546, %v2658
    %2660 = vmatprep.mubr.bf16.mxu0 %v194
    %2661 = vmatmul.mubr.bf16.gmra.mrb[0].mxu0 %v193
    %v2662 = vpop.f32.mrb[0].mxu0
    %v2663 = vadd.f32 %v2550, %v2662
    %v2664 = vpop.f32.mrb[0].mxu0
    %v2665 = vadd.f32 %v2552, %v2664
    %v2666 = vpop.f32.mrb[0].mxu0
    %v2667 = vadd.f32 %v2554, %v2666
    %v2668 = vpop.f32.mrb[0].mxu0
    %v2669 = vadd.f32 %v2556, %v2668
    %2670 = vmatprep.mubr.bf16.mxu0 %v198
    %2671 = vmatmul.mubr.bf16.gmra.mrb[0].mxu0 %v197
    %v2672 = vpop.f32.mrb[0].mxu0
    %v2673 = vadd.f32 %v2560, %v2672
    %v2674 = vpop.f32.mrb[0].mxu0
    %v2675 = vadd.f32 %v2562, %v2674
    %v2676 = vpop.f32.mrb[0].mxu0
    %v2677 = vadd.f32 %v2564, %v2676
    %v2678 = vpop.f32.mrb[0].mxu0
    %v2679 = vadd.f32 %v2566, %v2678
    %2680 = vdwg.mxu0
    %v2681 = vmax.f32 %v1925, 0.0
    %v2682 = vmax.f32 %v1927, 0.0
    %v2683 = vmax.f32 %v2151, 0.0
    %v2684 = vmax.f32 %v2153, 0.0
    %v2685 = vmax.f32 %v2377, 0.0
    %v2686 = vmax.f32 %v2379, 0.0
    %v2687 = vmax.f32 %v2603, 0.0
    %v2688 = vmax.f32 %v2605, 0.0
    %v2689 = vmax.f32 %v1929, 0.0
    %v2690 = vmax.f32 %v1931, 0.0
    %v2691 = vmax.f32 %v2155, 0.0
    %v2692 = vmax.f32 %v2157, 0.0
    %v2693 = vmax.f32 %v2381, 0.0
    %v2694 = vmax.f32 %v2383, 0.0
    %v2695 = vmax.f32 %v2607, 0.0
    %v2696 = vmax.f32 %v2609, 0.0
    %v2697 = vmax.f32 %v1935, 0.0
    %v2698 = vmax.f32 %v1937, 0.0
    %v2699 = vmax.f32 %v2161, 0.0
    %v2700 = vmax.f32 %v2163, 0.0
    %v2701 = vmax.f32 %v2387, 0.0
    %v2702 = vmax.f32 %v2389, 0.0
    %v2703 = vmax.f32 %v2613, 0.0
    %v2704 = vmax.f32 %v2615, 0.0
    %v2705 = vmax.f32 %v1939, 0.0
    %v2706 = vmax.f32 %v1941, 0.0
    %v2707 = vmax.f32 %v2165, 0.0
    %v2708 = vmax.f32 %v2167, 0.0
    %v2709 = vmax.f32 %v2391, 0.0
    %v2710 = vmax.f32 %v2393, 0.0
    %v2711 = vmax.f32 %v2617, 0.0
    %v2712 = vmax.f32 %v2619, 0.0
    %v2713 = vmax.f32 %v1945, 0.0
    %v2714 = vmax.f32 %v1947, 0.0
    %v2715 = vmax.f32 %v2171, 0.0
    %v2716 = vmax.f32 %v2173, 0.0
    %v2717 = vmax.f32 %v2397, 0.0
    %v2718 = vmax.f32 %v2399, 0.0
    %v2719 = vmax.f32 %v2623, 0.0
    %v2720 = vmax.f32 %v2625, 0.0
    %v2721 = vmax.f32 %v1949, 0.0
    %v2722 = vmax.f32 %v1951, 0.0
    %v2723 = vmax.f32 %v2175, 0.0
    %v2724 = vmax.f32 %v2177, 0.0
    %v2725 = vmax.f32 %v2401, 0.0
    %v2726 = vmax.f32 %v2403, 0.0
    %v2727 = vmax.f32 %v2627, 0.0
    %v2728 = vmax.f32 %v2629, 0.0
    %v2729 = vmax.f32 %v1955, 0.0
    %v2730 = vmax.f32 %v1957, 0.0
    %v2731 = vmax.f32 %v2181, 0.0
    %v2732 = vmax.f32 %v2183, 0.0
    %v2733 = vmax.f32 %v2407, 0.0
    %v2734 = vmax.f32 %v2409, 0.0
    %v2735 = vmax.f32 %v2633, 0.0
    %v2736 = vmax.f32 %v2635, 0.0
    %v2737 = vmax.f32 %v1959, 0.0
    %v2738 = vmax.f32 %v1961, 0.0
    %v2739 = vmax.f32 %v2185, 0.0
    %v2740 = vmax.f32 %v2187, 0.0
    %v2741 = vmax.f32 %v2411, 0.0
    %v2742 = vmax.f32 %v2413, 0.0
    %v2743 = vmax.f32 %v2637, 0.0
    %v2744 = vmax.f32 %v2639, 0.0
    %v2745 = vmax.f32 %v1965, 0.0
    %v2746 = vmax.f32 %v1967, 0.0
    %v2747 = vmax.f32 %v2191, 0.0
    %v2748 = vmax.f32 %v2193, 0.0
    %v2749 = vmax.f32 %v2417, 0.0
    %v2750 = vmax.f32 %v2419, 0.0
    %v2751 = vmax.f32 %v2643, 0.0
    %v2752 = vmax.f32 %v2645, 0.0
    %v2753 = vmax.f32 %v1969, 0.0
    %v2754 = vmax.f32 %v1971, 0.0
    %v2755 = vmax.f32 %v2195, 0.0
    %v2756 = vmax.f32 %v2197, 0.0
    %v2757 = vmax.f32 %v2421, 0.0
    %v2758 = vmax.f32 %v2423, 0.0
    %v2759 = vmax.f32 %v2647, 0.0
    %v2760 = vmax.f32 %v2649, 0.0
    %v2761 = vmax.f32 %v1975, 0.0
    %v2762 = vmax.f32 %v1977, 0.0
    %v2763 = vmax.f32 %v2201, 0.0
    %v2764 = vmax.f32 %v2203, 0.0
    %v2765 = vmax.f32 %v2427, 0.0
    %v2766 = vmax.f32 %v2429, 0.0
    %v2767 = vmax.f32 %v2653, 0.0
    %v2768 = vmax.f32 %v2655, 0.0
    %v2769 = vmax.f32 %v1979, 0.0
    %v2770 = vmax.f32 %v1981, 0.0
    %v2771 = vmax.f32 %v2205, 0.0
    %v2772 = vmax.f32 %v2207, 0.0
    %v2773 = vmax.f32 %v2431, 0.0
    %v2774 = vmax.f32 %v2433, 0.0
    %v2775 = vmax.f32 %v2657, 0.0
    %v2776 = vmax.f32 %v2659, 0.0
    %v2777 = vmax.f32 %v1985, 0.0
    %v2778 = vmax.f32 %v1987, 0.0
    %v2779 = vmax.f32 %v2211, 0.0
    %v2780 = vmax.f32 %v2213, 0.0
    %v2781 = vmax.f32 %v2437, 0.0
    %v2782 = vmax.f32 %v2439, 0.0
    %v2783 = vmax.f32 %v2663, 0.0
    %v2784 = vmax.f32 %v2665, 0.0
    %v2785 = vmax.f32 %v1989, 0.0
    %v2786 = vmax.f32 %v1991, 0.0
    %v2787 = vmax.f32 %v2215, 0.0
    %v2788 = vmax.f32 %v2217, 0.0
    %v2789 = vmax.f32 %v2441, 0.0
    %v2790 = vmax.f32 %v2443, 0.0
    %v2791 = vmax.f32 %v2667, 0.0
    %v2792 = vmax.f32 %v2669, 0.0
    %v2793 = vmax.f32 %v1995, 0.0
    %v2794 = vmax.f32 %v1997, 0.0
    %v2795 = vmax.f32 %v2221, 0.0
    %v2796 = vmax.f32 %v2223, 0.0
    %v2797 = vmax.f32 %v2447, 0.0
    %v2798 = vmax.f32 %v2449, 0.0
    %v2799 = vmax.f32 %v2673, 0.0
    %v2800 = vmax.f32 %v2675, 0.0
    %v2801 = vmax.f32 %v1999, 0.0
    %v2802 = vmax.f32 %v2001, 0.0
    %v2803 = vmax.f32 %v2225, 0.0
    %v2804 = vmax.f32 %v2227, 0.0
    %v2805 = vmax.f32 %v2451, 0.0
    %v2806 = vmax.f32 %v2453, 0.0
    %v2807 = vmax.f32 %v2677, 0.0
    %v2808 = vmax.f32 %v2679, 0.0
    %v2809 = vpack.c.bf16 %v2689, %v2681
    %v2810 = vpack.c.bf16 %v2690, %v2682
    %v2811 = vpack.c.bf16 %v2691, %v2683
    %v2812 = vpack.c.bf16 %v2692, %v2684
    %v2813 = vpack.c.bf16 %v2693, %v2685
    %v2814 = vpack.c.bf16 %v2694, %v2686
    %v2815 = vpack.c.bf16 %v2695, %v2687
    %v2816 = vpack.c.bf16 %v2696, %v2688
    %v2817 = vpack.c.bf16 %v2705, %v2697
    %v2818 = vpack.c.bf16 %v2706, %v2698
    %v2819 = vpack.c.bf16 %v2707, %v2699
    %v2820 = vpack.c.bf16 %v2708, %v2700
    %v2821 = vpack.c.bf16 %v2709, %v2701
    %v2822 = vpack.c.bf16 %v2710, %v2702
    %v2823 = vpack.c.bf16 %v2711, %v2703
    %v2824 = vpack.c.bf16 %v2712, %v2704
    %v2825 = vpack.c.bf16 %v2721, %v2713
    %v2826 = vpack.c.bf16 %v2722, %v2714
    %v2827 = vpack.c.bf16 %v2723, %v2715
    %v2828 = vpack.c.bf16 %v2724, %v2716
    %v2829 = vpack.c.bf16 %v2725, %v2717
    %v2830 = vpack.c.bf16 %v2726, %v2718
    %v2831 = vpack.c.bf16 %v2727, %v2719
    %v2832 = vpack.c.bf16 %v2728, %v2720
    %v2833 = vpack.c.bf16 %v2737, %v2729
    %v2834 = vpack.c.bf16 %v2738, %v2730
    %v2835 = vpack.c.bf16 %v2739, %v2731
    %v2836 = vpack.c.bf16 %v2740, %v2732
    %v2837 = vpack.c.bf16 %v2741, %v2733
    %v2838 = vpack.c.bf16 %v2742, %v2734
    %v2839 = vpack.c.bf16 %v2743, %v2735
    %v2840 = vpack.c.bf16 %v2744, %v2736
    %v2841 = vpack.c.bf16 %v2753, %v2745
    %v2842 = vpack.c.bf16 %v2754, %v2746
    %v2843 = vpack.c.bf16 %v2755, %v2747
    %v2844 = vpack.c.bf16 %v2756, %v2748
    %v2845 = vpack.c.bf16 %v2757, %v2749
    %v2846 = vpack.c.bf16 %v2758, %v2750
    %v2847 = vpack.c.bf16 %v2759, %v2751
    %v2848 = vpack.c.bf16 %v2760, %v2752
    %v2849 = vpack.c.bf16 %v2769, %v2761
    %v2850 = vpack.c.bf16 %v2770, %v2762
    %v2851 = vpack.c.bf16 %v2771, %v2763
    %v2852 = vpack.c.bf16 %v2772, %v2764
    %v2853 = vpack.c.bf16 %v2773, %v2765
    %v2854 = vpack.c.bf16 %v2774, %v2766
    %v2855 = vpack.c.bf16 %v2775, %v2767
    %v2856 = vpack.c.bf16 %v2776, %v2768
    %v2857 = vpack.c.bf16 %v2785, %v2777
    %v2858 = vpack.c.bf16 %v2786, %v2778
    %v2859 = vpack.c.bf16 %v2787, %v2779
    %v2860 = vpack.c.bf16 %v2788, %v2780
    %v2861 = vpack.c.bf16 %v2789, %v2781
    %v2862 = vpack.c.bf16 %v2790, %v2782
    %v2863 = vpack.c.bf16 %v2791, %v2783
    %v2864 = vpack.c.bf16 %v2792, %v2784
    %v2865 = vpack.c.bf16 %v2801, %v2793
    %v2866 = vpack.c.bf16 %v2802, %v2794
    %v2867 = vpack.c.bf16 %v2803, %v2795
    %v2868 = vpack.c.bf16 %v2804, %v2796
    %v2869 = vpack.c.bf16 %v2805, %v2797
    %v2870 = vpack.c.bf16 %v2806, %v2798
    %v2871 = vpack.c.bf16 %v2807, %v2799
    %v2872 = vpack.c.bf16 %v2808, %v2800
    %v2873 = vld [vmem:[#allocation6] sm:$0xff]
    %v2874 = vld [vmem:[#allocation6 + $0x8] sm:$0xff]
    %v2875 = vld [vmem:[#allocation6 + $0x10] sm:$0xff]
    %v2876 = vld [vmem:[#allocation6 + $0x18] sm:$0xff]
    %v2877 = vld [vmem:[#allocation6 + $0x20] sm:$0xff]
    %v2878 = vld [vmem:[#allocation6 + $0x28] sm:$0xff]
    %v2879 = vld [vmem:[#allocation6 + $0x30] sm:$0xff]
    %v2880 = vld [vmem:[#allocation6 + $0x38] sm:$0xff]
    %v2881 = vld [vmem:[#allocation6 + $0x40] sm:$0xff]
    %v2882 = vld [vmem:[#allocation6 + $0x48] sm:$0xff]
    %v2883 = vld [vmem:[#allocation6 + $0x50] sm:$0xff]
    %v2884 = vld [vmem:[#allocation6 + $0x58] sm:$0xff]
    %v2885 = vld [vmem:[#allocation6 + $0x60] sm:$0xff]
    %v2886 = vld [vmem:[#allocation6 + $0x68] sm:$0xff]
    %v2887 = vld [vmem:[#allocation6 + $0x70] sm:$0xff]
    %v2888 = vld [vmem:[#allocation6 + $0x78] sm:$0xff]
    %v2889 = vld [vmem:[#allocation6 + $0x80] sm:$0xff]
    %v2890 = vld [vmem:[#allocation6 + $0x88] sm:$0xff]
    %v2891 = vld [vmem:[#allocation6 + $0x90] sm:$0xff]
    %v2892 = vld [vmem:[#allocation6 + $0x98] sm:$0xff]
    %v2893 = vld [vmem:[#allocation6 + $0xa0] sm:$0xff]
    %v2894 = vld [vmem:[#allocation6 + $0xa8] sm:$0xff]
    %v2895 = vld [vmem:[#allocation6 + $0xb0] sm:$0xff]
    %v2896 = vld [vmem:[#allocation6 + $0xb8] sm:$0xff]
    %v2897 = vld [vmem:[#allocation6 + $0xc0] sm:$0xff]
    %v2898 = vld [vmem:[#allocation6 + $0xc8] sm:$0xff]
    %v2899 = vld [vmem:[#allocation6 + $0xd0] sm:$0xff]
    %v2900 = vld [vmem:[#allocation6 + $0xd8] sm:$0xff]
    %v2901 = vld [vmem:[#allocation6 + $0xe0] sm:$0xff]
    %v2902 = vld [vmem:[#allocation6 + $0xe8] sm:$0xff]
    %v2903 = vld [vmem:[#allocation6 + $0xf0] sm:$0xff]
    %v2904 = vld [vmem:[#allocation6 + $0xf8] sm:$0xff]
    %v2905 = vld [vmem:[#allocation6 + $0x100] sm:$0xff]
    %v2906 = vld [vmem:[#allocation6 + $0x108] sm:$0xff]
    %v2907 = vld [vmem:[#allocation6 + $0x110] sm:$0xff]
    %v2908 = vld [vmem:[#allocation6 + $0x118] sm:$0xff]
    %v2909 = vld [vmem:[#allocation6 + $0x120] sm:$0xff]
    %v2910 = vld [vmem:[#allocation6 + $0x128] sm:$0xff]
    %v2911 = vld [vmem:[#allocation6 + $0x130] sm:$0xff]
    %v2912 = vld [vmem:[#allocation6 + $0x138] sm:$0xff]
    %v2913 = vld [vmem:[#allocation6 + $0x140] sm:$0xff]
    %v2914 = vld [vmem:[#allocation6 + $0x148] sm:$0xff]
    %v2915 = vld [vmem:[#allocation6 + $0x150] sm:$0xff]
    %v2916 = vld [vmem:[#allocation6 + $0x158] sm:$0xff]
    %v2917 = vld [vmem:[#allocation6 + $0x160] sm:$0xff]
    %v2918 = vld [vmem:[#allocation6 + $0x168] sm:$0xff]
    %v2919 = vld [vmem:[#allocation6 + $0x170] sm:$0xff]
    %v2920 = vld [vmem:[#allocation6 + $0x178] sm:$0xff]
    %v2921 = vld [vmem:[#allocation6 + $0x180] sm:$0xff]
    %v2922 = vld [vmem:[#allocation6 + $0x188] sm:$0xff]
    %v2923 = vld [vmem:[#allocation6 + $0x190] sm:$0xff]
    %v2924 = vld [vmem:[#allocation6 + $0x198] sm:$0xff]
    %v2925 = vld [vmem:[#allocation6 + $0x1a0] sm:$0xff]
    %v2926 = vld [vmem:[#allocation6 + $0x1a8] sm:$0xff]
    %v2927 = vld [vmem:[#allocation6 + $0x1b0] sm:$0xff]
    %v2928 = vld [vmem:[#allocation6 + $0x1b8] sm:$0xff]
    %v2929 = vld [vmem:[#allocation6 + $0x1c0] sm:$0xff]
    %v2930 = vld [vmem:[#allocation6 + $0x1c8] sm:$0xff]
    %v2931 = vld [vmem:[#allocation6 + $0x1d0] sm:$0xff]
    %v2932 = vld [vmem:[#allocation6 + $0x1d8] sm:$0xff]
    %v2933 = vld [vmem:[#allocation6 + $0x1e0] sm:$0xff]
    %v2934 = vld [vmem:[#allocation6 + $0x1e8] sm:$0xff]
    %v2935 = vld [vmem:[#allocation6 + $0x1f0] sm:$0xff]
    %v2936 = vld [vmem:[#allocation6 + $0x1f8] sm:$0xff]
    %v2937 = vld [vmem:[#allocation6 + $0x200] sm:$0xff]
    %v2938 = vld [vmem:[#allocation6 + $0x208] sm:$0xff]
    %v2939 = vld [vmem:[#allocation6 + $0x210] sm:$0xff]
    %v2940 = vld [vmem:[#allocation6 + $0x218] sm:$0xff]
    %v2941 = vld [vmem:[#allocation6 + $0x220] sm:$0xff]
    %v2942 = vld [vmem:[#allocation6 + $0x228] sm:$0xff]
    %v2943 = vld [vmem:[#allocation6 + $0x230] sm:$0xff]
    %v2944 = vld [vmem:[#allocation6 + $0x238] sm:$0xff]
    %v2945 = vld [vmem:[#allocation6 + $0x240] sm:$0xff]
    %v2946 = vld [vmem:[#allocation6 + $0x248] sm:$0xff]
    %v2947 = vld [vmem:[#allocation6 + $0x250] sm:$0xff]
    %v2948 = vld [vmem:[#allocation6 + $0x258] sm:$0xff]
    %v2949 = vld [vmem:[#allocation6 + $0x260] sm:$0xff]
    %v2950 = vld [vmem:[#allocation6 + $0x268] sm:$0xff]
    %v2951 = vld [vmem:[#allocation6 + $0x270] sm:$0xff]
    %v2952 = vld [vmem:[#allocation6 + $0x278] sm:$0xff]
    %v2953 = vld [vmem:[#allocation6 + $0x280] sm:$0xff]
    %v2954 = vld [vmem:[#allocation6 + $0x288] sm:$0xff]
    %v2955 = vld [vmem:[#allocation6 + $0x290] sm:$0xff]
    %v2956 = vld [vmem:[#allocation6 + $0x298] sm:$0xff]
    %v2957 = vld [vmem:[#allocation6 + $0x2a0] sm:$0xff]
    %v2958 = vld [vmem:[#allocation6 + $0x2a8] sm:$0xff]
    %v2959 = vld [vmem:[#allocation6 + $0x2b0] sm:$0xff]
    %v2960 = vld [vmem:[#allocation6 + $0x2b8] sm:$0xff]
    %v2961 = vld [vmem:[#allocation6 + $0x2c0] sm:$0xff]
    %v2962 = vld [vmem:[#allocation6 + $0x2c8] sm:$0xff]
    %v2963 = vld [vmem:[#allocation6 + $0x2d0] sm:$0xff]
    %v2964 = vld [vmem:[#allocation6 + $0x2d8] sm:$0xff]
    %v2965 = vld [vmem:[#allocation6 + $0x2e0] sm:$0xff]
    %v2966 = vld [vmem:[#allocation6 + $0x2e8] sm:$0xff]
    %v2967 = vld [vmem:[#allocation6 + $0x2f0] sm:$0xff]
    %v2968 = vld [vmem:[#allocation6 + $0x2f8] sm:$0xff]
    %v2969 = vld [vmem:[#allocation6 + $0x300] sm:$0xff]
    %v2970 = vld [vmem:[#allocation6 + $0x308] sm:$0xff]
    %v2971 = vld [vmem:[#allocation6 + $0x310] sm:$0xff]
    %v2972 = vld [vmem:[#allocation6 + $0x318] sm:$0xff]
    %v2973 = vld [vmem:[#allocation6 + $0x320] sm:$0xff]
    %v2974 = vld [vmem:[#allocation6 + $0x328] sm:$0xff]
    %v2975 = vld [vmem:[#allocation6 + $0x330] sm:$0xff]
    %v2976 = vld [vmem:[#allocation6 + $0x338] sm:$0xff]
    %v2977 = vld [vmem:[#allocation6 + $0x340] sm:$0xff]
    %v2978 = vld [vmem:[#allocation6 + $0x348] sm:$0xff]
    %v2979 = vld [vmem:[#allocation6 + $0x350] sm:$0xff]
    %v2980 = vld [vmem:[#allocation6 + $0x358] sm:$0xff]
    %v2981 = vld [vmem:[#allocation6 + $0x360] sm:$0xff]
    %v2982 = vld [vmem:[#allocation6 + $0x368] sm:$0xff]
    %v2983 = vld [vmem:[#allocation6 + $0x370] sm:$0xff]
    %v2984 = vld [vmem:[#allocation6 + $0x378] sm:$0xff]
    %v2985 = vld [vmem:[#allocation6 + $0x380] sm:$0xff]
    %v2986 = vld [vmem:[#allocation6 + $0x388] sm:$0xff]
    %v2987 = vld [vmem:[#allocation6 + $0x390] sm:$0xff]
    %v2988 = vld [vmem:[#allocation6 + $0x398] sm:$0xff]
    %v2989 = vld [vmem:[#allocation6 + $0x3a0] sm:$0xff]
    %v2990 = vld [vmem:[#allocation6 + $0x3a8] sm:$0xff]
    %v2991 = vld [vmem:[#allocation6 + $0x3b0] sm:$0xff]
    %v2992 = vld [vmem:[#allocation6 + $0x3b8] sm:$0xff]
    %v2993 = vld [vmem:[#allocation6 + $0x3c0] sm:$0xff]
    %v2994 = vld [vmem:[#allocation6 + $0x3c8] sm:$0xff]
    %v2995 = vld [vmem:[#allocation6 + $0x3d0] sm:$0xff]
    %v2996 = vld [vmem:[#allocation6 + $0x3d8] sm:$0xff]
    %v2997 = vld [vmem:[#allocation6 + $0x3e0] sm:$0xff]
    %v2998 = vld [vmem:[#allocation6 + $0x3e8] sm:$0xff]
    %v2999 = vld [vmem:[#allocation6 + $0x3f0] sm:$0xff]
    %v3000 = vld [vmem:[#allocation6 + $0x3f8] sm:$0xff]
    %v3001 = vld [vmem:[#allocation6 + $0x400] sm:$0xff]
    %v3002 = vld [vmem:[#allocation6 + $0x408] sm:$0xff]
    %v3003 = vld [vmem:[#allocation6 + $0x410] sm:$0xff]
    %v3004 = vld [vmem:[#allocation6 + $0x418] sm:$0xff]
    %v3005 = vld [vmem:[#allocation6 + $0x420] sm:$0xff]
    %v3006 = vld [vmem:[#allocation6 + $0x428] sm:$0xff]
    %v3007 = vld [vmem:[#allocation6 + $0x430] sm:$0xff]
    %v3008 = vld [vmem:[#allocation6 + $0x438] sm:$0xff]
    %v3009 = vld [vmem:[#allocation6 + $0x440] sm:$0xff]
    %v3010 = vld [vmem:[#allocation6 + $0x448] sm:$0xff]
    %v3011 = vld [vmem:[#allocation6 + $0x450] sm:$0xff]
    %v3012 = vld [vmem:[#allocation6 + $0x458] sm:$0xff]
    %v3013 = vld [vmem:[#allocation6 + $0x460] sm:$0xff]
    %v3014 = vld [vmem:[#allocation6 + $0x468] sm:$0xff]
    %v3015 = vld [vmem:[#allocation6 + $0x470] sm:$0xff]
    %v3016 = vld [vmem:[#allocation6 + $0x478] sm:$0xff]
    %v3017 = vld [vmem:[#allocation6 + $0x480] sm:$0xff]
    %v3018 = vld [vmem:[#allocation6 + $0x488] sm:$0xff]
    %v3019 = vld [vmem:[#allocation6 + $0x490] sm:$0xff]
    %v3020 = vld [vmem:[#allocation6 + $0x498] sm:$0xff]
    %v3021 = vld [vmem:[#allocation6 + $0x4a0] sm:$0xff]
    %v3022 = vld [vmem:[#allocation6 + $0x4a8] sm:$0xff]
    %v3023 = vld [vmem:[#allocation6 + $0x4b0] sm:$0xff]
    %v3024 = vld [vmem:[#allocation6 + $0x4b8] sm:$0xff]
    %v3025 = vld [vmem:[#allocation6 + $0x4c0] sm:$0xff]
    %v3026 = vld [vmem:[#allocation6 + $0x4c8] sm:$0xff]
    %v3027 = vld [vmem:[#allocation6 + $0x4d0] sm:$0xff]
    %v3028 = vld [vmem:[#allocation6 + $0x4d8] sm:$0xff]
    %v3029 = vld [vmem:[#allocation6 + $0x4e0] sm:$0xff]
    %v3030 = vld [vmem:[#allocation6 + $0x4e8] sm:$0xff]
    %v3031 = vld [vmem:[#allocation6 + $0x4f0] sm:$0xff]
    %v3032 = vld [vmem:[#allocation6 + $0x4f8] sm:$0xff]
    %v3033 = vld [vmem:[#allocation6 + $0x500] sm:$0xff]
    %v3034 = vld [vmem:[#allocation6 + $0x508] sm:$0xff]
    %v3035 = vld [vmem:[#allocation6 + $0x510] sm:$0xff]
    %v3036 = vld [vmem:[#allocation6 + $0x518] sm:$0xff]
    %v3037 = vld [vmem:[#allocation6 + $0x520] sm:$0xff]
    %v3038 = vld [vmem:[#allocation6 + $0x528] sm:$0xff]
    %v3039 = vld [vmem:[#allocation6 + $0x530] sm:$0xff]
    %v3040 = vld [vmem:[#allocation6 + $0x538] sm:$0xff]
    %v3041 = vld [vmem:[#allocation6 + $0x540] sm:$0xff]
    %v3042 = vld [vmem:[#allocation6 + $0x548] sm:$0xff]
    %v3043 = vld [vmem:[#allocation6 + $0x550] sm:$0xff]
    %v3044 = vld [vmem:[#allocation6 + $0x558] sm:$0xff]
    %v3045 = vld [vmem:[#allocation6 + $0x560] sm:$0xff]
    %v3046 = vld [vmem:[#allocation6 + $0x568] sm:$0xff]
    %v3047 = vld [vmem:[#allocation6 + $0x570] sm:$0xff]
    %v3048 = vld [vmem:[#allocation6 + $0x578] sm:$0xff]
    %v3049 = vld [vmem:[#allocation6 + $0x580] sm:$0xff]
    %v3050 = vld [vmem:[#allocation6 + $0x588] sm:$0xff]
    %v3051 = vld [vmem:[#allocation6 + $0x590] sm:$0xff]
    %v3052 = vld [vmem:[#allocation6 + $0x598] sm:$0xff]
    %v3053 = vld [vmem:[#allocation6 + $0x5a0] sm:$0xff]
    %v3054 = vld [vmem:[#allocation6 + $0x5a8] sm:$0xff]
    %v3055 = vld [vmem:[#allocation6 + $0x5b0] sm:$0xff]
    %v3056 = vld [vmem:[#allocation6 + $0x5b8] sm:$0xff]
    %v3057 = vld [vmem:[#allocation6 + $0x5c0] sm:$0xff]
    %v3058 = vld [vmem:[#allocation6 + $0x5c8] sm:$0xff]
    %v3059 = vld [vmem:[#allocation6 + $0x5d0] sm:$0xff]
    %v3060 = vld [vmem:[#allocation6 + $0x5d8] sm:$0xff]
    %v3061 = vld [vmem:[#allocation6 + $0x5e0] sm:$0xff]
    %v3062 = vld [vmem:[#allocation6 + $0x5e8] sm:$0xff]
    %v3063 = vld [vmem:[#allocation6 + $0x5f0] sm:$0xff]
    %v3064 = vld [vmem:[#allocation6 + $0x5f8] sm:$0xff]
    %v3065 = vld [vmem:[#allocation6 + $0x600] sm:$0xff]
    %v3066 = vld [vmem:[#allocation6 + $0x608] sm:$0xff]
    %v3067 = vld [vmem:[#allocation6 + $0x610] sm:$0xff]
    %v3068 = vld [vmem:[#allocation6 + $0x618] sm:$0xff]
    %v3069 = vld [vmem:[#allocation6 + $0x620] sm:$0xff]
    %v3070 = vld [vmem:[#allocation6 + $0x628] sm:$0xff]
    %v3071 = vld [vmem:[#allocation6 + $0x630] sm:$0xff]
    %v3072 = vld [vmem:[#allocation6 + $0x638] sm:$0xff]
    %v3073 = vld [vmem:[#allocation6 + $0x640] sm:$0xff]
    %v3074 = vld [vmem:[#allocation6 + $0x648] sm:$0xff]
    %v3075 = vld [vmem:[#allocation6 + $0x650] sm:$0xff]
    %v3076 = vld [vmem:[#allocation6 + $0x658] sm:$0xff]
    %v3077 = vld [vmem:[#allocation6 + $0x660] sm:$0xff]
    %v3078 = vld [vmem:[#allocation6 + $0x668] sm:$0xff]
    %v3079 = vld [vmem:[#allocation6 + $0x670] sm:$0xff]
    %v3080 = vld [vmem:[#allocation6 + $0x678] sm:$0xff]
    %v3081 = vld [vmem:[#allocation6 + $0x680] sm:$0xff]
    %v3082 = vld [vmem:[#allocation6 + $0x688] sm:$0xff]
    %v3083 = vld [vmem:[#allocation6 + $0x690] sm:$0xff]
    %v3084 = vld [vmem:[#allocation6 + $0x698] sm:$0xff]
    %v3085 = vld [vmem:[#allocation6 + $0x6a0] sm:$0xff]
    %v3086 = vld [vmem:[#allocation6 + $0x6a8] sm:$0xff]
    %v3087 = vld [vmem:[#allocation6 + $0x6b0] sm:$0xff]
    %v3088 = vld [vmem:[#allocation6 + $0x6b8] sm:$0xff]
    %v3089 = vld [vmem:[#allocation6 + $0x6c0] sm:$0xff]
    %v3090 = vld [vmem:[#allocation6 + $0x6c8] sm:$0xff]
    %v3091 = vld [vmem:[#allocation6 + $0x6d0] sm:$0xff]
    %v3092 = vld [vmem:[#allocation6 + $0x6d8] sm:$0xff]
    %v3093 = vld [vmem:[#allocation6 + $0x6e0] sm:$0xff]
    %v3094 = vld [vmem:[#allocation6 + $0x6e8] sm:$0xff]
    %v3095 = vld [vmem:[#allocation6 + $0x6f0] sm:$0xff]
    %v3096 = vld [vmem:[#allocation6 + $0x6f8] sm:$0xff]
    %v3097 = vld [vmem:[#allocation6 + $0x700] sm:$0xff]
    %v3098 = vld [vmem:[#allocation6 + $0x708] sm:$0xff]
    %v3099 = vld [vmem:[#allocation6 + $0x710] sm:$0xff]
    %v3100 = vld [vmem:[#allocation6 + $0x718] sm:$0xff]
    %v3101 = vld [vmem:[#allocation6 + $0x720] sm:$0xff]
    %v3102 = vld [vmem:[#allocation6 + $0x728] sm:$0xff]
    %v3103 = vld [vmem:[#allocation6 + $0x730] sm:$0xff]
    %v3104 = vld [vmem:[#allocation6 + $0x738] sm:$0xff]
    %v3105 = vld [vmem:[#allocation6 + $0x740] sm:$0xff]
    %v3106 = vld [vmem:[#allocation6 + $0x748] sm:$0xff]
    %v3107 = vld [vmem:[#allocation6 + $0x750] sm:$0xff]
    %v3108 = vld [vmem:[#allocation6 + $0x758] sm:$0xff]
    %v3109 = vld [vmem:[#allocation6 + $0x760] sm:$0xff]
    %v3110 = vld [vmem:[#allocation6 + $0x768] sm:$0xff]
    %v3111 = vld [vmem:[#allocation6 + $0x770] sm:$0xff]
    %v3112 = vld [vmem:[#allocation6 + $0x778] sm:$0xff]
    %v3113 = vld [vmem:[#allocation6 + $0x780] sm:$0xff]
    %v3114 = vld [vmem:[#allocation6 + $0x788] sm:$0xff]
    %v3115 = vld [vmem:[#allocation6 + $0x790] sm:$0xff]
    %v3116 = vld [vmem:[#allocation6 + $0x798] sm:$0xff]
    %v3117 = vld [vmem:[#allocation6 + $0x7a0] sm:$0xff]
    %v3118 = vld [vmem:[#allocation6 + $0x7a8] sm:$0xff]
    %v3119 = vld [vmem:[#allocation6 + $0x7b0] sm:$0xff]
    %v3120 = vld [vmem:[#allocation6 + $0x7b8] sm:$0xff]
    %v3121 = vld [vmem:[#allocation6 + $0x7c0] sm:$0xff]
    %v3122 = vld [vmem:[#allocation6 + $0x7c8] sm:$0xff]
    %v3123 = vld [vmem:[#allocation6 + $0x7d0] sm:$0xff]
    %v3124 = vld [vmem:[#allocation6 + $0x7d8] sm:$0xff]
    %v3125 = vld [vmem:[#allocation6 + $0x7e0] sm:$0xff]
    %v3126 = vld [vmem:[#allocation6 + $0x7e8] sm:$0xff]
    %v3127 = vld [vmem:[#allocation6 + $0x7f0] sm:$0xff]
    %v3128 = vld [vmem:[#allocation6 + $0x7f8] sm:$0xff]
    %v3129 = vld [vmem:[#allocation6 + $0x800] sm:$0xff]
    %v3130 = vld [vmem:[#allocation6 + $0x808] sm:$0xff]
    %v3131 = vld [vmem:[#allocation6 + $0x810] sm:$0xff]
    %v3132 = vld [vmem:[#allocation6 + $0x818] sm:$0xff]
    %v3133 = vld [vmem:[#allocation6 + $0x820] sm:$0xff]
    %v3134 = vld [vmem:[#allocation6 + $0x828] sm:$0xff]
    %v3135 = vld [vmem:[#allocation6 + $0x830] sm:$0xff]
    %v3136 = vld [vmem:[#allocation6 + $0x838] sm:$0xff]
    %v3137 = vld [vmem:[#allocation6 + $0x840] sm:$0xff]
    %v3138 = vld [vmem:[#allocation6 + $0x848] sm:$0xff]
    %v3139 = vld [vmem:[#allocation6 + $0x850] sm:$0xff]
    %v3140 = vld [vmem:[#allocation6 + $0x858] sm:$0xff]
    %v3141 = vld [vmem:[#allocation6 + $0x860] sm:$0xff]
    %v3142 = vld [vmem:[#allocation6 + $0x868] sm:$0xff]
    %v3143 = vld [vmem:[#allocation6 + $0x870] sm:$0xff]
    %v3144 = vld [vmem:[#allocation6 + $0x878] sm:$0xff]
    %v3145 = vld [vmem:[#allocation6 + $0x880] sm:$0xff]
    %v3146 = vld [vmem:[#allocation6 + $0x888] sm:$0xff]
    %v3147 = vld [vmem:[#allocation6 + $0x890] sm:$0xff]
    %v3148 = vld [vmem:[#allocation6 + $0x898] sm:$0xff]
    %v3149 = vld [vmem:[#allocation6 + $0x8a0] sm:$0xff]
    %v3150 = vld [vmem:[#allocation6 + $0x8a8] sm:$0xff]
    %v3151 = vld [vmem:[#allocation6 + $0x8b0] sm:$0xff]
    %v3152 = vld [vmem:[#allocation6 + $0x8b8] sm:$0xff]
    %v3153 = vld [vmem:[#allocation6 + $0x8c0] sm:$0xff]
    %v3154 = vld [vmem:[#allocation6 + $0x8c8] sm:$0xff]
    %v3155 = vld [vmem:[#allocation6 + $0x8d0] sm:$0xff]
    %v3156 = vld [vmem:[#allocation6 + $0x8d8] sm:$0xff]
    %v3157 = vld [vmem:[#allocation6 + $0x8e0] sm:$0xff]
    %v3158 = vld [vmem:[#allocation6 + $0x8e8] sm:$0xff]
    %v3159 = vld [vmem:[#allocation6 + $0x8f0] sm:$0xff]
    %v3160 = vld [vmem:[#allocation6 + $0x8f8] sm:$0xff]
    %v3161 = vld [vmem:[#allocation6 + $0x900] sm:$0xff]
    %v3162 = vld [vmem:[#allocation6 + $0x908] sm:$0xff]
    %v3163 = vld [vmem:[#allocation6 + $0x910] sm:$0xff]
    %v3164 = vld [vmem:[#allocation6 + $0x918] sm:$0xff]
    %v3165 = vld [vmem:[#allocation6 + $0x920] sm:$0xff]
    %v3166 = vld [vmem:[#allocation6 + $0x928] sm:$0xff]
    %v3167 = vld [vmem:[#allocation6 + $0x930] sm:$0xff]
    %v3168 = vld [vmem:[#allocation6 + $0x938] sm:$0xff]
    %v3169 = vld [vmem:[#allocation6 + $0x940] sm:$0xff]
    %v3170 = vld [vmem:[#allocation6 + $0x948] sm:$0xff]
    %v3171 = vld [vmem:[#allocation6 + $0x950] sm:$0xff]
    %v3172 = vld [vmem:[#allocation6 + $0x958] sm:$0xff]
    %v3173 = vld [vmem:[#allocation6 + $0x960] sm:$0xff]
    %v3174 = vld [vmem:[#allocation6 + $0x968] sm:$0xff]
    %v3175 = vld [vmem:[#allocation6 + $0x970] sm:$0xff]
    %v3176 = vld [vmem:[#allocation6 + $0x978] sm:$0xff]
    %v3177 = vld [vmem:[#allocation6 + $0x980] sm:$0xff]
    %v3178 = vld [vmem:[#allocation6 + $0x988] sm:$0xff]
    %v3179 = vld [vmem:[#allocation6 + $0x990] sm:$0xff]
    %v3180 = vld [vmem:[#allocation6 + $0x998] sm:$0xff]
    %v3181 = vld [vmem:[#allocation6 + $0x9a0] sm:$0xff]
    %v3182 = vld [vmem:[#allocation6 + $0x9a8] sm:$0xff]
    %v3183 = vld [vmem:[#allocation6 + $0x9b0] sm:$0xff]
    %v3184 = vld [vmem:[#allocation6 + $0x9b8] sm:$0xff]
    %v3185 = vld [vmem:[#allocation6 + $0x9c0] sm:$0xff]
    %v3186 = vld [vmem:[#allocation6 + $0x9c8] sm:$0xff]
    %v3187 = vld [vmem:[#allocation6 + $0x9d0] sm:$0xff]
    %v3188 = vld [vmem:[#allocation6 + $0x9d8] sm:$0xff]
    %v3189 = vld [vmem:[#allocation6 + $0x9e0] sm:$0xff]
    %v3190 = vld [vmem:[#allocation6 + $0x9e8] sm:$0xff]
    %v3191 = vld [vmem:[#allocation6 + $0x9f0] sm:$0xff]
    %v3192 = vld [vmem:[#allocation6 + $0x9f8] sm:$0xff]
    %v3193 = vld [vmem:[#allocation6 + $0xa00] sm:$0xff]
    %v3194 = vld [vmem:[#allocation6 + $0xa08] sm:$0xff]
    %v3195 = vld [vmem:[#allocation6 + $0xa10] sm:$0xff]
    %v3196 = vld [vmem:[#allocation6 + $0xa18] sm:$0xff]
    %v3197 = vld [vmem:[#allocation6 + $0xa20] sm:$0xff]
    %v3198 = vld [vmem:[#allocation6 + $0xa28] sm:$0xff]
    %v3199 = vld [vmem:[#allocation6 + $0xa30] sm:$0xff]
    %v3200 = vld [vmem:[#allocation6 + $0xa38] sm:$0xff]
    %v3201 = vld [vmem:[#allocation6 + $0xa40] sm:$0xff]
    %v3202 = vld [vmem:[#allocation6 + $0xa48] sm:$0xff]
    %v3203 = vld [vmem:[#allocation6 + $0xa50] sm:$0xff]
    %v3204 = vld [vmem:[#allocation6 + $0xa58] sm:$0xff]
    %v3205 = vld [vmem:[#allocation6 + $0xa60] sm:$0xff]
    %v3206 = vld [vmem:[#allocation6 + $0xa68] sm:$0xff]
    %v3207 = vld [vmem:[#allocation6 + $0xa70] sm:$0xff]
    %v3208 = vld [vmem:[#allocation6 + $0xa78] sm:$0xff]
    %v3209 = vld [vmem:[#allocation6 + $0xa80] sm:$0xff]
    %v3210 = vld [vmem:[#allocation6 + $0xa88] sm:$0xff]
    %v3211 = vld [vmem:[#allocation6 + $0xa90] sm:$0xff]
    %v3212 = vld [vmem:[#allocation6 + $0xa98] sm:$0xff]
    %v3213 = vld [vmem:[#allocation6 + $0xaa0] sm:$0xff]
    %v3214 = vld [vmem:[#allocation6 + $0xaa8] sm:$0xff]
    %v3215 = vld [vmem:[#allocation6 + $0xab0] sm:$0xff]
    %v3216 = vld [vmem:[#allocation6 + $0xab8] sm:$0xff]
    %v3217 = vld [vmem:[#allocation6 + $0xac0] sm:$0xff]
    %v3218 = vld [vmem:[#allocation6 + $0xac8] sm:$0xff]
    %v3219 = vld [vmem:[#allocation6 + $0xad0] sm:$0xff]
    %v3220 = vld [vmem:[#allocation6 + $0xad8] sm:$0xff]
    %v3221 = vld [vmem:[#allocation6 + $0xae0] sm:$0xff]
    %v3222 = vld [vmem:[#allocation6 + $0xae8] sm:$0xff]
    %v3223 = vld [vmem:[#allocation6 + $0xaf0] sm:$0xff]
    %v3224 = vld [vmem:[#allocation6 + $0xaf8] sm:$0xff]
    %v3225 = vld [vmem:[#allocation6 + $0xb00] sm:$0xff]
    %v3226 = vld [vmem:[#allocation6 + $0xb08] sm:$0xff]
    %v3227 = vld [vmem:[#allocation6 + $0xb10] sm:$0xff]
    %v3228 = vld [vmem:[#allocation6 + $0xb18] sm:$0xff]
    %v3229 = vld [vmem:[#allocation6 + $0xb20] sm:$0xff]
    %v3230 = vld [vmem:[#allocation6 + $0xb28] sm:$0xff]
    %v3231 = vld [vmem:[#allocation6 + $0xb30] sm:$0xff]
    %v3232 = vld [vmem:[#allocation6 + $0xb38] sm:$0xff]
    %v3233 = vld [vmem:[#allocation6 + $0xb40] sm:$0xff]
    %v3234 = vld [vmem:[#allocation6 + $0xb48] sm:$0xff]
    %v3235 = vld [vmem:[#allocation6 + $0xb50] sm:$0xff]
    %v3236 = vld [vmem:[#allocation6 + $0xb58] sm:$0xff]
    %v3237 = vld [vmem:[#allocation6 + $0xb60] sm:$0xff]
    %v3238 = vld [vmem:[#allocation6 + $0xb68] sm:$0xff]
    %v3239 = vld [vmem:[#allocation6 + $0xb70] sm:$0xff]
    %v3240 = vld [vmem:[#allocation6 + $0xb78] sm:$0xff]
    %v3241 = vld [vmem:[#allocation6 + $0xb80] sm:$0xff]
    %v3242 = vld [vmem:[#allocation6 + $0xb88] sm:$0xff]
    %v3243 = vld [vmem:[#allocation6 + $0xb90] sm:$0xff]
    %v3244 = vld [vmem:[#allocation6 + $0xb98] sm:$0xff]
    %v3245 = vld [vmem:[#allocation6 + $0xba0] sm:$0xff]
    %v3246 = vld [vmem:[#allocation6 + $0xba8] sm:$0xff]
    %v3247 = vld [vmem:[#allocation6 + $0xbb0] sm:$0xff]
    %v3248 = vld [vmem:[#allocation6 + $0xbb8] sm:$0xff]
    %v3249 = vld [vmem:[#allocation6 + $0xbc0] sm:$0xff]
    %v3250 = vld [vmem:[#allocation6 + $0xbc8] sm:$0xff]
    %v3251 = vld [vmem:[#allocation6 + $0xbd0] sm:$0xff]
    %v3252 = vld [vmem:[#allocation6 + $0xbd8] sm:$0xff]
    %v3253 = vld [vmem:[#allocation6 + $0xbe0] sm:$0xff]
    %v3254 = vld [vmem:[#allocation6 + $0xbe8] sm:$0xff]
    %v3255 = vld [vmem:[#allocation6 + $0xbf0] sm:$0xff]
    %v3256 = vld [vmem:[#allocation6 + $0xbf8] sm:$0xff]
    %v3257 = vld [vmem:[#allocation6 + $0xc00] sm:$0xff]
    %v3258 = vld [vmem:[#allocation6 + $0xc08] sm:$0xff]
    %v3259 = vld [vmem:[#allocation6 + $0xc10] sm:$0xff]
    %v3260 = vld [vmem:[#allocation6 + $0xc18] sm:$0xff]
    %v3261 = vld [vmem:[#allocation6 + $0xc20] sm:$0xff]
    %v3262 = vld [vmem:[#allocation6 + $0xc28] sm:$0xff]
    %v3263 = vld [vmem:[#allocation6 + $0xc30] sm:$0xff]
    %v3264 = vld [vmem:[#allocation6 + $0xc38] sm:$0xff]
    %v3265 = vld [vmem:[#allocation6 + $0xc40] sm:$0xff]
    %v3266 = vld [vmem:[#allocation6 + $0xc48] sm:$0xff]
    %v3267 = vld [vmem:[#allocation6 + $0xc50] sm:$0xff]
    %v3268 = vld [vmem:[#allocation6 + $0xc58] sm:$0xff]
    %v3269 = vld [vmem:[#allocation6 + $0xc60] sm:$0xff]
    %v3270 = vld [vmem:[#allocation6 + $0xc68] sm:$0xff]
    %v3271 = vld [vmem:[#allocation6 + $0xc70] sm:$0xff]
    %v3272 = vld [vmem:[#allocation6 + $0xc78] sm:$0xff]
    %v3273 = vld [vmem:[#allocation6 + $0xc80] sm:$0xff]
    %v3274 = vld [vmem:[#allocation6 + $0xc88] sm:$0xff]
    %v3275 = vld [vmem:[#allocation6 + $0xc90] sm:$0xff]
    %v3276 = vld [vmem:[#allocation6 + $0xc98] sm:$0xff]
    %v3277 = vld [vmem:[#allocation6 + $0xca0] sm:$0xff]
    %v3278 = vld [vmem:[#allocation6 + $0xca8] sm:$0xff]
    %v3279 = vld [vmem:[#allocation6 + $0xcb0] sm:$0xff]
    %v3280 = vld [vmem:[#allocation6 + $0xcb8] sm:$0xff]
    %v3281 = vld [vmem:[#allocation6 + $0xcc0] sm:$0xff]
    %v3282 = vld [vmem:[#allocation6 + $0xcc8] sm:$0xff]
    %v3283 = vld [vmem:[#allocation6 + $0xcd0] sm:$0xff]
    %v3284 = vld [vmem:[#allocation6 + $0xcd8] sm:$0xff]
    %v3285 = vld [vmem:[#allocation6 + $0xce0] sm:$0xff]
    %v3286 = vld [vmem:[#allocation6 + $0xce8] sm:$0xff]
    %v3287 = vld [vmem:[#allocation6 + $0xcf0] sm:$0xff]
    %v3288 = vld [vmem:[#allocation6 + $0xcf8] sm:$0xff]
    %v3289 = vld [vmem:[#allocation6 + $0xd00] sm:$0xff]
    %v3290 = vld [vmem:[#allocation6 + $0xd08] sm:$0xff]
    %v3291 = vld [vmem:[#allocation6 + $0xd10] sm:$0xff]
    %v3292 = vld [vmem:[#allocation6 + $0xd18] sm:$0xff]
    %v3293 = vld [vmem:[#allocation6 + $0xd20] sm:$0xff]
    %v3294 = vld [vmem:[#allocation6 + $0xd28] sm:$0xff]
    %v3295 = vld [vmem:[#allocation6 + $0xd30] sm:$0xff]
    %v3296 = vld [vmem:[#allocation6 + $0xd38] sm:$0xff]
    %v3297 = vld [vmem:[#allocation6 + $0xd40] sm:$0xff]
    %v3298 = vld [vmem:[#allocation6 + $0xd48] sm:$0xff]
    %v3299 = vld [vmem:[#allocation6 + $0xd50] sm:$0xff]
    %v3300 = vld [vmem:[#allocation6 + $0xd58] sm:$0xff]
    %v3301 = vld [vmem:[#allocation6 + $0xd60] sm:$0xff]
    %v3302 = vld [vmem:[#allocation6 + $0xd68] sm:$0xff]
    %v3303 = vld [vmem:[#allocation6 + $0xd70] sm:$0xff]
    %v3304 = vld [vmem:[#allocation6 + $0xd78] sm:$0xff]
    %v3305 = vld [vmem:[#allocation6 + $0xd80] sm:$0xff]
    %v3306 = vld [vmem:[#allocation6 + $0xd88] sm:$0xff]
    %v3307 = vld [vmem:[#allocation6 + $0xd90] sm:$0xff]
    %v3308 = vld [vmem:[#allocation6 + $0xd98] sm:$0xff]
    %v3309 = vld [vmem:[#allocation6 + $0xda0] sm:$0xff]
    %v3310 = vld [vmem:[#allocation6 + $0xda8] sm:$0xff]
    %v3311 = vld [vmem:[#allocation6 + $0xdb0] sm:$0xff]
    %v3312 = vld [vmem:[#allocation6 + $0xdb8] sm:$0xff]
    %v3313 = vld [vmem:[#allocation6 + $0xdc0] sm:$0xff]
    %v3314 = vld [vmem:[#allocation6 + $0xdc8] sm:$0xff]
    %v3315 = vld [vmem:[#allocation6 + $0xdd0] sm:$0xff]
    %v3316 = vld [vmem:[#allocation6 + $0xdd8] sm:$0xff]
    %v3317 = vld [vmem:[#allocation6 + $0xde0] sm:$0xff]
    %v3318 = vld [vmem:[#allocation6 + $0xde8] sm:$0xff]
    %v3319 = vld [vmem:[#allocation6 + $0xdf0] sm:$0xff]
    %v3320 = vld [vmem:[#allocation6 + $0xdf8] sm:$0xff]
    %v3321 = vld [vmem:[#allocation6 + $0xe00] sm:$0xff]
    %v3322 = vld [vmem:[#allocation6 + $0xe08] sm:$0xff]
    %v3323 = vld [vmem:[#allocation6 + $0xe10] sm:$0xff]
    %v3324 = vld [vmem:[#allocation6 + $0xe18] sm:$0xff]
    %v3325 = vld [vmem:[#allocation6 + $0xe20] sm:$0xff]
    %v3326 = vld [vmem:[#allocation6 + $0xe28] sm:$0xff]
    %v3327 = vld [vmem:[#allocation6 + $0xe30] sm:$0xff]
    %v3328 = vld [vmem:[#allocation6 + $0xe38] sm:$0xff]
    %v3329 = vld [vmem:[#allocation6 + $0xe40] sm:$0xff]
    %v3330 = vld [vmem:[#allocation6 + $0xe48] sm:$0xff]
    %v3331 = vld [vmem:[#allocation6 + $0xe50] sm:$0xff]
    %v3332 = vld [vmem:[#allocation6 + $0xe58] sm:$0xff]
    %v3333 = vld [vmem:[#allocation6 + $0xe60] sm:$0xff]
    %v3334 = vld [vmem:[#allocation6 + $0xe68] sm:$0xff]
    %v3335 = vld [vmem:[#allocation6 + $0xe70] sm:$0xff]
    %v3336 = vld [vmem:[#allocation6 + $0xe78] sm:$0xff]
    %v3337 = vld [vmem:[#allocation6 + $0xe80] sm:$0xff]
    %v3338 = vld [vmem:[#allocation6 + $0xe88] sm:$0xff]
    %v3339 = vld [vmem:[#allocation6 + $0xe90] sm:$0xff]
    %v3340 = vld [vmem:[#allocation6 + $0xe98] sm:$0xff]
    %v3341 = vld [vmem:[#allocation6 + $0xea0] sm:$0xff]
    %v3342 = vld [vmem:[#allocation6 + $0xea8] sm:$0xff]
    %v3343 = vld [vmem:[#allocation6 + $0xeb0] sm:$0xff]
    %v3344 = vld [vmem:[#allocation6 + $0xeb8] sm:$0xff]
    %v3345 = vld [vmem:[#allocation6 + $0xec0] sm:$0xff]
    %v3346 = vld [vmem:[#allocation6 + $0xec8] sm:$0xff]
    %v3347 = vld [vmem:[#allocation6 + $0xed0] sm:$0xff]
    %v3348 = vld [vmem:[#allocation6 + $0xed8] sm:$0xff]
    %v3349 = vld [vmem:[#allocation6 + $0xee0] sm:$0xff]
    %v3350 = vld [vmem:[#allocation6 + $0xee8] sm:$0xff]
    %v3351 = vld [vmem:[#allocation6 + $0xef0] sm:$0xff]
    %v3352 = vld [vmem:[#allocation6 + $0xef8] sm:$0xff]
    %v3353 = vld [vmem:[#allocation6 + $0xf00] sm:$0xff]
    %v3354 = vld [vmem:[#allocation6 + $0xf08] sm:$0xff]
    %v3355 = vld [vmem:[#allocation6 + $0xf10] sm:$0xff]
    %v3356 = vld [vmem:[#allocation6 + $0xf18] sm:$0xff]
    %v3357 = vld [vmem:[#allocation6 + $0xf20] sm:$0xff]
    %v3358 = vld [vmem:[#allocation6 + $0xf28] sm:$0xff]
    %v3359 = vld [vmem:[#allocation6 + $0xf30] sm:$0xff]
    %v3360 = vld [vmem:[#allocation6 + $0xf38] sm:$0xff]
    %v3361 = vld [vmem:[#allocation6 + $0xf40] sm:$0xff]
    %v3362 = vld [vmem:[#allocation6 + $0xf48] sm:$0xff]
    %v3363 = vld [vmem:[#allocation6 + $0xf50] sm:$0xff]
    %v3364 = vld [vmem:[#allocation6 + $0xf58] sm:$0xff]
    %v3365 = vld [vmem:[#allocation6 + $0xf60] sm:$0xff]
    %v3366 = vld [vmem:[#allocation6 + $0xf68] sm:$0xff]
    %v3367 = vld [vmem:[#allocation6 + $0xf70] sm:$0xff]
    %v3368 = vld [vmem:[#allocation6 + $0xf78] sm:$0xff]
    %v3369 = vld [vmem:[#allocation6 + $0xf80] sm:$0xff]
    %v3370 = vld [vmem:[#allocation6 + $0xf88] sm:$0xff]
    %v3371 = vld [vmem:[#allocation6 + $0xf90] sm:$0xff]
    %v3372 = vld [vmem:[#allocation6 + $0xf98] sm:$0xff]
    %v3373 = vld [vmem:[#allocation6 + $0xfa0] sm:$0xff]
    %v3374 = vld [vmem:[#allocation6 + $0xfa8] sm:$0xff]
    %v3375 = vld [vmem:[#allocation6 + $0xfb0] sm:$0xff]
    %v3376 = vld [vmem:[#allocation6 + $0xfb8] sm:$0xff]
    %v3377 = vld [vmem:[#allocation6 + $0xfc0] sm:$0xff]
    %v3378 = vld [vmem:[#allocation6 + $0xfc8] sm:$0xff]
    %v3379 = vld [vmem:[#allocation6 + $0xfd0] sm:$0xff]
    %v3380 = vld [vmem:[#allocation6 + $0xfd8] sm:$0xff]
    %v3381 = vld [vmem:[#allocation6 + $0xfe0] sm:$0xff]
    %v3382 = vld [vmem:[#allocation6 + $0xfe8] sm:$0xff]
    %v3383 = vld [vmem:[#allocation6 + $0xff0] sm:$0xff]
    %v3384 = vld [vmem:[#allocation6 + $0xff8] sm:$0xff]
    %v3385 = vld [vmem:[#allocation7] sm:$0xff]
    %v3387 = vlaneseq
    %v3388 = vshrl.u32 %v3387, 7
    %v3389 = vsub.s32 0, %v3388
    %v3390 = vrot.slane %v3385, %v3389
    %v3391 = vlaneseq
    %v3392 = vshrl.u32 %v3391, 7
    %v3393 = vsub.s32 1, %v3392
    %v3394 = vrot.slane %v3385, %v3393
    %v3395 = vlaneseq
    %v3396 = vshrl.u32 %v3395, 7
    %v3397 = vsub.s32 2, %v3396
    %v3398 = vrot.slane %v3385, %v3397
    %v3399 = vlaneseq
    %v3400 = vshrl.u32 %v3399, 7
    %v3401 = vsub.s32 3, %v3400
    %v3402 = vrot.slane %v3385, %v3401
    %v3403 = vlaneseq
    %v3404 = vshrl.u32 %v3403, 7
    %v3405 = vsub.s32 4, %v3404
    %v3406 = vrot.slane %v3385, %v3405
    %v3407 = vlaneseq
    %v3408 = vshrl.u32 %v3407, 7
    %v3409 = vsub.s32 5, %v3408
    %v3410 = vrot.slane %v3385, %v3409
    %v3411 = vlaneseq
    %v3412 = vshrl.u32 %v3411, 7
    %v3413 = vsub.s32 6, %v3412
    %v3414 = vrot.slane %v3385, %v3413
    %v3415 = vlaneseq
    %v3416 = vshrl.u32 %v3415, 7
    %v3417 = vsub.s32 7, %v3416
    %v3418 = vrot.slane %v3385, %v3417
    %v3939 = vunpack.c.l.b16 %v2873
    %v3940 = vunpack.c.h.b16 %v2873
    %v3941 = vunpack.c.l.b16 %v2874
    %v3942 = vunpack.c.h.b16 %v2874
    %v3943 = vunpack.c.l.b16 %v2875
    %v3944 = vunpack.c.h.b16 %v2875
    %v3945 = vunpack.c.l.b16 %v2876
    %v3946 = vunpack.c.h.b16 %v2876
    %v3947 = vunpack.c.l.b16 %v2877
    %v3948 = vunpack.c.h.b16 %v2877
    %v3949 = vunpack.c.l.b16 %v2878
    %v3950 = vunpack.c.h.b16 %v2878
    %v3951 = vunpack.c.l.b16 %v2879
    %v3952 = vunpack.c.h.b16 %v2879
    %v3953 = vunpack.c.l.b16 %v2880
    %v3954 = vunpack.c.h.b16 %v2880
    %v3955 = vunpack.c.l.b16 %v2881
    %v3956 = vunpack.c.h.b16 %v2881
    %v3957 = vunpack.c.l.b16 %v2882
    %v3958 = vunpack.c.h.b16 %v2882
    %v3959 = vunpack.c.l.b16 %v2883
    %v3960 = vunpack.c.h.b16 %v2883
    %v3961 = vunpack.c.l.b16 %v2884
    %v3962 = vunpack.c.h.b16 %v2884
    %v3963 = vunpack.c.l.b16 %v2885
    %v3964 = vunpack.c.h.b16 %v2885
    %v3965 = vunpack.c.l.b16 %v2886
    %v3966 = vunpack.c.h.b16 %v2886
    %v3967 = vunpack.c.l.b16 %v2887
    %v3968 = vunpack.c.h.b16 %v2887
    %v3969 = vunpack.c.l.b16 %v2888
    %v3970 = vunpack.c.h.b16 %v2888
    %v3971 = vunpack.c.l.b16 %v2889
    %v3972 = vunpack.c.h.b16 %v2889
    %v3973 = vunpack.c.l.b16 %v2890
    %v3974 = vunpack.c.h.b16 %v2890
    %v3975 = vunpack.c.l.b16 %v2891
    %v3976 = vunpack.c.h.b16 %v2891
    %v3977 = vunpack.c.l.b16 %v2892
    %v3978 = vunpack.c.h.b16 %v2892
    %v3979 = vunpack.c.l.b16 %v2893
    %v3980 = vunpack.c.h.b16 %v2893
    %v3981 = vunpack.c.l.b16 %v2894
    %v3982 = vunpack.c.h.b16 %v2894
    %v3983 = vunpack.c.l.b16 %v2895
    %v3984 = vunpack.c.h.b16 %v2895
    %v3985 = vunpack.c.l.b16 %v2896
    %v3986 = vunpack.c.h.b16 %v2896
    %v3987 = vunpack.c.l.b16 %v2897
    %v3988 = vunpack.c.h.b16 %v2897
    %v3989 = vunpack.c.l.b16 %v2898
    %v3990 = vunpack.c.h.b16 %v2898
    %v3991 = vunpack.c.l.b16 %v2899
    %v3992 = vunpack.c.h.b16 %v2899
    %v3993 = vunpack.c.l.b16 %v2900
    %v3994 = vunpack.c.h.b16 %v2900
    %v3995 = vunpack.c.l.b16 %v2901
    %v3996 = vunpack.c.h.b16 %v2901
    %v3997 = vunpack.c.l.b16 %v2902
    %v3998 = vunpack.c.h.b16 %v2902
    %v3999 = vunpack.c.l.b16 %v2903
    %v4000 = vunpack.c.h.b16 %v2903
    %v4001 = vunpack.c.l.b16 %v2904
    %v4002 = vunpack.c.h.b16 %v2904
    %v4003 = vunpack.c.l.b16 %v2905
    %v4004 = vunpack.c.h.b16 %v2905
    %v4005 = vunpack.c.l.b16 %v2906
    %v4006 = vunpack.c.h.b16 %v2906
    %v4007 = vunpack.c.l.b16 %v2907
    %v4008 = vunpack.c.h.b16 %v2907
    %v4009 = vunpack.c.l.b16 %v2908
    %v4010 = vunpack.c.h.b16 %v2908
    %v4011 = vunpack.c.l.b16 %v2909
    %v4012 = vunpack.c.h.b16 %v2909
    %v4013 = vunpack.c.l.b16 %v2910
    %v4014 = vunpack.c.h.b16 %v2910
    %v4015 = vunpack.c.l.b16 %v2911
    %v4016 = vunpack.c.h.b16 %v2911
    %v4017 = vunpack.c.l.b16 %v2912
    %v4018 = vunpack.c.h.b16 %v2912
    %v4019 = vunpack.c.l.b16 %v2913
    %v4020 = vunpack.c.h.b16 %v2913
    %v4021 = vunpack.c.l.b16 %v2914
    %v4022 = vunpack.c.h.b16 %v2914
    %v4023 = vunpack.c.l.b16 %v2915
    %v4024 = vunpack.c.h.b16 %v2915
    %v4025 = vunpack.c.l.b16 %v2916
    %v4026 = vunpack.c.h.b16 %v2916
    %v4027 = vunpack.c.l.b16 %v2917
    %v4028 = vunpack.c.h.b16 %v2917
    %v4029 = vunpack.c.l.b16 %v2918
    %v4030 = vunpack.c.h.b16 %v2918
    %v4031 = vunpack.c.l.b16 %v2919
    %v4032 = vunpack.c.h.b16 %v2919
    %v4033 = vunpack.c.l.b16 %v2920
    %v4034 = vunpack.c.h.b16 %v2920
    %v4035 = vunpack.c.l.b16 %v2921
    %v4036 = vunpack.c.h.b16 %v2921
    %v4037 = vunpack.c.l.b16 %v2922
    %v4038 = vunpack.c.h.b16 %v2922
    %v4039 = vunpack.c.l.b16 %v2923
    %v4040 = vunpack.c.h.b16 %v2923
    %v4041 = vunpack.c.l.b16 %v2924
    %v4042 = vunpack.c.h.b16 %v2924
    %v4043 = vunpack.c.l.b16 %v2925
    %v4044 = vunpack.c.h.b16 %v2925
    %v4045 = vunpack.c.l.b16 %v2926
    %v4046 = vunpack.c.h.b16 %v2926
    %v4047 = vunpack.c.l.b16 %v2927
    %v4048 = vunpack.c.h.b16 %v2927
    %v4049 = vunpack.c.l.b16 %v2928
    %v4050 = vunpack.c.h.b16 %v2928
    %v4051 = vunpack.c.l.b16 %v2929
    %v4052 = vunpack.c.h.b16 %v2929
    %v4053 = vunpack.c.l.b16 %v2930
    %v4054 = vunpack.c.h.b16 %v2930
    %v4055 = vunpack.c.l.b16 %v2931
    %v4056 = vunpack.c.h.b16 %v2931
    %v4057 = vunpack.c.l.b16 %v2932
    %v4058 = vunpack.c.h.b16 %v2932
    %v4059 = vunpack.c.l.b16 %v2933
    %v4060 = vunpack.c.h.b16 %v2933
    %v4061 = vunpack.c.l.b16 %v2934
    %v4062 = vunpack.c.h.b16 %v2934
    %v4063 = vunpack.c.l.b16 %v2935
    %v4064 = vunpack.c.h.b16 %v2935
    %v4065 = vunpack.c.l.b16 %v2936
    %v4066 = vunpack.c.h.b16 %v2936
    %v4067 = vunpack.c.l.b16 %v2937
    %v4068 = vunpack.c.h.b16 %v2937
    %v4069 = vunpack.c.l.b16 %v2938
    %v4070 = vunpack.c.h.b16 %v2938
    %v4071 = vunpack.c.l.b16 %v2939
    %v4072 = vunpack.c.h.b16 %v2939
    %v4073 = vunpack.c.l.b16 %v2940
    %v4074 = vunpack.c.h.b16 %v2940
    %v4075 = vunpack.c.l.b16 %v2941
    %v4076 = vunpack.c.h.b16 %v2941
    %v4077 = vunpack.c.l.b16 %v2942
    %v4078 = vunpack.c.h.b16 %v2942
    %v4079 = vunpack.c.l.b16 %v2943
    %v4080 = vunpack.c.h.b16 %v2943
    %v4081 = vunpack.c.l.b16 %v2944
    %v4082 = vunpack.c.h.b16 %v2944
    %v4083 = vunpack.c.l.b16 %v2945
    %v4084 = vunpack.c.h.b16 %v2945
    %v4085 = vunpack.c.l.b16 %v2946
    %v4086 = vunpack.c.h.b16 %v2946
    %v4087 = vunpack.c.l.b16 %v2947
    %v4088 = vunpack.c.h.b16 %v2947
    %v4089 = vunpack.c.l.b16 %v2948
    %v4090 = vunpack.c.h.b16 %v2948
    %v4091 = vunpack.c.l.b16 %v2949
    %v4092 = vunpack.c.h.b16 %v2949
    %v4093 = vunpack.c.l.b16 %v2950
    %v4094 = vunpack.c.h.b16 %v2950
    %v4095 = vunpack.c.l.b16 %v2951
    %v4096 = vunpack.c.h.b16 %v2951
    %v4097 = vunpack.c.l.b16 %v2952
    %v4098 = vunpack.c.h.b16 %v2952
    %v4099 = vunpack.c.l.b16 %v2953
    %v4100 = vunpack.c.h.b16 %v2953
    %v4101 = vunpack.c.l.b16 %v2954
    %v4102 = vunpack.c.h.b16 %v2954
    %v4103 = vunpack.c.l.b16 %v2955
    %v4104 = vunpack.c.h.b16 %v2955
    %v4105 = vunpack.c.l.b16 %v2956
    %v4106 = vunpack.c.h.b16 %v2956
    %v4107 = vunpack.c.l.b16 %v2957
    %v4108 = vunpack.c.h.b16 %v2957
    %v4109 = vunpack.c.l.b16 %v2958
    %v4110 = vunpack.c.h.b16 %v2958
    %v4111 = vunpack.c.l.b16 %v2959
    %v4112 = vunpack.c.h.b16 %v2959
    %v4113 = vunpack.c.l.b16 %v2960
    %v4114 = vunpack.c.h.b16 %v2960
    %v4115 = vunpack.c.l.b16 %v2961
    %v4116 = vunpack.c.h.b16 %v2961
    %v4117 = vunpack.c.l.b16 %v2962
    %v4118 = vunpack.c.h.b16 %v2962
    %v4119 = vunpack.c.l.b16 %v2963
    %v4120 = vunpack.c.h.b16 %v2963
    %v4121 = vunpack.c.l.b16 %v2964
    %v4122 = vunpack.c.h.b16 %v2964
    %v4123 = vunpack.c.l.b16 %v2965
    %v4124 = vunpack.c.h.b16 %v2965
    %v4125 = vunpack.c.l.b16 %v2966
    %v4126 = vunpack.c.h.b16 %v2966
    %v4127 = vunpack.c.l.b16 %v2967
    %v4128 = vunpack.c.h.b16 %v2967
    %v4129 = vunpack.c.l.b16 %v2968
    %v4130 = vunpack.c.h.b16 %v2968
    %v4131 = vunpack.c.l.b16 %v2969
    %v4132 = vunpack.c.h.b16 %v2969
    %v4133 = vunpack.c.l.b16 %v2970
    %v4134 = vunpack.c.h.b16 %v2970
    %v4135 = vunpack.c.l.b16 %v2971
    %v4136 = vunpack.c.h.b16 %v2971
    %v4137 = vunpack.c.l.b16 %v2972
    %v4138 = vunpack.c.h.b16 %v2972
    %v4139 = vunpack.c.l.b16 %v2973
    %v4140 = vunpack.c.h.b16 %v2973
    %v4141 = vunpack.c.l.b16 %v2974
    %v4142 = vunpack.c.h.b16 %v2974
    %v4143 = vunpack.c.l.b16 %v2975
    %v4144 = vunpack.c.h.b16 %v2975
    %v4145 = vunpack.c.l.b16 %v2976
    %v4146 = vunpack.c.h.b16 %v2976
    %v4147 = vunpack.c.l.b16 %v2977
    %v4148 = vunpack.c.h.b16 %v2977
    %v4149 = vunpack.c.l.b16 %v2978
    %v4150 = vunpack.c.h.b16 %v2978
    %v4151 = vunpack.c.l.b16 %v2979
    %v4152 = vunpack.c.h.b16 %v2979
    %v4153 = vunpack.c.l.b16 %v2980
    %v4154 = vunpack.c.h.b16 %v2980
    %v4155 = vunpack.c.l.b16 %v2981
    %v4156 = vunpack.c.h.b16 %v2981
    %v4157 = vunpack.c.l.b16 %v2982
    %v4158 = vunpack.c.h.b16 %v2982
    %v4159 = vunpack.c.l.b16 %v2983
    %v4160 = vunpack.c.h.b16 %v2983
    %v4161 = vunpack.c.l.b16 %v2984
    %v4162 = vunpack.c.h.b16 %v2984
    %v4163 = vunpack.c.l.b16 %v2985
    %v4164 = vunpack.c.h.b16 %v2985
    %v4165 = vunpack.c.l.b16 %v2986
    %v4166 = vunpack.c.h.b16 %v2986
    %v4167 = vunpack.c.l.b16 %v2987
    %v4168 = vunpack.c.h.b16 %v2987
    %v4169 = vunpack.c.l.b16 %v2988
    %v4170 = vunpack.c.h.b16 %v2988
    %v4171 = vunpack.c.l.b16 %v2989
    %v4172 = vunpack.c.h.b16 %v2989
    %v4173 = vunpack.c.l.b16 %v2990
    %v4174 = vunpack.c.h.b16 %v2990
    %v4175 = vunpack.c.l.b16 %v2991
    %v4176 = vunpack.c.h.b16 %v2991
    %v4177 = vunpack.c.l.b16 %v2992
    %v4178 = vunpack.c.h.b16 %v2992
    %v4179 = vunpack.c.l.b16 %v2993
    %v4180 = vunpack.c.h.b16 %v2993
    %v4181 = vunpack.c.l.b16 %v2994
    %v4182 = vunpack.c.h.b16 %v2994
    %v4183 = vunpack.c.l.b16 %v2995
    %v4184 = vunpack.c.h.b16 %v2995
    %v4185 = vunpack.c.l.b16 %v2996
    %v4186 = vunpack.c.h.b16 %v2996
    %v4187 = vunpack.c.l.b16 %v2997
    %v4188 = vunpack.c.h.b16 %v2997
    %v4189 = vunpack.c.l.b16 %v2998
    %v4190 = vunpack.c.h.b16 %v2998
    %v4191 = vunpack.c.l.b16 %v2999
    %v4192 = vunpack.c.h.b16 %v2999
    %v4193 = vunpack.c.l.b16 %v3000
    %v4194 = vunpack.c.h.b16 %v3000
    %v4195 = vunpack.c.l.b16 %v3001
    %v4196 = vunpack.c.h.b16 %v3001
    %v4197 = vunpack.c.l.b16 %v3002
    %v4198 = vunpack.c.h.b16 %v3002
    %v4199 = vunpack.c.l.b16 %v3003
    %v4200 = vunpack.c.h.b16 %v3003
    %v4201 = vunpack.c.l.b16 %v3004
    %v4202 = vunpack.c.h.b16 %v3004
    %v4203 = vunpack.c.l.b16 %v3005
    %v4204 = vunpack.c.h.b16 %v3005
    %v4205 = vunpack.c.l.b16 %v3006
    %v4206 = vunpack.c.h.b16 %v3006
    %v4207 = vunpack.c.l.b16 %v3007
    %v4208 = vunpack.c.h.b16 %v3007
    %v4209 = vunpack.c.l.b16 %v3008
    %v4210 = vunpack.c.h.b16 %v3008
    %v4211 = vunpack.c.l.b16 %v3009
    %v4212 = vunpack.c.h.b16 %v3009
    %v4213 = vunpack.c.l.b16 %v3010
    %v4214 = vunpack.c.h.b16 %v3010
    %v4215 = vunpack.c.l.b16 %v3011
    %v4216 = vunpack.c.h.b16 %v3011
    %v4217 = vunpack.c.l.b16 %v3012
    %v4218 = vunpack.c.h.b16 %v3012
    %v4219 = vunpack.c.l.b16 %v3013
    %v4220 = vunpack.c.h.b16 %v3013
    %v4221 = vunpack.c.l.b16 %v3014
    %v4222 = vunpack.c.h.b16 %v3014
    %v4223 = vunpack.c.l.b16 %v3015
    %v4224 = vunpack.c.h.b16 %v3015
    %v4225 = vunpack.c.l.b16 %v3016
    %v4226 = vunpack.c.h.b16 %v3016
    %v4227 = vunpack.c.l.b16 %v3017
    %v4228 = vunpack.c.h.b16 %v3017
    %v4229 = vunpack.c.l.b16 %v3018
    %v4230 = vunpack.c.h.b16 %v3018
    %v4231 = vunpack.c.l.b16 %v3019
    %v4232 = vunpack.c.h.b16 %v3019
    %v4233 = vunpack.c.l.b16 %v3020
    %v4234 = vunpack.c.h.b16 %v3020
    %v4235 = vunpack.c.l.b16 %v3021
    %v4236 = vunpack.c.h.b16 %v3021
    %v4237 = vunpack.c.l.b16 %v3022
    %v4238 = vunpack.c.h.b16 %v3022
    %v4239 = vunpack.c.l.b16 %v3023
    %v4240 = vunpack.c.h.b16 %v3023
    %v4241 = vunpack.c.l.b16 %v3024
    %v4242 = vunpack.c.h.b16 %v3024
    %v4243 = vunpack.c.l.b16 %v3025
    %v4244 = vunpack.c.h.b16 %v3025
    %v4245 = vunpack.c.l.b16 %v3026
    %v4246 = vunpack.c.h.b16 %v3026
    %v4247 = vunpack.c.l.b16 %v3027
    %v4248 = vunpack.c.h.b16 %v3027
    %v4249 = vunpack.c.l.b16 %v3028
    %v4250 = vunpack.c.h.b16 %v3028
    %v4251 = vunpack.c.l.b16 %v3029
    %v4252 = vunpack.c.h.b16 %v3029
    %v4253 = vunpack.c.l.b16 %v3030
    %v4254 = vunpack.c.h.b16 %v3030
    %v4255 = vunpack.c.l.b16 %v3031
    %v4256 = vunpack.c.h.b16 %v3031
    %v4257 = vunpack.c.l.b16 %v3032
    %v4258 = vunpack.c.h.b16 %v3032
    %v4259 = vunpack.c.l.b16 %v3033
    %v4260 = vunpack.c.h.b16 %v3033
    %v4261 = vunpack.c.l.b16 %v3034
    %v4262 = vunpack.c.h.b16 %v3034
    %v4263 = vunpack.c.l.b16 %v3035
    %v4264 = vunpack.c.h.b16 %v3035
    %v4265 = vunpack.c.l.b16 %v3036
    %v4266 = vunpack.c.h.b16 %v3036
    %v4267 = vunpack.c.l.b16 %v3037
    %v4268 = vunpack.c.h.b16 %v3037
    %v4269 = vunpack.c.l.b16 %v3038
    %v4270 = vunpack.c.h.b16 %v3038
    %v4271 = vunpack.c.l.b16 %v3039
    %v4272 = vunpack.c.h.b16 %v3039
    %v4273 = vunpack.c.l.b16 %v3040
    %v4274 = vunpack.c.h.b16 %v3040
    %v4275 = vunpack.c.l.b16 %v3041
    %v4276 = vunpack.c.h.b16 %v3041
    %v4277 = vunpack.c.l.b16 %v3042
    %v4278 = vunpack.c.h.b16 %v3042
    %v4279 = vunpack.c.l.b16 %v3043
    %v4280 = vunpack.c.h.b16 %v3043
    %v4281 = vunpack.c.l.b16 %v3044
    %v4282 = vunpack.c.h.b16 %v3044
    %v4283 = vunpack.c.l.b16 %v3045
    %v4284 = vunpack.c.h.b16 %v3045
    %v4285 = vunpack.c.l.b16 %v3046
    %v4286 = vunpack.c.h.b16 %v3046
    %v4287 = vunpack.c.l.b16 %v3047
    %v4288 = vunpack.c.h.b16 %v3047
    %v4289 = vunpack.c.l.b16 %v3048
    %v4290 = vunpack.c.h.b16 %v3048
    %v4291 = vunpack.c.l.b16 %v3049
    %v4292 = vunpack.c.h.b16 %v3049
    %v4293 = vunpack.c.l.b16 %v3050
    %v4294 = vunpack.c.h.b16 %v3050
    %v4295 = vunpack.c.l.b16 %v3051
    %v4296 = vunpack.c.h.b16 %v3051
    %v4297 = vunpack.c.l.b16 %v3052
    %v4298 = vunpack.c.h.b16 %v3052
    %v4299 = vunpack.c.l.b16 %v3053
    %v4300 = vunpack.c.h.b16 %v3053
    %v4301 = vunpack.c.l.b16 %v3054
    %v4302 = vunpack.c.h.b16 %v3054
    %v4303 = vunpack.c.l.b16 %v3055
    %v4304 = vunpack.c.h.b16 %v3055
    %v4305 = vunpack.c.l.b16 %v3056
    %v4306 = vunpack.c.h.b16 %v3056
    %v4307 = vunpack.c.l.b16 %v3057
    %v4308 = vunpack.c.h.b16 %v3057
    %v4309 = vunpack.c.l.b16 %v3058
    %v4310 = vunpack.c.h.b16 %v3058
    %v4311 = vunpack.c.l.b16 %v3059
    %v4312 = vunpack.c.h.b16 %v3059
    %v4313 = vunpack.c.l.b16 %v3060
    %v4314 = vunpack.c.h.b16 %v3060
    %v4315 = vunpack.c.l.b16 %v3061
    %v4316 = vunpack.c.h.b16 %v3061
    %v4317 = vunpack.c.l.b16 %v3062
    %v4318 = vunpack.c.h.b16 %v3062
    %v4319 = vunpack.c.l.b16 %v3063
    %v4320 = vunpack.c.h.b16 %v3063
    %v4321 = vunpack.c.l.b16 %v3064
    %v4322 = vunpack.c.h.b16 %v3064
    %v4323 = vunpack.c.l.b16 %v3065
    %v4324 = vunpack.c.h.b16 %v3065
    %v4325 = vunpack.c.l.b16 %v3066
    %v4326 = vunpack.c.h.b16 %v3066
    %v4327 = vunpack.c.l.b16 %v3067
    %v4328 = vunpack.c.h.b16 %v3067
    %v4329 = vunpack.c.l.b16 %v3068
    %v4330 = vunpack.c.h.b16 %v3068
    %v4331 = vunpack.c.l.b16 %v3069
    %v4332 = vunpack.c.h.b16 %v3069
    %v4333 = vunpack.c.l.b16 %v3070
    %v4334 = vunpack.c.h.b16 %v3070
    %v4335 = vunpack.c.l.b16 %v3071
    %v4336 = vunpack.c.h.b16 %v3071
    %v4337 = vunpack.c.l.b16 %v3072
    %v4338 = vunpack.c.h.b16 %v3072
    %v4339 = vunpack.c.l.b16 %v3073
    %v4340 = vunpack.c.h.b16 %v3073
    %v4341 = vunpack.c.l.b16 %v3074
    %v4342 = vunpack.c.h.b16 %v3074
    %v4343 = vunpack.c.l.b16 %v3075
    %v4344 = vunpack.c.h.b16 %v3075
    %v4345 = vunpack.c.l.b16 %v3076
    %v4346 = vunpack.c.h.b16 %v3076
    %v4347 = vunpack.c.l.b16 %v3077
    %v4348 = vunpack.c.h.b16 %v3077
    %v4349 = vunpack.c.l.b16 %v3078
    %v4350 = vunpack.c.h.b16 %v3078
    %v4351 = vunpack.c.l.b16 %v3079
    %v4352 = vunpack.c.h.b16 %v3079
    %v4353 = vunpack.c.l.b16 %v3080
    %v4354 = vunpack.c.h.b16 %v3080
    %v4355 = vunpack.c.l.b16 %v3081
    %v4356 = vunpack.c.h.b16 %v3081
    %v4357 = vunpack.c.l.b16 %v3082
    %v4358 = vunpack.c.h.b16 %v3082
    %v4359 = vunpack.c.l.b16 %v3083
    %v4360 = vunpack.c.h.b16 %v3083
    %v4361 = vunpack.c.l.b16 %v3084
    %v4362 = vunpack.c.h.b16 %v3084
    %v4363 = vunpack.c.l.b16 %v3085
    %v4364 = vunpack.c.h.b16 %v3085
    %v4365 = vunpack.c.l.b16 %v3086
    %v4366 = vunpack.c.h.b16 %v3086
    %v4367 = vunpack.c.l.b16 %v3087
    %v4368 = vunpack.c.h.b16 %v3087
    %v4369 = vunpack.c.l.b16 %v3088
    %v4370 = vunpack.c.h.b16 %v3088
    %v4371 = vunpack.c.l.b16 %v3089
    %v4372 = vunpack.c.h.b16 %v3089
    %v4373 = vunpack.c.l.b16 %v3090
    %v4374 = vunpack.c.h.b16 %v3090
    %v4375 = vunpack.c.l.b16 %v3091
    %v4376 = vunpack.c.h.b16 %v3091
    %v4377 = vunpack.c.l.b16 %v3092
    %v4378 = vunpack.c.h.b16 %v3092
    %v4379 = vunpack.c.l.b16 %v3093
    %v4380 = vunpack.c.h.b16 %v3093
    %v4381 = vunpack.c.l.b16 %v3094
    %v4382 = vunpack.c.h.b16 %v3094
    %v4383 = vunpack.c.l.b16 %v3095
    %v4384 = vunpack.c.h.b16 %v3095
    %v4385 = vunpack.c.l.b16 %v3096
    %v4386 = vunpack.c.h.b16 %v3096
    %v4387 = vunpack.c.l.b16 %v3097
    %v4388 = vunpack.c.h.b16 %v3097
    %v4389 = vunpack.c.l.b16 %v3098
    %v4390 = vunpack.c.h.b16 %v3098
    %v4391 = vunpack.c.l.b16 %v3099
    %v4392 = vunpack.c.h.b16 %v3099
    %v4393 = vunpack.c.l.b16 %v3100
    %v4394 = vunpack.c.h.b16 %v3100
    %v4395 = vunpack.c.l.b16 %v3101
    %v4396 = vunpack.c.h.b16 %v3101
    %v4397 = vunpack.c.l.b16 %v3102
    %v4398 = vunpack.c.h.b16 %v3102
    %v4399 = vunpack.c.l.b16 %v3103
    %v4400 = vunpack.c.h.b16 %v3103
    %v4401 = vunpack.c.l.b16 %v3104
    %v4402 = vunpack.c.h.b16 %v3104
    %v4403 = vunpack.c.l.b16 %v3105
    %v4404 = vunpack.c.h.b16 %v3105
    %v4405 = vunpack.c.l.b16 %v3106
    %v4406 = vunpack.c.h.b16 %v3106
    %v4407 = vunpack.c.l.b16 %v3107
    %v4408 = vunpack.c.h.b16 %v3107
    %v4409 = vunpack.c.l.b16 %v3108
    %v4410 = vunpack.c.h.b16 %v3108
    %v4411 = vunpack.c.l.b16 %v3109
    %v4412 = vunpack.c.h.b16 %v3109
    %v4413 = vunpack.c.l.b16 %v3110
    %v4414 = vunpack.c.h.b16 %v3110
    %v4415 = vunpack.c.l.b16 %v3111
    %v4416 = vunpack.c.h.b16 %v3111
    %v4417 = vunpack.c.l.b16 %v3112
    %v4418 = vunpack.c.h.b16 %v3112
    %v4419 = vunpack.c.l.b16 %v3113
    %v4420 = vunpack.c.h.b16 %v3113
    %v4421 = vunpack.c.l.b16 %v3114
    %v4422 = vunpack.c.h.b16 %v3114
    %v4423 = vunpack.c.l.b16 %v3115
    %v4424 = vunpack.c.h.b16 %v3115
    %v4425 = vunpack.c.l.b16 %v3116
    %v4426 = vunpack.c.h.b16 %v3116
    %v4427 = vunpack.c.l.b16 %v3117
    %v4428 = vunpack.c.h.b16 %v3117
    %v4429 = vunpack.c.l.b16 %v3118
    %v4430 = vunpack.c.h.b16 %v3118
    %v4431 = vunpack.c.l.b16 %v3119
    %v4432 = vunpack.c.h.b16 %v3119
    %v4433 = vunpack.c.l.b16 %v3120
    %v4434 = vunpack.c.h.b16 %v3120
    %v4435 = vunpack.c.l.b16 %v3121
    %v4436 = vunpack.c.h.b16 %v3121
    %v4437 = vunpack.c.l.b16 %v3122
    %v4438 = vunpack.c.h.b16 %v3122
    %v4439 = vunpack.c.l.b16 %v3123
    %v4440 = vunpack.c.h.b16 %v3123
    %v4441 = vunpack.c.l.b16 %v3124
    %v4442 = vunpack.c.h.b16 %v3124
    %v4443 = vunpack.c.l.b16 %v3125
    %v4444 = vunpack.c.h.b16 %v3125
    %v4445 = vunpack.c.l.b16 %v3126
    %v4446 = vunpack.c.h.b16 %v3126
    %v4447 = vunpack.c.l.b16 %v3127
    %v4448 = vunpack.c.h.b16 %v3127
    %v4449 = vunpack.c.l.b16 %v3128
    %v4450 = vunpack.c.h.b16 %v3128
    %v4451 = vunpack.c.l.b16 %v3129
    %v4452 = vunpack.c.h.b16 %v3129
    %v4453 = vunpack.c.l.b16 %v3130
    %v4454 = vunpack.c.h.b16 %v3130
    %v4455 = vunpack.c.l.b16 %v3131
    %v4456 = vunpack.c.h.b16 %v3131
    %v4457 = vunpack.c.l.b16 %v3132
    %v4458 = vunpack.c.h.b16 %v3132
    %v4459 = vunpack.c.l.b16 %v3133
    %v4460 = vunpack.c.h.b16 %v3133
    %v4461 = vunpack.c.l.b16 %v3134
    %v4462 = vunpack.c.h.b16 %v3134
    %v4463 = vunpack.c.l.b16 %v3135
    %v4464 = vunpack.c.h.b16 %v3135
    %v4465 = vunpack.c.l.b16 %v3136
    %v4466 = vunpack.c.h.b16 %v3136
    %v4467 = vunpack.c.l.b16 %v3137
    %v4468 = vunpack.c.h.b16 %v3137
    %v4469 = vunpack.c.l.b16 %v3138
    %v4470 = vunpack.c.h.b16 %v3138
    %v4471 = vunpack.c.l.b16 %v3139
    %v4472 = vunpack.c.h.b16 %v3139
    %v4473 = vunpack.c.l.b16 %v3140
    %v4474 = vunpack.c.h.b16 %v3140
    %v4475 = vunpack.c.l.b16 %v3141
    %v4476 = vunpack.c.h.b16 %v3141
    %v4477 = vunpack.c.l.b16 %v3142
    %v4478 = vunpack.c.h.b16 %v3142
    %v4479 = vunpack.c.l.b16 %v3143
    %v4480 = vunpack.c.h.b16 %v3143
    %v4481 = vunpack.c.l.b16 %v3144
    %v4482 = vunpack.c.h.b16 %v3144
    %v4483 = vunpack.c.l.b16 %v3145
    %v4484 = vunpack.c.h.b16 %v3145
    %v4485 = vunpack.c.l.b16 %v3146
    %v4486 = vunpack.c.h.b16 %v3146
    %v4487 = vunpack.c.l.b16 %v3147
    %v4488 = vunpack.c.h.b16 %v3147
    %v4489 = vunpack.c.l.b16 %v3148
    %v4490 = vunpack.c.h.b16 %v3148
    %v4491 = vunpack.c.l.b16 %v3149
    %v4492 = vunpack.c.h.b16 %v3149
    %v4493 = vunpack.c.l.b16 %v3150
    %v4494 = vunpack.c.h.b16 %v3150
    %v4495 = vunpack.c.l.b16 %v3151
    %v4496 = vunpack.c.h.b16 %v3151
    %v4497 = vunpack.c.l.b16 %v3152
    %v4498 = vunpack.c.h.b16 %v3152
    %v4499 = vunpack.c.l.b16 %v3153
    %v4500 = vunpack.c.h.b16 %v3153
    %v4501 = vunpack.c.l.b16 %v3154
    %v4502 = vunpack.c.h.b16 %v3154
    %v4503 = vunpack.c.l.b16 %v3155
    %v4504 = vunpack.c.h.b16 %v3155
    %v4505 = vunpack.c.l.b16 %v3156
    %v4506 = vunpack.c.h.b16 %v3156
    %v4507 = vunpack.c.l.b16 %v3157
    %v4508 = vunpack.c.h.b16 %v3157
    %v4509 = vunpack.c.l.b16 %v3158
    %v4510 = vunpack.c.h.b16 %v3158
    %v4511 = vunpack.c.l.b16 %v3159
    %v4512 = vunpack.c.h.b16 %v3159
    %v4513 = vunpack.c.l.b16 %v3160
    %v4514 = vunpack.c.h.b16 %v3160
    %v4515 = vunpack.c.l.b16 %v3161
    %v4516 = vunpack.c.h.b16 %v3161
    %v4517 = vunpack.c.l.b16 %v3162
    %v4518 = vunpack.c.h.b16 %v3162
    %v4519 = vunpack.c.l.b16 %v3163
    %v4520 = vunpack.c.h.b16 %v3163
    %v4521 = vunpack.c.l.b16 %v3164
    %v4522 = vunpack.c.h.b16 %v3164
    %v4523 = vunpack.c.l.b16 %v3165
    %v4524 = vunpack.c.h.b16 %v3165
    %v4525 = vunpack.c.l.b16 %v3166
    %v4526 = vunpack.c.h.b16 %v3166
    %v4527 = vunpack.c.l.b16 %v3167
    %v4528 = vunpack.c.h.b16 %v3167
    %v4529 = vunpack.c.l.b16 %v3168
    %v4530 = vunpack.c.h.b16 %v3168
    %v4531 = vunpack.c.l.b16 %v3169
    %v4532 = vunpack.c.h.b16 %v3169
    %v4533 = vunpack.c.l.b16 %v3170
    %v4534 = vunpack.c.h.b16 %v3170
    %v4535 = vunpack.c.l.b16 %v3171
    %v4536 = vunpack.c.h.b16 %v3171
    %v4537 = vunpack.c.l.b16 %v3172
    %v4538 = vunpack.c.h.b16 %v3172
    %v4539 = vunpack.c.l.b16 %v3173
    %v4540 = vunpack.c.h.b16 %v3173
    %v4541 = vunpack.c.l.b16 %v3174
    %v4542 = vunpack.c.h.b16 %v3174
    %v4543 = vunpack.c.l.b16 %v3175
    %v4544 = vunpack.c.h.b16 %v3175
    %v4545 = vunpack.c.l.b16 %v3176
    %v4546 = vunpack.c.h.b16 %v3176
    %v4547 = vunpack.c.l.b16 %v3177
    %v4548 = vunpack.c.h.b16 %v3177
    %v4549 = vunpack.c.l.b16 %v3178
    %v4550 = vunpack.c.h.b16 %v3178
    %v4551 = vunpack.c.l.b16 %v3179
    %v4552 = vunpack.c.h.b16 %v3179
    %v4553 = vunpack.c.l.b16 %v3180
    %v4554 = vunpack.c.h.b16 %v3180
    %v4555 = vunpack.c.l.b16 %v3181
    %v4556 = vunpack.c.h.b16 %v3181
    %v4557 = vunpack.c.l.b16 %v3182
    %v4558 = vunpack.c.h.b16 %v3182
    %v4559 = vunpack.c.l.b16 %v3183
    %v4560 = vunpack.c.h.b16 %v3183
    %v4561 = vunpack.c.l.b16 %v3184
    %v4562 = vunpack.c.h.b16 %v3184
    %v4563 = vunpack.c.l.b16 %v3185
    %v4564 = vunpack.c.h.b16 %v3185
    %v4565 = vunpack.c.l.b16 %v3186
    %v4566 = vunpack.c.h.b16 %v3186
    %v4567 = vunpack.c.l.b16 %v3187
    %v4568 = vunpack.c.h.b16 %v3187
    %v4569 = vunpack.c.l.b16 %v3188
    %v4570 = vunpack.c.h.b16 %v3188
    %v4571 = vunpack.c.l.b16 %v3189
    %v4572 = vunpack.c.h.b16 %v3189
    %v4573 = vunpack.c.l.b16 %v3190
    %v4574 = vunpack.c.h.b16 %v3190
    %v4575 = vunpack.c.l.b16 %v3191
    %v4576 = vunpack.c.h.b16 %v3191
    %v4577 = vunpack.c.l.b16 %v3192
    %v4578 = vunpack.c.h.b16 %v3192
    %v4579 = vunpack.c.l.b16 %v3193
    %v4580 = vunpack.c.h.b16 %v3193
    %v4581 = vunpack.c.l.b16 %v3194
    %v4582 = vunpack.c.h.b16 %v3194
    %v4583 = vunpack.c.l.b16 %v3195
    %v4584 = vunpack.c.h.b16 %v3195
    %v4585 = vunpack.c.l.b16 %v3196
    %v4586 = vunpack.c.h.b16 %v3196
    %v4587 = vunpack.c.l.b16 %v3197
    %v4588 = vunpack.c.h.b16 %v3197
    %v4589 = vunpack.c.l.b16 %v3198
    %v4590 = vunpack.c.h.b16 %v3198
    %v4591 = vunpack.c.l.b16 %v3199
    %v4592 = vunpack.c.h.b16 %v3199
    %v4593 = vunpack.c.l.b16 %v3200
    %v4594 = vunpack.c.h.b16 %v3200
    %v4595 = vunpack.c.l.b16 %v3201
    %v4596 = vunpack.c.h.b16 %v3201
    %v4597 = vunpack.c.l.b16 %v3202
    %v4598 = vunpack.c.h.b16 %v3202
    %v4599 = vunpack.c.l.b16 %v3203
    %v4600 = vunpack.c.h.b16 %v3203
    %v4601 = vunpack.c.l.b16 %v3204
    %v4602 = vunpack.c.h.b16 %v3204
    %v4603 = vunpack.c.l.b16 %v3205
    %v4604 = vunpack.c.h.b16 %v3205
    %v4605 = vunpack.c.l.b16 %v3206
    %v4606 = vunpack.c.h.b16 %v3206
    %v4607 = vunpack.c.l.b16 %v3207
    %v4608 = vunpack.c.h.b16 %v3207
    %v4609 = vunpack.c.l.b16 %v3208
    %v4610 = vunpack.c.h.b16 %v3208
    %v4611 = vunpack.c.l.b16 %v3209
    %v4612 = vunpack.c.h.b16 %v3209
    %v4613 = vunpack.c.l.b16 %v3210
    %v4614 = vunpack.c.h.b16 %v3210
    %v4615 = vunpack.c.l.b16 %v3211
    %v4616 = vunpack.c.h.b16 %v3211
    %v4617 = vunpack.c.l.b16 %v3212
    %v4618 = vunpack.c.h.b16 %v3212
    %v4619 = vunpack.c.l.b16 %v3213
    %v4620 = vunpack.c.h.b16 %v3213
    %v4621 = vunpack.c.l.b16 %v3214
    %v4622 = vunpack.c.h.b16 %v3214
    %v4623 = vunpack.c.l.b16 %v3215
    %v4624 = vunpack.c.h.b16 %v3215
    %v4625 = vunpack.c.l.b16 %v3216
    %v4626 = vunpack.c.h.b16 %v3216
    %v4627 = vunpack.c.l.b16 %v3217
    %v4628 = vunpack.c.h.b16 %v3217
    %v4629 = vunpack.c.l.b16 %v3218
    %v4630 = vunpack.c.h.b16 %v3218
    %v4631 = vunpack.c.l.b16 %v3219
    %v4632 = vunpack.c.h.b16 %v3219
    %v4633 = vunpack.c.l.b16 %v3220
    %v4634 = vunpack.c.h.b16 %v3220
    %v4635 = vunpack.c.l.b16 %v3221
    %v4636 = vunpack.c.h.b16 %v3221
    %v4637 = vunpack.c.l.b16 %v3222
    %v4638 = vunpack.c.h.b16 %v3222
    %v4639 = vunpack.c.l.b16 %v3223
    %v4640 = vunpack.c.h.b16 %v3223
    %v4641 = vunpack.c.l.b16 %v3224
    %v4642 = vunpack.c.h.b16 %v3224
    %v4643 = vunpack.c.l.b16 %v3225
    %v4644 = vunpack.c.h.b16 %v3225
    %v4645 = vunpack.c.l.b16 %v3226
    %v4646 = vunpack.c.h.b16 %v3226
    %v4647 = vunpack.c.l.b16 %v3227
    %v4648 = vunpack.c.h.b16 %v3227
    %v4649 = vunpack.c.l.b16 %v3228
    %v4650 = vunpack.c.h.b16 %v3228
    %v4651 = vunpack.c.l.b16 %v3229
    %v4652 = vunpack.c.h.b16 %v3229
    %v4653 = vunpack.c.l.b16 %v3230
    %v4654 = vunpack.c.h.b16 %v3230
    %v4655 = vunpack.c.l.b16 %v3231
    %v4656 = vunpack.c.h.b16 %v3231
    %v4657 = vunpack.c.l.b16 %v3232
    %v4658 = vunpack.c.h.b16 %v3232
    %v4659 = vunpack.c.l.b16 %v3233
    %v4660 = vunpack.c.h.b16 %v3233
    %v4661 = vunpack.c.l.b16 %v3234
    %v4662 = vunpack.c.h.b16 %v3234
    %v4663 = vunpack.c.l.b16 %v3235
    %v4664 = vunpack.c.h.b16 %v3235
    %v4665 = vunpack.c.l.b16 %v3236
    %v4666 = vunpack.c.h.b16 %v3236
    %v4667 = vunpack.c.l.b16 %v3237
    %v4668 = vunpack.c.h.b16 %v3237
    %v4669 = vunpack.c.l.b16 %v3238
    %v4670 = vunpack.c.h.b16 %v3238
    %v4671 = vunpack.c.l.b16 %v3239
    %v4672 = vunpack.c.h.b16 %v3239
    %v4673 = vunpack.c.l.b16 %v3240
    %v4674 = vunpack.c.h.b16 %v3240
    %v4675 = vunpack.c.l.b16 %v3241
    %v4676 = vunpack.c.h.b16 %v3241
    %v4677 = vunpack.c.l.b16 %v3242
    %v4678 = vunpack.c.h.b16 %v3242
    %v4679 = vunpack.c.l.b16 %v3243
    %v4680 = vunpack.c.h.b16 %v3243
    %v4681 = vunpack.c.l.b16 %v3244
    %v4682 = vunpack.c.h.b16 %v3244
    %v4683 = vunpack.c.l.b16 %v3245
    %v4684 = vunpack.c.h.b16 %v3245
    %v4685 = vunpack.c.l.b16 %v3246
    %v4686 = vunpack.c.h.b16 %v3246
    %v4687 = vunpack.c.l.b16 %v3247
    %v4688 = vunpack.c.h.b16 %v3247
    %v4689 = vunpack.c.l.b16 %v3248
    %v4690 = vunpack.c.h.b16 %v3248
    %v4691 = vunpack.c.l.b16 %v3249
    %v4692 = vunpack.c.h.b16 %v3249
    %v4693 = vunpack.c.l.b16 %v3250
    %v4694 = vunpack.c.h.b16 %v3250
    %v4695 = vunpack.c.l.b16 %v3251
    %v4696 = vunpack.c.h.b16 %v3251
    %v4697 = vunpack.c.l.b16 %v3252
    %v4698 = vunpack.c.h.b16 %v3252
    %v4699 = vunpack.c.l.b16 %v3253
    %v4700 = vunpack.c.h.b16 %v3253
    %v4701 = vunpack.c.l.b16 %v3254
    %v4702 = vunpack.c.h.b16 %v3254
    %v4703 = vunpack.c.l.b16 %v3255
    %v4704 = vunpack.c.h.b16 %v3255
    %v4705 = vunpack.c.l.b16 %v3256
    %v4706 = vunpack.c.h.b16 %v3256
    %v4707 = vunpack.c.l.b16 %v3257
    %v4708 = vunpack.c.h.b16 %v3257
    %v4709 = vunpack.c.l.b16 %v3258
    %v4710 = vunpack.c.h.b16 %v3258
    %v4711 = vunpack.c.l.b16 %v3259
    %v4712 = vunpack.c.h.b16 %v3259
    %v4713 = vunpack.c.l.b16 %v3260
    %v4714 = vunpack.c.h.b16 %v3260
    %v4715 = vunpack.c.l.b16 %v3261
    %v4716 = vunpack.c.h.b16 %v3261
    %v4717 = vunpack.c.l.b16 %v3262
    %v4718 = vunpack.c.h.b16 %v3262
    %v4719 = vunpack.c.l.b16 %v3263
    %v4720 = vunpack.c.h.b16 %v3263
    %v4721 = vunpack.c.l.b16 %v3264
    %v4722 = vunpack.c.h.b16 %v3264
    %v4723 = vunpack.c.l.b16 %v3265
    %v4724 = vunpack.c.h.b16 %v3265
    %v4725 = vunpack.c.l.b16 %v3266
    %v4726 = vunpack.c.h.b16 %v3266
    %v4727 = vunpack.c.l.b16 %v3267
    %v4728 = vunpack.c.h.b16 %v3267
    %v4729 = vunpack.c.l.b16 %v3268
    %v4730 = vunpack.c.h.b16 %v3268
    %v4731 = vunpack.c.l.b16 %v3269
    %v4732 = vunpack.c.h.b16 %v3269
    %v4733 = vunpack.c.l.b16 %v3270
    %v4734 = vunpack.c.h.b16 %v3270
    %v4735 = vunpack.c.l.b16 %v3271
    %v4736 = vunpack.c.h.b16 %v3271
    %v4737 = vunpack.c.l.b16 %v3272
    %v4738 = vunpack.c.h.b16 %v3272
    %v4739 = vunpack.c.l.b16 %v3273
    %v4740 = vunpack.c.h.b16 %v3273
    %v4741 = vunpack.c.l.b16 %v3274
    %v4742 = vunpack.c.h.b16 %v3274
    %v4743 = vunpack.c.l.b16 %v3275
    %v4744 = vunpack.c.h.b16 %v3275
    %v4745 = vunpack.c.l.b16 %v3276
    %v4746 = vunpack.c.h.b16 %v3276
    %v4747 = vunpack.c.l.b16 %v3277
    %v4748 = vunpack.c.h.b16 %v3277
    %v4749 = vunpack.c.l.b16 %v3278
    %v4750 = vunpack.c.h.b16 %v3278
    %v4751 = vunpack.c.l.b16 %v3279
    %v4752 = vunpack.c.h.b16 %v3279
    %v4753 = vunpack.c.l.b16 %v3280
    %v4754 = vunpack.c.h.b16 %v3280
    %v4755 = vunpack.c.l.b16 %v3281
    %v4756 = vunpack.c.h.b16 %v3281
    %v4757 = vunpack.c.l.b16 %v3282
    %v4758 = vunpack.c.h.b16 %v3282
    %v4759 = vunpack.c.l.b16 %v3283
    %v4760 = vunpack.c.h.b16 %v3283
    %v4761 = vunpack.c.l.b16 %v3284
    %v4762 = vunpack.c.h.b16 %v3284
    %v4763 = vunpack.c.l.b16 %v3285
    %v4764 = vunpack.c.h.b16 %v3285
    %v4765 = vunpack.c.l.b16 %v3286
    %v4766 = vunpack.c.h.b16 %v3286
    %v4767 = vunpack.c.l.b16 %v3287
    %v4768 = vunpack.c.h.b16 %v3287
    %v4769 = vunpack.c.l.b16 %v3288
    %v4770 = vunpack.c.h.b16 %v3288
    %v4771 = vunpack.c.l.b16 %v3289
    %v4772 = vunpack.c.h.b16 %v3289
    %v4773 = vunpack.c.l.b16 %v3290
    %v4774 = vunpack.c.h.b16 %v3290
    %v4775 = vunpack.c.l.b16 %v3291
    %v4776 = vunpack.c.h.b16 %v3291
    %v4777 = vunpack.c.l.b16 %v3292
    %v4778 = vunpack.c.h.b16 %v3292
    %v4779 = vunpack.c.l.b16 %v3293
    %v4780 = vunpack.c.h.b16 %v3293
    %v4781 = vunpack.c.l.b16 %v3294
    %v4782 = vunpack.c.h.b16 %v3294
    %v4783 = vunpack.c.l.b16 %v3295
    %v4784 = vunpack.c.h.b16 %v3295
    %v4785 = vunpack.c.l.b16 %v3296
    %v4786 = vunpack.c.h.b16 %v3296
    %v4787 = vunpack.c.l.b16 %v3297
    %v4788 = vunpack.c.h.b16 %v3297
    %v4789 = vunpack.c.l.b16 %v3298
    %v4790 = vunpack.c.h.b16 %v3298
    %v4791 = vunpack.c.l.b16 %v3299
    %v4792 = vunpack.c.h.b16 %v3299
    %v4793 = vunpack.c.l.b16 %v3300
    %v4794 = vunpack.c.h.b16 %v3300
    %v4795 = vunpack.c.l.b16 %v3301
    %v4796 = vunpack.c.h.b16 %v3301
    %v4797 = vunpack.c.l.b16 %v3302
    %v4798 = vunpack.c.h.b16 %v3302
    %v4799 = vunpack.c.l.b16 %v3303
    %v4800 = vunpack.c.h.b16 %v3303
    %v4801 = vunpack.c.l.b16 %v3304
    %v4802 = vunpack.c.h.b16 %v3304
    %v4803 = vunpack.c.l.b16 %v3305
    %v4804 = vunpack.c.h.b16 %v3305
    %v4805 = vunpack.c.l.b16 %v3306
    %v4806 = vunpack.c.h.b16 %v3306
    %v4807 = vunpack.c.l.b16 %v3307
    %v4808 = vunpack.c.h.b16 %v3307
    %v4809 = vunpack.c.l.b16 %v3308
    %v4810 = vunpack.c.h.b16 %v3308
    %v4811 = vunpack.c.l.b16 %v3309
    %v4812 = vunpack.c.h.b16 %v3309
    %v4813 = vunpack.c.l.b16 %v3310
    %v4814 = vunpack.c.h.b16 %v3310
    %v4815 = vunpack.c.l.b16 %v3311
    %v4816 = vunpack.c.h.b16 %v3311
    %v4817 = vunpack.c.l.b16 %v3312
    %v4818 = vunpack.c.h.b16 %v3312
    %v4819 = vunpack.c.l.b16 %v3313
    %v4820 = vunpack.c.h.b16 %v3313
    %v4821 = vunpack.c.l.b16 %v3314
    %v4822 = vunpack.c.h.b16 %v3314
    %v4823 = vunpack.c.l.b16 %v3315
    %v4824 = vunpack.c.h.b16 %v3315
    %v4825 = vunpack.c.l.b16 %v3316
    %v4826 = vunpack.c.h.b16 %v3316
    %v4827 = vunpack.c.l.b16 %v3317
    %v4828 = vunpack.c.h.b16 %v3317
    %v4829 = vunpack.c.l.b16 %v3318
    %v4830 = vunpack.c.h.b16 %v3318
    %v4831 = vunpack.c.l.b16 %v3319
    %v4832 = vunpack.c.h.b16 %v3319
    %v4833 = vunpack.c.l.b16 %v3320
    %v4834 = vunpack.c.h.b16 %v3320
    %v4835 = vunpack.c.l.b16 %v3321
    %v4836 = vunpack.c.h.b16 %v3321
    %v4837 = vunpack.c.l.b16 %v3322
    %v4838 = vunpack.c.h.b16 %v3322
    %v4839 = vunpack.c.l.b16 %v3323
    %v4840 = vunpack.c.h.b16 %v3323
    %v4841 = vunpack.c.l.b16 %v3324
    %v4842 = vunpack.c.h.b16 %v3324
    %v4843 = vunpack.c.l.b16 %v3325
    %v4844 = vunpack.c.h.b16 %v3325
    %v4845 = vunpack.c.l.b16 %v3326
    %v4846 = vunpack.c.h.b16 %v3326
    %v4847 = vunpack.c.l.b16 %v3327
    %v4848 = vunpack.c.h.b16 %v3327
    %v4849 = vunpack.c.l.b16 %v3328
    %v4850 = vunpack.c.h.b16 %v3328
    %v4851 = vunpack.c.l.b16 %v3329
    %v4852 = vunpack.c.h.b16 %v3329
    %v4853 = vunpack.c.l.b16 %v3330
    %v4854 = vunpack.c.h.b16 %v3330
    %v4855 = vunpack.c.l.b16 %v3331
    %v4856 = vunpack.c.h.b16 %v3331
    %v4857 = vunpack.c.l.b16 %v3332
    %v4858 = vunpack.c.h.b16 %v3332
    %v4859 = vunpack.c.l.b16 %v3333
    %v4860 = vunpack.c.h.b16 %v3333
    %v4861 = vunpack.c.l.b16 %v3334
    %v4862 = vunpack.c.h.b16 %v3334
    %v4863 = vunpack.c.l.b16 %v3335
    %v4864 = vunpack.c.h.b16 %v3335
    %v4865 = vunpack.c.l.b16 %v3336
    %v4866 = vunpack.c.h.b16 %v3336
    %v4867 = vunpack.c.l.b16 %v3337
    %v4868 = vunpack.c.h.b16 %v3337
    %v4869 = vunpack.c.l.b16 %v3338
    %v4870 = vunpack.c.h.b16 %v3338
    %v4871 = vunpack.c.l.b16 %v3339
    %v4872 = vunpack.c.h.b16 %v3339
    %v4873 = vunpack.c.l.b16 %v3340
    %v4874 = vunpack.c.h.b16 %v3340
    %v4875 = vunpack.c.l.b16 %v3341
    %v4876 = vunpack.c.h.b16 %v3341
    %v4877 = vunpack.c.l.b16 %v3342
    %v4878 = vunpack.c.h.b16 %v3342
    %v4879 = vunpack.c.l.b16 %v3343
    %v4880 = vunpack.c.h.b16 %v3343
    %v4881 = vunpack.c.l.b16 %v3344
    %v4882 = vunpack.c.h.b16 %v3344
    %v4883 = vunpack.c.l.b16 %v3345
    %v4884 = vunpack.c.h.b16 %v3345
    %v4885 = vunpack.c.l.b16 %v3346
    %v4886 = vunpack.c.h.b16 %v3346
    %v4887 = vunpack.c.l.b16 %v3347
    %v4888 = vunpack.c.h.b16 %v3347
    %v4889 = vunpack.c.l.b16 %v3348
    %v4890 = vunpack.c.h.b16 %v3348
    %v4891 = vunpack.c.l.b16 %v3349
    %v4892 = vunpack.c.h.b16 %v3349
    %v4893 = vunpack.c.l.b16 %v3350
    %v4894 = vunpack.c.h.b16 %v3350
    %v4895 = vunpack.c.l.b16 %v3351
    %v4896 = vunpack.c.h.b16 %v3351
    %v4897 = vunpack.c.l.b16 %v3352
    %v4898 = vunpack.c.h.b16 %v3352
    %v4899 = vunpack.c.l.b16 %v3353
    %v4900 = vunpack.c.h.b16 %v3353
    %v4901 = vunpack.c.l.b16 %v3354
    %v4902 = vunpack.c.h.b16 %v3354
    %v4903 = vunpack.c.l.b16 %v3355
    %v4904 = vunpack.c.h.b16 %v3355
    %v4905 = vunpack.c.l.b16 %v3356
    %v4906 = vunpack.c.h.b16 %v3356
    %v4907 = vunpack.c.l.b16 %v3357
    %v4908 = vunpack.c.h.b16 %v3357
    %v4909 = vunpack.c.l.b16 %v3358
    %v4910 = vunpack.c.h.b16 %v3358
    %v4911 = vunpack.c.l.b16 %v3359
    %v4912 = vunpack.c.h.b16 %v3359
    %v4913 = vunpack.c.l.b16 %v3360
    %v4914 = vunpack.c.h.b16 %v3360
    %v4915 = vunpack.c.l.b16 %v3361
    %v4916 = vunpack.c.h.b16 %v3361
    %v4917 = vunpack.c.l.b16 %v3362
    %v4918 = vunpack.c.h.b16 %v3362
    %v4919 = vunpack.c.l.b16 %v3363
    %v4920 = vunpack.c.h.b16 %v3363
    %v4921 = vunpack.c.l.b16 %v3364
    %v4922 = vunpack.c.h.b16 %v3364
    %v4923 = vunpack.c.l.b16 %v3365
    %v4924 = vunpack.c.h.b16 %v3365
    %v4925 = vunpack.c.l.b16 %v3366
    %v4926 = vunpack.c.h.b16 %v3366
    %v4927 = vunpack.c.l.b16 %v3367
    %v4928 = vunpack.c.h.b16 %v3367
    %v4929 = vunpack.c.l.b16 %v3368
    %v4930 = vunpack.c.h.b16 %v3368
    %v4931 = vunpack.c.l.b16 %v3369
    %v4932 = vunpack.c.h.b16 %v3369
    %v4933 = vunpack.c.l.b16 %v3370
    %v4934 = vunpack.c.h.b16 %v3370
    %v4935 = vunpack.c.l.b16 %v3371
    %v4936 = vunpack.c.h.b16 %v3371
    %v4937 = vunpack.c.l.b16 %v3372
    %v4938 = vunpack.c.h.b16 %v3372
    %v4939 = vunpack.c.l.b16 %v3373
    %v4940 = vunpack.c.h.b16 %v3373
    %v4941 = vunpack.c.l.b16 %v3374
    %v4942 = vunpack.c.h.b16 %v3374
    %v4943 = vunpack.c.l.b16 %v3375
    %v4944 = vunpack.c.h.b16 %v3375
    %v4945 = vunpack.c.l.b16 %v3376
    %v4946 = vunpack.c.h.b16 %v3376
    %v4947 = vunpack.c.l.b16 %v3377
    %v4948 = vunpack.c.h.b16 %v3377
    %v4949 = vunpack.c.l.b16 %v3378
    %v4950 = vunpack.c.h.b16 %v3378
    %v4951 = vunpack.c.l.b16 %v3379
    %v4952 = vunpack.c.h.b16 %v3379
    %v4953 = vunpack.c.l.b16 %v3380
    %v4954 = vunpack.c.h.b16 %v3380
    %v4955 = vunpack.c.l.b16 %v3381
    %v4956 = vunpack.c.h.b16 %v3381
    %v4957 = vunpack.c.l.b16 %v3382
    %v4958 = vunpack.c.h.b16 %v3382
    %v4959 = vunpack.c.l.b16 %v3383
    %v4960 = vunpack.c.h.b16 %v3383
    %v4961 = vunpack.c.l.b16 %v3384
    %v4962 = vunpack.c.h.b16 %v3384
    %v4963 = vpack.c.b16 %v3947, %v3939
    %v4964 = vpack.c.b16 %v3948, %v3940
    %v4965 = vpack.c.b16 %v3949, %v3941
    %v4966 = vpack.c.b16 %v3950, %v3942
    %v4967 = vpack.c.b16 %v3951, %v3943
    %v4968 = vpack.c.b16 %v3952, %v3944
    %v4969 = vpack.c.b16 %v3953, %v3945
    %v4970 = vpack.c.b16 %v3954, %v3946
    %v4971 = vpack.c.b16 %v3963, %v3955
    %v4972 = vpack.c.b16 %v3964, %v3956
    %v4973 = vpack.c.b16 %v3965, %v3957
    %v4974 = vpack.c.b16 %v3966, %v3958
    %v4975 = vpack.c.b16 %v3967, %v3959
    %v4976 = vpack.c.b16 %v3968, %v3960
    %v4977 = vpack.c.b16 %v3969, %v3961
    %v4978 = vpack.c.b16 %v3970, %v3962
    %v4979 = vpack.c.b16 %v3979, %v3971
    %v4980 = vpack.c.b16 %v3980, %v3972
    %v4981 = vpack.c.b16 %v3981, %v3973
    %v4982 = vpack.c.b16 %v3982, %v3974
    %v4983 = vpack.c.b16 %v3983, %v3975
    %v4984 = vpack.c.b16 %v3984, %v3976
    %v4985 = vpack.c.b16 %v3985, %v3977
    %v4986 = vpack.c.b16 %v3986, %v3978
    %v4987 = vpack.c.b16 %v3995, %v3987
    %v4988 = vpack.c.b16 %v3996, %v3988
    %v4989 = vpack.c.b16 %v3997, %v3989
    %v4990 = vpack.c.b16 %v3998, %v3990
    %v4991 = vpack.c.b16 %v3999, %v3991
    %v4992 = vpack.c.b16 %v4000, %v3992
    %v4993 = vpack.c.b16 %v4001, %v3993
    %v4994 = vpack.c.b16 %v4002, %v3994
    %v4995 = vpack.c.b16 %v4011, %v4003
    %v4996 = vpack.c.b16 %v4012, %v4004
    %v4997 = vpack.c.b16 %v4013, %v4005
    %v4998 = vpack.c.b16 %v4014, %v4006
    %v4999 = vpack.c.b16 %v4015, %v4007
    %v5000 = vpack.c.b16 %v4016, %v4008
    %v5001 = vpack.c.b16 %v4017, %v4009
    %v5002 = vpack.c.b16 %v4018, %v4010
    %v5003 = vpack.c.b16 %v4027, %v4019
    %v5004 = vpack.c.b16 %v4028, %v4020
    %v5005 = vpack.c.b16 %v4029, %v4021
    %v5006 = vpack.c.b16 %v4030, %v4022
    %v5007 = vpack.c.b16 %v4031, %v4023
    %v5008 = vpack.c.b16 %v4032, %v4024
    %v5009 = vpack.c.b16 %v4033, %v4025
    %v5010 = vpack.c.b16 %v4034, %v4026
    %v5011 = vpack.c.b16 %v4043, %v4035
    %v5012 = vpack.c.b16 %v4044, %v4036
    %v5013 = vpack.c.b16 %v4045, %v4037
    %v5014 = vpack.c.b16 %v4046, %v4038
    %v5015 = vpack.c.b16 %v4047, %v4039
    %v5016 = vpack.c.b16 %v4048, %v4040
    %v5017 = vpack.c.b16 %v4049, %v4041
    %v5018 = vpack.c.b16 %v4050, %v4042
    %v5019 = vpack.c.b16 %v4059, %v4051
    %v5020 = vpack.c.b16 %v4060, %v4052
    %v5021 = vpack.c.b16 %v4061, %v4053
    %v5022 = vpack.c.b16 %v4062, %v4054
    %v5023 = vpack.c.b16 %v4063, %v4055
    %v5024 = vpack.c.b16 %v4064, %v4056
    %v5025 = vpack.c.b16 %v4065, %v4057
    %v5026 = vpack.c.b16 %v4066, %v4058
    %v5027 = vpack.c.b16 %v4075, %v4067
    %v5028 = vpack.c.b16 %v4076, %v4068
    %v5029 = vpack.c.b16 %v4077, %v4069
    %v5030 = vpack.c.b16 %v4078, %v4070
    %v5031 = vpack.c.b16 %v4079, %v4071
    %v5032 = vpack.c.b16 %v4080, %v4072
    %v5033 = vpack.c.b16 %v4081, %v4073
    %v5034 = vpack.c.b16 %v4082, %v4074
    %v5035 = vpack.c.b16 %v4091, %v4083
    %v5036 = vpack.c.b16 %v4092, %v4084
    %v5037 = vpack.c.b16 %v4093, %v4085
    %v5038 = vpack.c.b16 %v4094, %v4086
    %v5039 = vpack.c.b16 %v4095, %v4087
    %v5040 = vpack.c.b16 %v4096, %v4088
    %v5041 = vpack.c.b16 %v4097, %v4089
    %v5042 = vpack.c.b16 %v4098, %v4090
    %v5043 = vpack.c.b16 %v4107, %v4099
    %v5044 = vpack.c.b16 %v4108, %v4100
    %v5045 = vpack.c.b16 %v4109, %v4101
    %v5046 = vpack.c.b16 %v4110, %v4102
    %v5047 = vpack.c.b16 %v4111, %v4103
    %v5048 = vpack.c.b16 %v4112, %v4104
    %v5049 = vpack.c.b16 %v4113, %v4105
    %v5050 = vpack.c.b16 %v4114, %v4106
    %v5051 = vpack.c.b16 %v4123, %v4115
    %v5052 = vpack.c.b16 %v4124, %v4116
    %v5053 = vpack.c.b16 %v4125, %v4117
    %v5054 = vpack.c.b16 %v4126, %v4118
    %v5055 = vpack.c.b16 %v4127, %v4119
    %v5056 = vpack.c.b16 %v4128, %v4120
    %v5057 = vpack.c.b16 %v4129, %v4121
    %v5058 = vpack.c.b16 %v4130, %v4122
    %v5059 = vpack.c.b16 %v4139, %v4131
    %v5060 = vpack.c.b16 %v4140, %v4132
    %v5061 = vpack.c.b16 %v4141, %v4133
    %v5062 = vpack.c.b16 %v4142, %v4134
    %v5063 = vpack.c.b16 %v4143, %v4135
    %v5064 = vpack.c.b16 %v4144, %v4136
    %v5065 = vpack.c.b16 %v4145, %v4137
    %v5066 = vpack.c.b16 %v4146, %v4138
    %v5067 = vpack.c.b16 %v4155, %v4147
    %v5068 = vpack.c.b16 %v4156, %v4148
    %v5069 = vpack.c.b16 %v4157, %v4149
    %v5070 = vpack.c.b16 %v4158, %v4150
    %v5071 = vpack.c.b16 %v4159, %v4151
    %v5072 = vpack.c.b16 %v4160, %v4152
    %v5073 = vpack.c.b16 %v4161, %v4153
    %v5074 = vpack.c.b16 %v4162, %v4154
    %v5075 = vpack.c.b16 %v4171, %v4163
    %v5076 = vpack.c.b16 %v4172, %v4164
    %v5077 = vpack.c.b16 %v4173, %v4165
    %v5078 = vpack.c.b16 %v4174, %v4166
    %v5079 = vpack.c.b16 %v4175, %v4167
    %v5080 = vpack.c.b16 %v4176, %v4168
    %v5081 = vpack.c.b16 %v4177, %v4169
    %v5082 = vpack.c.b16 %v4178, %v4170
    %v5083 = vpack.c.b16 %v4187, %v4179
    %v5084 = vpack.c.b16 %v4188, %v4180
    %v5085 = vpack.c.b16 %v4189, %v4181
    %v5086 = vpack.c.b16 %v4190, %v4182
    %v5087 = vpack.c.b16 %v4191, %v4183
    %v5088 = vpack.c.b16 %v4192, %v4184
    %v5089 = vpack.c.b16 %v4193, %v4185
    %v5090 = vpack.c.b16 %v4194, %v4186
    %v5091 = vpack.c.b16 %v4203, %v4195
    %v5092 = vpack.c.b16 %v4204, %v4196
    %v5093 = vpack.c.b16 %v4205, %v4197
    %v5094 = vpack.c.b16 %v4206, %v4198
    %v5095 = vpack.c.b16 %v4207, %v4199
    %v5096 = vpack.c.b16 %v4208, %v4200
    %v5097 = vpack.c.b16 %v4209, %v4201
    %v5098 = vpack.c.b16 %v4210, %v4202
    %v5099 = vpack.c.b16 %v4219, %v4211
    %v5100 = vpack.c.b16 %v4220, %v4212
    %v5101 = vpack.c.b16 %v4221, %v4213
    %v5102 = vpack.c.b16 %v4222, %v4214
    %v5103 = vpack.c.b16 %v4223, %v4215
    %v5104 = vpack.c.b16 %v4224, %v4216
    %v5105 = vpack.c.b16 %v4225, %v4217
    %v5106 = vpack.c.b16 %v4226, %v4218
    %v5107 = vpack.c.b16 %v4235, %v4227
    %v5108 = vpack.c.b16 %v4236, %v4228
    %v5109 = vpack.c.b16 %v4237, %v4229
    %v5110 = vpack.c.b16 %v4238, %v4230
    %v5111 = vpack.c.b16 %v4239, %v4231
    %v5112 = vpack.c.b16 %v4240, %v4232
    %v5113 = vpack.c.b16 %v4241, %v4233
    %v5114 = vpack.c.b16 %v4242, %v4234
    %v5115 = vpack.c.b16 %v4251, %v4243
    %v5116 = vpack.c.b16 %v4252, %v4244
    %v5117 = vpack.c.b16 %v4253, %v4245
    %v5118 = vpack.c.b16 %v4254, %v4246
    %v5119 = vpack.c.b16 %v4255, %v4247
    %v5120 = vpack.c.b16 %v4256, %v4248
    %v5121 = vpack.c.b16 %v4257, %v4249
    %v5122 = vpack.c.b16 %v4258, %v4250
    %v5123 = vpack.c.b16 %v4267, %v4259
    %v5124 = vpack.c.b16 %v4268, %v4260
    %v5125 = vpack.c.b16 %v4269, %v4261
    %v5126 = vpack.c.b16 %v4270, %v4262
    %v5127 = vpack.c.b16 %v4271, %v4263
    %v5128 = vpack.c.b16 %v4272, %v4264
    %v5129 = vpack.c.b16 %v4273, %v4265
    %v5130 = vpack.c.b16 %v4274, %v4266
    %v5131 = vpack.c.b16 %v4283, %v4275
    %v5132 = vpack.c.b16 %v4284, %v4276
    %v5133 = vpack.c.b16 %v4285, %v4277
    %v5134 = vpack.c.b16 %v4286, %v4278
    %v5135 = vpack.c.b16 %v4287, %v4279
    %v5136 = vpack.c.b16 %v4288, %v4280
    %v5137 = vpack.c.b16 %v4289, %v4281
    %v5138 = vpack.c.b16 %v4290, %v4282
    %v5139 = vpack.c.b16 %v4299, %v4291
    %v5140 = vpack.c.b16 %v4300, %v4292
    %v5141 = vpack.c.b16 %v4301, %v4293
    %v5142 = vpack.c.b16 %v4302, %v4294
    %v5143 = vpack.c.b16 %v4303, %v4295
    %v5144 = vpack.c.b16 %v4304, %v4296
    %v5145 = vpack.c.b16 %v4305, %v4297
    %v5146 = vpack.c.b16 %v4306, %v4298
    %v5147 = vpack.c.b16 %v4315, %v4307
    %v5148 = vpack.c.b16 %v4316, %v4308
    %v5149 = vpack.c.b16 %v4317, %v4309
    %v5150 = vpack.c.b16 %v4318, %v4310
    %v5151 = vpack.c.b16 %v4319, %v4311
    %v5152 = vpack.c.b16 %v4320, %v4312
    %v5153 = vpack.c.b16 %v4321, %v4313
    %v5154 = vpack.c.b16 %v4322, %v4314
    %v5155 = vpack.c.b16 %v4331, %v4323
    %v5156 = vpack.c.b16 %v4332, %v4324
    %v5157 = vpack.c.b16 %v4333, %v4325
    %v5158 = vpack.c.b16 %v4334, %v4326
    %v5159 = vpack.c.b16 %v4335, %v4327
    %v5160 = vpack.c.b16 %v4336, %v4328
    %v5161 = vpack.c.b16 %v4337, %v4329
    %v5162 = vpack.c.b16 %v4338, %v4330
    %v5163 = vpack.c.b16 %v4347, %v4339
    %v5164 = vpack.c.b16 %v4348, %v4340
    %v5165 = vpack.c.b16 %v4349, %v4341
    %v5166 = vpack.c.b16 %v4350, %v4342
    %v5167 = vpack.c.b16 %v4351, %v4343
    %v5168 = vpack.c.b16 %v4352, %v4344
    %v5169 = vpack.c.b16 %v4353, %v4345
    %v5170 = vpack.c.b16 %v4354, %v4346
    %v5171 = vpack.c.b16 %v4363, %v4355
    %v5172 = vpack.c.b16 %v4364, %v4356
    %v5173 = vpack.c.b16 %v4365, %v4357
    %v5174 = vpack.c.b16 %v4366, %v4358
    %v5175 = vpack.c.b16 %v4367, %v4359
    %v5176 = vpack.c.b16 %v4368, %v4360
    %v5177 = vpack.c.b16 %v4369, %v4361
    %v5178 = vpack.c.b16 %v4370, %v4362
    %v5179 = vpack.c.b16 %v4379, %v4371
    %v5180 = vpack.c.b16 %v4380, %v4372
    %v5181 = vpack.c.b16 %v4381, %v4373
    %v5182 = vpack.c.b16 %v4382, %v4374
    %v5183 = vpack.c.b16 %v4383, %v4375
    %v5184 = vpack.c.b16 %v4384, %v4376
    %v5185 = vpack.c.b16 %v4385, %v4377
    %v5186 = vpack.c.b16 %v4386, %v4378
    %v5187 = vpack.c.b16 %v4395, %v4387
    %v5188 = vpack.c.b16 %v4396, %v4388
    %v5189 = vpack.c.b16 %v4397, %v4389
    %v5190 = vpack.c.b16 %v4398, %v4390
    %v5191 = vpack.c.b16 %v4399, %v4391
    %v5192 = vpack.c.b16 %v4400, %v4392
    %v5193 = vpack.c.b16 %v4401, %v4393
    %v5194 = vpack.c.b16 %v4402, %v4394
    %v5195 = vpack.c.b16 %v4411, %v4403
    %v5196 = vpack.c.b16 %v4412, %v4404
    %v5197 = vpack.c.b16 %v4413, %v4405
    %v5198 = vpack.c.b16 %v4414, %v4406
    %v5199 = vpack.c.b16 %v4415, %v4407
    %v5200 = vpack.c.b16 %v4416, %v4408
    %v5201 = vpack.c.b16 %v4417, %v4409
    %v5202 = vpack.c.b16 %v4418, %v4410
    %v5203 = vpack.c.b16 %v4427, %v4419
    %v5204 = vpack.c.b16 %v4428, %v4420
    %v5205 = vpack.c.b16 %v4429, %v4421
    %v5206 = vpack.c.b16 %v4430, %v4422
    %v5207 = vpack.c.b16 %v4431, %v4423
    %v5208 = vpack.c.b16 %v4432, %v4424
    %v5209 = vpack.c.b16 %v4433, %v4425
    %v5210 = vpack.c.b16 %v4434, %v4426
    %v5211 = vpack.c.b16 %v4443, %v4435
    %v5212 = vpack.c.b16 %v4444, %v4436
    %v5213 = vpack.c.b16 %v4445, %v4437
    %v5214 = vpack.c.b16 %v4446, %v4438
    %v5215 = vpack.c.b16 %v4447, %v4439
    %v5216 = vpack.c.b16 %v4448, %v4440
    %v5217 = vpack.c.b16 %v4449, %v4441
    %v5218 = vpack.c.b16 %v4450, %v4442
    %v5219 = vpack.c.b16 %v4459, %v4451
    %v5220 = vpack.c.b16 %v4460, %v4452
    %v5221 = vpack.c.b16 %v4461, %v4453
    %v5222 = vpack.c.b16 %v4462, %v4454
    %v5223 = vpack.c.b16 %v4463, %v4455
    %v5224 = vpack.c.b16 %v4464, %v4456
    %v5225 = vpack.c.b16 %v4465, %v4457
    %v5226 = vpack.c.b16 %v4466, %v4458
    %v5227 = vpack.c.b16 %v4475, %v4467
    %v5228 = vpack.c.b16 %v4476, %v4468
    %v5229 = vpack.c.b16 %v4477, %v4469
    %v5230 = vpack.c.b16 %v4478, %v4470
    %v5231 = vpack.c.b16 %v4479, %v4471
    %v5232 = vpack.c.b16 %v4480, %v4472
    %v5233 = vpack.c.b16 %v4481, %v4473
    %v5234 = vpack.c.b16 %v4482, %v4474
    %v5235 = vpack.c.b16 %v4491, %v4483
    %v5236 = vpack.c.b16 %v4492, %v4484
    %v5237 = vpack.c.b16 %v4493, %v4485
    %v5238 = vpack.c.b16 %v4494, %v4486
    %v5239 = vpack.c.b16 %v4495, %v4487
    %v5240 = vpack.c.b16 %v4496, %v4488
    %v5241 = vpack.c.b16 %v4497, %v4489
    %v5242 = vpack.c.b16 %v4498, %v4490
    %v5243 = vpack.c.b16 %v4507, %v4499
    %v5244 = vpack.c.b16 %v4508, %v4500
    %v5245 = vpack.c.b16 %v4509, %v4501
    %v5246 = vpack.c.b16 %v4510, %v4502
    %v5247 = vpack.c.b16 %v4511, %v4503
    %v5248 = vpack.c.b16 %v4512, %v4504
    %v5249 = vpack.c.b16 %v4513, %v4505
    %v5250 = vpack.c.b16 %v4514, %v4506
    %v5251 = vpack.c.b16 %v4523, %v4515
    %v5252 = vpack.c.b16 %v4524, %v4516
    %v5253 = vpack.c.b16 %v4525, %v4517
    %v5254 = vpack.c.b16 %v4526, %v4518
    %v5255 = vpack.c.b16 %v4527, %v4519
    %v5256 = vpack.c.b16 %v4528, %v4520
    %v5257 = vpack.c.b16 %v4529, %v4521
    %v5258 = vpack.c.b16 %v4530, %v4522
    %v5259 = vpack.c.b16 %v4539, %v4531
    %v5260 = vpack.c.b16 %v4540, %v4532
    %v5261 = vpack.c.b16 %v4541, %v4533
    %v5262 = vpack.c.b16 %v4542, %v4534
    %v5263 = vpack.c.b16 %v4543, %v4535
    %v5264 = vpack.c.b16 %v4544, %v4536
    %v5265 = vpack.c.b16 %v4545, %v4537
    %v5266 = vpack.c.b16 %v4546, %v4538
    %v5267 = vpack.c.b16 %v4555, %v4547
    %v5268 = vpack.c.b16 %v4556, %v4548
    %v5269 = vpack.c.b16 %v4557, %v4549
    %v5270 = vpack.c.b16 %v4558, %v4550
    %v5271 = vpack.c.b16 %v4559, %v4551
    %v5272 = vpack.c.b16 %v4560, %v4552
    %v5273 = vpack.c.b16 %v4561, %v4553
    %v5274 = vpack.c.b16 %v4562, %v4554
    %v5275 = vpack.c.b16 %v4571, %v4563
    %v5276 = vpack.c.b16 %v4572, %v4564
    %v5277 = vpack.c.b16 %v4573, %v4565
    %v5278 = vpack.c.b16 %v4574, %v4566
    %v5279 = vpack.c.b16 %v4575, %v4567
    %v5280 = vpack.c.b16 %v4576, %v4568
    %v5281 = vpack.c.b16 %v4577, %v4569
    %v5282 = vpack.c.b16 %v4578, %v4570
    %v5283 = vpack.c.b16 %v4587, %v4579
    %v5284 = vpack.c.b16 %v4588, %v4580
    %v5285 = vpack.c.b16 %v4589, %v4581
    %v5286 = vpack.c.b16 %v4590, %v4582
    %v5287 = vpack.c.b16 %v4591, %v4583
    %v5288 = vpack.c.b16 %v4592, %v4584
    %v5289 = vpack.c.b16 %v4593, %v4585
    %v5290 = vpack.c.b16 %v4594, %v4586
    %v5291 = vpack.c.b16 %v4603, %v4595
    %v5292 = vpack.c.b16 %v4604, %v4596
    %v5293 = vpack.c.b16 %v4605, %v4597
    %v5294 = vpack.c.b16 %v4606, %v4598
    %v5295 = vpack.c.b16 %v4607, %v4599
    %v5296 = vpack.c.b16 %v4608, %v4600
    %v5297 = vpack.c.b16 %v4609, %v4601
    %v5298 = vpack.c.b16 %v4610, %v4602
    %v5299 = vpack.c.b16 %v4619, %v4611
    %v5300 = vpack.c.b16 %v4620, %v4612
    %v5301 = vpack.c.b16 %v4621, %v4613
    %v5302 = vpack.c.b16 %v4622, %v4614
    %v5303 = vpack.c.b16 %v4623, %v4615
    %v5304 = vpack.c.b16 %v4624, %v4616
    %v5305 = vpack.c.b16 %v4625, %v4617
    %v5306 = vpack.c.b16 %v4626, %v4618
    %v5307 = vpack.c.b16 %v4635, %v4627
    %v5308 = vpack.c.b16 %v4636, %v4628
    %v5309 = vpack.c.b16 %v4637, %v4629
    %v5310 = vpack.c.b16 %v4638, %v4630
    %v5311 = vpack.c.b16 %v4639, %v4631
    %v5312 = vpack.c.b16 %v4640, %v4632
    %v5313 = vpack.c.b16 %v4641, %v4633
    %v5314 = vpack.c.b16 %v4642, %v4634
    %v5315 = vpack.c.b16 %v4651, %v4643
    %v5316 = vpack.c.b16 %v4652, %v4644
    %v5317 = vpack.c.b16 %v4653, %v4645
    %v5318 = vpack.c.b16 %v4654, %v4646
    %v5319 = vpack.c.b16 %v4655, %v4647
    %v5320 = vpack.c.b16 %v4656, %v4648
    %v5321 = vpack.c.b16 %v4657, %v4649
    %v5322 = vpack.c.b16 %v4658, %v4650
    %v5323 = vpack.c.b16 %v4667, %v4659
    %v5324 = vpack.c.b16 %v4668, %v4660
    %v5325 = vpack.c.b16 %v4669, %v4661
    %v5326 = vpack.c.b16 %v4670, %v4662
    %v5327 = vpack.c.b16 %v4671, %v4663
    %v5328 = vpack.c.b16 %v4672, %v4664
    %v5329 = vpack.c.b16 %v4673, %v4665
    %v5330 = vpack.c.b16 %v4674, %v4666
    %v5331 = vpack.c.b16 %v4683, %v4675
    %v5332 = vpack.c.b16 %v4684, %v4676
    %v5333 = vpack.c.b16 %v4685, %v4677
    %v5334 = vpack.c.b16 %v4686, %v4678
    %v5335 = vpack.c.b16 %v4687, %v4679
    %v5336 = vpack.c.b16 %v4688, %v4680
    %v5337 = vpack.c.b16 %v4689, %v4681
    %v5338 = vpack.c.b16 %v4690, %v4682
    %v5339 = vpack.c.b16 %v4699, %v4691
    %v5340 = vpack.c.b16 %v4700, %v4692
    %v5341 = vpack.c.b16 %v4701, %v4693
    %v5342 = vpack.c.b16 %v4702, %v4694
    %v5343 = vpack.c.b16 %v4703, %v4695
    %v5344 = vpack.c.b16 %v4704, %v4696
    %v5345 = vpack.c.b16 %v4705, %v4697
    %v5346 = vpack.c.b16 %v4706, %v4698
    %v5347 = vpack.c.b16 %v4715, %v4707
    %v5348 = vpack.c.b16 %v4716, %v4708
    %v5349 = vpack.c.b16 %v4717, %v4709
    %v5350 = vpack.c.b16 %v4718, %v4710
    %v5351 = vpack.c.b16 %v4719, %v4711
    %v5352 = vpack.c.b16 %v4720, %v4712
    %v5353 = vpack.c.b16 %v4721, %v4713
    %v5354 = vpack.c.b16 %v4722, %v4714
    %v5355 = vpack.c.b16 %v4731, %v4723
    %v5356 = vpack.c.b16 %v4732, %v4724
    %v5357 = vpack.c.b16 %v4733, %v4725
    %v5358 = vpack.c.b16 %v4734, %v4726
    %v5359 = vpack.c.b16 %v4735, %v4727
    %v5360 = vpack.c.b16 %v4736, %v4728
    %v5361 = vpack.c.b16 %v4737, %v4729
    %v5362 = vpack.c.b16 %v4738, %v4730
    %v5363 = vpack.c.b16 %v4747, %v4739
    %v5364 = vpack.c.b16 %v4748, %v4740
    %v5365 = vpack.c.b16 %v4749, %v4741
    %v5366 = vpack.c.b16 %v4750, %v4742
    %v5367 = vpack.c.b16 %v4751, %v4743
    %v5368 = vpack.c.b16 %v4752, %v4744
    %v5369 = vpack.c.b16 %v4753, %v4745
    %v5370 = vpack.c.b16 %v4754, %v4746
    %v5371 = vpack.c.b16 %v4763, %v4755
    %v5372 = vpack.c.b16 %v4764, %v4756
    %v5373 = vpack.c.b16 %v4765, %v4757
    %v5374 = vpack.c.b16 %v4766, %v4758
    %v5375 = vpack.c.b16 %v4767, %v4759
    %v5376 = vpack.c.b16 %v4768, %v4760
    %v5377 = vpack.c.b16 %v4769, %v4761
    %v5378 = vpack.c.b16 %v4770, %v4762
    %v5379 = vpack.c.b16 %v4779, %v4771
    %v5380 = vpack.c.b16 %v4780, %v4772
    %v5381 = vpack.c.b16 %v4781, %v4773
    %v5382 = vpack.c.b16 %v4782, %v4774
    %v5383 = vpack.c.b16 %v4783, %v4775
    %v5384 = vpack.c.b16 %v4784, %v4776
    %v5385 = vpack.c.b16 %v4785, %v4777
    %v5386 = vpack.c.b16 %v4786, %v4778
    %v5387 = vpack.c.b16 %v4795, %v4787
    %v5388 = vpack.c.b16 %v4796, %v4788
    %v5389 = vpack.c.b16 %v4797, %v4789
    %v5390 = vpack.c.b16 %v4798, %v4790
    %v5391 = vpack.c.b16 %v4799, %v4791
    %v5392 = vpack.c.b16 %v4800, %v4792
    %v5393 = vpack.c.b16 %v4801, %v4793
    %v5394 = vpack.c.b16 %v4802, %v4794
    %v5395 = vpack.c.b16 %v4811, %v4803
    %v5396 = vpack.c.b16 %v4812, %v4804
    %v5397 = vpack.c.b16 %v4813, %v4805
    %v5398 = vpack.c.b16 %v4814, %v4806
    %v5399 = vpack.c.b16 %v4815, %v4807
    %v5400 = vpack.c.b16 %v4816, %v4808
    %v5401 = vpack.c.b16 %v4817, %v4809
    %v5402 = vpack.c.b16 %v4818, %v4810
    %v5403 = vpack.c.b16 %v4827, %v4819
    %v5404 = vpack.c.b16 %v4828, %v4820
    %v5405 = vpack.c.b16 %v4829, %v4821
    %v5406 = vpack.c.b16 %v4830, %v4822
    %v5407 = vpack.c.b16 %v4831, %v4823
    %v5408 = vpack.c.b16 %v4832, %v4824
    %v5409 = vpack.c.b16 %v4833, %v4825
    %v5410 = vpack.c.b16 %v4834, %v4826
    %v5411 = vpack.c.b16 %v4843, %v4835
    %v5412 = vpack.c.b16 %v4844, %v4836
    %v5413 = vpack.c.b16 %v4845, %v4837
    %v5414 = vpack.c.b16 %v4846, %v4838
    %v5415 = vpack.c.b16 %v4847, %v4839
    %v5416 = vpack.c.b16 %v4848, %v4840
    %v5417 = vpack.c.b16 %v4849, %v4841
    %v5418 = vpack.c.b16 %v4850, %v4842
    %v5419 = vpack.c.b16 %v4859, %v4851
    %v5420 = vpack.c.b16 %v4860, %v4852
    %v5421 = vpack.c.b16 %v4861, %v4853
    %v5422 = vpack.c.b16 %v4862, %v4854
    %v5423 = vpack.c.b16 %v4863, %v4855
    %v5424 = vpack.c.b16 %v4864, %v4856
    %v5425 = vpack.c.b16 %v4865, %v4857
    %v5426 = vpack.c.b16 %v4866, %v4858
    %v5427 = vpack.c.b16 %v4875, %v4867
    %v5428 = vpack.c.b16 %v4876, %v4868
    %v5429 = vpack.c.b16 %v4877, %v4869
    %v5430 = vpack.c.b16 %v4878, %v4870
    %v5431 = vpack.c.b16 %v4879, %v4871
    %v5432 = vpack.c.b16 %v4880, %v4872
    %v5433 = vpack.c.b16 %v4881, %v4873
    %v5434 = vpack.c.b16 %v4882, %v4874
    %v5435 = vpack.c.b16 %v4891, %v4883
    %v5436 = vpack.c.b16 %v4892, %v4884
    %v5437 = vpack.c.b16 %v4893, %v4885
    %v5438 = vpack.c.b16 %v4894, %v4886
    %v5439 = vpack.c.b16 %v4895, %v4887
    %v5440 = vpack.c.b16 %v4896, %v4888
    %v5441 = vpack.c.b16 %v4897, %v4889
    %v5442 = vpack.c.b16 %v4898, %v4890
    %v5443 = vpack.c.b16 %v4907, %v4899
    %v5444 = vpack.c.b16 %v4908, %v4900
    %v5445 = vpack.c.b16 %v4909, %v4901
    %v5446 = vpack.c.b16 %v4910, %v4902
    %v5447 = vpack.c.b16 %v4911, %v4903
    %v5448 = vpack.c.b16 %v4912, %v4904
    %v5449 = vpack.c.b16 %v4913, %v4905
    %v5450 = vpack.c.b16 %v4914, %v4906
    %v5451 = vpack.c.b16 %v4923, %v4915
    %v5452 = vpack.c.b16 %v4924, %v4916
    %v5453 = vpack.c.b16 %v4925, %v4917
    %v5454 = vpack.c.b16 %v4926, %v4918
    %v5455 = vpack.c.b16 %v4927, %v4919
    %v5456 = vpack.c.b16 %v4928, %v4920
    %v5457 = vpack.c.b16 %v4929, %v4921
    %v5458 = vpack.c.b16 %v4930, %v4922
    %v5459 = vpack.c.b16 %v4939, %v4931
    %v5460 = vpack.c.b16 %v4940, %v4932
    %v5461 = vpack.c.b16 %v4941, %v4933
    %v5462 = vpack.c.b16 %v4942, %v4934
    %v5463 = vpack.c.b16 %v4943, %v4935
    %v5464 = vpack.c.b16 %v4944, %v4936
    %v5465 = vpack.c.b16 %v4945, %v4937
    %v5466 = vpack.c.b16 %v4946, %v4938
    %v5467 = vpack.c.b16 %v4955, %v4947
    %v5468 = vpack.c.b16 %v4956, %v4948
    %v5469 = vpack.c.b16 %v4957, %v4949
    %v5470 = vpack.c.b16 %v4958, %v4950
    %v5471 = vpack.c.b16 %v4959, %v4951
    %v5472 = vpack.c.b16 %v4960, %v4952
    %v5473 = vpack.c.b16 %v4961, %v4953
    %v5474 = vpack.c.b16 %v4962, %v4954
    %5987 = vmatprep.subr.bf16.mxu0 %v4964
    %5988 = vmatpush1.bf16.msra.mxu0 %v4963
    %5989 = vmatprep.subr.bf16.mxu0 %v4972
    %5990 = vmatpush1.bf16.msra.mxu0 %v4971
    %5991 = vmatprep.subr.bf16.mxu0 %v4980
    %5992 = vmatpush1.bf16.msra.mxu0 %v4979
    %5993 = vmatprep.subr.bf16.mxu0 %v4988
    %5994 = vmatpush1.bf16.msra.mxu0 %v4987
    %5995 = vmatprep.subr.bf16.mxu0 %v4996
    %5996 = vmatpush1.bf16.msra.mxu0 %v4995
    %5997 = vmatprep.subr.bf16.mxu0 %v5004
    %5998 = vmatpush1.bf16.msra.mxu0 %v5003
    %5999 = vmatprep.subr.bf16.mxu0 %v5012
    %6000 = vmatpush1.bf16.msra.mxu0 %v5011
    %6001 = vmatprep.subr.bf16.mxu0 %v5020
    %6002 = vmatpush1.bf16.msra.mxu0 %v5019
    %6003 = vmatprep.subr.bf16.mxu0 %v5028
    %6004 = vmatpush1.bf16.msra.mxu0 %v5027
    %6005 = vmatprep.subr.bf16.mxu0 %v5036
    %6006 = vmatpush1.bf16.msra.mxu0 %v5035
    %6007 = vmatprep.subr.bf16.mxu0 %v5044
    %6008 = vmatpush1.bf16.msra.mxu0 %v5043
    %6009 = vmatprep.subr.bf16.mxu0 %v5052
    %6010 = vmatpush1.bf16.msra.mxu0 %v5051
    %6011 = vmatprep.subr.bf16.mxu0 %v5060
    %6012 = vmatpush1.bf16.msra.mxu0 %v5059
    %6013 = vmatprep.subr.bf16.mxu0 %v5068
    %6014 = vmatpush1.bf16.msra.mxu0 %v5067
    %6015 = vmatprep.subr.bf16.mxu0 %v5076
    %6016 = vmatpush1.bf16.msra.mxu0 %v5075
    %6017 = vmatprep.subr.bf16.mxu0 %v5084
    %6018 = vmatpush1.bf16.msra.mxu0 %v5083
    %6019 = vmatprep.mubr.bf16.mxu0 %v2810
    %6020 = vmatmul.mubr.bf16.gmra.mrb[0].mxu0 %v2809
    %v6021 = vpop.f32.mrb[0].mxu0
    %v6022 = vadd.f32 %v3390, %v6021
    %v6023 = vpop.f32.mrb[0].mxu0
    %v6024 = vadd.f32 %v3394, %v6023
    %v6025 = vpop.f32.mrb[0].mxu0
    %v6026 = vadd.f32 %v3390, %v6025
    %v6027 = vpop.f32.mrb[0].mxu0
    %v6028 = vadd.f32 %v3394, %v6027
    %6029 = vmatprep.mubr.bf16.mxu0 %v2818
    %6030 = vmatmul.mubr.bf16.gmra.mrb[0].mxu0 %v2817
    %v6031 = vpop.f32.mrb[0].mxu0
    %v6032 = vadd.f32 %v3390, %v6031
    %v6033 = vpop.f32.mrb[0].mxu0
    %v6034 = vadd.f32 %v3394, %v6033
    %v6035 = vpop.f32.mrb[0].mxu0
    %v6036 = vadd.f32 %v3390, %v6035
    %v6037 = vpop.f32.mrb[0].mxu0
    %v6038 = vadd.f32 %v3394, %v6037
    %6039 = vmatprep.mubr.bf16.mxu0 %v2826
    %6040 = vmatmul.mubr.bf16.gmra.mrb[0].mxu0 %v2825
    %v6041 = vpop.f32.mrb[0].mxu0
    %v6042 = vadd.f32 %v3390, %v6041
    %v6043 = vpop.f32.mrb[0].mxu0
    %v6044 = vadd.f32 %v3394, %v6043
    %v6045 = vpop.f32.mrb[0].mxu0
    %v6046 = vadd.f32 %v3390, %v6045
    %v6047 = vpop.f32.mrb[0].mxu0
    %v6048 = vadd.f32 %v3394, %v6047
    %6049 = vmatprep.mubr.bf16.mxu0 %v2834
    %6050 = vmatmul.mubr.bf16.gmra.mrb[0].mxu0 %v2833
    %v6051 = vpop.f32.mrb[0].mxu0
    %v6052 = vadd.f32 %v3390, %v6051
    %v6053 = vpop.f32.mrb[0].mxu0
    %v6054 = vadd.f32 %v3394, %v6053
    %v6055 = vpop.f32.mrb[0].mxu0
    %v6056 = vadd.f32 %v3390, %v6055
    %v6057 = vpop.f32.mrb[0].mxu0
    %v6058 = vadd.f32 %v3394, %v6057
    %6059 = vmatprep.mubr.bf16.mxu0 %v2842
    %6060 = vmatmul.mubr.bf16.gmra.mrb[0].mxu0 %v2841
    %v6061 = vpop.f32.mrb[0].mxu0
    %v6062 = vadd.f32 %v3390, %v6061
    %v6063 = vpop.f32.mrb[0].mxu0
    %v6064 = vadd.f32 %v3394, %v6063
    %v6065 = vpop.f32.mrb[0].mxu0
    %v6066 = vadd.f32 %v3390, %v6065
    %v6067 = vpop.f32.mrb[0].mxu0
    %v6068 = vadd.f32 %v3394, %v6067
    %6069 = vmatprep.mubr.bf16.mxu0 %v2850
    %6070 = vmatmul.mubr.bf16.gmra.mrb[0].mxu0 %v2849
    %v6071 = vpop.f32.mrb[0].mxu0
    %v6072 = vadd.f32 %v3390, %v6071
    %v6073 = vpop.f32.mrb[0].mxu0
    %v6074 = vadd.f32 %v3394, %v6073
    %v6075 = vpop.f32.mrb[0].mxu0
    %v6076 = vadd.f32 %v3390, %v6075
    %v6077 = vpop.f32.mrb[0].mxu0
    %v6078 = vadd.f32 %v3394, %v6077
    %6079 = vmatprep.mubr.bf16.mxu0 %v2858
    %6080 = vmatmul.mubr.bf16.gmra.mrb[0].mxu0 %v2857
    %v6081 = vpop.f32.mrb[0].mxu0
    %v6082 = vadd.f32 %v3390, %v6081
    %v6083 = vpop.f32.mrb[0].mxu0
    %v6084 = vadd.f32 %v3394, %v6083
    %v6085 = vpop.f32.mrb[0].mxu0
    %v6086 = vadd.f32 %v3390, %v6085
    %v6087 = vpop.f32.mrb[0].mxu0
    %v6088 = vadd.f32 %v3394, %v6087
    %6089 = vmatprep.mubr.bf16.mxu0 %v2866
    %6090 = vmatmul.mubr.bf16.gmra.mrb[0].mxu0 %v2865
    %v6091 = vpop.f32.mrb[0].mxu0
    %v6092 = vadd.f32 %v3390, %v6091
    %v6093 = vpop.f32.mrb[0].mxu0
    %v6094 = vadd.f32 %v3394, %v6093
    %v6095 = vpop.f32.mrb[0].mxu0
    %v6096 = vadd.f32 %v3390, %v6095
    %v6097 = vpop.f32.mrb[0].mxu0
    %v6098 = vadd.f32 %v3394, %v6097
    %6099 = vdwg.mxu0
    %6100 = vmatprep.subr.bf16.mxu0 %v5092
    %6101 = vmatpush1.bf16.msra.mxu0 %v5091
    %6102 = vmatprep.subr.bf16.mxu0 %v5100
    %6103 = vmatpush1.bf16.msra.mxu0 %v5099
    %6104 = vmatprep.subr.bf16.mxu0 %v5108
    %6105 = vmatpush1.bf16.msra.mxu0 %v5107
    %6106 = vmatprep.subr.bf16.mxu0 %v5116
    %6107 = vmatpush1.bf16.msra.mxu0 %v5115
    %6108 = vmatprep.subr.bf16.mxu0 %v5124
    %6109 = vmatpush1.bf16.msra.mxu0 %v5123
    %6110 = vmatprep.subr.bf16.mxu0 %v5132
    %6111 = vmatpush1.bf16.msra.mxu0 %v5131
    %6112 = vmatprep.subr.bf16.mxu0 %v5140
    %6113 = vmatpush1.bf16.msra.mxu0 %v5139
    %6114 = vmatprep.subr.bf16.mxu0 %v5148
    %6115 = vmatpush1.bf16.msra.mxu0 %v5147
    %6116 = vmatprep.subr.bf16.mxu0 %v5156
    %6117 = vmatpush1.bf16.msra.mxu0 %v5155
    %6118 = vmatprep.subr.bf16.mxu0 %v5164
    %6119 = vmatpush1.bf16.msra.mxu0 %v5163
    %6120 = vmatprep.subr.bf16.mxu0 %v5172
    %6121 = vmatpush1.bf16.msra.mxu0 %v5171
    %6122 = vmatprep.subr.bf16.mxu0 %v5180
    %6123 = vmatpush1.bf16.msra.mxu0 %v5179
    %6124 = vmatprep.subr.bf16.mxu0 %v5188
    %6125 = vmatpush1.bf16.msra.mxu0 %v5187
    %6126 = vmatprep.subr.bf16.mxu0 %v5196
    %6127 = vmatpush1.bf16.msra.mxu0 %v5195
    %6128 = vmatprep.subr.bf16.mxu0 %v5204
    %6129 = vmatpush1.bf16.msra.mxu0 %v5203
    %6130 = vmatprep.subr.bf16.mxu0 %v5212
    %6131 = vmatpush1.bf16.msra.mxu0 %v5211
    %6132 = vmatprep.mubr.bf16.mxu0 %v2812
    %6133 = vmatmul.mubr.bf16.gmra.mrb[0].mxu0 %v2811
    %v6134 = vpop.f32.mrb[0].mxu0
    %v6135 = vadd.f32 %v6022, %v6134
    %v6136 = vpop.f32.mrb[0].mxu0
    %v6137 = vadd.f32 %v6024, %v6136
    %v6138 = vpop.f32.mrb[0].mxu0
    %v6139 = vadd.f32 %v6026, %v6138
    %v6140 = vpop.f32.mrb[0].mxu0
    %v6141 = vadd.f32 %v6028, %v6140
    %6142 = vmatprep.mubr.bf16.mxu0 %v2820
    %6143 = vmatmul.mubr.bf16.gmra.mrb[0].mxu0 %v2819
    %v6144 = vpop.f32.mrb[0].mxu0
    %v6145 = vadd.f32 %v6032, %v6144
    %v6146 = vpop.f32.mrb[0].mxu0
    %v6147 = vadd.f32 %v6034, %v6146
    %v6148 = vpop.f32.mrb[0].mxu0
    %v6149 = vadd.f32 %v6036, %v6148
    %v6150 = vpop.f32.mrb[0].mxu0
    %v6151 = vadd.f32 %v6038, %v6150
    %6152 = vmatprep.mubr.bf16.mxu0 %v2828
    %6153 = vmatmul.mubr.bf16.gmra.mrb[0].mxu0 %v2827
    %v6154 = vpop.f32.mrb[0].mxu0
    %v6155 = vadd.f32 %v6042, %v6154
    %v6156 = vpop.f32.mrb[0].mxu0
    %v6157 = vadd.f32 %v6044, %v6156
    %v6158 = vpop.f32.mrb[0].mxu0
    %v6159 = vadd.f32 %v6046, %v6158
    %v6160 = vpop.f32.mrb[0].mxu0
    %v6161 = vadd.f32 %v6048, %v6160
    %6162 = vmatprep.mubr.bf16.mxu0 %v2836
    %6163 = vmatmul.mubr.bf16.gmra.mrb[0].mxu0 %v2835
    %v6164 = vpop.f32.mrb[0].mxu0
    %v6165 = vadd.f32 %v6052, %v6164
    %v6166 = vpop.f32.mrb[0].mxu0
    %v6167 = vadd.f32 %v6054, %v6166
    %v6168 = vpop.f32.mrb[0].mxu0
    %v6169 = vadd.f32 %v6056, %v6168
    %v6170 = vpop.f32.mrb[0].mxu0
    %v6171 = vadd.f32 %v6058, %v6170
    %6172 = vmatprep.mubr.bf16.mxu0 %v2844
    %6173 = vmatmul.mubr.bf16.gmra.mrb[0].mxu0 %v2843
    %v6174 = vpop.f32.mrb[0].mxu0
    %v6175 = vadd.f32 %v6062, %v6174
    %v6176 = vpop.f32.mrb[0].mxu0
    %v6177 = vadd.f32 %v6064, %v6176
    %v6178 = vpop.f32.mrb[0].mxu0
    %v6179 = vadd.f32 %v6066, %v6178
    %v6180 = vpop.f32.mrb[0].mxu0
    %v6181 = vadd.f32 %v6068, %v6180
    %6182 = vmatprep.mubr.bf16.mxu0 %v2852
    %6183 = vmatmul.mubr.bf16.gmra.mrb[0].mxu0 %v2851
    %v6184 = vpop.f32.mrb[0].mxu0
    %v6185 = vadd.f32 %v6072, %v6184
    %v6186 = vpop.f32.mrb[0].mxu0
    %v6187 = vadd.f32 %v6074, %v6186
    %v6188 = vpop.f32.mrb[0].mxu0
    %v6189 = vadd.f32 %v6076, %v6188
    %v6190 = vpop.f32.mrb[0].mxu0
    %v6191 = vadd.f32 %v6078, %v6190
    %6192 = vmatprep.mubr.bf16.mxu0 %v2860
    %6193 = vmatmul.mubr.bf16.gmra.mrb[0].mxu0 %v2859
    %v6194 = vpop.f32.mrb[0].mxu0
    %v6195 = vadd.f32 %v6082, %v6194
    %v6196 = vpop.f32.mrb[0].mxu0
    %v6197 = vadd.f32 %v6084, %v6196
    %v6198 = vpop.f32.mrb[0].mxu0
    %v6199 = vadd.f32 %v6086, %v6198
    %v6200 = vpop.f32.mrb[0].mxu0
    %v6201 = vadd.f32 %v6088, %v6200
    %6202 = vmatprep.mubr.bf16.mxu0 %v2868
    %6203 = vmatmul.mubr.bf16.gmra.mrb[0].mxu0 %v2867
    %v6204 = vpop.f32.mrb[0].mxu0
    %v6205 = vadd.f32 %v6092, %v6204
    %v6206 = vpop.f32.mrb[0].mxu0
    %v6207 = vadd.f32 %v6094, %v6206
    %v6208 = vpop.f32.mrb[0].mxu0
    %v6209 = vadd.f32 %v6096, %v6208
    %v6210 = vpop.f32.mrb[0].mxu0
    %v6211 = vadd.f32 %v6098, %v6210
    %6212 = vdwg.mxu0
    %6213 = vmatprep.subr.bf16.mxu0 %v5220
    %6214 = vmatpush1.bf16.msra.mxu0 %v5219
    %6215 = vmatprep.subr.bf16.mxu0 %v5228
    %6216 = vmatpush1.bf16.msra.mxu0 %v5227
    %6217 = vmatprep.subr.bf16.mxu0 %v5236
    %6218 = vmatpush1.bf16.msra.mxu0 %v5235
    %6219 = vmatprep.subr.bf16.mxu0 %v5244
    %6220 = vmatpush1.bf16.msra.mxu0 %v5243
    %6221 = vmatprep.subr.bf16.mxu0 %v5252
    %6222 = vmatpush1.bf16.msra.mxu0 %v5251
    %6223 = vmatprep.subr.bf16.mxu0 %v5260
    %6224 = vmatpush1.bf16.msra.mxu0 %v5259
    %6225 = vmatprep.subr.bf16.mxu0 %v5268
    %6226 = vmatpush1.bf16.msra.mxu0 %v5267
    %6227 = vmatprep.subr.bf16.mxu0 %v5276
    %6228 = vmatpush1.bf16.msra.mxu0 %v5275
    %6229 = vmatprep.subr.bf16.mxu0 %v5284
    %6230 = vmatpush1.bf16.msra.mxu0 %v5283
    %6231 = vmatprep.subr.bf16.mxu0 %v5292
    %6232 = vmatpush1.bf16.msra.mxu0 %v5291
    %6233 = vmatprep.subr.bf16.mxu0 %v5300
    %6234 = vmatpush1.bf16.msra.mxu0 %v5299
    %6235 = vmatprep.subr.bf16.mxu0 %v5308
    %6236 = vmatpush1.bf16.msra.mxu0 %v5307
    %6237 = vmatprep.subr.bf16.mxu0 %v5316
    %6238 = vmatpush1.bf16.msra.mxu0 %v5315
    %6239 = vmatprep.subr.bf16.mxu0 %v5324
    %6240 = vmatpush1.bf16.msra.mxu0 %v5323
    %6241 = vmatprep.subr.bf16.mxu0 %v5332
    %6242 = vmatpush1.bf16.msra.mxu0 %v5331
    %6243 = vmatprep.subr.bf16.mxu0 %v5340
    %6244 = vmatpush1.bf16.msra.mxu0 %v5339
    %6245 = vmatprep.mubr.bf16.mxu0 %v2814
    %6246 = vmatmul.mubr.bf16.gmra.mrb[0].mxu0 %v2813
    %v6247 = vpop.f32.mrb[0].mxu0
    %v6248 = vadd.f32 %v6135, %v6247
    %v6249 = vpop.f32.mrb[0].mxu0
    %v6250 = vadd.f32 %v6137, %v6249
    %v6251 = vpop.f32.mrb[0].mxu0
    %v6252 = vadd.f32 %v6139, %v6251
    %v6253 = vpop.f32.mrb[0].mxu0
    %v6254 = vadd.f32 %v6141, %v6253
    %6255 = vmatprep.mubr.bf16.mxu0 %v2822
    %6256 = vmatmul.mubr.bf16.gmra.mrb[0].mxu0 %v2821
    %v6257 = vpop.f32.mrb[0].mxu0
    %v6258 = vadd.f32 %v6145, %v6257
    %v6259 = vpop.f32.mrb[0].mxu0
    %v6260 = vadd.f32 %v6147, %v6259
    %v6261 = vpop.f32.mrb[0].mxu0
    %v6262 = vadd.f32 %v6149, %v6261
    %v6263 = vpop.f32.mrb[0].mxu0
    %v6264 = vadd.f32 %v6151, %v6263
    %6265 = vmatprep.mubr.bf16.mxu0 %v2830
    %6266 = vmatmul.mubr.bf16.gmra.mrb[0].mxu0 %v2829
    %v6267 = vpop.f32.mrb[0].mxu0
    %v6268 = vadd.f32 %v6155, %v6267
    %v6269 = vpop.f32.mrb[0].mxu0
    %v6270 = vadd.f32 %v6157, %v6269
    %v6271 = vpop.f32.mrb[0].mxu0
    %v6272 = vadd.f32 %v6159, %v6271
    %v6273 = vpop.f32.mrb[0].mxu0
    %v6274 = vadd.f32 %v6161, %v6273
    %6275 = vmatprep.mubr.bf16.mxu0 %v2838
    %6276 = vmatmul.mubr.bf16.gmra.mrb[0].mxu0 %v2837
    %v6277 = vpop.f32.mrb[0].mxu0
    %v6278 = vadd.f32 %v6165, %v6277
    %v6279 = vpop.f32.mrb[0].mxu0
    %v6280 = vadd.f32 %v6167, %v6279
    %v6281 = vpop.f32.mrb[0].mxu0
    %v6282 = vadd.f32 %v6169, %v6281
    %v6283 = vpop.f32.mrb[0].mxu0
    %v6284 = vadd.f32 %v6171, %v6283
    %6285 = vmatprep.mubr.bf16.mxu0 %v2846
    %6286 = vmatmul.mubr.bf16.gmra.mrb[0].mxu0 %v2845
    %v6287 = vpop.f32.mrb[0].mxu0
    %v6288 = vadd.f32 %v6175, %v6287
    %v6289 = vpop.f32.mrb[0].mxu0
    %v6290 = vadd.f32 %v6177, %v6289
    %v6291 = vpop.f32.mrb[0].mxu0
    %v6292 = vadd.f32 %v6179, %v6291
    %v6293 = vpop.f32.mrb[0].mxu0
    %v6294 = vadd.f32 %v6181, %v6293
    %6295 = vmatprep.mubr.bf16.mxu0 %v2854
    %6296 = vmatmul.mubr.bf16.gmra.mrb[0].mxu0 %v2853
    %v6297 = vpop.f32.mrb[0].mxu0
    %v6298 = vadd.f32 %v6185, %v6297
    %v6299 = vpop.f32.mrb[0].mxu0
    %v6300 = vadd.f32 %v6187, %v6299
    %v6301 = vpop.f32.mrb[0].mxu0
    %v6302 = vadd.f32 %v6189, %v6301
    %v6303 = vpop.f32.mrb[0].mxu0
    %v6304 = vadd.f32 %v6191, %v6303
    %6305 = vmatprep.mubr.bf16.mxu0 %v2862
    %6306 = vmatmul.mubr.bf16.gmra.mrb[0].mxu0 %v2861
    %v6307 = vpop.f32.mrb[0].mxu0
    %v6308 = vadd.f32 %v6195, %v6307
    %v6309 = vpop.f32.mrb[0].mxu0
    %v6310 = vadd.f32 %v6197, %v6309
    %v6311 = vpop.f32.mrb[0].mxu0
    %v6312 = vadd.f32 %v6199, %v6311
    %v6313 = vpop.f32.mrb[0].mxu0
    %v6314 = vadd.f32 %v6201, %v6313
    %6315 = vmatprep.mubr.bf16.mxu0 %v2870
    %6316 = vmatmul.mubr.bf16.gmra.mrb[0].mxu0 %v2869
    %v6317 = vpop.f32.mrb[0].mxu0
    %v6318 = vadd.f32 %v6205, %v6317
    %v6319 = vpop.f32.mrb[0].mxu0
    %v6320 = vadd.f32 %v6207, %v6319
    %v6321 = vpop.f32.mrb[0].mxu0
    %v6322 = vadd.f32 %v6209, %v6321
    %v6323 = vpop.f32.mrb[0].mxu0
    %v6324 = vadd.f32 %v6211, %v6323
    %6325 = vdwg.mxu0
    %6326 = vmatprep.subr.bf16.mxu0 %v5348
    %6327 = vmatpush1.bf16.msra.mxu0 %v5347
    %6328 = vmatprep.subr.bf16.mxu0 %v5356
    %6329 = vmatpush1.bf16.msra.mxu0 %v5355
    %6330 = vmatprep.subr.bf16.mxu0 %v5364
    %6331 = vmatpush1.bf16.msra.mxu0 %v5363
    %6332 = vmatprep.subr.bf16.mxu0 %v5372
    %6333 = vmatpush1.bf16.msra.mxu0 %v5371
    %6334 = vmatprep.subr.bf16.mxu0 %v5380
    %6335 = vmatpush1.bf16.msra.mxu0 %v5379
    %6336 = vmatprep.subr.bf16.mxu0 %v5388
    %6337 = vmatpush1.bf16.msra.mxu0 %v5387
    %6338 = vmatprep.subr.bf16.mxu0 %v5396
    %6339 = vmatpush1.bf16.msra.mxu0 %v5395
    %6340 = vmatprep.subr.bf16.mxu0 %v5404
    %6341 = vmatpush1.bf16.msra.mxu0 %v5403
    %6342 = vmatprep.subr.bf16.mxu0 %v5412
    %6343 = vmatpush1.bf16.msra.mxu0 %v5411
    %6344 = vmatprep.subr.bf16.mxu0 %v5420
    %6345 = vmatpush1.bf16.msra.mxu0 %v5419
    %6346 = vmatprep.subr.bf16.mxu0 %v5428
    %6347 = vmatpush1.bf16.msra.mxu0 %v5427
    %6348 = vmatprep.subr.bf16.mxu0 %v5436
    %6349 = vmatpush1.bf16.msra.mxu0 %v5435
    %6350 = vmatprep.subr.bf16.mxu0 %v5444
    %6351 = vmatpush1.bf16.msra.mxu0 %v5443
    %6352 = vmatprep.subr.bf16.mxu0 %v5452
    %6353 = vmatpush1.bf16.msra.mxu0 %v5451
    %6354 = vmatprep.subr.bf16.mxu0 %v5460
    %6355 = vmatpush1.bf16.msra.mxu0 %v5459
    %6356 = vmatprep.subr.bf16.mxu0 %v5468
    %6357 = vmatpush1.bf16.msra.mxu0 %v5467
    %6358 = vmatprep.mubr.bf16.mxu0 %v2816
    %6359 = vmatmul.mubr.bf16.gmra.mrb[0].mxu0 %v2815
    %v6360 = vpop.f32.mrb[0].mxu0
    %v6361 = vadd.f32 %v6248, %v6360
    %v6362 = vpop.f32.mrb[0].mxu0
    %v6363 = vadd.f32 %v6250, %v6362
    %v6364 = vpop.f32.mrb[0].mxu0
    %v6365 = vadd.f32 %v6252, %v6364
    %v6366 = vpop.f32.mrb[0].mxu0
    %v6367 = vadd.f32 %v6254, %v6366
    %6368 = vmatprep.mubr.bf16.mxu0 %v2824
    %6369 = vmatmul.mubr.bf16.gmra.mrb[0].mxu0 %v2823
    %v6370 = vpop.f32.mrb[0].mxu0
    %v6371 = vadd.f32 %v6258, %v6370
    %v6372 = vpop.f32.mrb[0].mxu0
    %v6373 = vadd.f32 %v6260, %v6372
    %v6374 = vpop.f32.mrb[0].mxu0
    %v6375 = vadd.f32 %v6262, %v6374
    %v6376 = vpop.f32.mrb[0].mxu0
    %v6377 = vadd.f32 %v6264, %v6376
    %6378 = vmatprep.mubr.bf16.mxu0 %v2832
    %6379 = vmatmul.mubr.bf16.gmra.mrb[0].mxu0 %v2831
    %v6380 = vpop.f32.mrb[0].mxu0
    %v6381 = vadd.f32 %v6268, %v6380
    %v6382 = vpop.f32.mrb[0].mxu0
    %v6383 = vadd.f32 %v6270, %v6382
    %v6384 = vpop.f32.mrb[0].mxu0
    %v6385 = vadd.f32 %v6272, %v6384
    %v6386 = vpop.f32.mrb[0].mxu0
    %v6387 = vadd.f32 %v6274, %v6386
    %6388 = vmatprep.mubr.bf16.mxu0 %v2840
    %6389 = vmatmul.mubr.bf16.gmra.mrb[0].mxu0 %v2839
    %v6390 = vpop.f32.mrb[0].mxu0
    %v6391 = vadd.f32 %v6278, %v6390
    %v6392 = vpop.f32.mrb[0].mxu0
    %v6393 = vadd.f32 %v6280, %v6392
    %v6394 = vpop.f32.mrb[0].mxu0
    %v6395 = vadd.f32 %v6282, %v6394
    %v6396 = vpop.f32.mrb[0].mxu0
    %v6397 = vadd.f32 %v6284, %v6396
    %6398 = vmatprep.mubr.bf16.mxu0 %v2848
    %6399 = vmatmul.mubr.bf16.gmra.mrb[0].mxu0 %v2847
    %v6400 = vpop.f32.mrb[0].mxu0
    %v6401 = vadd.f32 %v6288, %v6400
    %v6402 = vpop.f32.mrb[0].mxu0
    %v6403 = vadd.f32 %v6290, %v6402
    %v6404 = vpop.f32.mrb[0].mxu0
    %v6405 = vadd.f32 %v6292, %v6404
    %v6406 = vpop.f32.mrb[0].mxu0
    %v6407 = vadd.f32 %v6294, %v6406
    %6408 = vmatprep.mubr.bf16.mxu0 %v2856
    %6409 = vmatmul.mubr.bf16.gmra.mrb[0].mxu0 %v2855
    %v6410 = vpop.f32.mrb[0].mxu0
    %v6411 = vadd.f32 %v6298, %v6410
    %v6412 = vpop.f32.mrb[0].mxu0
    %v6413 = vadd.f32 %v6300, %v6412
    %v6414 = vpop.f32.mrb[0].mxu0
    %v6415 = vadd.f32 %v6302, %v6414
    %v6416 = vpop.f32.mrb[0].mxu0
    %v6417 = vadd.f32 %v6304, %v6416
    %6418 = vmatprep.mubr.bf16.mxu0 %v2864
    %6419 = vmatmul.mubr.bf16.gmra.mrb[0].mxu0 %v2863
    %v6420 = vpop.f32.mrb[0].mxu0
    %v6421 = vadd.f32 %v6308, %v6420
    %v6422 = vpop.f32.mrb[0].mxu0
    %v6423 = vadd.f32 %v6310, %v6422
    %v6424 = vpop.f32.mrb[0].mxu0
    %v6425 = vadd.f32 %v6312, %v6424
    %v6426 = vpop.f32.mrb[0].mxu0
    %v6427 = vadd.f32 %v6314, %v6426
    %6428 = vmatprep.mubr.bf16.mxu0 %v2872
    %6429 = vmatmul.mubr.bf16.gmra.mrb[0].mxu0 %v2871
    %v6430 = vpop.f32.mrb[0].mxu0
    %v6431 = vadd.f32 %v6318, %v6430
    %v6432 = vpop.f32.mrb[0].mxu0
    %v6433 = vadd.f32 %v6320, %v6432
    %v6434 = vpop.f32.mrb[0].mxu0
    %v6435 = vadd.f32 %v6322, %v6434
    %v6436 = vpop.f32.mrb[0].mxu0
    %v6437 = vadd.f32 %v6324, %v6436
    %6438 = vdwg.mxu0
    %6439 = vmatprep.subr.bf16.mxu0 %v4966
    %6440 = vmatpush1.bf16.msra.mxu0 %v4965
    %6441 = vmatprep.subr.bf16.mxu0 %v4974
    %6442 = vmatpush1.bf16.msra.mxu0 %v4973
    %6443 = vmatprep.subr.bf16.mxu0 %v4982
    %6444 = vmatpush1.bf16.msra.mxu0 %v4981
    %6445 = vmatprep.subr.bf16.mxu0 %v4990
    %6446 = vmatpush1.bf16.msra.mxu0 %v4989
    %6447 = vmatprep.subr.bf16.mxu0 %v4998
    %6448 = vmatpush1.bf16.msra.mxu0 %v4997
    %6449 = vmatprep.subr.bf16.mxu0 %v5006
    %6450 = vmatpush1.bf16.msra.mxu0 %v5005
    %6451 = vmatprep.subr.bf16.mxu0 %v5014
    %6452 = vmatpush1.bf16.msra.mxu0 %v5013
    %6453 = vmatprep.subr.bf16.mxu0 %v5022
    %6454 = vmatpush1.bf16.msra.mxu0 %v5021
    %6455 = vmatprep.subr.bf16.mxu0 %v5030
    %6456 = vmatpush1.bf16.msra.mxu0 %v5029
    %6457 = vmatprep.subr.bf16.mxu0 %v5038
    %6458 = vmatpush1.bf16.msra.mxu0 %v5037
    %6459 = vmatprep.subr.bf16.mxu0 %v5046
    %6460 = vmatpush1.bf16.msra.mxu0 %v5045
    %6461 = vmatprep.subr.bf16.mxu0 %v5054
    %6462 = vmatpush1.bf16.msra.mxu0 %v5053
    %6463 = vmatprep.subr.bf16.mxu0 %v5062
    %6464 = vmatpush1.bf16.msra.mxu0 %v5061
    %6465 = vmatprep.subr.bf16.mxu0 %v5070
    %6466 = vmatpush1.bf16.msra.mxu0 %v5069
    %6467 = vmatprep.subr.bf16.mxu0 %v5078
    %6468 = vmatpush1.bf16.msra.mxu0 %v5077
    %6469 = vmatprep.subr.bf16.mxu0 %v5086
    %6470 = vmatpush1.bf16.msra.mxu0 %v5085
    %6471 = vmatprep.mubr.bf16.mxu0 %v2810
    %6472 = vmatmul.mubr.bf16.gmra.mrb[0].mxu0 %v2809
    %v6473 = vpop.f32.mrb[0].mxu0
    %v6474 = vadd.f32 %v3398, %v6473
    %v6475 = vpop.f32.mrb[0].mxu0
    %v6476 = vadd.f32 %v3402, %v6475
    %v6477 = vpop.f32.mrb[0].mxu0
    %v6478 = vadd.f32 %v3398, %v6477
    %v6479 = vpop.f32.mrb[0].mxu0
    %v6480 = vadd.f32 %v3402, %v6479
    %6481 = vmatprep.mubr.bf16.mxu0 %v2818
    %6482 = vmatmul.mubr.bf16.gmra.mrb[0].mxu0 %v2817
    %v6483 = vpop.f32.mrb[0].mxu0
    %v6484 = vadd.f32 %v3398, %v6483
    %v6485 = vpop.f32.mrb[0].mxu0
    %v6486 = vadd.f32 %v3402, %v6485
    %v6487 = vpop.f32.mrb[0].mxu0
    %v6488 = vadd.f32 %v3398, %v6487
    %v6489 = vpop.f32.mrb[0].mxu0
    %v6490 = vadd.f32 %v3402, %v6489
    %6491 = vmatprep.mubr.bf16.mxu0 %v2826
    %6492 = vmatmul.mubr.bf16.gmra.mrb[0].mxu0 %v2825
    %v6493 = vpop.f32.mrb[0].mxu0
    %v6494 = vadd.f32 %v3398, %v6493
    %v6495 = vpop.f32.mrb[0].mxu0
    %v6496 = vadd.f32 %v3402, %v6495
    %v6497 = vpop.f32.mrb[0].mxu0
    %v6498 = vadd.f32 %v3398, %v6497
    %v6499 = vpop.f32.mrb[0].mxu0
    %v6500 = vadd.f32 %v3402, %v6499
    %6501 = vmatprep.mubr.bf16.mxu0 %v2834
    %6502 = vmatmul.mubr.bf16.gmra.mrb[0].mxu0 %v2833
    %v6503 = vpop.f32.mrb[0].mxu0
    %v6504 = vadd.f32 %v3398, %v6503
    %v6505 = vpop.f32.mrb[0].mxu0
    %v6506 = vadd.f32 %v3402, %v6505
    %v6507 = vpop.f32.mrb[0].mxu0
    %v6508 = vadd.f32 %v3398, %v6507
    %v6509 = vpop.f32.mrb[0].mxu0
    %v6510 = vadd.f32 %v3402, %v6509
    %6511 = vmatprep.mubr.bf16.mxu0 %v2842
    %6512 = vmatmul.mubr.bf16.gmra.mrb[0].mxu0 %v2841
    %v6513 = vpop.f32.mrb[0].mxu0
    %v6514 = vadd.f32 %v3398, %v6513
    %v6515 = vpop.f32.mrb[0].mxu0
    %v6516 = vadd.f32 %v3402, %v6515
    %v6517 = vpop.f32.mrb[0].mxu0
    %v6518 = vadd.f32 %v3398, %v6517
    %v6519 = vpop.f32.mrb[0].mxu0
    %v6520 = vadd.f32 %v3402, %v6519
    %6521 = vmatprep.mubr.bf16.mxu0 %v2850
    %6522 = vmatmul.mubr.bf16.gmra.mrb[0].mxu0 %v2849
    %v6523 = vpop.f32.mrb[0].mxu0
    %v6524 = vadd.f32 %v3398, %v6523
    %v6525 = vpop.f32.mrb[0].mxu0
    %v6526 = vadd.f32 %v3402, %v6525
    %v6527 = vpop.f32.mrb[0].mxu0
    %v6528 = vadd.f32 %v3398, %v6527
    %v6529 = vpop.f32.mrb[0].mxu0
    %v6530 = vadd.f32 %v3402, %v6529
    %6531 = vmatprep.mubr.bf16.mxu0 %v2858
    %6532 = vmatmul.mubr.bf16.gmra.mrb[0].mxu0 %v2857
    %v6533 = vpop.f32.mrb[0].mxu0
    %v6534 = vadd.f32 %v3398, %v6533
    %v6535 = vpop.f32.mrb[0].mxu0
    %v6536 = vadd.f32 %v3402, %v6535
    %v6537 = vpop.f32.mrb[0].mxu0
    %v6538 = vadd.f32 %v3398, %v6537
    %v6539 = vpop.f32.mrb[0].mxu0
    %v6540 = vadd.f32 %v3402, %v6539
    %6541 = vmatprep.mubr.bf16.mxu0 %v2866
    %6542 = vmatmul.mubr.bf16.gmra.mrb[0].mxu0 %v2865
    %v6543 = vpop.f32.mrb[0].mxu0
    %v6544 = vadd.f32 %v3398, %v6543
    %v6545 = vpop.f32.mrb[0].mxu0
    %v6546 = vadd.f32 %v3402, %v6545
    %v6547 = vpop.f32.mrb[0].mxu0
    %v6548 = vadd.f32 %v3398, %v6547
    %v6549 = vpop.f32.mrb[0].mxu0
    %v6550 = vadd.f32 %v3402, %v6549
    %6551 = vdwg.mxu0
    %6552 = vmatprep.subr.bf16.mxu0 %v5094
    %6553 = vmatpush1.bf16.msra.mxu0 %v5093
    %6554 = vmatprep.subr.bf16.mxu0 %v5102
    %6555 = vmatpush1.bf16.msra.mxu0 %v5101
    %6556 = vmatprep.subr.bf16.mxu0 %v5110
    %6557 = vmatpush1.bf16.msra.mxu0 %v5109
    %6558 = vmatprep.subr.bf16.mxu0 %v5118
    %6559 = vmatpush1.bf16.msra.mxu0 %v5117
    %6560 = vmatprep.subr.bf16.mxu0 %v5126
    %6561 = vmatpush1.bf16.msra.mxu0 %v5125
    %6562 = vmatprep.subr.bf16.mxu0 %v5134
    %6563 = vmatpush1.bf16.msra.mxu0 %v5133
    %6564 = vmatprep.subr.bf16.mxu0 %v5142
    %6565 = vmatpush1.bf16.msra.mxu0 %v5141
    %6566 = vmatprep.subr.bf16.mxu0 %v5150
    %6567 = vmatpush1.bf16.msra.mxu0 %v5149
    %6568 = vmatprep.subr.bf16.mxu0 %v5158
    %6569 = vmatpush1.bf16.msra.mxu0 %v5157
    %6570 = vmatprep.subr.bf16.mxu0 %v5166
    %6571 = vmatpush1.bf16.msra.mxu0 %v5165
    %6572 = vmatprep.subr.bf16.mxu0 %v5174
    %6573 = vmatpush1.bf16.msra.mxu0 %v5173
    %6574 = vmatprep.subr.bf16.mxu0 %v5182
    %6575 = vmatpush1.bf16.msra.mxu0 %v5181
    %6576 = vmatprep.subr.bf16.mxu0 %v5190
    %6577 = vmatpush1.bf16.msra.mxu0 %v5189
    %6578 = vmatprep.subr.bf16.mxu0 %v5198
    %6579 = vmatpush1.bf16.msra.mxu0 %v5197
    %6580 = vmatprep.subr.bf16.mxu0 %v5206
    %6581 = vmatpush1.bf16.msra.mxu0 %v5205
    %6582 = vmatprep.subr.bf16.mxu0 %v5214
    %6583 = vmatpush1.bf16.msra.mxu0 %v5213
    %6584 = vmatprep.mubr.bf16.mxu0 %v2812
    %6585 = vmatmul.mubr.bf16.gmra.mrb[0].mxu0 %v2811
    %v6586 = vpop.f32.mrb[0].mxu0
    %v6587 = vadd.f32 %v6474, %v6586
    %v6588 = vpop.f32.mrb[0].mxu0
    %v6589 = vadd.f32 %v6476, %v6588
    %v6590 = vpop.f32.mrb[0].mxu0
    %v6591 = vadd.f32 %v6478, %v6590
    %v6592 = vpop.f32.mrb[0].mxu0
    %v6593 = vadd.f32 %v6480, %v6592
    %6594 = vmatprep.mubr.bf16.mxu0 %v2820
    %6595 = vmatmul.mubr.bf16.gmra.mrb[0].mxu0 %v2819
    %v6596 = vpop.f32.mrb[0].mxu0
    %v6597 = vadd.f32 %v6484, %v6596
    %v6598 = vpop.f32.mrb[0].mxu0
    %v6599 = vadd.f32 %v6486, %v6598
    %v6600 = vpop.f32.mrb[0].mxu0
    %v6601 = vadd.f32 %v6488, %v6600
    %v6602 = vpop.f32.mrb[0].mxu0
    %v6603 = vadd.f32 %v6490, %v6602
    %6604 = vmatprep.mubr.bf16.mxu0 %v2828
    %6605 = vmatmul.mubr.bf16.gmra.mrb[0].mxu0 %v2827
    %v6606 = vpop.f32.mrb[0].mxu0
    %v6607 = vadd.f32 %v6494, %v6606
    %v6608 = vpop.f32.mrb[0].mxu0
    %v6609 = vadd.f32 %v6496, %v6608
    %v6610 = vpop.f32.mrb[0].mxu0
    %v6611 = vadd.f32 %v6498, %v6610
    %v6612 = vpop.f32.mrb[0].mxu0
    %v6613 = vadd.f32 %v6500, %v6612
    %6614 = vmatprep.mubr.bf16.mxu0 %v2836
    %6615 = vmatmul.mubr.bf16.gmra.mrb[0].mxu0 %v2835
    %v6616 = vpop.f32.mrb[0].mxu0
    %v6617 = vadd.f32 %v6504, %v6616
    %v6618 = vpop.f32.mrb[0].mxu0
    %v6619 = vadd.f32 %v6506, %v6618
    %v6620 = vpop.f32.mrb[0].mxu0
    %v6621 = vadd.f32 %v6508, %v6620
    %v6622 = vpop.f32.mrb[0].mxu0
    %v6623 = vadd.f32 %v6510, %v6622
    %6624 = vmatprep.mubr.bf16.mxu0 %v2844
    %6625 = vmatmul.mubr.bf16.gmra.mrb[0].mxu0 %v2843
    %v6626 = vpop.f32.mrb[0].mxu0
    %v6627 = vadd.f32 %v6514, %v6626
    %v6628 = vpop.f32.mrb[0].mxu0
    %v6629 = vadd.f32 %v6516, %v6628
    %v6630 = vpop.f32.mrb[0].mxu0
    %v6631 = vadd.f32 %v6518, %v6630
    %v6632 = vpop.f32.mrb[0].mxu0
    %v6633 = vadd.f32 %v6520, %v6632
    %6634 = vmatprep.mubr.bf16.mxu0 %v2852
    %6635 = vmatmul.mubr.bf16.gmra.mrb[0].mxu0 %v2851
    %v6636 = vpop.f32.mrb[0].mxu0
    %v6637 = vadd.f32 %v6524, %v6636
    %v6638 = vpop.f32.mrb[0].mxu0
    %v6639 = vadd.f32 %v6526, %v6638
    %v6640 = vpop.f32.mrb[0].mxu0
    %v6641 = vadd.f32 %v6528, %v6640
    %v6642 = vpop.f32.mrb[0].mxu0
    %v6643 = vadd.f32 %v6530, %v6642
    %6644 = vmatprep.mubr.bf16.mxu0 %v2860
    %6645 = vmatmul.mubr.bf16.gmra.mrb[0].mxu0 %v2859
    %v6646 = vpop.f32.mrb[0].mxu0
    %v6647 = vadd.f32 %v6534, %v6646
    %v6648 = vpop.f32.mrb[0].mxu0
    %v6649 = vadd.f32 %v6536, %v6648
    %v6650 = vpop.f32.mrb[0].mxu0
    %v6651 = vadd.f32 %v6538, %v6650
    %v6652 = vpop.f32.mrb[0].mxu0
    %v6653 = vadd.f32 %v6540, %v6652
    %6654 = vmatprep.mubr.bf16.mxu0 %v2868
    %6655 = vmatmul.mubr.bf16.gmra.mrb[0].mxu0 %v2867
    %v6656 = vpop.f32.mrb[0].mxu0
    %v6657 = vadd.f32 %v6544, %v6656
    %v6658 = vpop.f32.mrb[0].mxu0
    %v6659 = vadd.f32 %v6546, %v6658
    %v6660 = vpop.f32.mrb[0].mxu0
    %v6661 = vadd.f32 %v6548, %v6660
    %v6662 = vpop.f32.mrb[0].mxu0
    %v6663 = vadd.f32 %v6550, %v6662
    %6664 = vdwg.mxu0
    %6665 = vmatprep.subr.bf16.mxu0 %v5222
    %6666 = vmatpush1.bf16.msra.mxu0 %v5221
    %6667 = vmatprep.subr.bf16.mxu0 %v5230
    %6668 = vmatpush1.bf16.msra.mxu0 %v5229
    %6669 = vmatprep.subr.bf16.mxu0 %v5238
    %6670 = vmatpush1.bf16.msra.mxu0 %v5237
    %6671 = vmatprep.subr.bf16.mxu0 %v5246
    %6672 = vmatpush1.bf16.msra.mxu0 %v5245
    %6673 = vmatprep.subr.bf16.mxu0 %v5254
    %6674 = vmatpush1.bf16.msra.mxu0 %v5253
    %6675 = vmatprep.subr.bf16.mxu0 %v5262
    %6676 = vmatpush1.bf16.msra.mxu0 %v5261
    %6677 = vmatprep.subr.bf16.mxu0 %v5270
    %6678 = vmatpush1.bf16.msra.mxu0 %v5269
    %6679 = vmatprep.subr.bf16.mxu0 %v5278
    %6680 = vmatpush1.bf16.msra.mxu0 %v5277
    %6681 = vmatprep.subr.bf16.mxu0 %v5286
    %6682 = vmatpush1.bf16.msra.mxu0 %v5285
    %6683 = vmatprep.subr.bf16.mxu0 %v5294
    %6684 = vmatpush1.bf16.msra.mxu0 %v5293
    %6685 = vmatprep.subr.bf16.mxu0 %v5302
    %6686 = vmatpush1.bf16.msra.mxu0 %v5301
    %6687 = vmatprep.subr.bf16.mxu0 %v5310
    %6688 = vmatpush1.bf16.msra.mxu0 %v5309
    %6689 = vmatprep.subr.bf16.mxu0 %v5318
    %6690 = vmatpush1.bf16.msra.mxu0 %v5317
    %6691 = vmatprep.subr.bf16.mxu0 %v5326
    %6692 = vmatpush1.bf16.msra.mxu0 %v5325
    %6693 = vmatprep.subr.bf16.mxu0 %v5334
    %6694 = vmatpush1.bf16.msra.mxu0 %v5333
    %6695 = vmatprep.subr.bf16.mxu0 %v5342
    %6696 = vmatpush1.bf16.msra.mxu0 %v5341
    %6697 = vmatprep.mubr.bf16.mxu0 %v2814
    %6698 = vmatmul.mubr.bf16.gmra.mrb[0].mxu0 %v2813
    %v6699 = vpop.f32.mrb[0].mxu0
    %v6700 = vadd.f32 %v6587, %v6699
    %v6701 = vpop.f32.mrb[0].mxu0
    %v6702 = vadd.f32 %v6589, %v6701
    %v6703 = vpop.f32.mrb[0].mxu0
    %v6704 = vadd.f32 %v6591, %v6703
    %v6705 = vpop.f32.mrb[0].mxu0
    %v6706 = vadd.f32 %v6593, %v6705
    %6707 = vmatprep.mubr.bf16.mxu0 %v2822
    %6708 = vmatmul.mubr.bf16.gmra.mrb[0].mxu0 %v2821
    %v6709 = vpop.f32.mrb[0].mxu0
    %v6710 = vadd.f32 %v6597, %v6709
    %v6711 = vpop.f32.mrb[0].mxu0
    %v6712 = vadd.f32 %v6599, %v6711
    %v6713 = vpop.f32.mrb[0].mxu0
    %v6714 = vadd.f32 %v6601, %v6713
    %v6715 = vpop.f32.mrb[0].mxu0
    %v6716 = vadd.f32 %v6603, %v6715
    %6717 = vmatprep.mubr.bf16.mxu0 %v2830
    %6718 = vmatmul.mubr.bf16.gmra.mrb[0].mxu0 %v2829
    %v6719 = vpop.f32.mrb[0].mxu0
    %v6720 = vadd.f32 %v6607, %v6719
    %v6721 = vpop.f32.mrb[0].mxu0
    %v6722 = vadd.f32 %v6609, %v6721
    %v6723 = vpop.f32.mrb[0].mxu0
    %v6724 = vadd.f32 %v6611, %v6723
    %v6725 = vpop.f32.mrb[0].mxu0
    %v6726 = vadd.f32 %v6613, %v6725
    %6727 = vmatprep.mubr.bf16.mxu0 %v2838
    %6728 = vmatmul.mubr.bf16.gmra.mrb[0].mxu0 %v2837
    %v6729 = vpop.f32.mrb[0].mxu0
    %v6730 = vadd.f32 %v6617, %v6729
    %v6731 = vpop.f32.mrb[0].mxu0
    %v6732 = vadd.f32 %v6619, %v6731
    %v6733 = vpop.f32.mrb[0].mxu0
    %v6734 = vadd.f32 %v6621, %v6733
    %v6735 = vpop.f32.mrb[0].mxu0
    %v6736 = vadd.f32 %v6623, %v6735
    %6737 = vmatprep.mubr.bf16.mxu0 %v2846
    %6738 = vmatmul.mubr.bf16.gmra.mrb[0].mxu0 %v2845
    %v6739 = vpop.f32.mrb[0].mxu0
    %v6740 = vadd.f32 %v6627, %v6739
    %v6741 = vpop.f32.mrb[0].mxu0
    %v6742 = vadd.f32 %v6629, %v6741
    %v6743 = vpop.f32.mrb[0].mxu0
    %v6744 = vadd.f32 %v6631, %v6743
    %v6745 = vpop.f32.mrb[0].mxu0
    %v6746 = vadd.f32 %v6633, %v6745
    %6747 = vmatprep.mubr.bf16.mxu0 %v2854
    %6748 = vmatmul.mubr.bf16.gmra.mrb[0].mxu0 %v2853
    %v6749 = vpop.f32.mrb[0].mxu0
    %v6750 = vadd.f32 %v6637, %v6749
    %v6751 = vpop.f32.mrb[0].mxu0
    %v6752 = vadd.f32 %v6639, %v6751
    %v6753 = vpop.f32.mrb[0].mxu0
    %v6754 = vadd.f32 %v6641, %v6753
    %v6755 = vpop.f32.mrb[0].mxu0
    %v6756 = vadd.f32 %v6643, %v6755
    %6757 = vmatprep.mubr.bf16.mxu0 %v2862
    %6758 = vmatmul.mubr.bf16.gmra.mrb[0].mxu0 %v2861
    %v6759 = vpop.f32.mrb[0].mxu0
    %v6760 = vadd.f32 %v6647, %v6759
    %v6761 = vpop.f32.mrb[0].mxu0
    %v6762 = vadd.f32 %v6649, %v6761
    %v6763 = vpop.f32.mrb[0].mxu0
    %v6764 = vadd.f32 %v6651, %v6763
    %v6765 = vpop.f32.mrb[0].mxu0
    %v6766 = vadd.f32 %v6653, %v6765
    %6767 = vmatprep.mubr.bf16.mxu0 %v2870
    %6768 = vmatmul.mubr.bf16.gmra.mrb[0].mxu0 %v2869
    %v6769 = vpop.f32.mrb[0].mxu0
    %v6770 = vadd.f32 %v6657, %v6769
    %v6771 = vpop.f32.mrb[0].mxu0
    %v6772 = vadd.f32 %v6659, %v6771
    %v6773 = vpop.f32.mrb[0].mxu0
    %v6774 = vadd.f32 %v6661, %v6773
    %v6775 = vpop.f32.mrb[0].mxu0
    %v6776 = vadd.f32 %v6663, %v6775
    %6777 = vdwg.mxu0
    %6778 = vmatprep.subr.bf16.mxu0 %v5350
    %6779 = vmatpush1.bf16.msra.mxu0 %v5349
    %6780 = vmatprep.subr.bf16.mxu0 %v5358
    %6781 = vmatpush1.bf16.msra.mxu0 %v5357
    %6782 = vmatprep.subr.bf16.mxu0 %v5366
    %6783 = vmatpush1.bf16.msra.mxu0 %v5365
    %6784 = vmatprep.subr.bf16.mxu0 %v5374
    %6785 = vmatpush1.bf16.msra.mxu0 %v5373
    %6786 = vmatprep.subr.bf16.mxu0 %v5382
    %6787 = vmatpush1.bf16.msra.mxu0 %v5381
    %6788 = vmatprep.subr.bf16.mxu0 %v5390
    %6789 = vmatpush1.bf16.msra.mxu0 %v5389
    %6790 = vmatprep.subr.bf16.mxu0 %v5398
    %6791 = vmatpush1.bf16.msra.mxu0 %v5397
    %6792 = vmatprep.subr.bf16.mxu0 %v5406
    %6793 = vmatpush1.bf16.msra.mxu0 %v5405
    %6794 = vmatprep.subr.bf16.mxu0 %v5414
    %6795 = vmatpush1.bf16.msra.mxu0 %v5413
    %6796 = vmatprep.subr.bf16.mxu0 %v5422
    %6797 = vmatpush1.bf16.msra.mxu0 %v5421
    %6798 = vmatprep.subr.bf16.mxu0 %v5430
    %6799 = vmatpush1.bf16.msra.mxu0 %v5429
    %6800 = vmatprep.subr.bf16.mxu0 %v5438
    %6801 = vmatpush1.bf16.msra.mxu0 %v5437
    %6802 = vmatprep.subr.bf16.mxu0 %v5446
    %6803 = vmatpush1.bf16.msra.mxu0 %v5445
    %6804 = vmatprep.subr.bf16.mxu0 %v5454
    %6805 = vmatpush1.bf16.msra.mxu0 %v5453
    %6806 = vmatprep.subr.bf16.mxu0 %v5462
    %6807 = vmatpush1.bf16.msra.mxu0 %v5461
    %6808 = vmatprep.subr.bf16.mxu0 %v5470
    %6809 = vmatpush1.bf16.msra.mxu0 %v5469
    %6810 = vmatprep.mubr.bf16.mxu0 %v2816
    %6811 = vmatmul.mubr.bf16.gmra.mrb[0].mxu0 %v2815
    %v6812 = vpop.f32.mrb[0].mxu0
    %v6813 = vadd.f32 %v6700, %v6812
    %v6814 = vpop.f32.mrb[0].mxu0
    %v6815 = vadd.f32 %v6702, %v6814
    %v6816 = vpop.f32.mrb[0].mxu0
    %v6817 = vadd.f32 %v6704, %v6816
    %v6818 = vpop.f32.mrb[0].mxu0
    %v6819 = vadd.f32 %v6706, %v6818
    %6820 = vmatprep.mubr.bf16.mxu0 %v2824
    %6821 = vmatmul.mubr.bf16.gmra.mrb[0].mxu0 %v2823
    %v6822 = vpop.f32.mrb[0].mxu0
    %v6823 = vadd.f32 %v6710, %v6822
    %v6824 = vpop.f32.mrb[0].mxu0
    %v6825 = vadd.f32 %v6712, %v6824
    %v6826 = vpop.f32.mrb[0].mxu0
    %v6827 = vadd.f32 %v6714, %v6826
    %v6828 = vpop.f32.mrb[0].mxu0
    %v6829 = vadd.f32 %v6716, %v6828
    %6830 = vmatprep.mubr.bf16.mxu0 %v2832
    %6831 = vmatmul.mubr.bf16.gmra.mrb[0].mxu0 %v2831
    %v6832 = vpop.f32.mrb[0].mxu0
    %v6833 = vadd.f32 %v6720, %v6832
    %v6834 = vpop.f32.mrb[0].mxu0
    %v6835 = vadd.f32 %v6722, %v6834
    %v6836 = vpop.f32.mrb[0].mxu0
    %v6837 = vadd.f32 %v6724, %v6836
    %v6838 = vpop.f32.mrb[0].mxu0
    %v6839 = vadd.f32 %v6726, %v6838
    %6840 = vmatprep.mubr.bf16.mxu0 %v2840
    %6841 = vmatmul.mubr.bf16.gmra.mrb[0].mxu0 %v2839
    %v6842 = vpop.f32.mrb[0].mxu0
    %v6843 = vadd.f32 %v6730, %v6842
    %v6844 = vpop.f32.mrb[0].mxu0
    %v6845 = vadd.f32 %v6732, %v6844
    %v6846 = vpop.f32.mrb[0].mxu0
    %v6847 = vadd.f32 %v6734, %v6846
    %v6848 = vpop.f32.mrb[0].mxu0
    %v6849 = vadd.f32 %v6736, %v6848
    %6850 = vmatprep.mubr.bf16.mxu0 %v2848
    %6851 = vmatmul.mubr.bf16.gmra.mrb[0].mxu0 %v2847
    %v6852 = vpop.f32.mrb[0].mxu0
    %v6853 = vadd.f32 %v6740, %v6852
    %v6854 = vpop.f32.mrb[0].mxu0
    %v6855 = vadd.f32 %v6742, %v6854
    %v6856 = vpop.f32.mrb[0].mxu0
    %v6857 = vadd.f32 %v6744, %v6856
    %v6858 = vpop.f32.mrb[0].mxu0
    %v6859 = vadd.f32 %v6746, %v6858
    %6860 = vmatprep.mubr.bf16.mxu0 %v2856
    %6861 = vmatmul.mubr.bf16.gmra.mrb[0].mxu0 %v2855
    %v6862 = vpop.f32.mrb[0].mxu0
    %v6863 = vadd.f32 %v6750, %v6862
    %v6864 = vpop.f32.mrb[0].mxu0
    %v6865 = vadd.f32 %v6752, %v6864
    %v6866 = vpop.f32.mrb[0].mxu0
    %v6867 = vadd.f32 %v6754, %v6866
    %v6868 = vpop.f32.mrb[0].mxu0
    %v6869 = vadd.f32 %v6756, %v6868
    %6870 = vmatprep.mubr.bf16.mxu0 %v2864
    %6871 = vmatmul.mubr.bf16.gmra.mrb[0].mxu0 %v2863
    %v6872 = vpop.f32.mrb[0].mxu0
    %v6873 = vadd.f32 %v6760, %v6872
    %v6874 = vpop.f32.mrb[0].mxu0
    %v6875 = vadd.f32 %v6762, %v6874
    %v6876 = vpop.f32.mrb[0].mxu0
    %v6877 = vadd.f32 %v6764, %v6876
    %v6878 = vpop.f32.mrb[0].mxu0
    %v6879 = vadd.f32 %v6766, %v6878
    %6880 = vmatprep.mubr.bf16.mxu0 %v2872
    %6881 = vmatmul.mubr.bf16.gmra.mrb[0].mxu0 %v2871
    %v6882 = vpop.f32.mrb[0].mxu0
    %v6883 = vadd.f32 %v6770, %v6882
    %v6884 = vpop.f32.mrb[0].mxu0
    %v6885 = vadd.f32 %v6772, %v6884
    %v6886 = vpop.f32.mrb[0].mxu0
    %v6887 = vadd.f32 %v6774, %v6886
    %v6888 = vpop.f32.mrb[0].mxu0
    %v6889 = vadd.f32 %v6776, %v6888
    %6890 = vdwg.mxu0
    %6891 = vmatprep.subr.bf16.mxu0 %v4968
    %6892 = vmatpush1.bf16.msra.mxu0 %v4967
    %6893 = vmatprep.subr.bf16.mxu0 %v4976
    %6894 = vmatpush1.bf16.msra.mxu0 %v4975
    %6895 = vmatprep.subr.bf16.mxu0 %v4984
    %6896 = vmatpush1.bf16.msra.mxu0 %v4983
    %6897 = vmatprep.subr.bf16.mxu0 %v4992
    %6898 = vmatpush1.bf16.msra.mxu0 %v4991
    %6899 = vmatprep.subr.bf16.mxu0 %v5000
    %6900 = vmatpush1.bf16.msra.mxu0 %v4999
    %6901 = vmatprep.subr.bf16.mxu0 %v5008
    %6902 = vmatpush1.bf16.msra.mxu0 %v5007
    %6903 = vmatprep.subr.bf16.mxu0 %v5016
    %6904 = vmatpush1.bf16.msra.mxu0 %v5015
    %6905 = vmatprep.subr.bf16.mxu0 %v5024
    %6906 = vmatpush1.bf16.msra.mxu0 %v5023
    %6907 = vmatprep.subr.bf16.mxu0 %v5032
    %6908 = vmatpush1.bf16.msra.mxu0 %v5031
    %6909 = vmatprep.subr.bf16.mxu0 %v5040
    %6910 = vmatpush1.bf16.msra.mxu0 %v5039
    %6911 = vmatprep.subr.bf16.mxu0 %v5048
    %6912 = vmatpush1.bf16.msra.mxu0 %v5047
    %6913 = vmatprep.subr.bf16.mxu0 %v5056
    %6914 = vmatpush1.bf16.msra.mxu0 %v5055
    %6915 = vmatprep.subr.bf16.mxu0 %v5064
    %6916 = vmatpush1.bf16.msra.mxu0 %v5063
    %6917 = vmatprep.subr.bf16.mxu0 %v5072
    %6918 = vmatpush1.bf16.msra.mxu0 %v5071
    %6919 = vmatprep.subr.bf16.mxu0 %v5080
    %6920 = vmatpush1.bf16.msra.mxu0 %v5079
    %6921 = vmatprep.subr.bf16.mxu0 %v5088
    %6922 = vmatpush1.bf16.msra.mxu0 %v5087
    %6923 = vmatprep.mubr.bf16.mxu0 %v2810
    %6924 = vmatmul.mubr.bf16.gmra.mrb[0].mxu0 %v2809
    %v6925 = vpop.f32.mrb[0].mxu0
    %v6926 = vadd.f32 %v3406, %v6925
    %v6927 = vpop.f32.mrb[0].mxu0
    %v6928 = vadd.f32 %v3410, %v6927
    %v6929 = vpop.f32.mrb[0].mxu0
    %v6930 = vadd.f32 %v3406, %v6929
    %v6931 = vpop.f32.mrb[0].mxu0
    %v6932 = vadd.f32 %v3410, %v6931
    %6933 = vmatprep.mubr.bf16.mxu0 %v2818
    %6934 = vmatmul.mubr.bf16.gmra.mrb[0].mxu0 %v2817
    %v6935 = vpop.f32.mrb[0].mxu0
    %v6936 = vadd.f32 %v3406, %v6935
    %v6937 = vpop.f32.mrb[0].mxu0
    %v6938 = vadd.f32 %v3410, %v6937
    %v6939 = vpop.f32.mrb[0].mxu0
    %v6940 = vadd.f32 %v3406, %v6939
    %v6941 = vpop.f32.mrb[0].mxu0
    %v6942 = vadd.f32 %v3410, %v6941
    %6943 = vmatprep.mubr.bf16.mxu0 %v2826
    %6944 = vmatmul.mubr.bf16.gmra.mrb[0].mxu0 %v2825
    %v6945 = vpop.f32.mrb[0].mxu0
    %v6946 = vadd.f32 %v3406, %v6945
    %v6947 = vpop.f32.mrb[0].mxu0
    %v6948 = vadd.f32 %v3410, %v6947
    %v6949 = vpop.f32.mrb[0].mxu0
    %v6950 = vadd.f32 %v3406, %v6949
    %v6951 = vpop.f32.mrb[0].mxu0
    %v6952 = vadd.f32 %v3410, %v6951
    %6953 = vmatprep.mubr.bf16.mxu0 %v2834
    %6954 = vmatmul.mubr.bf16.gmra.mrb[0].mxu0 %v2833
    %v6955 = vpop.f32.mrb[0].mxu0
    %v6956 = vadd.f32 %v3406, %v6955
    %v6957 = vpop.f32.mrb[0].mxu0
    %v6958 = vadd.f32 %v3410, %v6957
    %v6959 = vpop.f32.mrb[0].mxu0
    %v6960 = vadd.f32 %v3406, %v6959
    %v6961 = vpop.f32.mrb[0].mxu0
    %v6962 = vadd.f32 %v3410, %v6961
    %6963 = vmatprep.mubr.bf16.mxu0 %v2842
    %6964 = vmatmul.mubr.bf16.gmra.mrb[0].mxu0 %v2841
    %v6965 = vpop.f32.mrb[0].mxu0
    %v6966 = vadd.f32 %v3406, %v6965
    %v6967 = vpop.f32.mrb[0].mxu0
    %v6968 = vadd.f32 %v3410, %v6967
    %v6969 = vpop.f32.mrb[0].mxu0
    %v6970 = vadd.f32 %v3406, %v6969
    %v6971 = vpop.f32.mrb[0].mxu0
    %v6972 = vadd.f32 %v3410, %v6971
    %6973 = vmatprep.mubr.bf16.mxu0 %v2850
    %6974 = vmatmul.mubr.bf16.gmra.mrb[0].mxu0 %v2849
    %v6975 = vpop.f32.mrb[0].mxu0
    %v6976 = vadd.f32 %v3406, %v6975
    %v6977 = vpop.f32.mrb[0].mxu0
    %v6978 = vadd.f32 %v3410, %v6977
    %v6979 = vpop.f32.mrb[0].mxu0
    %v6980 = vadd.f32 %v3406, %v6979
    %v6981 = vpop.f32.mrb[0].mxu0
    %v6982 = vadd.f32 %v3410, %v6981
    %6983 = vmatprep.mubr.bf16.mxu0 %v2858
    %6984 = vmatmul.mubr.bf16.gmra.mrb[0].mxu0 %v2857
    %v6985 = vpop.f32.mrb[0].mxu0
    %v6986 = vadd.f32 %v3406, %v6985
    %v6987 = vpop.f32.mrb[0].mxu0
    %v6988 = vadd.f32 %v3410, %v6987
    %v6989 = vpop.f32.mrb[0].mxu0
    %v6990 = vadd.f32 %v3406, %v6989
    %v6991 = vpop.f32.mrb[0].mxu0
    %v6992 = vadd.f32 %v3410, %v6991
    %6993 = vmatprep.mubr.bf16.mxu0 %v2866
    %6994 = vmatmul.mubr.bf16.gmra.mrb[0].mxu0 %v2865
    %v6995 = vpop.f32.mrb[0].mxu0
    %v6996 = vadd.f32 %v3406, %v6995
    %v6997 = vpop.f32.mrb[0].mxu0
    %v6998 = vadd.f32 %v3410, %v6997
    %v6999 = vpop.f32.mrb[0].mxu0
    %v7000 = vadd.f32 %v3406, %v6999
    %v7001 = vpop.f32.mrb[0].mxu0
    %v7002 = vadd.f32 %v3410, %v7001
    %7003 = vdwg.mxu0
    %7004 = vmatprep.subr.bf16.mxu0 %v5096
    %7005 = vmatpush1.bf16.msra.mxu0 %v5095
    %7006 = vmatprep.subr.bf16.mxu0 %v5104
    %7007 = vmatpush1.bf16.msra.mxu0 %v5103
    %7008 = vmatprep.subr.bf16.mxu0 %v5112
    %7009 = vmatpush1.bf16.msra.mxu0 %v5111
    %7010 = vmatprep.subr.bf16.mxu0 %v5120
    %7011 = vmatpush1.bf16.msra.mxu0 %v5119
    %7012 = vmatprep.subr.bf16.mxu0 %v5128
    %7013 = vmatpush1.bf16.msra.mxu0 %v5127
    %7014 = vmatprep.subr.bf16.mxu0 %v5136
    %7015 = vmatpush1.bf16.msra.mxu0 %v5135
    %7016 = vmatprep.subr.bf16.mxu0 %v5144
    %7017 = vmatpush1.bf16.msra.mxu0 %v5143
    %7018 = vmatprep.subr.bf16.mxu0 %v5152
    %7019 = vmatpush1.bf16.msra.mxu0 %v5151
    %7020 = vmatprep.subr.bf16.mxu0 %v5160
    %7021 = vmatpush1.bf16.msra.mxu0 %v5159
    %7022 = vmatprep.subr.bf16.mxu0 %v5168
    %7023 = vmatpush1.bf16.msra.mxu0 %v5167
    %7024 = vmatprep.subr.bf16.mxu0 %v5176
    %7025 = vmatpush1.bf16.msra.mxu0 %v5175
    %7026 = vmatprep.subr.bf16.mxu0 %v5184
    %7027 = vmatpush1.bf16.msra.mxu0 %v5183
    %7028 = vmatprep.subr.bf16.mxu0 %v5192
    %7029 = vmatpush1.bf16.msra.mxu0 %v5191
    %7030 = vmatprep.subr.bf16.mxu0 %v5200
    %7031 = vmatpush1.bf16.msra.mxu0 %v5199
    %7032 = vmatprep.subr.bf16.mxu0 %v5208
    %7033 = vmatpush1.bf16.msra.mxu0 %v5207
    %7034 = vmatprep.subr.bf16.mxu0 %v5216
    %7035 = vmatpush1.bf16.msra.mxu0 %v5215
    %7036 = vmatprep.mubr.bf16.mxu0 %v2812
    %7037 = vmatmul.mubr.bf16.gmra.mrb[0].mxu0 %v2811
    %v7038 = vpop.f32.mrb[0].mxu0
    %v7039 = vadd.f32 %v6926, %v7038
    %v7040 = vpop.f32.mrb[0].mxu0
    %v7041 = vadd.f32 %v6928, %v7040
    %v7042 = vpop.f32.mrb[0].mxu0
    %v7043 = vadd.f32 %v6930, %v7042
    %v7044 = vpop.f32.mrb[0].mxu0
    %v7045 = vadd.f32 %v6932, %v7044
    %7046 = vmatprep.mubr.bf16.mxu0 %v2820
    %7047 = vmatmul.mubr.bf16.gmra.mrb[0].mxu0 %v2819
    %v7048 = vpop.f32.mrb[0].mxu0
    %v7049 = vadd.f32 %v6936, %v7048
    %v7050 = vpop.f32.mrb[0].mxu0
    %v7051 = vadd.f32 %v6938, %v7050
    %v7052 = vpop.f32.mrb[0].mxu0
    %v7053 = vadd.f32 %v6940, %v7052
    %v7054 = vpop.f32.mrb[0].mxu0
    %v7055 = vadd.f32 %v6942, %v7054
    %7056 = vmatprep.mubr.bf16.mxu0 %v2828
    %7057 = vmatmul.mubr.bf16.gmra.mrb[0].mxu0 %v2827
    %v7058 = vpop.f32.mrb[0].mxu0
    %v7059 = vadd.f32 %v6946, %v7058
    %v7060 = vpop.f32.mrb[0].mxu0
    %v7061 = vadd.f32 %v6948, %v7060
    %v7062 = vpop.f32.mrb[0].mxu0
    %v7063 = vadd.f32 %v6950, %v7062
    %v7064 = vpop.f32.mrb[0].mxu0
    %v7065 = vadd.f32 %v6952, %v7064
    %7066 = vmatprep.mubr.bf16.mxu0 %v2836
    %7067 = vmatmul.mubr.bf16.gmra.mrb[0].mxu0 %v2835
    %v7068 = vpop.f32.mrb[0].mxu0
    %v7069 = vadd.f32 %v6956, %v7068
    %v7070 = vpop.f32.mrb[0].mxu0
    %v7071 = vadd.f32 %v6958, %v7070
    %v7072 = vpop.f32.mrb[0].mxu0
    %v7073 = vadd.f32 %v6960, %v7072
    %v7074 = vpop.f32.mrb[0].mxu0
    %v7075 = vadd.f32 %v6962, %v7074
    %7076 = vmatprep.mubr.bf16.mxu0 %v2844
    %7077 = vmatmul.mubr.bf16.gmra.mrb[0].mxu0 %v2843
    %v7078 = vpop.f32.mrb[0].mxu0
    %v7079 = vadd.f32 %v6966, %v7078
    %v7080 = vpop.f32.mrb[0].mxu0
    %v7081 = vadd.f32 %v6968, %v7080
    %v7082 = vpop.f32.mrb[0].mxu0
    %v7083 = vadd.f32 %v6970, %v7082
    %v7084 = vpop.f32.mrb[0].mxu0
    %v7085 = vadd.f32 %v6972, %v7084
    %7086 = vmatprep.mubr.bf16.mxu0 %v2852
    %7087 = vmatmul.mubr.bf16.gmra.mrb[0].mxu0 %v2851
    %v7088 = vpop.f32.mrb[0].mxu0
    %v7089 = vadd.f32 %v6976, %v7088
    %v7090 = vpop.f32.mrb[0].mxu0
    %v7091 = vadd.f32 %v6978, %v7090
    %v7092 = vpop.f32.mrb[0].mxu0
    %v7093 = vadd.f32 %v6980, %v7092
    %v7094 = vpop.f32.mrb[0].mxu0
    %v7095 = vadd.f32 %v6982, %v7094
    %7096 = vmatprep.mubr.bf16.mxu0 %v2860
    %7097 = vmatmul.mubr.bf16.gmra.mrb[0].mxu0 %v2859
    %v7098 = vpop.f32.mrb[0].mxu0
    %v7099 = vadd.f32 %v6986, %v7098
    %v7100 = vpop.f32.mrb[0].mxu0
    %v7101 = vadd.f32 %v6988, %v7100
    %v7102 = vpop.f32.mrb[0].mxu0
    %v7103 = vadd.f32 %v6990, %v7102
    %v7104 = vpop.f32.mrb[0].mxu0
    %v7105 = vadd.f32 %v6992, %v7104
    %7106 = vmatprep.mubr.bf16.mxu0 %v2868
    %7107 = vmatmul.mubr.bf16.gmra.mrb[0].mxu0 %v2867
    %v7108 = vpop.f32.mrb[0].mxu0
    %v7109 = vadd.f32 %v6996, %v7108
    %v7110 = vpop.f32.mrb[0].mxu0
    %v7111 = vadd.f32 %v6998, %v7110
    %v7112 = vpop.f32.mrb[0].mxu0
    %v7113 = vadd.f32 %v7000, %v7112
    %v7114 = vpop.f32.mrb[0].mxu0
    %v7115 = vadd.f32 %v7002, %v7114
    %7116 = vdwg.mxu0
    %7117 = vmatprep.subr.bf16.mxu0 %v5224
    %7118 = vmatpush1.bf16.msra.mxu0 %v5223
    %7119 = vmatprep.subr.bf16.mxu0 %v5232
    %7120 = vmatpush1.bf16.msra.mxu0 %v5231
    %7121 = vmatprep.subr.bf16.mxu0 %v5240
    %7122 = vmatpush1.bf16.msra.mxu0 %v5239
    %7123 = vmatprep.subr.bf16.mxu0 %v5248
    %7124 = vmatpush1.bf16.msra.mxu0 %v5247
    %7125 = vmatprep.subr.bf16.mxu0 %v5256
    %7126 = vmatpush1.bf16.msra.mxu0 %v5255
    %7127 = vmatprep.subr.bf16.mxu0 %v5264
    %7128 = vmatpush1.bf16.msra.mxu0 %v5263
    %7129 = vmatprep.subr.bf16.mxu0 %v5272
    %7130 = vmatpush1.bf16.msra.mxu0 %v5271
    %7131 = vmatprep.subr.bf16.mxu0 %v5280
    %7132 = vmatpush1.bf16.msra.mxu0 %v5279
    %7133 = vmatprep.subr.bf16.mxu0 %v5288
    %7134 = vmatpush1.bf16.msra.mxu0 %v5287
    %7135 = vmatprep.subr.bf16.mxu0 %v5296
    %7136 = vmatpush1.bf16.msra.mxu0 %v5295
    %7137 = vmatprep.subr.bf16.mxu0 %v5304
    %7138 = vmatpush1.bf16.msra.mxu0 %v5303
    %7139 = vmatprep.subr.bf16.mxu0 %v5312
    %7140 = vmatpush1.bf16.msra.mxu0 %v5311
    %7141 = vmatprep.subr.bf16.mxu0 %v5320
    %7142 = vmatpush1.bf16.msra.mxu0 %v5319
    %7143 = vmatprep.subr.bf16.mxu0 %v5328
    %7144 = vmatpush1.bf16.msra.mxu0 %v5327
    %7145 = vmatprep.subr.bf16.mxu0 %v5336
    %7146 = vmatpush1.bf16.msra.mxu0 %v5335
    %7147 = vmatprep.subr.bf16.mxu0 %v5344
    %7148 = vmatpush1.bf16.msra.mxu0 %v5343
    %7149 = vmatprep.mubr.bf16.mxu0 %v2814
    %7150 = vmatmul.mubr.bf16.gmra.mrb[0].mxu0 %v2813
    %v7151 = vpop.f32.mrb[0].mxu0
    %v7152 = vadd.f32 %v7039, %v7151
    %v7153 = vpop.f32.mrb[0].mxu0
    %v7154 = vadd.f32 %v7041, %v7153
    %v7155 = vpop.f32.mrb[0].mxu0
    %v7156 = vadd.f32 %v7043, %v7155
    %v7157 = vpop.f32.mrb[0].mxu0
    %v7158 = vadd.f32 %v7045, %v7157
    %7159 = vmatprep.mubr.bf16.mxu0 %v2822
    %7160 = vmatmul.mubr.bf16.gmra.mrb[0].mxu0 %v2821
    %v7161 = vpop.f32.mrb[0].mxu0
    %v7162 = vadd.f32 %v7049, %v7161
    %v7163 = vpop.f32.mrb[0].mxu0
    %v7164 = vadd.f32 %v7051, %v7163
    %v7165 = vpop.f32.mrb[0].mxu0
    %v7166 = vadd.f32 %v7053, %v7165
    %v7167 = vpop.f32.mrb[0].mxu0
    %v7168 = vadd.f32 %v7055, %v7167
    %7169 = vmatprep.mubr.bf16.mxu0 %v2830
    %7170 = vmatmul.mubr.bf16.gmra.mrb[0].mxu0 %v2829
    %v7171 = vpop.f32.mrb[0].mxu0
    %v7172 = vadd.f32 %v7059, %v7171
    %v7173 = vpop.f32.mrb[0].mxu0
    %v7174 = vadd.f32 %v7061, %v7173
    %v7175 = vpop.f32.mrb[0].mxu0
    %v7176 = vadd.f32 %v7063, %v7175
    %v7177 = vpop.f32.mrb[0].mxu0
    %v7178 = vadd.f32 %v7065, %v7177
    %7179 = vmatprep.mubr.bf16.mxu0 %v2838
    %7180 = vmatmul.mubr.bf16.gmra.mrb[0].mxu0 %v2837
    %v7181 = vpop.f32.mrb[0].mxu0
    %v7182 = vadd.f32 %v7069, %v7181
    %v7183 = vpop.f32.mrb[0].mxu0
    %v7184 = vadd.f32 %v7071, %v7183
    %v7185 = vpop.f32.mrb[0].mxu0
    %v7186 = vadd.f32 %v7073, %v7185
    %v7187 = vpop.f32.mrb[0].mxu0
    %v7188 = vadd.f32 %v7075, %v7187
    %7189 = vmatprep.mubr.bf16.mxu0 %v2846
    %7190 = vmatmul.mubr.bf16.gmra.mrb[0].mxu0 %v2845
    %v7191 = vpop.f32.mrb[0].mxu0
    %v7192 = vadd.f32 %v7079, %v7191
    %v7193 = vpop.f32.mrb[0].mxu0
    %v7194 = vadd.f32 %v7081, %v7193
    %v7195 = vpop.f32.mrb[0].mxu0
    %v7196 = vadd.f32 %v7083, %v7195
    %v7197 = vpop.f32.mrb[0].mxu0
    %v7198 = vadd.f32 %v7085, %v7197
    %7199 = vmatprep.mubr.bf16.mxu0 %v2854
    %7200 = vmatmul.mubr.bf16.gmra.mrb[0].mxu0 %v2853
    %v7201 = vpop.f32.mrb[0].mxu0
    %v7202 = vadd.f32 %v7089, %v7201
    %v7203 = vpop.f32.mrb[0].mxu0
    %v7204 = vadd.f32 %v7091, %v7203
    %v7205 = vpop.f32.mrb[0].mxu0
    %v7206 = vadd.f32 %v7093, %v7205
    %v7207 = vpop.f32.mrb[0].mxu0
    %v7208 = vadd.f32 %v7095, %v7207
    %7209 = vmatprep.mubr.bf16.mxu0 %v2862
    %7210 = vmatmul.mubr.bf16.gmra.mrb[0].mxu0 %v2861
    %v7211 = vpop.f32.mrb[0].mxu0
    %v7212 = vadd.f32 %v7099, %v7211
    %v7213 = vpop.f32.mrb[0].mxu0
    %v7214 = vadd.f32 %v7101, %v7213
    %v7215 = vpop.f32.mrb[0].mxu0
    %v7216 = vadd.f32 %v7103, %v7215
    %v7217 = vpop.f32.mrb[0].mxu0
    %v7218 = vadd.f32 %v7105, %v7217
    %7219 = vmatprep.mubr.bf16.mxu0 %v2870
    %7220 = vmatmul.mubr.bf16.gmra.mrb[0].mxu0 %v2869
    %v7221 = vpop.f32.mrb[0].mxu0
    %v7222 = vadd.f32 %v7109, %v7221
    %v7223 = vpop.f32.mrb[0].mxu0
    %v7224 = vadd.f32 %v7111, %v7223
    %v7225 = vpop.f32.mrb[0].mxu0
    %v7226 = vadd.f32 %v7113, %v7225
    %v7227 = vpop.f32.mrb[0].mxu0
    %v7228 = vadd.f32 %v7115, %v7227
    %7229 = vdwg.mxu0
    %7230 = vmatprep.subr.bf16.mxu0 %v5352
    %7231 = vmatpush1.bf16.msra.mxu0 %v5351
    %7232 = vmatprep.subr.bf16.mxu0 %v5360
    %7233 = vmatpush1.bf16.msra.mxu0 %v5359
    %7234 = vmatprep.subr.bf16.mxu0 %v5368
    %7235 = vmatpush1.bf16.msra.mxu0 %v5367
    %7236 = vmatprep.subr.bf16.mxu0 %v5376
    %7237 = vmatpush1.bf16.msra.mxu0 %v5375
    %7238 = vmatprep.subr.bf16.mxu0 %v5384
    %7239 = vmatpush1.bf16.msra.mxu0 %v5383
    %7240 = vmatprep.subr.bf16.mxu0 %v5392
    %7241 = vmatpush1.bf16.msra.mxu0 %v5391
    %7242 = vmatprep.subr.bf16.mxu0 %v5400
    %7243 = vmatpush1.bf16.msra.mxu0 %v5399
    %7244 = vmatprep.subr.bf16.mxu0 %v5408
    %7245 = vmatpush1.bf16.msra.mxu0 %v5407
    %7246 = vmatprep.subr.bf16.mxu0 %v5416
    %7247 = vmatpush1.bf16.msra.mxu0 %v5415
    %7248 = vmatprep.subr.bf16.mxu0 %v5424
    %7249 = vmatpush1.bf16.msra.mxu0 %v5423
    %7250 = vmatprep.subr.bf16.mxu0 %v5432
    %7251 = vmatpush1.bf16.msra.mxu0 %v5431
    %7252 = vmatprep.subr.bf16.mxu0 %v5440
    %7253 = vmatpush1.bf16.msra.mxu0 %v5439
    %7254 = vmatprep.subr.bf16.mxu0 %v5448
    %7255 = vmatpush1.bf16.msra.mxu0 %v5447
    %7256 = vmatprep.subr.bf16.mxu0 %v5456
    %7257 = vmatpush1.bf16.msra.mxu0 %v5455
    %7258 = vmatprep.subr.bf16.mxu0 %v5464
    %7259 = vmatpush1.bf16.msra.mxu0 %v5463
    %7260 = vmatprep.subr.bf16.mxu0 %v5472
    %7261 = vmatpush1.bf16.msra.mxu0 %v5471
    %7262 = vmatprep.mubr.bf16.mxu0 %v2816
    %7263 = vmatmul.mubr.bf16.gmra.mrb[0].mxu0 %v2815
    %v7264 = vpop.f32.mrb[0].mxu0
    %v7265 = vadd.f32 %v7152, %v7264
    %v7266 = vpop.f32.mrb[0].mxu0
    %v7267 = vadd.f32 %v7154, %v7266
    %v7268 = vpop.f32.mrb[0].mxu0
    %v7269 = vadd.f32 %v7156, %v7268
    %v7270 = vpop.f32.mrb[0].mxu0
    %v7271 = vadd.f32 %v7158, %v7270
    %7272 = vmatprep.mubr.bf16.mxu0 %v2824
    %7273 = vmatmul.mubr.bf16.gmra.mrb[0].mxu0 %v2823
    %v7274 = vpop.f32.mrb[0].mxu0
    %v7275 = vadd.f32 %v7162, %v7274
    %v7276 = vpop.f32.mrb[0].mxu0
    %v7277 = vadd.f32 %v7164, %v7276
    %v7278 = vpop.f32.mrb[0].mxu0
    %v7279 = vadd.f32 %v7166, %v7278
    %v7280 = vpop.f32.mrb[0].mxu0
    %v7281 = vadd.f32 %v7168, %v7280
    %7282 = vmatprep.mubr.bf16.mxu0 %v2832
    %7283 = vmatmul.mubr.bf16.gmra.mrb[0].mxu0 %v2831
    %v7284 = vpop.f32.mrb[0].mxu0
    %v7285 = vadd.f32 %v7172, %v7284
    %v7286 = vpop.f32.mrb[0].mxu0
    %v7287 = vadd.f32 %v7174, %v7286
    %v7288 = vpop.f32.mrb[0].mxu0
    %v7289 = vadd.f32 %v7176, %v7288
    %v7290 = vpop.f32.mrb[0].mxu0
    %v7291 = vadd.f32 %v7178, %v7290
    %7292 = vmatprep.mubr.bf16.mxu0 %v2840
    %7293 = vmatmul.mubr.bf16.gmra.mrb[0].mxu0 %v2839
    %v7294 = vpop.f32.mrb[0].mxu0
    %v7295 = vadd.f32 %v7182, %v7294
    %v7296 = vpop.f32.mrb[0].mxu0
    %v7297 = vadd.f32 %v7184, %v7296
    %v7298 = vpop.f32.mrb[0].mxu0
    %v7299 = vadd.f32 %v7186, %v7298
    %v7300 = vpop.f32.mrb[0].mxu0
    %v7301 = vadd.f32 %v7188, %v7300
    %7302 = vmatprep.mubr.bf16.mxu0 %v2848
    %7303 = vmatmul.mubr.bf16.gmra.mrb[0].mxu0 %v2847
    %v7304 = vpop.f32.mrb[0].mxu0
    %v7305 = vadd.f32 %v7192, %v7304
    %v7306 = vpop.f32.mrb[0].mxu0
    %v7307 = vadd.f32 %v7194, %v7306
    %v7308 = vpop.f32.mrb[0].mxu0
    %v7309 = vadd.f32 %v7196, %v7308
    %v7310 = vpop.f32.mrb[0].mxu0
    %v7311 = vadd.f32 %v7198, %v7310
    %7312 = vmatprep.mubr.bf16.mxu0 %v2856
    %7313 = vmatmul.mubr.bf16.gmra.mrb[0].mxu0 %v2855
    %v7314 = vpop.f32.mrb[0].mxu0
    %v7315 = vadd.f32 %v7202, %v7314
    %v7316 = vpop.f32.mrb[0].mxu0
    %v7317 = vadd.f32 %v7204, %v7316
    %v7318 = vpop.f32.mrb[0].mxu0
    %v7319 = vadd.f32 %v7206, %v7318
    %v7320 = vpop.f32.mrb[0].mxu0
    %v7321 = vadd.f32 %v7208, %v7320
    %7322 = vmatprep.mubr.bf16.mxu0 %v2864
    %7323 = vmatmul.mubr.bf16.gmra.mrb[0].mxu0 %v2863
    %v7324 = vpop.f32.mrb[0].mxu0
    %v7325 = vadd.f32 %v7212, %v7324
    %v7326 = vpop.f32.mrb[0].mxu0
    %v7327 = vadd.f32 %v7214, %v7326
    %v7328 = vpop.f32.mrb[0].mxu0
    %v7329 = vadd.f32 %v7216, %v7328
    %v7330 = vpop.f32.mrb[0].mxu0
    %v7331 = vadd.f32 %v7218, %v7330
    %7332 = vmatprep.mubr.bf16.mxu0 %v2872
    %7333 = vmatmul.mubr.bf16.gmra.mrb[0].mxu0 %v2871
    %v7334 = vpop.f32.mrb[0].mxu0
    %v7335 = vadd.f32 %v7222, %v7334
    %v7336 = vpop.f32.mrb[0].mxu0
    %v7337 = vadd.f32 %v7224, %v7336
    %v7338 = vpop.f32.mrb[0].mxu0
    %v7339 = vadd.f32 %v7226, %v7338
    %v7340 = vpop.f32.mrb[0].mxu0
    %v7341 = vadd.f32 %v7228, %v7340
    %7342 = vdwg.mxu0
    %7343 = vmatprep.subr.bf16.mxu0 %v4970
    %7344 = vmatpush1.bf16.msra.mxu0 %v4969
    %7345 = vmatprep.subr.bf16.mxu0 %v4978
    %7346 = vmatpush1.bf16.msra.mxu0 %v4977
    %7347 = vmatprep.subr.bf16.mxu0 %v4986
    %7348 = vmatpush1.bf16.msra.mxu0 %v4985
    %7349 = vmatprep.subr.bf16.mxu0 %v4994
    %7350 = vmatpush1.bf16.msra.mxu0 %v4993
    %7351 = vmatprep.subr.bf16.mxu0 %v5002
    %7352 = vmatpush1.bf16.msra.mxu0 %v5001
    %7353 = vmatprep.subr.bf16.mxu0 %v5010
    %7354 = vmatpush1.bf16.msra.mxu0 %v5009
    %7355 = vmatprep.subr.bf16.mxu0 %v5018
    %7356 = vmatpush1.bf16.msra.mxu0 %v5017
    %7357 = vmatprep.subr.bf16.mxu0 %v5026
    %7358 = vmatpush1.bf16.msra.mxu0 %v5025
    %7359 = vmatprep.subr.bf16.mxu0 %v5034
    %7360 = vmatpush1.bf16.msra.mxu0 %v5033
    %7361 = vmatprep.subr.bf16.mxu0 %v5042
    %7362 = vmatpush1.bf16.msra.mxu0 %v5041
    %7363 = vmatprep.subr.bf16.mxu0 %v5050
    %7364 = vmatpush1.bf16.msra.mxu0 %v5049
    %7365 = vmatprep.subr.bf16.mxu0 %v5058
    %7366 = vmatpush1.bf16.msra.mxu0 %v5057
    %7367 = vmatprep.subr.bf16.mxu0 %v5066
    %7368 = vmatpush1.bf16.msra.mxu0 %v5065
    %7369 = vmatprep.subr.bf16.mxu0 %v5074
    %7370 = vmatpush1.bf16.msra.mxu0 %v5073
    %7371 = vmatprep.subr.bf16.mxu0 %v5082
    %7372 = vmatpush1.bf16.msra.mxu0 %v5081
    %7373 = vmatprep.subr.bf16.mxu0 %v5090
    %7374 = vmatpush1.bf16.msra.mxu0 %v5089
    %7375 = vmatprep.mubr.bf16.mxu0 %v2810
    %7376 = vmatmul.mubr.bf16.gmra.mrb[0].mxu0 %v2809
    %v7377 = vpop.f32.mrb[0].mxu0
    %v7378 = vadd.f32 %v3414, %v7377
    %v7379 = vpop.f32.mrb[0].mxu0
    %v7380 = vadd.f32 %v3418, %v7379
    %v7381 = vpop.f32.mrb[0].mxu0
    %v7382 = vadd.f32 %v3414, %v7381
    %v7383 = vpop.f32.mrb[0].mxu0
    %v7384 = vadd.f32 %v3418, %v7383
    %7385 = vmatprep.mubr.bf16.mxu0 %v2818
    %7386 = vmatmul.mubr.bf16.gmra.mrb[0].mxu0 %v2817
    %v7387 = vpop.f32.mrb[0].mxu0
    %v7388 = vadd.f32 %v3414, %v7387
    %v7389 = vpop.f32.mrb[0].mxu0
    %v7390 = vadd.f32 %v3418, %v7389
    %v7391 = vpop.f32.mrb[0].mxu0
    %v7392 = vadd.f32 %v3414, %v7391
    %v7393 = vpop.f32.mrb[0].mxu0
    %v7394 = vadd.f32 %v3418, %v7393
    %7395 = vmatprep.mubr.bf16.mxu0 %v2826
    %7396 = vmatmul.mubr.bf16.gmra.mrb[0].mxu0 %v2825
    %v7397 = vpop.f32.mrb[0].mxu0
    %v7398 = vadd.f32 %v3414, %v7397
    %v7399 = vpop.f32.mrb[0].mxu0
    %v7400 = vadd.f32 %v3418, %v7399
    %v7401 = vpop.f32.mrb[0].mxu0
    %v7402 = vadd.f32 %v3414, %v7401
    %v7403 = vpop.f32.mrb[0].mxu0
    %v7404 = vadd.f32 %v3418, %v7403
    %7405 = vmatprep.mubr.bf16.mxu0 %v2834
    %7406 = vmatmul.mubr.bf16.gmra.mrb[0].mxu0 %v2833
    %v7407 = vpop.f32.mrb[0].mxu0
    %v7408 = vadd.f32 %v3414, %v7407
    %v7409 = vpop.f32.mrb[0].mxu0
    %v7410 = vadd.f32 %v3418, %v7409
    %v7411 = vpop.f32.mrb[0].mxu0
    %v7412 = vadd.f32 %v3414, %v7411
    %v7413 = vpop.f32.mrb[0].mxu0
    %v7414 = vadd.f32 %v3418, %v7413
    %7415 = vmatprep.mubr.bf16.mxu0 %v2842
    %7416 = vmatmul.mubr.bf16.gmra.mrb[0].mxu0 %v2841
    %v7417 = vpop.f32.mrb[0].mxu0
    %v7418 = vadd.f32 %v3414, %v7417
    %v7419 = vpop.f32.mrb[0].mxu0
    %v7420 = vadd.f32 %v3418, %v7419
    %v7421 = vpop.f32.mrb[0].mxu0
    %v7422 = vadd.f32 %v3414, %v7421
    %v7423 = vpop.f32.mrb[0].mxu0
    %v7424 = vadd.f32 %v3418, %v7423
    %7425 = vmatprep.mubr.bf16.mxu0 %v2850
    %7426 = vmatmul.mubr.bf16.gmra.mrb[0].mxu0 %v2849
    %v7427 = vpop.f32.mrb[0].mxu0
    %v7428 = vadd.f32 %v3414, %v7427
    %v7429 = vpop.f32.mrb[0].mxu0
    %v7430 = vadd.f32 %v3418, %v7429
    %v7431 = vpop.f32.mrb[0].mxu0
    %v7432 = vadd.f32 %v3414, %v7431
    %v7433 = vpop.f32.mrb[0].mxu0
    %v7434 = vadd.f32 %v3418, %v7433
    %7435 = vmatprep.mubr.bf16.mxu0 %v2858
    %7436 = vmatmul.mubr.bf16.gmra.mrb[0].mxu0 %v2857
    %v7437 = vpop.f32.mrb[0].mxu0
    %v7438 = vadd.f32 %v3414, %v7437
    %v7439 = vpop.f32.mrb[0].mxu0
    %v7440 = vadd.f32 %v3418, %v7439
    %v7441 = vpop.f32.mrb[0].mxu0
    %v7442 = vadd.f32 %v3414, %v7441
    %v7443 = vpop.f32.mrb[0].mxu0
    %v7444 = vadd.f32 %v3418, %v7443
    %7445 = vmatprep.mubr.bf16.mxu0 %v2866
    %7446 = vmatmul.mubr.bf16.gmra.mrb[0].mxu0 %v2865
    %v7447 = vpop.f32.mrb[0].mxu0
    %v7448 = vadd.f32 %v3414, %v7447
    %v7449 = vpop.f32.mrb[0].mxu0
    %v7450 = vadd.f32 %v3418, %v7449
    %v7451 = vpop.f32.mrb[0].mxu0
    %v7452 = vadd.f32 %v3414, %v7451
    %v7453 = vpop.f32.mrb[0].mxu0
    %v7454 = vadd.f32 %v3418, %v7453
    %7455 = vdwg.mxu0
    %7456 = vmatprep.subr.bf16.mxu0 %v5098
    %7457 = vmatpush1.bf16.msra.mxu0 %v5097
    %7458 = vmatprep.subr.bf16.mxu0 %v5106
    %7459 = vmatpush1.bf16.msra.mxu0 %v5105
    %7460 = vmatprep.subr.bf16.mxu0 %v5114
    %7461 = vmatpush1.bf16.msra.mxu0 %v5113
    %7462 = vmatprep.subr.bf16.mxu0 %v5122
    %7463 = vmatpush1.bf16.msra.mxu0 %v5121
    %7464 = vmatprep.subr.bf16.mxu0 %v5130
    %7465 = vmatpush1.bf16.msra.mxu0 %v5129
    %7466 = vmatprep.subr.bf16.mxu0 %v5138
    %7467 = vmatpush1.bf16.msra.mxu0 %v5137
    %7468 = vmatprep.subr.bf16.mxu0 %v5146
    %7469 = vmatpush1.bf16.msra.mxu0 %v5145
    %7470 = vmatprep.subr.bf16.mxu0 %v5154
    %7471 = vmatpush1.bf16.msra.mxu0 %v5153
    %7472 = vmatprep.subr.bf16.mxu0 %v5162
    %7473 = vmatpush1.bf16.msra.mxu0 %v5161
    %7474 = vmatprep.subr.bf16.mxu0 %v5170
    %7475 = vmatpush1.bf16.msra.mxu0 %v5169
    %7476 = vmatprep.subr.bf16.mxu0 %v5178
    %7477 = vmatpush1.bf16.msra.mxu0 %v5177
    %7478 = vmatprep.subr.bf16.mxu0 %v5186
    %7479 = vmatpush1.bf16.msra.mxu0 %v5185
    %7480 = vmatprep.subr.bf16.mxu0 %v5194
    %7481 = vmatpush1.bf16.msra.mxu0 %v5193
    %7482 = vmatprep.subr.bf16.mxu0 %v5202
    %7483 = vmatpush1.bf16.msra.mxu0 %v5201
    %7484 = vmatprep.subr.bf16.mxu0 %v5210
    %7485 = vmatpush1.bf16.msra.mxu0 %v5209
    %7486 = vmatprep.subr.bf16.mxu0 %v5218
    %7487 = vmatpush1.bf16.msra.mxu0 %v5217
    %7488 = vmatprep.mubr.bf16.mxu0 %v2812
    %7489 = vmatmul.mubr.bf16.gmra.mrb[0].mxu0 %v2811
    %v7490 = vpop.f32.mrb[0].mxu0
    %v7491 = vadd.f32 %v7378, %v7490
    %v7492 = vpop.f32.mrb[0].mxu0
    %v7493 = vadd.f32 %v7380, %v7492
    %v7494 = vpop.f32.mrb[0].mxu0
    %v7495 = vadd.f32 %v7382, %v7494
    %v7496 = vpop.f32.mrb[0].mxu0
    %v7497 = vadd.f32 %v7384, %v7496
    %7498 = vmatprep.mubr.bf16.mxu0 %v2820
    %7499 = vmatmul.mubr.bf16.gmra.mrb[0].mxu0 %v2819
    %v7500 = vpop.f32.mrb[0].mxu0
    %v7501 = vadd.f32 %v7388, %v7500
    %v7502 = vpop.f32.mrb[0].mxu0
    %v7503 = vadd.f32 %v7390, %v7502
    %v7504 = vpop.f32.mrb[0].mxu0
    %v7505 = vadd.f32 %v7392, %v7504
    %v7506 = vpop.f32.mrb[0].mxu0
    %v7507 = vadd.f32 %v7394, %v7506
    %7508 = vmatprep.mubr.bf16.mxu0 %v2828
    %7509 = vmatmul.mubr.bf16.gmra.mrb[0].mxu0 %v2827
    %v7510 = vpop.f32.mrb[0].mxu0
    %v7511 = vadd.f32 %v7398, %v7510
    %v7512 = vpop.f32.mrb[0].mxu0
    %v7513 = vadd.f32 %v7400, %v7512
    %v7514 = vpop.f32.mrb[0].mxu0
    %v7515 = vadd.f32 %v7402, %v7514
    %v7516 = vpop.f32.mrb[0].mxu0
    %v7517 = vadd.f32 %v7404, %v7516
    %7518 = vmatprep.mubr.bf16.mxu0 %v2836
    %7519 = vmatmul.mubr.bf16.gmra.mrb[0].mxu0 %v2835
    %v7520 = vpop.f32.mrb[0].mxu0
    %v7521 = vadd.f32 %v7408, %v7520
    %v7522 = vpop.f32.mrb[0].mxu0
    %v7523 = vadd.f32 %v7410, %v7522
    %v7524 = vpop.f32.mrb[0].mxu0
    %v7525 = vadd.f32 %v7412, %v7524
    %v7526 = vpop.f32.mrb[0].mxu0
    %v7527 = vadd.f32 %v7414, %v7526
    %7528 = vmatprep.mubr.bf16.mxu0 %v2844
    %7529 = vmatmul.mubr.bf16.gmra.mrb[0].mxu0 %v2843
    %v7530 = vpop.f32.mrb[0].mxu0
    %v7531 = vadd.f32 %v7418, %v7530
    %v7532 = vpop.f32.mrb[0].mxu0
    %v7533 = vadd.f32 %v7420, %v7532
    %v7534 = vpop.f32.mrb[0].mxu0
    %v7535 = vadd.f32 %v7422, %v7534
    %v7536 = vpop.f32.mrb[0].mxu0
    %v7537 = vadd.f32 %v7424, %v7536
    %7538 = vmatprep.mubr.bf16.mxu0 %v2852
    %7539 = vmatmul.mubr.bf16.gmra.mrb[0].mxu0 %v2851
    %v7540 = vpop.f32.mrb[0].mxu0
    %v7541 = vadd.f32 %v7428, %v7540
    %v7542 = vpop.f32.mrb[0].mxu0
    %v7543 = vadd.f32 %v7430, %v7542
    %v7544 = vpop.f32.mrb[0].mxu0
    %v7545 = vadd.f32 %v7432, %v7544
    %v7546 = vpop.f32.mrb[0].mxu0
    %v7547 = vadd.f32 %v7434, %v7546
    %7548 = vmatprep.mubr.bf16.mxu0 %v2860
    %7549 = vmatmul.mubr.bf16.gmra.mrb[0].mxu0 %v2859
    %v7550 = vpop.f32.mrb[0].mxu0
    %v7551 = vadd.f32 %v7438, %v7550
    %v7552 = vpop.f32.mrb[0].mxu0
    %v7553 = vadd.f32 %v7440, %v7552
    %v7554 = vpop.f32.mrb[0].mxu0
    %v7555 = vadd.f32 %v7442, %v7554
    %v7556 = vpop.f32.mrb[0].mxu0
    %v7557 = vadd.f32 %v7444, %v7556
    %7558 = vmatprep.mubr.bf16.mxu0 %v2868
    %7559 = vmatmul.mubr.bf16.gmra.mrb[0].mxu0 %v2867
    %v7560 = vpop.f32.mrb[0].mxu0
    %v7561 = vadd.f32 %v7448, %v7560
    %v7562 = vpop.f32.mrb[0].mxu0
    %v7563 = vadd.f32 %v7450, %v7562
    %v7564 = vpop.f32.mrb[0].mxu0
    %v7565 = vadd.f32 %v7452, %v7564
    %v7566 = vpop.f32.mrb[0].mxu0
    %v7567 = vadd.f32 %v7454, %v7566
    %7568 = vdwg.mxu0
    %7569 = vmatprep.subr.bf16.mxu0 %v5226
    %7570 = vmatpush1.bf16.msra.mxu0 %v5225
    %7571 = vmatprep.subr.bf16.mxu0 %v5234
    %7572 = vmatpush1.bf16.msra.mxu0 %v5233
    %7573 = vmatprep.subr.bf16.mxu0 %v5242
    %7574 = vmatpush1.bf16.msra.mxu0 %v5241
    %7575 = vmatprep.subr.bf16.mxu0 %v5250
    %7576 = vmatpush1.bf16.msra.mxu0 %v5249
    %7577 = vmatprep.subr.bf16.mxu0 %v5258
    %7578 = vmatpush1.bf16.msra.mxu0 %v5257
    %7579 = vmatprep.subr.bf16.mxu0 %v5266
    %7580 = vmatpush1.bf16.msra.mxu0 %v5265
    %7581 = vmatprep.subr.bf16.mxu0 %v5274
    %7582 = vmatpush1.bf16.msra.mxu0 %v5273
    %7583 = vmatprep.subr.bf16.mxu0 %v5282
    %7584 = vmatpush1.bf16.msra.mxu0 %v5281
    %7585 = vmatprep.subr.bf16.mxu0 %v5290
    %7586 = vmatpush1.bf16.msra.mxu0 %v5289
    %7587 = vmatprep.subr.bf16.mxu0 %v5298
    %7588 = vmatpush1.bf16.msra.mxu0 %v5297
    %7589 = vmatprep.subr.bf16.mxu0 %v5306
    %7590 = vmatpush1.bf16.msra.mxu0 %v5305
    %7591 = vmatprep.subr.bf16.mxu0 %v5314
    %7592 = vmatpush1.bf16.msra.mxu0 %v5313
    %7593 = vmatprep.subr.bf16.mxu0 %v5322
    %7594 = vmatpush1.bf16.msra.mxu0 %v5321
    %7595 = vmatprep.subr.bf16.mxu0 %v5330
    %7596 = vmatpush1.bf16.msra.mxu0 %v5329
    %7597 = vmatprep.subr.bf16.mxu0 %v5338
    %7598 = vmatpush1.bf16.msra.mxu0 %v5337
    %7599 = vmatprep.subr.bf16.mxu0 %v5346
    %7600 = vmatpush1.bf16.msra.mxu0 %v5345
    %7601 = vmatprep.mubr.bf16.mxu0 %v2814
    %7602 = vmatmul.mubr.bf16.gmra.mrb[0].mxu0 %v2813
    %v7603 = vpop.f32.mrb[0].mxu0
    %v7604 = vadd.f32 %v7491, %v7603
    %v7605 = vpop.f32.mrb[0].mxu0
    %v7606 = vadd.f32 %v7493, %v7605
    %v7607 = vpop.f32.mrb[0].mxu0
    %v7608 = vadd.f32 %v7495, %v7607
    %v7609 = vpop.f32.mrb[0].mxu0
    %v7610 = vadd.f32 %v7497, %v7609
    %7611 = vmatprep.mubr.bf16.mxu0 %v2822
    %7612 = vmatmul.mubr.bf16.gmra.mrb[0].mxu0 %v2821
    %v7613 = vpop.f32.mrb[0].mxu0
    %v7614 = vadd.f32 %v7501, %v7613
    %v7615 = vpop.f32.mrb[0].mxu0
    %v7616 = vadd.f32 %v7503, %v7615
    %v7617 = vpop.f32.mrb[0].mxu0
    %v7618 = vadd.f32 %v7505, %v7617
    %v7619 = vpop.f32.mrb[0].mxu0
    %v7620 = vadd.f32 %v7507, %v7619
    %7621 = vmatprep.mubr.bf16.mxu0 %v2830
    %7622 = vmatmul.mubr.bf16.gmra.mrb[0].mxu0 %v2829
    %v7623 = vpop.f32.mrb[0].mxu0
    %v7624 = vadd.f32 %v7511, %v7623
    %v7625 = vpop.f32.mrb[0].mxu0
    %v7626 = vadd.f32 %v7513, %v7625
    %v7627 = vpop.f32.mrb[0].mxu0
    %v7628 = vadd.f32 %v7515, %v7627
    %v7629 = vpop.f32.mrb[0].mxu0
    %v7630 = vadd.f32 %v7517, %v7629
    %7631 = vmatprep.mubr.bf16.mxu0 %v2838
    %7632 = vmatmul.mubr.bf16.gmra.mrb[0].mxu0 %v2837
    %v7633 = vpop.f32.mrb[0].mxu0
    %v7634 = vadd.f32 %v7521, %v7633
    %v7635 = vpop.f32.mrb[0].mxu0
    %v7636 = vadd.f32 %v7523, %v7635
    %v7637 = vpop.f32.mrb[0].mxu0
    %v7638 = vadd.f32 %v7525, %v7637
    %v7639 = vpop.f32.mrb[0].mxu0
    %v7640 = vadd.f32 %v7527, %v7639
    %7641 = vmatprep.mubr.bf16.mxu0 %v2846
    %7642 = vmatmul.mubr.bf16.gmra.mrb[0].mxu0 %v2845
    %v7643 = vpop.f32.mrb[0].mxu0
    %v7644 = vadd.f32 %v7531, %v7643
    %v7645 = vpop.f32.mrb[0].mxu0
    %v7646 = vadd.f32 %v7533, %v7645
    %v7647 = vpop.f32.mrb[0].mxu0
    %v7648 = vadd.f32 %v7535, %v7647
    %v7649 = vpop.f32.mrb[0].mxu0
    %v7650 = vadd.f32 %v7537, %v7649
    %7651 = vmatprep.mubr.bf16.mxu0 %v2854
    %7652 = vmatmul.mubr.bf16.gmra.mrb[0].mxu0 %v2853
    %v7653 = vpop.f32.mrb[0].mxu0
    %v7654 = vadd.f32 %v7541, %v7653
    %v7655 = vpop.f32.mrb[0].mxu0
    %v7656 = vadd.f32 %v7543, %v7655
    %v7657 = vpop.f32.mrb[0].mxu0
    %v7658 = vadd.f32 %v7545, %v7657
    %v7659 = vpop.f32.mrb[0].mxu0
    %v7660 = vadd.f32 %v7547, %v7659
    %7661 = vmatprep.mubr.bf16.mxu0 %v2862
    %7662 = vmatmul.mubr.bf16.gmra.mrb[0].mxu0 %v2861
    %v7663 = vpop.f32.mrb[0].mxu0
    %v7664 = vadd.f32 %v7551, %v7663
    %v7665 = vpop.f32.mrb[0].mxu0
    %v7666 = vadd.f32 %v7553, %v7665
    %v7667 = vpop.f32.mrb[0].mxu0
    %v7668 = vadd.f32 %v7555, %v7667
    %v7669 = vpop.f32.mrb[0].mxu0
    %v7670 = vadd.f32 %v7557, %v7669
    %7671 = vmatprep.mubr.bf16.mxu0 %v2870
    %7672 = vmatmul.mubr.bf16.gmra.mrb[0].mxu0 %v2869
    %v7673 = vpop.f32.mrb[0].mxu0
    %v7674 = vadd.f32 %v7561, %v7673
    %v7675 = vpop.f32.mrb[0].mxu0
    %v7676 = vadd.f32 %v7563, %v7675
    %v7677 = vpop.f32.mrb[0].mxu0
    %v7678 = vadd.f32 %v7565, %v7677
    %v7679 = vpop.f32.mrb[0].mxu0
    %v7680 = vadd.f32 %v7567, %v7679
    %7681 = vdwg.mxu0
    %7682 = vmatprep.subr.bf16.mxu0 %v5354
    %7683 = vmatpush1.bf16.msra.mxu0 %v5353
    %7684 = vmatprep.subr.bf16.mxu0 %v5362
    %7685 = vmatpush1.bf16.msra.mxu0 %v5361
    %7686 = vmatprep.subr.bf16.mxu0 %v5370
    %7687 = vmatpush1.bf16.msra.mxu0 %v5369
    %7688 = vmatprep.subr.bf16.mxu0 %v5378
    %7689 = vmatpush1.bf16.msra.mxu0 %v5377
    %7690 = vmatprep.subr.bf16.mxu0 %v5386
    %7691 = vmatpush1.bf16.msra.mxu0 %v5385
    %7692 = vmatprep.subr.bf16.mxu0 %v5394
    %7693 = vmatpush1.bf16.msra.mxu0 %v5393
    %7694 = vmatprep.subr.bf16.mxu0 %v5402
    %7695 = vmatpush1.bf16.msra.mxu0 %v5401
    %7696 = vmatprep.subr.bf16.mxu0 %v5410
    %7697 = vmatpush1.bf16.msra.mxu0 %v5409
    %7698 = vmatprep.subr.bf16.mxu0 %v5418
    %7699 = vmatpush1.bf16.msra.mxu0 %v5417
    %7700 = vmatprep.subr.bf16.mxu0 %v5426
    %7701 = vmatpush1.bf16.msra.mxu0 %v5425
    %7702 = vmatprep.subr.bf16.mxu0 %v5434
    %7703 = vmatpush1.bf16.msra.mxu0 %v5433
    %7704 = vmatprep.subr.bf16.mxu0 %v5442
    %7705 = vmatpush1.bf16.msra.mxu0 %v5441
    %7706 = vmatprep.subr.bf16.mxu0 %v5450
    %7707 = vmatpush1.bf16.msra.mxu0 %v5449
    %7708 = vmatprep.subr.bf16.mxu0 %v5458
    %7709 = vmatpush1.bf16.msra.mxu0 %v5457
    %7710 = vmatprep.subr.bf16.mxu0 %v5466
    %7711 = vmatpush1.bf16.msra.mxu0 %v5465
    %7712 = vmatprep.subr.bf16.mxu0 %v5474
    %7713 = vmatpush1.bf16.msra.mxu0 %v5473
    %7714 = vmatprep.mubr.bf16.mxu0 %v2816
    %7715 = vmatmul.mubr.bf16.gmra.mrb[0].mxu0 %v2815
    %v7716 = vpop.f32.mrb[0].mxu0
    %v7717 = vadd.f32 %v7604, %v7716
    %v7718 = vpop.f32.mrb[0].mxu0
    %v7719 = vadd.f32 %v7606, %v7718
    %v7720 = vpop.f32.mrb[0].mxu0
    %v7721 = vadd.f32 %v7608, %v7720
    %v7722 = vpop.f32.mrb[0].mxu0
    %v7723 = vadd.f32 %v7610, %v7722
    %7724 = vmatprep.mubr.bf16.mxu0 %v2824
    %7725 = vmatmul.mubr.bf16.gmra.mrb[0].mxu0 %v2823
    %v7726 = vpop.f32.mrb[0].mxu0
    %v7727 = vadd.f32 %v7614, %v7726
    %v7728 = vpop.f32.mrb[0].mxu0
    %v7729 = vadd.f32 %v7616, %v7728
    %v7730 = vpop.f32.mrb[0].mxu0
    %v7731 = vadd.f32 %v7618, %v7730
    %v7732 = vpop.f32.mrb[0].mxu0
    %v7733 = vadd.f32 %v7620, %v7732
    %7734 = vmatprep.mubr.bf16.mxu0 %v2832
    %7735 = vmatmul.mubr.bf16.gmra.mrb[0].mxu0 %v2831
    %v7736 = vpop.f32.mrb[0].mxu0
    %v7737 = vadd.f32 %v7624, %v7736
    %v7738 = vpop.f32.mrb[0].mxu0
    %v7739 = vadd.f32 %v7626, %v7738
    %v7740 = vpop.f32.mrb[0].mxu0
    %v7741 = vadd.f32 %v7628, %v7740
    %v7742 = vpop.f32.mrb[0].mxu0
    %v7743 = vadd.f32 %v7630, %v7742
    %7744 = vmatprep.mubr.bf16.mxu0 %v2840
    %7745 = vmatmul.mubr.bf16.gmra.mrb[0].mxu0 %v2839
    %v7746 = vpop.f32.mrb[0].mxu0
    %v7747 = vadd.f32 %v7634, %v7746
    %v7748 = vpop.f32.mrb[0].mxu0
    %v7749 = vadd.f32 %v7636, %v7748
    %v7750 = vpop.f32.mrb[0].mxu0
    %v7751 = vadd.f32 %v7638, %v7750
    %v7752 = vpop.f32.mrb[0].mxu0
    %v7753 = vadd.f32 %v7640, %v7752
    %7754 = vmatprep.mubr.bf16.mxu0 %v2848
    %7755 = vmatmul.mubr.bf16.gmra.mrb[0].mxu0 %v2847
    %v7756 = vpop.f32.mrb[0].mxu0
    %v7757 = vadd.f32 %v7644, %v7756
    %v7758 = vpop.f32.mrb[0].mxu0
    %v7759 = vadd.f32 %v7646, %v7758
    %v7760 = vpop.f32.mrb[0].mxu0
    %v7761 = vadd.f32 %v7648, %v7760
    %v7762 = vpop.f32.mrb[0].mxu0
    %v7763 = vadd.f32 %v7650, %v7762
    %7764 = vmatprep.mubr.bf16.mxu0 %v2856
    %7765 = vmatmul.mubr.bf16.gmra.mrb[0].mxu0 %v2855
    %v7766 = vpop.f32.mrb[0].mxu0
    %v7767 = vadd.f32 %v7654, %v7766
    %v7768 = vpop.f32.mrb[0].mxu0
    %v7769 = vadd.f32 %v7656, %v7768
    %v7770 = vpop.f32.mrb[0].mxu0
    %v7771 = vadd.f32 %v7658, %v7770
    %v7772 = vpop.f32.mrb[0].mxu0
    %v7773 = vadd.f32 %v7660, %v7772
    %7774 = vmatprep.mubr.bf16.mxu0 %v2864
    %7775 = vmatmul.mubr.bf16.gmra.mrb[0].mxu0 %v2863
    %v7776 = vpop.f32.mrb[0].mxu0
    %v7777 = vadd.f32 %v7664, %v7776
    %v7778 = vpop.f32.mrb[0].mxu0
    %v7779 = vadd.f32 %v7666, %v7778
    %v7780 = vpop.f32.mrb[0].mxu0
    %v7781 = vadd.f32 %v7668, %v7780
    %v7782 = vpop.f32.mrb[0].mxu0
    %v7783 = vadd.f32 %v7670, %v7782
    %7784 = vmatprep.mubr.bf16.mxu0 %v2872
    %7785 = vmatmul.mubr.bf16.gmra.mrb[0].mxu0 %v2871
    %v7786 = vpop.f32.mrb[0].mxu0
    %v7787 = vadd.f32 %v7674, %v7786
    %v7788 = vpop.f32.mrb[0].mxu0
    %v7789 = vadd.f32 %v7676, %v7788
    %v7790 = vpop.f32.mrb[0].mxu0
    %v7791 = vadd.f32 %v7678, %v7790
    %v7792 = vpop.f32.mrb[0].mxu0
    %v7793 = vadd.f32 %v7680, %v7792
    %7794 = vdwg.mxu0
    %v7795 = vmax.f32 %v6361, 0.0
    %v7796 = vmax.f32 %v6363, 0.0
    %v7797 = vmax.f32 %v6813, 0.0
    %v7798 = vmax.f32 %v6815, 0.0
    %v7799 = vmax.f32 %v7265, 0.0
    %v7800 = vmax.f32 %v7267, 0.0
    %v7801 = vmax.f32 %v7717, 0.0
    %v7802 = vmax.f32 %v7719, 0.0
    %v7803 = vmax.f32 %v6365, 0.0
    %v7804 = vmax.f32 %v6367, 0.0
    %v7805 = vmax.f32 %v6817, 0.0
    %v7806 = vmax.f32 %v6819, 0.0
    %v7807 = vmax.f32 %v7269, 0.0
    %v7808 = vmax.f32 %v7271, 0.0
    %v7809 = vmax.f32 %v7721, 0.0
    %v7810 = vmax.f32 %v7723, 0.0
    %v7811 = vmax.f32 %v6371, 0.0
    %v7812 = vmax.f32 %v6373, 0.0
    %v7813 = vmax.f32 %v6823, 0.0
    %v7814 = vmax.f32 %v6825, 0.0
    %v7815 = vmax.f32 %v7275, 0.0
    %v7816 = vmax.f32 %v7277, 0.0
    %v7817 = vmax.f32 %v7727, 0.0
    %v7818 = vmax.f32 %v7729, 0.0
    %v7819 = vmax.f32 %v6375, 0.0
    %v7820 = vmax.f32 %v6377, 0.0
    %v7821 = vmax.f32 %v6827, 0.0
    %v7822 = vmax.f32 %v6829, 0.0
    %v7823 = vmax.f32 %v7279, 0.0
    %v7824 = vmax.f32 %v7281, 0.0
    %v7825 = vmax.f32 %v7731, 0.0
    %v7826 = vmax.f32 %v7733, 0.0
    %v7827 = vmax.f32 %v6381, 0.0
    %v7828 = vmax.f32 %v6383, 0.0
    %v7829 = vmax.f32 %v6833, 0.0
    %v7830 = vmax.f32 %v6835, 0.0
    %v7831 = vmax.f32 %v7285, 0.0
    %v7832 = vmax.f32 %v7287, 0.0
    %v7833 = vmax.f32 %v7737, 0.0
    %v7834 = vmax.f32 %v7739, 0.0
    %v7835 = vmax.f32 %v6385, 0.0
    %v7836 = vmax.f32 %v6387, 0.0
    %v7837 = vmax.f32 %v6837, 0.0
    %v7838 = vmax.f32 %v6839, 0.0
    %v7839 = vmax.f32 %v7289, 0.0
    %v7840 = vmax.f32 %v7291, 0.0
    %v7841 = vmax.f32 %v7741, 0.0
    %v7842 = vmax.f32 %v7743, 0.0
    %v7843 = vmax.f32 %v6391, 0.0
    %v7844 = vmax.f32 %v6393, 0.0
    %v7845 = vmax.f32 %v6843, 0.0
    %v7846 = vmax.f32 %v6845, 0.0
    %v7847 = vmax.f32 %v7295, 0.0
    %v7848 = vmax.f32 %v7297, 0.0
    %v7849 = vmax.f32 %v7747, 0.0
    %v7850 = vmax.f32 %v7749, 0.0
    %v7851 = vmax.f32 %v6395, 0.0
    %v7852 = vmax.f32 %v6397, 0.0
    %v7853 = vmax.f32 %v6847, 0.0
    %v7854 = vmax.f32 %v6849, 0.0
    %v7855 = vmax.f32 %v7299, 0.0
    %v7856 = vmax.f32 %v7301, 0.0
    %v7857 = vmax.f32 %v7751, 0.0
    %v7858 = vmax.f32 %v7753, 0.0
    %v7859 = vmax.f32 %v6401, 0.0
    %v7860 = vmax.f32 %v6403, 0.0
    %v7861 = vmax.f32 %v6853, 0.0
    %v7862 = vmax.f32 %v6855, 0.0
    %v7863 = vmax.f32 %v7305, 0.0
    %v7864 = vmax.f32 %v7307, 0.0
    %v7865 = vmax.f32 %v7757, 0.0
    %v7866 = vmax.f32 %v7759, 0.0
    %v7867 = vmax.f32 %v6405, 0.0
    %v7868 = vmax.f32 %v6407, 0.0
    %v7869 = vmax.f32 %v6857, 0.0
    %v7870 = vmax.f32 %v6859, 0.0
    %v7871 = vmax.f32 %v7309, 0.0
    %v7872 = vmax.f32 %v7311, 0.0
    %v7873 = vmax.f32 %v7761, 0.0
    %v7874 = vmax.f32 %v7763, 0.0
    %v7875 = vmax.f32 %v6411, 0.0
    %v7876 = vmax.f32 %v6413, 0.0
    %v7877 = vmax.f32 %v6863, 0.0
    %v7878 = vmax.f32 %v6865, 0.0
    %v7879 = vmax.f32 %v7315, 0.0
    %v7880 = vmax.f32 %v7317, 0.0
    %v7881 = vmax.f32 %v7767, 0.0
    %v7882 = vmax.f32 %v7769, 0.0
    %v7883 = vmax.f32 %v6415, 0.0
    %v7884 = vmax.f32 %v6417, 0.0
    %v7885 = vmax.f32 %v6867, 0.0
    %v7886 = vmax.f32 %v6869, 0.0
    %v7887 = vmax.f32 %v7319, 0.0
    %v7888 = vmax.f32 %v7321, 0.0
    %v7889 = vmax.f32 %v7771, 0.0
    %v7890 = vmax.f32 %v7773, 0.0
    %v7891 = vmax.f32 %v6421, 0.0
    %v7892 = vmax.f32 %v6423, 0.0
    %v7893 = vmax.f32 %v6873, 0.0
    %v7894 = vmax.f32 %v6875, 0.0
    %v7895 = vmax.f32 %v7325, 0.0
    %v7896 = vmax.f32 %v7327, 0.0
    %v7897 = vmax.f32 %v7777, 0.0
    %v7898 = vmax.f32 %v7779, 0.0
    %v7899 = vmax.f32 %v6425, 0.0
    %v7900 = vmax.f32 %v6427, 0.0
    %v7901 = vmax.f32 %v6877, 0.0
    %v7902 = vmax.f32 %v6879, 0.0
    %v7903 = vmax.f32 %v7329, 0.0
    %v7904 = vmax.f32 %v7331, 0.0
    %v7905 = vmax.f32 %v7781, 0.0
    %v7906 = vmax.f32 %v7783, 0.0
    %v7907 = vmax.f32 %v6431, 0.0
    %v7908 = vmax.f32 %v6433, 0.0
    %v7909 = vmax.f32 %v6883, 0.0
    %v7910 = vmax.f32 %v6885, 0.0
    %v7911 = vmax.f32 %v7335, 0.0
    %v7912 = vmax.f32 %v7337, 0.0
    %v7913 = vmax.f32 %v7787, 0.0
    %v7914 = vmax.f32 %v7789, 0.0
    %v7915 = vmax.f32 %v6435, 0.0
    %v7916 = vmax.f32 %v6437, 0.0
    %v7917 = vmax.f32 %v6887, 0.0
    %v7918 = vmax.f32 %v6889, 0.0
    %v7919 = vmax.f32 %v7339, 0.0
    %v7920 = vmax.f32 %v7341, 0.0
    %v7921 = vmax.f32 %v7791, 0.0
    %v7922 = vmax.f32 %v7793, 0.0
    %v7923 = vpack.c.bf16 %v7803, %v7795
    %v7924 = vpack.c.bf16 %v7804, %v7796
    %v7925 = vpack.c.bf16 %v7805, %v7797
    %v7926 = vpack.c.bf16 %v7806, %v7798
    %v7927 = vpack.c.bf16 %v7807, %v7799
    %v7928 = vpack.c.bf16 %v7808, %v7800
    %v7929 = vpack.c.bf16 %v7809, %v7801
    %v7930 = vpack.c.bf16 %v7810, %v7802
    %v7931 = vpack.c.bf16 %v7819, %v7811
    %v7932 = vpack.c.bf16 %v7820, %v7812
    %v7933 = vpack.c.bf16 %v7821, %v7813
    %v7934 = vpack.c.bf16 %v7822, %v7814
    %v7935 = vpack.c.bf16 %v7823, %v7815
    %v7936 = vpack.c.bf16 %v7824, %v7816
    %v7937 = vpack.c.bf16 %v7825, %v7817
    %v7938 = vpack.c.bf16 %v7826, %v7818
    %v7939 = vpack.c.bf16 %v7835, %v7827
    %v7940 = vpack.c.bf16 %v7836, %v7828
    %v7941 = vpack.c.bf16 %v7837, %v7829
    %v7942 = vpack.c.bf16 %v7838, %v7830
    %v7943 = vpack.c.bf16 %v7839, %v7831
    %v7944 = vpack.c.bf16 %v7840, %v7832
    %v7945 = vpack.c.bf16 %v7841, %v7833
    %v7946 = vpack.c.bf16 %v7842, %v7834
    %v7947 = vpack.c.bf16 %v7851, %v7843
    %v7948 = vpack.c.bf16 %v7852, %v7844
    %v7949 = vpack.c.bf16 %v7853, %v7845
    %v7950 = vpack.c.bf16 %v7854, %v7846
    %v7951 = vpack.c.bf16 %v7855, %v7847
    %v7952 = vpack.c.bf16 %v7856, %v7848
    %v7953 = vpack.c.bf16 %v7857, %v7849
    %v7954 = vpack.c.bf16 %v7858, %v7850
    %v7955 = vpack.c.bf16 %v7867, %v7859
    %v7956 = vpack.c.bf16 %v7868, %v7860
    %v7957 = vpack.c.bf16 %v7869, %v7861
    %v7958 = vpack.c.bf16 %v7870, %v7862
    %v7959 = vpack.c.bf16 %v7871, %v7863
    %v7960 = vpack.c.bf16 %v7872, %v7864
    %v7961 = vpack.c.bf16 %v7873, %v7865
    %v7962 = vpack.c.bf16 %v7874, %v7866
    %v7963 = vpack.c.bf16 %v7883, %v7875
    %v7964 = vpack.c.bf16 %v7884, %v7876
    %v7965 = vpack.c.bf16 %v7885, %v7877
    %v7966 = vpack.c.bf16 %v7886, %v7878
    %v7967 = vpack.c.bf16 %v7887, %v7879
    %v7968 = vpack.c.bf16 %v7888, %v7880
    %v7969 = vpack.c.bf16 %v7889, %v7881
    %v7970 = vpack.c.bf16 %v7890, %v7882
    %v7971 = vpack.c.bf16 %v7899, %v7891
    %v7972 = vpack.c.bf16 %v7900, %v7892
    %v7973 = vpack.c.bf16 %v7901, %v7893
    %v7974 = vpack.c.bf16 %v7902, %v7894
    %v7975 = vpack.c.bf16 %v7903, %v7895
    %v7976 = vpack.c.bf16 %v7904, %v7896
    %v7977 = vpack.c.bf16 %v7905, %v7897
    %v7978 = vpack.c.bf16 %v7906, %v7898
    %v7979 = vpack.c.bf16 %v7915, %v7907
    %v7980 = vpack.c.bf16 %v7916, %v7908
    %v7981 = vpack.c.bf16 %v7917, %v7909
    %v7982 = vpack.c.bf16 %v7918, %v7910
    %v7983 = vpack.c.bf16 %v7919, %v7911
    %v7984 = vpack.c.bf16 %v7920, %v7912
    %v7985 = vpack.c.bf16 %v7921, %v7913
    %v7986 = vpack.c.bf16 %v7922, %v7914
    %v7987 = vld [vmem:[#allocation9] sm:$0xff]
    %v7988 = vld [vmem:[#allocation9 + $0x8] sm:$0xff]
    %v7989 = vld [vmem:[#allocation9 + $0x10] sm:$0xff]
    %v7990 = vld [vmem:[#allocation9 + $0x18] sm:$0xf]
    %v7991 = vld [vmem:[#allocation9 + $0x1c] sm:$0xff]
    %v7992 = vld [vmem:[#allocation9 + $0x24] sm:$0xff]
    %v7993 = vld [vmem:[#allocation9 + $0x2c] sm:$0xff]
    %v7994 = vld [vmem:[#allocation9 + $0x34] sm:$0xf]
    %v7995 = vld [vmem:[#allocation9 + $0x38] sm:$0xff]
    %v7996 = vld [vmem:[#allocation9 + $0x40] sm:$0xff]
    %v7997 = vld [vmem:[#allocation9 + $0x48] sm:$0xff]
    %v7998 = vld [vmem:[#allocation9 + $0x50] sm:$0xf]
    %v7999 = vld [vmem:[#allocation9 + $0x54] sm:$0xff]
    %v8000 = vld [vmem:[#allocation9 + $0x5c] sm:$0xff]
    %v8001 = vld [vmem:[#allocation9 + $0x64] sm:$0xff]
    %v8002 = vld [vmem:[#allocation9 + $0x6c] sm:$0xf]
    %v8003 = vld [vmem:[#allocation9 + $0x70] sm:$0xff]
    %v8004 = vld [vmem:[#allocation9 + $0x78] sm:$0xff]
    %v8005 = vld [vmem:[#allocation9 + $0x80] sm:$0xff]
    %v8006 = vld [vmem:[#allocation9 + $0x88] sm:$0xf]
    %v8007 = vld [vmem:[#allocation9 + $0x8c] sm:$0xff]
    %v8008 = vld [vmem:[#allocation9 + $0x94] sm:$0xff]
    %v8009 = vld [vmem:[#allocation9 + $0x9c] sm:$0xff]
    %v8010 = vld [vmem:[#allocation9 + $0xa4] sm:$0xf]
    %v8011 = vld [vmem:[#allocation9 + $0xa8] sm:$0xff]
    %v8012 = vld [vmem:[#allocation9 + $0xb0] sm:$0xff]
    %v8013 = vld [vmem:[#allocation9 + $0xb8] sm:$0xff]
    %v8014 = vld [vmem:[#allocation9 + $0xc0] sm:$0xf]
    %v8015 = vld [vmem:[#allocation9 + $0xc4] sm:$0xff]
    %v8016 = vld [vmem:[#allocation9 + $0xcc] sm:$0xff]
    %v8017 = vld [vmem:[#allocation9 + $0xd4] sm:$0xff]
    %v8018 = vld [vmem:[#allocation9 + $0xdc] sm:$0xf]
    %v8019 = vld [vmem:[#allocation9 + $0xe0] sm:$0xff]
    %v8020 = vld [vmem:[#allocation9 + $0xe8] sm:$0xff]
    %v8021 = vld [vmem:[#allocation9 + $0xf0] sm:$0xff]
    %v8022 = vld [vmem:[#allocation9 + $0xf8] sm:$0xf]
    %v8023 = vld [vmem:[#allocation9 + $0xfc] sm:$0xff]
    %v8024 = vld [vmem:[#allocation9 + $0x104] sm:$0xff]
    %v8025 = vld [vmem:[#allocation9 + $0x10c] sm:$0xff]
    %v8026 = vld [vmem:[#allocation9 + $0x114] sm:$0xf]
    %v8027 = vld [vmem:[#allocation9 + $0x118] sm:$0xff]
    %v8028 = vld [vmem:[#allocation9 + $0x120] sm:$0xff]
    %v8029 = vld [vmem:[#allocation9 + $0x128] sm:$0xff]
    %v8030 = vld [vmem:[#allocation9 + $0x130] sm:$0xf]
    %v8031 = vld [vmem:[#allocation9 + $0x134] sm:$0xff]
    %v8032 = vld [vmem:[#allocation9 + $0x13c] sm:$0xff]
    %v8033 = vld [vmem:[#allocation9 + $0x144] sm:$0xff]
    %v8034 = vld [vmem:[#allocation9 + $0x14c] sm:$0xf]
    %v8035 = vld [vmem:[#allocation9 + $0x150] sm:$0xff]
    %v8036 = vld [vmem:[#allocation9 + $0x158] sm:$0xff]
    %v8037 = vld [vmem:[#allocation9 + $0x160] sm:$0xff]
    %v8038 = vld [vmem:[#allocation9 + $0x168] sm:$0xf]
    %v8039 = vld [vmem:[#allocation9 + $0x16c] sm:$0xff]
    %v8040 = vld [vmem:[#allocation9 + $0x174] sm:$0xff]
    %v8041 = vld [vmem:[#allocation9 + $0x17c] sm:$0xff]
    %v8042 = vld [vmem:[#allocation9 + $0x184] sm:$0xf]
    %v8043 = vld [vmem:[#allocation9 + $0x188] sm:$0xff]
    %v8044 = vld [vmem:[#allocation9 + $0x190] sm:$0xff]
    %v8045 = vld [vmem:[#allocation9 + $0x198] sm:$0xff]
    %v8046 = vld [vmem:[#allocation9 + $0x1a0] sm:$0xf]
    %v8047 = vld [vmem:[#allocation9 + $0x1a4] sm:$0xff]
    %v8048 = vld [vmem:[#allocation9 + $0x1ac] sm:$0xff]
    %v8049 = vld [vmem:[#allocation9 + $0x1b4] sm:$0xff]
    %v8050 = vld [vmem:[#allocation9 + $0x1bc] sm:$0xf]
    %v8051 = vld [vmem:[#allocation9 + $0x1c0] sm:$0xff]
    %v8052 = vld [vmem:[#allocation9 + $0x1c8] sm:$0xff]
    %v8053 = vld [vmem:[#allocation9 + $0x1d0] sm:$0xff]
    %v8054 = vld [vmem:[#allocation9 + $0x1d8] sm:$0xf]
    %v8055 = vld [vmem:[#allocation9 + $0x1dc] sm:$0xff]
    %v8056 = vld [vmem:[#allocation9 + $0x1e4] sm:$0xff]
    %v8057 = vld [vmem:[#allocation9 + $0x1ec] sm:$0xff]
    %v8058 = vld [vmem:[#allocation9 + $0x1f4] sm:$0xf]
    %v8059 = vld [vmem:[#allocation9 + $0x1f8] sm:$0xff]
    %v8060 = vld [vmem:[#allocation9 + $0x200] sm:$0xff]
    %v8061 = vld [vmem:[#allocation9 + $0x208] sm:$0xff]
    %v8062 = vld [vmem:[#allocation9 + $0x210] sm:$0xf]
    %v8063 = vld [vmem:[#allocation9 + $0x214] sm:$0xff]
    %v8064 = vld [vmem:[#allocation9 + $0x21c] sm:$0xff]
    %v8065 = vld [vmem:[#allocation9 + $0x224] sm:$0xff]
    %v8066 = vld [vmem:[#allocation9 + $0x22c] sm:$0xf]
    %v8067 = vld [vmem:[#allocation9 + $0x230] sm:$0xff]
    %v8068 = vld [vmem:[#allocation9 + $0x238] sm:$0xff]
    %v8069 = vld [vmem:[#allocation9 + $0x240] sm:$0xff]
    %v8070 = vld [vmem:[#allocation9 + $0x248] sm:$0xf]
    %v8071 = vld [vmem:[#allocation9 + $0x24c] sm:$0xff]
    %v8072 = vld [vmem:[#allocation9 + $0x254] sm:$0xff]
    %v8073 = vld [vmem:[#allocation9 + $0x25c] sm:$0xff]
    %v8074 = vld [vmem:[#allocation9 + $0x264] sm:$0xf]
    %v8075 = vld [vmem:[#allocation9 + $0x268] sm:$0xff]
    %v8076 = vld [vmem:[#allocation9 + $0x270] sm:$0xff]
    %v8077 = vld [vmem:[#allocation9 + $0x278] sm:$0xff]
    %v8078 = vld [vmem:[#allocation9 + $0x280] sm:$0xf]
    %v8079 = vld [vmem:[#allocation9 + $0x284] sm:$0xff]
    %v8080 = vld [vmem:[#allocation9 + $0x28c] sm:$0xff]
    %v8081 = vld [vmem:[#allocation9 + $0x294] sm:$0xff]
    %v8082 = vld [vmem:[#allocation9 + $0x29c] sm:$0xf]
    %v8083 = vld [vmem:[#allocation9 + $0x2a0] sm:$0xff]
    %v8084 = vld [vmem:[#allocation9 + $0x2a8] sm:$0xff]
    %v8085 = vld [vmem:[#allocation9 + $0x2b0] sm:$0xff]
    %v8086 = vld [vmem:[#allocation9 + $0x2b8] sm:$0xf]
    %v8087 = vld [vmem:[#allocation9 + $0x2bc] sm:$0xff]
    %v8088 = vld [vmem:[#allocation9 + $0x2c4] sm:$0xff]
    %v8089 = vld [vmem:[#allocation9 + $0x2cc] sm:$0xff]
    %v8090 = vld [vmem:[#allocation9 + $0x2d4] sm:$0xf]
    %v8091 = vld [vmem:[#allocation9 + $0x2d8] sm:$0xff]
    %v8092 = vld [vmem:[#allocation9 + $0x2e0] sm:$0xff]
    %v8093 = vld [vmem:[#allocation9 + $0x2e8] sm:$0xff]
    %v8094 = vld [vmem:[#allocation9 + $0x2f0] sm:$0xf]
    %v8095 = vld [vmem:[#allocation9 + $0x2f4] sm:$0xff]
    %v8096 = vld [vmem:[#allocation9 + $0x2fc] sm:$0xff]
    %v8097 = vld [vmem:[#allocation9 + $0x304] sm:$0xff]
    %v8098 = vld [vmem:[#allocation9 + $0x30c] sm:$0xf]
    %v8099 = vld [vmem:[#allocation9 + $0x310] sm:$0xff]
    %v8100 = vld [vmem:[#allocation9 + $0x318] sm:$0xff]
    %v8101 = vld [vmem:[#allocation9 + $0x320] sm:$0xff]
    %v8102 = vld [vmem:[#allocation9 + $0x328] sm:$0xf]
    %v8103 = vld [vmem:[#allocation9 + $0x32c] sm:$0xff]
    %v8104 = vld [vmem:[#allocation9 + $0x334] sm:$0xff]
    %v8105 = vld [vmem:[#allocation9 + $0x33c] sm:$0xff]
    %v8106 = vld [vmem:[#allocation9 + $0x344] sm:$0xf]
    %v8107 = vld [vmem:[#allocation9 + $0x348] sm:$0xff]
    %v8108 = vld [vmem:[#allocation9 + $0x350] sm:$0xff]
    %v8109 = vld [vmem:[#allocation9 + $0x358] sm:$0xff]
    %v8110 = vld [vmem:[#allocation9 + $0x360] sm:$0xf]
    %v8111 = vld [vmem:[#allocation9 + $0x364] sm:$0xff]
    %v8112 = vld [vmem:[#allocation9 + $0x36c] sm:$0xff]
    %v8113 = vld [vmem:[#allocation9 + $0x374] sm:$0xff]
    %v8114 = vld [vmem:[#allocation9 + $0x37c] sm:$0xf]
    %v8115 = vld [vmem:[#allocation9 + $0x380] sm:$0xff]
    %v8116 = vld [vmem:[#allocation9 + $0x388] sm:$0xff]
    %v8117 = vld [vmem:[#allocation9 + $0x390] sm:$0xff]
    %v8118 = vld [vmem:[#allocation9 + $0x398] sm:$0xf]
    %v8119 = vld [vmem:[#allocation9 + $0x39c] sm:$0xff]
    %v8120 = vld [vmem:[#allocation9 + $0x3a4] sm:$0xff]
    %v8121 = vld [vmem:[#allocation9 + $0x3ac] sm:$0xff]
    %v8122 = vld [vmem:[#allocation9 + $0x3b4] sm:$0xf]
    %v8123 = vld [vmem:[#allocation9 + $0x3b8] sm:$0xff]
    %v8124 = vld [vmem:[#allocation9 + $0x3c0] sm:$0xff]
    %v8125 = vld [vmem:[#allocation9 + $0x3c8] sm:$0xff]
    %v8126 = vld [vmem:[#allocation9 + $0x3d0] sm:$0xf]
    %v8127 = vld [vmem:[#allocation9 + $0x3d4] sm:$0xff]
    %v8128 = vld [vmem:[#allocation9 + $0x3dc] sm:$0xff]
    %v8129 = vld [vmem:[#allocation9 + $0x3e4] sm:$0xff]
    %v8130 = vld [vmem:[#allocation9 + $0x3ec] sm:$0xf]
    %v8131 = vld [vmem:[#allocation9 + $0x3f0] sm:$0xff]
    %v8132 = vld [vmem:[#allocation9 + $0x3f8] sm:$0xff]
    %v8133 = vld [vmem:[#allocation9 + $0x400] sm:$0xff]
    %v8134 = vld [vmem:[#allocation9 + $0x408] sm:$0xf]
    %v8135 = vld [vmem:[#allocation9 + $0x40c] sm:$0xff]
    %v8136 = vld [vmem:[#allocation9 + $0x414] sm:$0xff]
    %v8137 = vld [vmem:[#allocation9 + $0x41c] sm:$0xff]
    %v8138 = vld [vmem:[#allocation9 + $0x424] sm:$0xf]
    %v8139 = vld [vmem:[#allocation9 + $0x428] sm:$0xff]
    %v8140 = vld [vmem:[#allocation9 + $0x430] sm:$0xff]
    %v8141 = vld [vmem:[#allocation9 + $0x438] sm:$0xff]
    %v8142 = vld [vmem:[#allocation9 + $0x440] sm:$0xf]
    %v8143 = vld [vmem:[#allocation9 + $0x444] sm:$0xff]
    %v8144 = vld [vmem:[#allocation9 + $0x44c] sm:$0xff]
    %v8145 = vld [vmem:[#allocation9 + $0x454] sm:$0xff]
    %v8146 = vld [vmem:[#allocation9 + $0x45c] sm:$0xf]
    %v8147 = vld [vmem:[#allocation9 + $0x460] sm:$0xff]
    %v8148 = vld [vmem:[#allocation9 + $0x468] sm:$0xff]
    %v8149 = vld [vmem:[#allocation9 + $0x470] sm:$0xff]
    %v8150 = vld [vmem:[#allocation9 + $0x478] sm:$0xf]
    %v8151 = vld [vmem:[#allocation9 + $0x47c] sm:$0xff]
    %v8152 = vld [vmem:[#allocation9 + $0x484] sm:$0xff]
    %v8153 = vld [vmem:[#allocation9 + $0x48c] sm:$0xff]
    %v8154 = vld [vmem:[#allocation9 + $0x494] sm:$0xf]
    %v8155 = vld [vmem:[#allocation9 + $0x498] sm:$0xff]
    %v8156 = vld [vmem:[#allocation9 + $0x4a0] sm:$0xff]
    %v8157 = vld [vmem:[#allocation9 + $0x4a8] sm:$0xff]
    %v8158 = vld [vmem:[#allocation9 + $0x4b0] sm:$0xf]
    %v8159 = vld [vmem:[#allocation9 + $0x4b4] sm:$0xff]
    %v8160 = vld [vmem:[#allocation9 + $0x4bc] sm:$0xff]
    %v8161 = vld [vmem:[#allocation9 + $0x4c4] sm:$0xff]
    %v8162 = vld [vmem:[#allocation9 + $0x4cc] sm:$0xf]
    %v8163 = vld [vmem:[#allocation9 + $0x4d0] sm:$0xff]
    %v8164 = vld [vmem:[#allocation9 + $0x4d8] sm:$0xff]
    %v8165 = vld [vmem:[#allocation9 + $0x4e0] sm:$0xff]
    %v8166 = vld [vmem:[#allocation9 + $0x4e8] sm:$0xf]
    %v8167 = vld [vmem:[#allocation9 + $0x4ec] sm:$0xff]
    %v8168 = vld [vmem:[#allocation9 + $0x4f4] sm:$0xff]
    %v8169 = vld [vmem:[#allocation9 + $0x4fc] sm:$0xff]
    %v8170 = vld [vmem:[#allocation9 + $0x504] sm:$0xf]
    %v8171 = vld [vmem:[#allocation9 + $0x508] sm:$0xff]
    %v8172 = vld [vmem:[#allocation9 + $0x510] sm:$0xff]
    %v8173 = vld [vmem:[#allocation9 + $0x518] sm:$0xff]
    %v8174 = vld [vmem:[#allocation9 + $0x520] sm:$0xf]
    %v8175 = vld [vmem:[#allocation9 + $0x524] sm:$0xff]
    %v8176 = vld [vmem:[#allocation9 + $0x52c] sm:$0xff]
    %v8177 = vld [vmem:[#allocation9 + $0x534] sm:$0xff]
    %v8178 = vld [vmem:[#allocation9 + $0x53c] sm:$0xf]
    %v8179 = vld [vmem:[#allocation9 + $0x540] sm:$0xff]
    %v8180 = vld [vmem:[#allocation9 + $0x548] sm:$0xff]
    %v8181 = vld [vmem:[#allocation9 + $0x550] sm:$0xff]
    %v8182 = vld [vmem:[#allocation9 + $0x558] sm:$0xf]
    %v8183 = vld [vmem:[#allocation9 + $0x55c] sm:$0xff]
    %v8184 = vld [vmem:[#allocation9 + $0x564] sm:$0xff]
    %v8185 = vld [vmem:[#allocation9 + $0x56c] sm:$0xff]
    %v8186 = vld [vmem:[#allocation9 + $0x574] sm:$0xf]
    %v8187 = vld [vmem:[#allocation9 + $0x578] sm:$0xff]
    %v8188 = vld [vmem:[#allocation9 + $0x580] sm:$0xff]
    %v8189 = vld [vmem:[#allocation9 + $0x588] sm:$0xff]
    %v8190 = vld [vmem:[#allocation9 + $0x590] sm:$0xf]
    %v8191 = vld [vmem:[#allocation9 + $0x594] sm:$0xff]
    %v8192 = vld [vmem:[#allocation9 + $0x59c] sm:$0xff]
    %v8193 = vld [vmem:[#allocation9 + $0x5a4] sm:$0xff]
    %v8194 = vld [vmem:[#allocation9 + $0x5ac] sm:$0xf]
    %v8195 = vld [vmem:[#allocation9 + $0x5b0] sm:$0xff]
    %v8196 = vld [vmem:[#allocation9 + $0x5b8] sm:$0xff]
    %v8197 = vld [vmem:[#allocation9 + $0x5c0] sm:$0xff]
    %v8198 = vld [vmem:[#allocation9 + $0x5c8] sm:$0xf]
    %v8199 = vld [vmem:[#allocation9 + $0x5cc] sm:$0xff]
    %v8200 = vld [vmem:[#allocation9 + $0x5d4] sm:$0xff]
    %v8201 = vld [vmem:[#allocation9 + $0x5dc] sm:$0xff]
    %v8202 = vld [vmem:[#allocation9 + $0x5e4] sm:$0xf]
    %v8203 = vld [vmem:[#allocation9 + $0x5e8] sm:$0xff]
    %v8204 = vld [vmem:[#allocation9 + $0x5f0] sm:$0xff]
    %v8205 = vld [vmem:[#allocation9 + $0x5f8] sm:$0xff]
    %v8206 = vld [vmem:[#allocation9 + $0x600] sm:$0xf]
    %v8207 = vld [vmem:[#allocation9 + $0x604] sm:$0xff]
    %v8208 = vld [vmem:[#allocation9 + $0x60c] sm:$0xff]
    %v8209 = vld [vmem:[#allocation9 + $0x614] sm:$0xff]
    %v8210 = vld [vmem:[#allocation9 + $0x61c] sm:$0xf]
    %v8211 = vld [vmem:[#allocation9 + $0x620] sm:$0xff]
    %v8212 = vld [vmem:[#allocation9 + $0x628] sm:$0xff]
    %v8213 = vld [vmem:[#allocation9 + $0x630] sm:$0xff]
    %v8214 = vld [vmem:[#allocation9 + $0x638] sm:$0xf]
    %v8215 = vld [vmem:[#allocation9 + $0x63c] sm:$0xff]
    %v8216 = vld [vmem:[#allocation9 + $0x644] sm:$0xff]
    %v8217 = vld [vmem:[#allocation9 + $0x64c] sm:$0xff]
    %v8218 = vld [vmem:[#allocation9 + $0x654] sm:$0xf]
    %v8219 = vld [vmem:[#allocation9 + $0x658] sm:$0xff]
    %v8220 = vld [vmem:[#allocation9 + $0x660] sm:$0xff]
    %v8221 = vld [vmem:[#allocation9 + $0x668] sm:$0xff]
    %v8222 = vld [vmem:[#allocation9 + $0x670] sm:$0xf]
    %v8223 = vld [vmem:[#allocation9 + $0x674] sm:$0xff]
    %v8224 = vld [vmem:[#allocation9 + $0x67c] sm:$0xff]
    %v8225 = vld [vmem:[#allocation9 + $0x684] sm:$0xff]
    %v8226 = vld [vmem:[#allocation9 + $0x68c] sm:$0xf]
    %v8227 = vld [vmem:[#allocation9 + $0x690] sm:$0xff]
    %v8228 = vld [vmem:[#allocation9 + $0x698] sm:$0xff]
    %v8229 = vld [vmem:[#allocation9 + $0x6a0] sm:$0xff]
    %v8230 = vld [vmem:[#allocation9 + $0x6a8] sm:$0xf]
    %v8231 = vld [vmem:[#allocation9 + $0x6ac] sm:$0xff]
    %v8232 = vld [vmem:[#allocation9 + $0x6b4] sm:$0xff]
    %v8233 = vld [vmem:[#allocation9 + $0x6bc] sm:$0xff]
    %v8234 = vld [vmem:[#allocation9 + $0x6c4] sm:$0xf]
    %v8235 = vld [vmem:[#allocation9 + $0x6c8] sm:$0xff]
    %v8236 = vld [vmem:[#allocation9 + $0x6d0] sm:$0xff]
    %v8237 = vld [vmem:[#allocation9 + $0x6d8] sm:$0xff]
    %v8238 = vld [vmem:[#allocation9 + $0x6e0] sm:$0xf]
    %v8239 = vld [vmem:[#allocation9 + $0x6e4] sm:$0xff]
    %v8240 = vld [vmem:[#allocation9 + $0x6ec] sm:$0xff]
    %v8241 = vld [vmem:[#allocation9 + $0x6f4] sm:$0xff]
    %v8242 = vld [vmem:[#allocation9 + $0x6fc] sm:$0xf]
    %v8243 = vld [vmem:[#allocation9 + $0x700] sm:$0xff]
    %v8244 = vld [vmem:[#allocation9 + $0x708] sm:$0xff]
    %v8245 = vld [vmem:[#allocation9 + $0x710] sm:$0xff]
    %v8246 = vld [vmem:[#allocation9 + $0x718] sm:$0xf]
    %v8247 = vld [vmem:[#allocation9 + $0x71c] sm:$0xff]
    %v8248 = vld [vmem:[#allocation9 + $0x724] sm:$0xff]
    %v8249 = vld [vmem:[#allocation9 + $0x72c] sm:$0xff]
    %v8250 = vld [vmem:[#allocation9 + $0x734] sm:$0xf]
    %v8251 = vld [vmem:[#allocation9 + $0x738] sm:$0xff]
    %v8252 = vld [vmem:[#allocation9 + $0x740] sm:$0xff]
    %v8253 = vld [vmem:[#allocation9 + $0x748] sm:$0xff]
    %v8254 = vld [vmem:[#allocation9 + $0x750] sm:$0xf]
    %v8255 = vld [vmem:[#allocation9 + $0x754] sm:$0xff]
    %v8256 = vld [vmem:[#allocation9 + $0x75c] sm:$0xff]
    %v8257 = vld [vmem:[#allocation9 + $0x764] sm:$0xff]
    %v8258 = vld [vmem:[#allocation9 + $0x76c] sm:$0xf]
    %v8259 = vld [vmem:[#allocation9 + $0x770] sm:$0xff]
    %v8260 = vld [vmem:[#allocation9 + $0x778] sm:$0xff]
    %v8261 = vld [vmem:[#allocation9 + $0x780] sm:$0xff]
    %v8262 = vld [vmem:[#allocation9 + $0x788] sm:$0xf]
    %v8263 = vld [vmem:[#allocation9 + $0x78c] sm:$0xff]
    %v8264 = vld [vmem:[#allocation9 + $0x794] sm:$0xff]
    %v8265 = vld [vmem:[#allocation9 + $0x79c] sm:$0xff]
    %v8266 = vld [vmem:[#allocation9 + $0x7a4] sm:$0xf]
    %v8267 = vld [vmem:[#allocation9 + $0x7a8] sm:$0xff]
    %v8268 = vld [vmem:[#allocation9 + $0x7b0] sm:$0xff]
    %v8269 = vld [vmem:[#allocation9 + $0x7b8] sm:$0xff]
    %v8270 = vld [vmem:[#allocation9 + $0x7c0] sm:$0xf]
    %v8271 = vld [vmem:[#allocation9 + $0x7c4] sm:$0xff]
    %v8272 = vld [vmem:[#allocation9 + $0x7cc] sm:$0xff]
    %v8273 = vld [vmem:[#allocation9 + $0x7d4] sm:$0xff]
    %v8274 = vld [vmem:[#allocation9 + $0x7dc] sm:$0xf]
    %v8275 = vld [vmem:[#allocation9 + $0x7e0] sm:$0xff]
    %v8276 = vld [vmem:[#allocation9 + $0x7e8] sm:$0xff]
    %v8277 = vld [vmem:[#allocation9 + $0x7f0] sm:$0xff]
    %v8278 = vld [vmem:[#allocation9 + $0x7f8] sm:$0xf]
    %v8279 = vld [vmem:[#allocation9 + $0x7fc] sm:$0xff]
    %v8280 = vld [vmem:[#allocation9 + $0x804] sm:$0xff]
    %v8281 = vld [vmem:[#allocation9 + $0x80c] sm:$0xff]
    %v8282 = vld [vmem:[#allocation9 + $0x814] sm:$0xf]
    %v8283 = vld [vmem:[#allocation9 + $0x818] sm:$0xff]
    %v8284 = vld [vmem:[#allocation9 + $0x820] sm:$0xff]
    %v8285 = vld [vmem:[#allocation9 + $0x828] sm:$0xff]
    %v8286 = vld [vmem:[#allocation9 + $0x830] sm:$0xf]
    %v8287 = vld [vmem:[#allocation9 + $0x834] sm:$0xff]
    %v8288 = vld [vmem:[#allocation9 + $0x83c] sm:$0xff]
    %v8289 = vld [vmem:[#allocation9 + $0x844] sm:$0xff]
    %v8290 = vld [vmem:[#allocation9 + $0x84c] sm:$0xf]
    %v8291 = vld [vmem:[#allocation9 + $0x850] sm:$0xff]
    %v8292 = vld [vmem:[#allocation9 + $0x858] sm:$0xff]
    %v8293 = vld [vmem:[#allocation9 + $0x860] sm:$0xff]
    %v8294 = vld [vmem:[#allocation9 + $0x868] sm:$0xf]
    %v8295 = vld [vmem:[#allocation9 + $0x86c] sm:$0xff]
    %v8296 = vld [vmem:[#allocation9 + $0x874] sm:$0xff]
    %v8297 = vld [vmem:[#allocation9 + $0x87c] sm:$0xff]
    %v8298 = vld [vmem:[#allocation9 + $0x884] sm:$0xf]
    %v8299 = vld [vmem:[#allocation9 + $0x888] sm:$0xff]
    %v8300 = vld [vmem:[#allocation9 + $0x890] sm:$0xff]
    %v8301 = vld [vmem:[#allocation9 + $0x898] sm:$0xff]
    %v8302 = vld [vmem:[#allocation9 + $0x8a0] sm:$0xf]
    %v8303 = vld [vmem:[#allocation9 + $0x8a4] sm:$0xff]
    %v8304 = vld [vmem:[#allocation9 + $0x8ac] sm:$0xff]
    %v8305 = vld [vmem:[#allocation9 + $0x8b4] sm:$0xff]
    %v8306 = vld [vmem:[#allocation9 + $0x8bc] sm:$0xf]
    %v8307 = vld [vmem:[#allocation9 + $0x8c0] sm:$0xff]
    %v8308 = vld [vmem:[#allocation9 + $0x8c8] sm:$0xff]
    %v8309 = vld [vmem:[#allocation9 + $0x8d0] sm:$0xff]
    %v8310 = vld [vmem:[#allocation9 + $0x8d8] sm:$0xf]
    %v8311 = vld [vmem:[#allocation9 + $0x8dc] sm:$0xff]
    %v8312 = vld [vmem:[#allocation9 + $0x8e4] sm:$0xff]
    %v8313 = vld [vmem:[#allocation9 + $0x8ec] sm:$0xff]
    %v8314 = vld [vmem:[#allocation9 + $0x8f4] sm:$0xf]
    %v8315 = vld [vmem:[#allocation9 + $0x8f8] sm:$0xff]
    %v8316 = vld [vmem:[#allocation9 + $0x900] sm:$0xff]
    %v8317 = vld [vmem:[#allocation9 + $0x908] sm:$0xff]
    %v8318 = vld [vmem:[#allocation9 + $0x910] sm:$0xf]
    %v8319 = vld [vmem:[#allocation9 + $0x914] sm:$0xff]
    %v8320 = vld [vmem:[#allocation9 + $0x91c] sm:$0xff]
    %v8321 = vld [vmem:[#allocation9 + $0x924] sm:$0xff]
    %v8322 = vld [vmem:[#allocation9 + $0x92c] sm:$0xf]
    %v8323 = vld [vmem:[#allocation9 + $0x930] sm:$0xff]
    %v8324 = vld [vmem:[#allocation9 + $0x938] sm:$0xff]
    %v8325 = vld [vmem:[#allocation9 + $0x940] sm:$0xff]
    %v8326 = vld [vmem:[#allocation9 + $0x948] sm:$0xf]
    %v8327 = vld [vmem:[#allocation9 + $0x94c] sm:$0xff]
    %v8328 = vld [vmem:[#allocation9 + $0x954] sm:$0xff]
    %v8329 = vld [vmem:[#allocation9 + $0x95c] sm:$0xff]
    %v8330 = vld [vmem:[#allocation9 + $0x964] sm:$0xf]
    %v8331 = vld [vmem:[#allocation9 + $0x968] sm:$0xff]
    %v8332 = vld [vmem:[#allocation9 + $0x970] sm:$0xff]
    %v8333 = vld [vmem:[#allocation9 + $0x978] sm:$0xff]
    %v8334 = vld [vmem:[#allocation9 + $0x980] sm:$0xf]
    %v8335 = vld [vmem:[#allocation9 + $0x984] sm:$0xff]
    %v8336 = vld [vmem:[#allocation9 + $0x98c] sm:$0xff]
    %v8337 = vld [vmem:[#allocation9 + $0x994] sm:$0xff]
    %v8338 = vld [vmem:[#allocation9 + $0x99c] sm:$0xf]
    %v8339 = vld [vmem:[#allocation9 + $0x9a0] sm:$0xff]
    %v8340 = vld [vmem:[#allocation9 + $0x9a8] sm:$0xff]
    %v8341 = vld [vmem:[#allocation9 + $0x9b0] sm:$0xff]
    %v8342 = vld [vmem:[#allocation9 + $0x9b8] sm:$0xf]
    %v8343 = vld [vmem:[#allocation9 + $0x9bc] sm:$0xff]
    %v8344 = vld [vmem:[#allocation9 + $0x9c4] sm:$0xff]
    %v8345 = vld [vmem:[#allocation9 + $0x9cc] sm:$0xff]
    %v8346 = vld [vmem:[#allocation9 + $0x9d4] sm:$0xf]
    %v8347 = vld [vmem:[#allocation9 + $0x9d8] sm:$0xff]
    %v8348 = vld [vmem:[#allocation9 + $0x9e0] sm:$0xff]
    %v8349 = vld [vmem:[#allocation9 + $0x9e8] sm:$0xff]
    %v8350 = vld [vmem:[#allocation9 + $0x9f0] sm:$0xf]
    %v8351 = vld [vmem:[#allocation9 + $0x9f4] sm:$0xff]
    %v8352 = vld [vmem:[#allocation9 + $0x9fc] sm:$0xff]
    %v8353 = vld [vmem:[#allocation9 + $0xa04] sm:$0xff]
    %v8354 = vld [vmem:[#allocation9 + $0xa0c] sm:$0xf]
    %v8355 = vld [vmem:[#allocation9 + $0xa10] sm:$0xff]
    %v8356 = vld [vmem:[#allocation9 + $0xa18] sm:$0xff]
    %v8357 = vld [vmem:[#allocation9 + $0xa20] sm:$0xff]
    %v8358 = vld [vmem:[#allocation9 + $0xa28] sm:$0xf]
    %v8359 = vld [vmem:[#allocation9 + $0xa2c] sm:$0xff]
    %v8360 = vld [vmem:[#allocation9 + $0xa34] sm:$0xff]
    %v8361 = vld [vmem:[#allocation9 + $0xa3c] sm:$0xff]
    %v8362 = vld [vmem:[#allocation9 + $0xa44] sm:$0xf]
    %v8363 = vld [vmem:[#allocation9 + $0xa48] sm:$0xff]
    %v8364 = vld [vmem:[#allocation9 + $0xa50] sm:$0xff]
    %v8365 = vld [vmem:[#allocation9 + $0xa58] sm:$0xff]
    %v8366 = vld [vmem:[#allocation9 + $0xa60] sm:$0xf]
    %v8367 = vld [vmem:[#allocation9 + $0xa64] sm:$0xff]
    %v8368 = vld [vmem:[#allocation9 + $0xa6c] sm:$0xff]
    %v8369 = vld [vmem:[#allocation9 + $0xa74] sm:$0xff]
    %v8370 = vld [vmem:[#allocation9 + $0xa7c] sm:$0xf]
    %v8371 = vld [vmem:[#allocation9 + $0xa80] sm:$0xff]
    %v8372 = vld [vmem:[#allocation9 + $0xa88] sm:$0xff]
    %v8373 = vld [vmem:[#allocation9 + $0xa90] sm:$0xff]
    %v8374 = vld [vmem:[#allocation9 + $0xa98] sm:$0xf]
    %v8375 = vld [vmem:[#allocation9 + $0xa9c] sm:$0xff]
    %v8376 = vld [vmem:[#allocation9 + $0xaa4] sm:$0xff]
    %v8377 = vld [vmem:[#allocation9 + $0xaac] sm:$0xff]
    %v8378 = vld [vmem:[#allocation9 + $0xab4] sm:$0xf]
    %v8379 = vld [vmem:[#allocation9 + $0xab8] sm:$0xff]
    %v8380 = vld [vmem:[#allocation9 + $0xac0] sm:$0xff]
    %v8381 = vld [vmem:[#allocation9 + $0xac8] sm:$0xff]
    %v8382 = vld [vmem:[#allocation9 + $0xad0] sm:$0xf]
    %v8383 = vld [vmem:[#allocation9 + $0xad4] sm:$0xff]
    %v8384 = vld [vmem:[#allocation9 + $0xadc] sm:$0xff]
    %v8385 = vld [vmem:[#allocation9 + $0xae4] sm:$0xff]
    %v8386 = vld [vmem:[#allocation9 + $0xaec] sm:$0xf]
    %v8387 = vld [vmem:[#allocation9 + $0xaf0] sm:$0xff]
    %v8388 = vld [vmem:[#allocation9 + $0xaf8] sm:$0xff]
    %v8389 = vld [vmem:[#allocation9 + $0xb00] sm:$0xff]
    %v8390 = vld [vmem:[#allocation9 + $0xb08] sm:$0xf]
    %v8391 = vld [vmem:[#allocation9 + $0xb0c] sm:$0xff]
    %v8392 = vld [vmem:[#allocation9 + $0xb14] sm:$0xff]
    %v8393 = vld [vmem:[#allocation9 + $0xb1c] sm:$0xff]
    %v8394 = vld [vmem:[#allocation9 + $0xb24] sm:$0xf]
    %v8395 = vld [vmem:[#allocation9 + $0xb28] sm:$0xff]
    %v8396 = vld [vmem:[#allocation9 + $0xb30] sm:$0xff]
    %v8397 = vld [vmem:[#allocation9 + $0xb38] sm:$0xff]
    %v8398 = vld [vmem:[#allocation9 + $0xb40] sm:$0xf]
    %v8399 = vld [vmem:[#allocation9 + $0xb44] sm:$0xff]
    %v8400 = vld [vmem:[#allocation9 + $0xb4c] sm:$0xff]
    %v8401 = vld [vmem:[#allocation9 + $0xb54] sm:$0xff]
    %v8402 = vld [vmem:[#allocation9 + $0xb5c] sm:$0xf]
    %v8403 = vld [vmem:[#allocation9 + $0xb60] sm:$0xff]
    %v8404 = vld [vmem:[#allocation9 + $0xb68] sm:$0xff]
    %v8405 = vld [vmem:[#allocation9 + $0xb70] sm:$0xff]
    %v8406 = vld [vmem:[#allocation9 + $0xb78] sm:$0xf]
    %v8407 = vld [vmem:[#allocation9 + $0xb7c] sm:$0xff]
    %v8408 = vld [vmem:[#allocation9 + $0xb84] sm:$0xff]
    %v8409 = vld [vmem:[#allocation9 + $0xb8c] sm:$0xff]
    %v8410 = vld [vmem:[#allocation9 + $0xb94] sm:$0xf]
    %v8411 = vld [vmem:[#allocation9 + $0xb98] sm:$0xff]
    %v8412 = vld [vmem:[#allocation9 + $0xba0] sm:$0xff]
    %v8413 = vld [vmem:[#allocation9 + $0xba8] sm:$0xff]
    %v8414 = vld [vmem:[#allocation9 + $0xbb0] sm:$0xf]
    %v8415 = vld [vmem:[#allocation9 + $0xbb4] sm:$0xff]
    %v8416 = vld [vmem:[#allocation9 + $0xbbc] sm:$0xff]
    %v8417 = vld [vmem:[#allocation9 + $0xbc4] sm:$0xff]
    %v8418 = vld [vmem:[#allocation9 + $0xbcc] sm:$0xf]
    %v8419 = vld [vmem:[#allocation9 + $0xbd0] sm:$0xff]
    %v8420 = vld [vmem:[#allocation9 + $0xbd8] sm:$0xff]
    %v8421 = vld [vmem:[#allocation9 + $0xbe0] sm:$0xff]
    %v8422 = vld [vmem:[#allocation9 + $0xbe8] sm:$0xf]
    %v8423 = vld [vmem:[#allocation9 + $0xbec] sm:$0xff]
    %v8424 = vld [vmem:[#allocation9 + $0xbf4] sm:$0xff]
    %v8425 = vld [vmem:[#allocation9 + $0xbfc] sm:$0xff]
    %v8426 = vld [vmem:[#allocation9 + $0xc04] sm:$0xf]
    %v8427 = vld [vmem:[#allocation9 + $0xc08] sm:$0xff]
    %v8428 = vld [vmem:[#allocation9 + $0xc10] sm:$0xff]
    %v8429 = vld [vmem:[#allocation9 + $0xc18] sm:$0xff]
    %v8430 = vld [vmem:[#allocation9 + $0xc20] sm:$0xf]
    %v8431 = vld [vmem:[#allocation9 + $0xc24] sm:$0xff]
    %v8432 = vld [vmem:[#allocation9 + $0xc2c] sm:$0xff]
    %v8433 = vld [vmem:[#allocation9 + $0xc34] sm:$0xff]
    %v8434 = vld [vmem:[#allocation9 + $0xc3c] sm:$0xf]
    %v8435 = vld [vmem:[#allocation9 + $0xc40] sm:$0xff]
    %v8436 = vld [vmem:[#allocation9 + $0xc48] sm:$0xff]
    %v8437 = vld [vmem:[#allocation9 + $0xc50] sm:$0xff]
    %v8438 = vld [vmem:[#allocation9 + $0xc58] sm:$0xf]
    %v8439 = vld [vmem:[#allocation9 + $0xc5c] sm:$0xff]
    %v8440 = vld [vmem:[#allocation9 + $0xc64] sm:$0xff]
    %v8441 = vld [vmem:[#allocation9 + $0xc6c] sm:$0xff]
    %v8442 = vld [vmem:[#allocation9 + $0xc74] sm:$0xf]
    %v8443 = vld [vmem:[#allocation9 + $0xc78] sm:$0xff]
    %v8444 = vld [vmem:[#allocation9 + $0xc80] sm:$0xff]
    %v8445 = vld [vmem:[#allocation9 + $0xc88] sm:$0xff]
    %v8446 = vld [vmem:[#allocation9 + $0xc90] sm:$0xf]
    %v8447 = vld [vmem:[#allocation9 + $0xc94] sm:$0xff]
    %v8448 = vld [vmem:[#allocation9 + $0xc9c] sm:$0xff]
    %v8449 = vld [vmem:[#allocation9 + $0xca4] sm:$0xff]
    %v8450 = vld [vmem:[#allocation9 + $0xcac] sm:$0xf]
    %v8451 = vld [vmem:[#allocation9 + $0xcb0] sm:$0xff]
    %v8452 = vld [vmem:[#allocation9 + $0xcb8] sm:$0xff]
    %v8453 = vld [vmem:[#allocation9 + $0xcc0] sm:$0xff]
    %v8454 = vld [vmem:[#allocation9 + $0xcc8] sm:$0xf]
    %v8455 = vld [vmem:[#allocation9 + $0xccc] sm:$0xff]
    %v8456 = vld [vmem:[#allocation9 + $0xcd4] sm:$0xff]
    %v8457 = vld [vmem:[#allocation9 + $0xcdc] sm:$0xff]
    %v8458 = vld [vmem:[#allocation9 + $0xce4] sm:$0xf]
    %v8459 = vld [vmem:[#allocation9 + $0xce8] sm:$0xff]
    %v8460 = vld [vmem:[#allocation9 + $0xcf0] sm:$0xff]
    %v8461 = vld [vmem:[#allocation9 + $0xcf8] sm:$0xff]
    %v8462 = vld [vmem:[#allocation9 + $0xd00] sm:$0xf]
    %v8463 = vld [vmem:[#allocation9 + $0xd04] sm:$0xff]
    %v8464 = vld [vmem:[#allocation9 + $0xd0c] sm:$0xff]
    %v8465 = vld [vmem:[#allocation9 + $0xd14] sm:$0xff]
    %v8466 = vld [vmem:[#allocation9 + $0xd1c] sm:$0xf]
    %v8467 = vld [vmem:[#allocation9 + $0xd20] sm:$0xff]
    %v8468 = vld [vmem:[#allocation9 + $0xd28] sm:$0xff]
    %v8469 = vld [vmem:[#allocation9 + $0xd30] sm:$0xff]
    %v8470 = vld [vmem:[#allocation9 + $0xd38] sm:$0xf]
    %v8471 = vld [vmem:[#allocation9 + $0xd3c] sm:$0xff]
    %v8472 = vld [vmem:[#allocation9 + $0xd44] sm:$0xff]
    %v8473 = vld [vmem:[#allocation9 + $0xd4c] sm:$0xff]
    %v8474 = vld [vmem:[#allocation9 + $0xd54] sm:$0xf]
    %v8475 = vld [vmem:[#allocation9 + $0xd58] sm:$0xff]
    %v8476 = vld [vmem:[#allocation9 + $0xd60] sm:$0xff]
    %v8477 = vld [vmem:[#allocation9 + $0xd68] sm:$0xff]
    %v8478 = vld [vmem:[#allocation9 + $0xd70] sm:$0xf]
    %v8479 = vld [vmem:[#allocation9 + $0xd74] sm:$0xff]
    %v8480 = vld [vmem:[#allocation9 + $0xd7c] sm:$0xff]
    %v8481 = vld [vmem:[#allocation9 + $0xd84] sm:$0xff]
    %v8482 = vld [vmem:[#allocation9 + $0xd8c] sm:$0xf]
    %v8483 = vld [vmem:[#allocation9 + $0xd90] sm:$0xff]
    %v8484 = vld [vmem:[#allocation9 + $0xd98] sm:$0xff]
    %v8485 = vld [vmem:[#allocation9 + $0xda0] sm:$0xff]
    %v8486 = vld [vmem:[#allocation9 + $0xda8] sm:$0xf]
    %v8487 = vld [vmem:[#allocation9 + $0xdac] sm:$0xff]
    %v8488 = vld [vmem:[#allocation9 + $0xdb4] sm:$0xff]
    %v8489 = vld [vmem:[#allocation9 + $0xdbc] sm:$0xff]
    %v8490 = vld [vmem:[#allocation9 + $0xdc4] sm:$0xf]
    %v8491 = vld [vmem:[#allocation9 + $0xdc8] sm:$0xff]
    %v8492 = vld [vmem:[#allocation9 + $0xdd0] sm:$0xff]
    %v8493 = vld [vmem:[#allocation9 + $0xdd8] sm:$0xff]
    %v8494 = vld [vmem:[#allocation9 + $0xde0] sm:$0xf]
    %v8495 = vld [vmem:[#allocation9 + $0xde4] sm:$0xff]
    %v8496 = vld [vmem:[#allocation9 + $0xdec] sm:$0xff]
    %v8497 = vld [vmem:[#allocation9 + $0xdf4] sm:$0xff]
    %v8498 = vld [vmem:[#allocation9 + $0xdfc] sm:$0xf]
    %v8499 = vld [vmem:[#allocation10] sm:$0xff]
    %v8501 = vlaneseq
    %v8502 = vshrl.u32 %v8501, 7
    %v8503 = vsub.s32 0, %v8502
    %v8504 = vrot.slane %v8499, %v8503
    %v8505 = vlaneseq
    %v8506 = vshrl.u32 %v8505, 7
    %v8507 = vsub.s32 1, %v8506
    %v8508 = vrot.slane %v8499, %v8507
    %v8509 = vlaneseq
    %v8510 = vshrl.u32 %v8509, 7
    %v8511 = vsub.s32 2, %v8510
    %v8512 = vrot.slane %v8499, %v8511
    %v8513 = vlaneseq
    %v8514 = vshrl.u32 %v8513, 7
    %v8515 = vsub.s32 3, %v8514
    %v8516 = vrot.slane %v8499, %v8515
    %v8517 = vlaneseq
    %v8518 = vshrl.u32 %v8517, 7
    %v8519 = vsub.s32 4, %v8518
    %v8520 = vrot.slane %v8499, %v8519
    %v8521 = vlaneseq
    %v8522 = vshrl.u32 %v8521, 7
    %v8523 = vsub.s32 5, %v8522
    %v8524 = vrot.slane %v8499, %v8523
    %v8525 = vlaneseq
    %v8526 = vshrl.u32 %v8525, 7
    %v8527 = vsub.s32 6, %v8526
    %v8528 = vrot.slane %v8499, %v8527
    %v9048 = vunpack.c.l.b16 %v7987
    %v9049 = vunpack.c.h.b16 %v7987
    %v9050 = vunpack.c.l.b16 %v7988
    %v9051 = vunpack.c.h.b16 %v7988
    %v9052 = vunpack.c.l.b16 %v7989
    %v9053 = vunpack.c.h.b16 %v7989
    %v9054 = vunpack.c.l.b16 %v7990
    %v9055 = vunpack.c.l.b16 %v7991
    %v9056 = vunpack.c.h.b16 %v7991
    %v9057 = vunpack.c.l.b16 %v7992
    %v9058 = vunpack.c.h.b16 %v7992
    %v9059 = vunpack.c.l.b16 %v7993
    %v9060 = vunpack.c.h.b16 %v7993
    %v9061 = vunpack.c.l.b16 %v7994
    %v9062 = vunpack.c.l.b16 %v7995
    %v9063 = vunpack.c.h.b16 %v7995
    %v9064 = vunpack.c.l.b16 %v7996
    %v9065 = vunpack.c.h.b16 %v7996
    %v9066 = vunpack.c.l.b16 %v7997
    %v9067 = vunpack.c.h.b16 %v7997
    %v9068 = vunpack.c.l.b16 %v7998
    %v9069 = vunpack.c.l.b16 %v7999
    %v9070 = vunpack.c.h.b16 %v7999
    %v9071 = vunpack.c.l.b16 %v8000
    %v9072 = vunpack.c.h.b16 %v8000
    %v9073 = vunpack.c.l.b16 %v8001
    %v9074 = vunpack.c.h.b16 %v8001
    %v9075 = vunpack.c.l.b16 %v8002
    %v9076 = vunpack.c.l.b16 %v8003
    %v9077 = vunpack.c.h.b16 %v8003
    %v9078 = vunpack.c.l.b16 %v8004
    %v9079 = vunpack.c.h.b16 %v8004
    %v9080 = vunpack.c.l.b16 %v8005
    %v9081 = vunpack.c.h.b16 %v8005
    %v9082 = vunpack.c.l.b16 %v8006
    %v9083 = vunpack.c.l.b16 %v8007
    %v9084 = vunpack.c.h.b16 %v8007
    %v9085 = vunpack.c.l.b16 %v8008
    %v9086 = vunpack.c.h.b16 %v8008
    %v9087 = vunpack.c.l.b16 %v8009
    %v9088 = vunpack.c.h.b16 %v8009
    %v9089 = vunpack.c.l.b16 %v8010
    %v9090 = vunpack.c.l.b16 %v8011
    %v9091 = vunpack.c.h.b16 %v8011
    %v9092 = vunpack.c.l.b16 %v8012
    %v9093 = vunpack.c.h.b16 %v8012
    %v9094 = vunpack.c.l.b16 %v8013
    %v9095 = vunpack.c.h.b16 %v8013
    %v9096 = vunpack.c.l.b16 %v8014
    %v9097 = vunpack.c.l.b16 %v8015
    %v9098 = vunpack.c.h.b16 %v8015
    %v9099 = vunpack.c.l.b16 %v8016
    %v9100 = vunpack.c.h.b16 %v8016
    %v9101 = vunpack.c.l.b16 %v8017
    %v9102 = vunpack.c.h.b16 %v8017
    %v9103 = vunpack.c.l.b16 %v8018
    %v9104 = vunpack.c.l.b16 %v8019
    %v9105 = vunpack.c.h.b16 %v8019
    %v9106 = vunpack.c.l.b16 %v8020
    %v9107 = vunpack.c.h.b16 %v8020
    %v9108 = vunpack.c.l.b16 %v8021
    %v9109 = vunpack.c.h.b16 %v8021
    %v9110 = vunpack.c.l.b16 %v8022
    %v9111 = vunpack.c.l.b16 %v8023
    %v9112 = vunpack.c.h.b16 %v8023
    %v9113 = vunpack.c.l.b16 %v8024
    %v9114 = vunpack.c.h.b16 %v8024
    %v9115 = vunpack.c.l.b16 %v8025
    %v9116 = vunpack.c.h.b16 %v8025
    %v9117 = vunpack.c.l.b16 %v8026
    %v9118 = vunpack.c.l.b16 %v8027
    %v9119 = vunpack.c.h.b16 %v8027
    %v9120 = vunpack.c.l.b16 %v8028
    %v9121 = vunpack.c.h.b16 %v8028
    %v9122 = vunpack.c.l.b16 %v8029
    %v9123 = vunpack.c.h.b16 %v8029
    %v9124 = vunpack.c.l.b16 %v8030
    %v9125 = vunpack.c.l.b16 %v8031
    %v9126 = vunpack.c.h.b16 %v8031
    %v9127 = vunpack.c.l.b16 %v8032
    %v9128 = vunpack.c.h.b16 %v8032
    %v9129 = vunpack.c.l.b16 %v8033
    %v9130 = vunpack.c.h.b16 %v8033
    %v9131 = vunpack.c.l.b16 %v8034
    %v9132 = vunpack.c.l.b16 %v8035
    %v9133 = vunpack.c.h.b16 %v8035
    %v9134 = vunpack.c.l.b16 %v8036
    %v9135 = vunpack.c.h.b16 %v8036
    %v9136 = vunpack.c.l.b16 %v8037
    %v9137 = vunpack.c.h.b16 %v8037
    %v9138 = vunpack.c.l.b16 %v8038
    %v9139 = vunpack.c.l.b16 %v8039
    %v9140 = vunpack.c.h.b16 %v8039
    %v9141 = vunpack.c.l.b16 %v8040
    %v9142 = vunpack.c.h.b16 %v8040
    %v9143 = vunpack.c.l.b16 %v8041
    %v9144 = vunpack.c.h.b16 %v8041
    %v9145 = vunpack.c.l.b16 %v8042
    %v9146 = vunpack.c.l.b16 %v8043
    %v9147 = vunpack.c.h.b16 %v8043
    %v9148 = vunpack.c.l.b16 %v8044
    %v9149 = vunpack.c.h.b16 %v8044
    %v9150 = vunpack.c.l.b16 %v8045
    %v9151 = vunpack.c.h.b16 %v8045
    %v9152 = vunpack.c.l.b16 %v8046
    %v9153 = vunpack.c.l.b16 %v8047
    %v9154 = vunpack.c.h.b16 %v8047
    %v9155 = vunpack.c.l.b16 %v8048
    %v9156 = vunpack.c.h.b16 %v8048
    %v9157 = vunpack.c.l.b16 %v8049
    %v9158 = vunpack.c.h.b16 %v8049
    %v9159 = vunpack.c.l.b16 %v8050
    %v9160 = vunpack.c.l.b16 %v8051
    %v9161 = vunpack.c.h.b16 %v8051
    %v9162 = vunpack.c.l.b16 %v8052
    %v9163 = vunpack.c.h.b16 %v8052
    %v9164 = vunpack.c.l.b16 %v8053
    %v9165 = vunpack.c.h.b16 %v8053
    %v9166 = vunpack.c.l.b16 %v8054
    %v9167 = vunpack.c.l.b16 %v8055
    %v9168 = vunpack.c.h.b16 %v8055
    %v9169 = vunpack.c.l.b16 %v8056
    %v9170 = vunpack.c.h.b16 %v8056
    %v9171 = vunpack.c.l.b16 %v8057
    %v9172 = vunpack.c.h.b16 %v8057
    %v9173 = vunpack.c.l.b16 %v8058
    %v9174 = vunpack.c.l.b16 %v8059
    %v9175 = vunpack.c.h.b16 %v8059
    %v9176 = vunpack.c.l.b16 %v8060
    %v9177 = vunpack.c.h.b16 %v8060
    %v9178 = vunpack.c.l.b16 %v8061
    %v9179 = vunpack.c.h.b16 %v8061
    %v9180 = vunpack.c.l.b16 %v8062
    %v9181 = vunpack.c.l.b16 %v8063
    %v9182 = vunpack.c.h.b16 %v8063
    %v9183 = vunpack.c.l.b16 %v8064
    %v9184 = vunpack.c.h.b16 %v8064
    %v9185 = vunpack.c.l.b16 %v8065
    %v9186 = vunpack.c.h.b16 %v8065
    %v9187 = vunpack.c.l.b16 %v8066
    %v9188 = vunpack.c.l.b16 %v8067
    %v9189 = vunpack.c.h.b16 %v8067
    %v9190 = vunpack.c.l.b16 %v8068
    %v9191 = vunpack.c.h.b16 %v8068
    %v9192 = vunpack.c.l.b16 %v8069
    %v9193 = vunpack.c.h.b16 %v8069
    %v9194 = vunpack.c.l.b16 %v8070
    %v9195 = vunpack.c.l.b16 %v8071
    %v9196 = vunpack.c.h.b16 %v8071
    %v9197 = vunpack.c.l.b16 %v8072
    %v9198 = vunpack.c.h.b16 %v8072
    %v9199 = vunpack.c.l.b16 %v8073
    %v9200 = vunpack.c.h.b16 %v8073
    %v9201 = vunpack.c.l.b16 %v8074
    %v9202 = vunpack.c.l.b16 %v8075
    %v9203 = vunpack.c.h.b16 %v8075
    %v9204 = vunpack.c.l.b16 %v8076
    %v9205 = vunpack.c.h.b16 %v8076
    %v9206 = vunpack.c.l.b16 %v8077
    %v9207 = vunpack.c.h.b16 %v8077
    %v9208 = vunpack.c.l.b16 %v8078
    %v9209 = vunpack.c.l.b16 %v8079
    %v9210 = vunpack.c.h.b16 %v8079
    %v9211 = vunpack.c.l.b16 %v8080
    %v9212 = vunpack.c.h.b16 %v8080
    %v9213 = vunpack.c.l.b16 %v8081
    %v9214 = vunpack.c.h.b16 %v8081
    %v9215 = vunpack.c.l.b16 %v8082
    %v9216 = vunpack.c.l.b16 %v8083
    %v9217 = vunpack.c.h.b16 %v8083
    %v9218 = vunpack.c.l.b16 %v8084
    %v9219 = vunpack.c.h.b16 %v8084
    %v9220 = vunpack.c.l.b16 %v8085
    %v9221 = vunpack.c.h.b16 %v8085
    %v9222 = vunpack.c.l.b16 %v8086
    %v9223 = vunpack.c.l.b16 %v8087
    %v9224 = vunpack.c.h.b16 %v8087
    %v9225 = vunpack.c.l.b16 %v8088
    %v9226 = vunpack.c.h.b16 %v8088
    %v9227 = vunpack.c.l.b16 %v8089
    %v9228 = vunpack.c.h.b16 %v8089
    %v9229 = vunpack.c.l.b16 %v8090
    %v9230 = vunpack.c.l.b16 %v8091
    %v9231 = vunpack.c.h.b16 %v8091
    %v9232 = vunpack.c.l.b16 %v8092
    %v9233 = vunpack.c.h.b16 %v8092
    %v9234 = vunpack.c.l.b16 %v8093
    %v9235 = vunpack.c.h.b16 %v8093
    %v9236 = vunpack.c.l.b16 %v8094
    %v9237 = vunpack.c.l.b16 %v8095
    %v9238 = vunpack.c.h.b16 %v8095
    %v9239 = vunpack.c.l.b16 %v8096
    %v9240 = vunpack.c.h.b16 %v8096
    %v9241 = vunpack.c.l.b16 %v8097
    %v9242 = vunpack.c.h.b16 %v8097
    %v9243 = vunpack.c.l.b16 %v8098
    %v9244 = vunpack.c.l.b16 %v8099
    %v9245 = vunpack.c.h.b16 %v8099
    %v9246 = vunpack.c.l.b16 %v8100
    %v9247 = vunpack.c.h.b16 %v8100
    %v9248 = vunpack.c.l.b16 %v8101
    %v9249 = vunpack.c.h.b16 %v8101
    %v9250 = vunpack.c.l.b16 %v8102
    %v9251 = vunpack.c.l.b16 %v8103
    %v9252 = vunpack.c.h.b16 %v8103
    %v9253 = vunpack.c.l.b16 %v8104
    %v9254 = vunpack.c.h.b16 %v8104
    %v9255 = vunpack.c.l.b16 %v8105
    %v9256 = vunpack.c.h.b16 %v8105
    %v9257 = vunpack.c.l.b16 %v8106
    %v9258 = vunpack.c.l.b16 %v8107
    %v9259 = vunpack.c.h.b16 %v8107
    %v9260 = vunpack.c.l.b16 %v8108
    %v9261 = vunpack.c.h.b16 %v8108
    %v9262 = vunpack.c.l.b16 %v8109
    %v9263 = vunpack.c.h.b16 %v8109
    %v9264 = vunpack.c.l.b16 %v8110
    %v9265 = vunpack.c.l.b16 %v8111
    %v9266 = vunpack.c.h.b16 %v8111
    %v9267 = vunpack.c.l.b16 %v8112
    %v9268 = vunpack.c.h.b16 %v8112
    %v9269 = vunpack.c.l.b16 %v8113
    %v9270 = vunpack.c.h.b16 %v8113
    %v9271 = vunpack.c.l.b16 %v8114
    %v9272 = vunpack.c.l.b16 %v8115
    %v9273 = vunpack.c.h.b16 %v8115
    %v9274 = vunpack.c.l.b16 %v8116
    %v9275 = vunpack.c.h.b16 %v8116
    %v9276 = vunpack.c.l.b16 %v8117
    %v9277 = vunpack.c.h.b16 %v8117
    %v9278 = vunpack.c.l.b16 %v8118
    %v9279 = vunpack.c.l.b16 %v8119
    %v9280 = vunpack.c.h.b16 %v8119
    %v9281 = vunpack.c.l.b16 %v8120
    %v9282 = vunpack.c.h.b16 %v8120
    %v9283 = vunpack.c.l.b16 %v8121
    %v9284 = vunpack.c.h.b16 %v8121
    %v9285 = vunpack.c.l.b16 %v8122
    %v9286 = vunpack.c.l.b16 %v8123
    %v9287 = vunpack.c.h.b16 %v8123
    %v9288 = vunpack.c.l.b16 %v8124
    %v9289 = vunpack.c.h.b16 %v8124
    %v9290 = vunpack.c.l.b16 %v8125
    %v9291 = vunpack.c.h.b16 %v8125
    %v9292 = vunpack.c.l.b16 %v8126
    %v9293 = vunpack.c.l.b16 %v8127
    %v9294 = vunpack.c.h.b16 %v8127
    %v9295 = vunpack.c.l.b16 %v8128
    %v9296 = vunpack.c.h.b16 %v8128
    %v9297 = vunpack.c.l.b16 %v8129
    %v9298 = vunpack.c.h.b16 %v8129
    %v9299 = vunpack.c.l.b16 %v8130
    %v9300 = vunpack.c.l.b16 %v8131
    %v9301 = vunpack.c.h.b16 %v8131
    %v9302 = vunpack.c.l.b16 %v8132
    %v9303 = vunpack.c.h.b16 %v8132
    %v9304 = vunpack.c.l.b16 %v8133
    %v9305 = vunpack.c.h.b16 %v8133
    %v9306 = vunpack.c.l.b16 %v8134
    %v9307 = vunpack.c.l.b16 %v8135
    %v9308 = vunpack.c.h.b16 %v8135
    %v9309 = vunpack.c.l.b16 %v8136
    %v9310 = vunpack.c.h.b16 %v8136
    %v9311 = vunpack.c.l.b16 %v8137
    %v9312 = vunpack.c.h.b16 %v8137
    %v9313 = vunpack.c.l.b16 %v8138
    %v9314 = vunpack.c.l.b16 %v8139
    %v9315 = vunpack.c.h.b16 %v8139
    %v9316 = vunpack.c.l.b16 %v8140
    %v9317 = vunpack.c.h.b16 %v8140
    %v9318 = vunpack.c.l.b16 %v8141
    %v9319 = vunpack.c.h.b16 %v8141
    %v9320 = vunpack.c.l.b16 %v8142
    %v9321 = vunpack.c.l.b16 %v8143
    %v9322 = vunpack.c.h.b16 %v8143
    %v9323 = vunpack.c.l.b16 %v8144
    %v9324 = vunpack.c.h.b16 %v8144
    %v9325 = vunpack.c.l.b16 %v8145
    %v9326 = vunpack.c.h.b16 %v8145
    %v9327 = vunpack.c.l.b16 %v8146
    %v9328 = vunpack.c.l.b16 %v8147
    %v9329 = vunpack.c.h.b16 %v8147
    %v9330 = vunpack.c.l.b16 %v8148
    %v9331 = vunpack.c.h.b16 %v8148
    %v9332 = vunpack.c.l.b16 %v8149
    %v9333 = vunpack.c.h.b16 %v8149
    %v9334 = vunpack.c.l.b16 %v8150
    %v9335 = vunpack.c.l.b16 %v8151
    %v9336 = vunpack.c.h.b16 %v8151
    %v9337 = vunpack.c.l.b16 %v8152
    %v9338 = vunpack.c.h.b16 %v8152
    %v9339 = vunpack.c.l.b16 %v8153
    %v9340 = vunpack.c.h.b16 %v8153
    %v9341 = vunpack.c.l.b16 %v8154
    %v9342 = vunpack.c.l.b16 %v8155
    %v9343 = vunpack.c.h.b16 %v8155
    %v9344 = vunpack.c.l.b16 %v8156
    %v9345 = vunpack.c.h.b16 %v8156
    %v9346 = vunpack.c.l.b16 %v8157
    %v9347 = vunpack.c.h.b16 %v8157
    %v9348 = vunpack.c.l.b16 %v8158
    %v9349 = vunpack.c.l.b16 %v8159
    %v9350 = vunpack.c.h.b16 %v8159
    %v9351 = vunpack.c.l.b16 %v8160
    %v9352 = vunpack.c.h.b16 %v8160
    %v9353 = vunpack.c.l.b16 %v8161
    %v9354 = vunpack.c.h.b16 %v8161
    %v9355 = vunpack.c.l.b16 %v8162
    %v9356 = vunpack.c.l.b16 %v8163
    %v9357 = vunpack.c.h.b16 %v8163
    %v9358 = vunpack.c.l.b16 %v8164
    %v9359 = vunpack.c.h.b16 %v8164
    %v9360 = vunpack.c.l.b16 %v8165
    %v9361 = vunpack.c.h.b16 %v8165
    %v9362 = vunpack.c.l.b16 %v8166
    %v9363 = vunpack.c.l.b16 %v8167
    %v9364 = vunpack.c.h.b16 %v8167
    %v9365 = vunpack.c.l.b16 %v8168
    %v9366 = vunpack.c.h.b16 %v8168
    %v9367 = vunpack.c.l.b16 %v8169
    %v9368 = vunpack.c.h.b16 %v8169
    %v9369 = vunpack.c.l.b16 %v8170
    %v9370 = vunpack.c.l.b16 %v8171
    %v9371 = vunpack.c.h.b16 %v8171
    %v9372 = vunpack.c.l.b16 %v8172
    %v9373 = vunpack.c.h.b16 %v8172
    %v9374 = vunpack.c.l.b16 %v8173
    %v9375 = vunpack.c.h.b16 %v8173
    %v9376 = vunpack.c.l.b16 %v8174
    %v9377 = vunpack.c.l.b16 %v8175
    %v9378 = vunpack.c.h.b16 %v8175
    %v9379 = vunpack.c.l.b16 %v8176
    %v9380 = vunpack.c.h.b16 %v8176
    %v9381 = vunpack.c.l.b16 %v8177
    %v9382 = vunpack.c.h.b16 %v8177
    %v9383 = vunpack.c.l.b16 %v8178
    %v9384 = vunpack.c.l.b16 %v8179
    %v9385 = vunpack.c.h.b16 %v8179
    %v9386 = vunpack.c.l.b16 %v8180
    %v9387 = vunpack.c.h.b16 %v8180
    %v9388 = vunpack.c.l.b16 %v8181
    %v9389 = vunpack.c.h.b16 %v8181
    %v9390 = vunpack.c.l.b16 %v8182
    %v9391 = vunpack.c.l.b16 %v8183
    %v9392 = vunpack.c.h.b16 %v8183
    %v9393 = vunpack.c.l.b16 %v8184
    %v9394 = vunpack.c.h.b16 %v8184
    %v9395 = vunpack.c.l.b16 %v8185
    %v9396 = vunpack.c.h.b16 %v8185
    %v9397 = vunpack.c.l.b16 %v8186
    %v9398 = vunpack.c.l.b16 %v8187
    %v9399 = vunpack.c.h.b16 %v8187
    %v9400 = vunpack.c.l.b16 %v8188
    %v9401 = vunpack.c.h.b16 %v8188
    %v9402 = vunpack.c.l.b16 %v8189
    %v9403 = vunpack.c.h.b16 %v8189
    %v9404 = vunpack.c.l.b16 %v8190
    %v9405 = vunpack.c.l.b16 %v8191
    %v9406 = vunpack.c.h.b16 %v8191
    %v9407 = vunpack.c.l.b16 %v8192
    %v9408 = vunpack.c.h.b16 %v8192
    %v9409 = vunpack.c.l.b16 %v8193
    %v9410 = vunpack.c.h.b16 %v8193
    %v9411 = vunpack.c.l.b16 %v8194
    %v9412 = vunpack.c.l.b16 %v8195
    %v9413 = vunpack.c.h.b16 %v8195
    %v9414 = vunpack.c.l.b16 %v8196
    %v9415 = vunpack.c.h.b16 %v8196
    %v9416 = vunpack.c.l.b16 %v8197
    %v9417 = vunpack.c.h.b16 %v8197
    %v9418 = vunpack.c.l.b16 %v8198
    %v9419 = vunpack.c.l.b16 %v8199
    %v9420 = vunpack.c.h.b16 %v8199
    %v9421 = vunpack.c.l.b16 %v8200
    %v9422 = vunpack.c.h.b16 %v8200
    %v9423 = vunpack.c.l.b16 %v8201
    %v9424 = vunpack.c.h.b16 %v8201
    %v9425 = vunpack.c.l.b16 %v8202
    %v9426 = vunpack.c.l.b16 %v8203
    %v9427 = vunpack.c.h.b16 %v8203
    %v9428 = vunpack.c.l.b16 %v8204
    %v9429 = vunpack.c.h.b16 %v8204
    %v9430 = vunpack.c.l.b16 %v8205
    %v9431 = vunpack.c.h.b16 %v8205
    %v9432 = vunpack.c.l.b16 %v8206
    %v9433 = vunpack.c.l.b16 %v8207
    %v9434 = vunpack.c.h.b16 %v8207
    %v9435 = vunpack.c.l.b16 %v8208
    %v9436 = vunpack.c.h.b16 %v8208
    %v9437 = vunpack.c.l.b16 %v8209
    %v9438 = vunpack.c.h.b16 %v8209
    %v9439 = vunpack.c.l.b16 %v8210
    %v9440 = vunpack.c.l.b16 %v8211
    %v9441 = vunpack.c.h.b16 %v8211
    %v9442 = vunpack.c.l.b16 %v8212
    %v9443 = vunpack.c.h.b16 %v8212
    %v9444 = vunpack.c.l.b16 %v8213
    %v9445 = vunpack.c.h.b16 %v8213
    %v9446 = vunpack.c.l.b16 %v8214
    %v9447 = vunpack.c.l.b16 %v8215
    %v9448 = vunpack.c.h.b16 %v8215
    %v9449 = vunpack.c.l.b16 %v8216
    %v9450 = vunpack.c.h.b16 %v8216
    %v9451 = vunpack.c.l.b16 %v8217
    %v9452 = vunpack.c.h.b16 %v8217
    %v9453 = vunpack.c.l.b16 %v8218
    %v9454 = vunpack.c.l.b16 %v8219
    %v9455 = vunpack.c.h.b16 %v8219
    %v9456 = vunpack.c.l.b16 %v8220
    %v9457 = vunpack.c.h.b16 %v8220
    %v9458 = vunpack.c.l.b16 %v8221
    %v9459 = vunpack.c.h.b16 %v8221
    %v9460 = vunpack.c.l.b16 %v8222
    %v9461 = vunpack.c.l.b16 %v8223
    %v9462 = vunpack.c.h.b16 %v8223
    %v9463 = vunpack.c.l.b16 %v8224
    %v9464 = vunpack.c.h.b16 %v8224
    %v9465 = vunpack.c.l.b16 %v8225
    %v9466 = vunpack.c.h.b16 %v8225
    %v9467 = vunpack.c.l.b16 %v8226
    %v9468 = vunpack.c.l.b16 %v8227
    %v9469 = vunpack.c.h.b16 %v8227
    %v9470 = vunpack.c.l.b16 %v8228
    %v9471 = vunpack.c.h.b16 %v8228
    %v9472 = vunpack.c.l.b16 %v8229
    %v9473 = vunpack.c.h.b16 %v8229
    %v9474 = vunpack.c.l.b16 %v8230
    %v9475 = vunpack.c.l.b16 %v8231
    %v9476 = vunpack.c.h.b16 %v8231
    %v9477 = vunpack.c.l.b16 %v8232
    %v9478 = vunpack.c.h.b16 %v8232
    %v9479 = vunpack.c.l.b16 %v8233
    %v9480 = vunpack.c.h.b16 %v8233
    %v9481 = vunpack.c.l.b16 %v8234
    %v9482 = vunpack.c.l.b16 %v8235
    %v9483 = vunpack.c.h.b16 %v8235
    %v9484 = vunpack.c.l.b16 %v8236
    %v9485 = vunpack.c.h.b16 %v8236
    %v9486 = vunpack.c.l.b16 %v8237
    %v9487 = vunpack.c.h.b16 %v8237
    %v9488 = vunpack.c.l.b16 %v8238
    %v9489 = vunpack.c.l.b16 %v8239
    %v9490 = vunpack.c.h.b16 %v8239
    %v9491 = vunpack.c.l.b16 %v8240
    %v9492 = vunpack.c.h.b16 %v8240
    %v9493 = vunpack.c.l.b16 %v8241
    %v9494 = vunpack.c.h.b16 %v8241
    %v9495 = vunpack.c.l.b16 %v8242
    %v9496 = vunpack.c.l.b16 %v8243
    %v9497 = vunpack.c.h.b16 %v8243
    %v9498 = vunpack.c.l.b16 %v8244
    %v9499 = vunpack.c.h.b16 %v8244
    %v9500 = vunpack.c.l.b16 %v8245
    %v9501 = vunpack.c.h.b16 %v8245
    %v9502 = vunpack.c.l.b16 %v8246
    %v9503 = vunpack.c.l.b16 %v8247
    %v9504 = vunpack.c.h.b16 %v8247
    %v9505 = vunpack.c.l.b16 %v8248
    %v9506 = vunpack.c.h.b16 %v8248
    %v9507 = vunpack.c.l.b16 %v8249
    %v9508 = vunpack.c.h.b16 %v8249
    %v9509 = vunpack.c.l.b16 %v8250
    %v9510 = vunpack.c.l.b16 %v8251
    %v9511 = vunpack.c.h.b16 %v8251
    %v9512 = vunpack.c.l.b16 %v8252
    %v9513 = vunpack.c.h.b16 %v8252
    %v9514 = vunpack.c.l.b16 %v8253
    %v9515 = vunpack.c.h.b16 %v8253
    %v9516 = vunpack.c.l.b16 %v8254
    %v9517 = vunpack.c.l.b16 %v8255
    %v9518 = vunpack.c.h.b16 %v8255
    %v9519 = vunpack.c.l.b16 %v8256
    %v9520 = vunpack.c.h.b16 %v8256
    %v9521 = vunpack.c.l.b16 %v8257
    %v9522 = vunpack.c.h.b16 %v8257
    %v9523 = vunpack.c.l.b16 %v8258
    %v9524 = vunpack.c.l.b16 %v8259
    %v9525 = vunpack.c.h.b16 %v8259
    %v9526 = vunpack.c.l.b16 %v8260
    %v9527 = vunpack.c.h.b16 %v8260
    %v9528 = vunpack.c.l.b16 %v8261
    %v9529 = vunpack.c.h.b16 %v8261
    %v9530 = vunpack.c.l.b16 %v8262
    %v9531 = vunpack.c.l.b16 %v8263
    %v9532 = vunpack.c.h.b16 %v8263
    %v9533 = vunpack.c.l.b16 %v8264
    %v9534 = vunpack.c.h.b16 %v8264
    %v9535 = vunpack.c.l.b16 %v8265
    %v9536 = vunpack.c.h.b16 %v8265
    %v9537 = vunpack.c.l.b16 %v8266
    %v9538 = vunpack.c.l.b16 %v8267
    %v9539 = vunpack.c.h.b16 %v8267
    %v9540 = vunpack.c.l.b16 %v8268
    %v9541 = vunpack.c.h.b16 %v8268
    %v9542 = vunpack.c.l.b16 %v8269
    %v9543 = vunpack.c.h.b16 %v8269
    %v9544 = vunpack.c.l.b16 %v8270
    %v9545 = vunpack.c.l.b16 %v8271
    %v9546 = vunpack.c.h.b16 %v8271
    %v9547 = vunpack.c.l.b16 %v8272
    %v9548 = vunpack.c.h.b16 %v8272
    %v9549 = vunpack.c.l.b16 %v8273
    %v9550 = vunpack.c.h.b16 %v8273
    %v9551 = vunpack.c.l.b16 %v8274
    %v9552 = vunpack.c.l.b16 %v8275
    %v9553 = vunpack.c.h.b16 %v8275
    %v9554 = vunpack.c.l.b16 %v8276
    %v9555 = vunpack.c.h.b16 %v8276
    %v9556 = vunpack.c.l.b16 %v8277
    %v9557 = vunpack.c.h.b16 %v8277
    %v9558 = vunpack.c.l.b16 %v8278
    %v9559 = vunpack.c.l.b16 %v8279
    %v9560 = vunpack.c.h.b16 %v8279
    %v9561 = vunpack.c.l.b16 %v8280
    %v9562 = vunpack.c.h.b16 %v8280
    %v9563 = vunpack.c.l.b16 %v8281
    %v9564 = vunpack.c.h.b16 %v8281
    %v9565 = vunpack.c.l.b16 %v8282
    %v9566 = vunpack.c.l.b16 %v8283
    %v9567 = vunpack.c.h.b16 %v8283
    %v9568 = vunpack.c.l.b16 %v8284
    %v9569 = vunpack.c.h.b16 %v8284
    %v9570 = vunpack.c.l.b16 %v8285
    %v9571 = vunpack.c.h.b16 %v8285
    %v9572 = vunpack.c.l.b16 %v8286
    %v9573 = vunpack.c.l.b16 %v8287
    %v9574 = vunpack.c.h.b16 %v8287
    %v9575 = vunpack.c.l.b16 %v8288
    %v9576 = vunpack.c.h.b16 %v8288
    %v9577 = vunpack.c.l.b16 %v8289
    %v9578 = vunpack.c.h.b16 %v8289
    %v9579 = vunpack.c.l.b16 %v8290
    %v9580 = vunpack.c.l.b16 %v8291
    %v9581 = vunpack.c.h.b16 %v8291
    %v9582 = vunpack.c.l.b16 %v8292
    %v9583 = vunpack.c.h.b16 %v8292
    %v9584 = vunpack.c.l.b16 %v8293
    %v9585 = vunpack.c.h.b16 %v8293
    %v9586 = vunpack.c.l.b16 %v8294
    %v9587 = vunpack.c.l.b16 %v8295
    %v9588 = vunpack.c.h.b16 %v8295
    %v9589 = vunpack.c.l.b16 %v8296
    %v9590 = vunpack.c.h.b16 %v8296
    %v9591 = vunpack.c.l.b16 %v8297
    %v9592 = vunpack.c.h.b16 %v8297
    %v9593 = vunpack.c.l.b16 %v8298
    %v9594 = vunpack.c.l.b16 %v8299
    %v9595 = vunpack.c.h.b16 %v8299
    %v9596 = vunpack.c.l.b16 %v8300
    %v9597 = vunpack.c.h.b16 %v8300
    %v9598 = vunpack.c.l.b16 %v8301
    %v9599 = vunpack.c.h.b16 %v8301
    %v9600 = vunpack.c.l.b16 %v8302
    %v9601 = vunpack.c.l.b16 %v8303
    %v9602 = vunpack.c.h.b16 %v8303
    %v9603 = vunpack.c.l.b16 %v8304
    %v9604 = vunpack.c.h.b16 %v8304
    %v9605 = vunpack.c.l.b16 %v8305
    %v9606 = vunpack.c.h.b16 %v8305
    %v9607 = vunpack.c.l.b16 %v8306
    %v9608 = vunpack.c.l.b16 %v8307
    %v9609 = vunpack.c.h.b16 %v8307
    %v9610 = vunpack.c.l.b16 %v8308
    %v9611 = vunpack.c.h.b16 %v8308
    %v9612 = vunpack.c.l.b16 %v8309
    %v9613 = vunpack.c.h.b16 %v8309
    %v9614 = vunpack.c.l.b16 %v8310
    %v9615 = vunpack.c.l.b16 %v8311
    %v9616 = vunpack.c.h.b16 %v8311
    %v9617 = vunpack.c.l.b16 %v8312
    %v9618 = vunpack.c.h.b16 %v8312
    %v9619 = vunpack.c.l.b16 %v8313
    %v9620 = vunpack.c.h.b16 %v8313
    %v9621 = vunpack.c.l.b16 %v8314
    %v9622 = vunpack.c.l.b16 %v8315
    %v9623 = vunpack.c.h.b16 %v8315
    %v9624 = vunpack.c.l.b16 %v8316
    %v9625 = vunpack.c.h.b16 %v8316
    %v9626 = vunpack.c.l.b16 %v8317
    %v9627 = vunpack.c.h.b16 %v8317
    %v9628 = vunpack.c.l.b16 %v8318
    %v9629 = vunpack.c.l.b16 %v8319
    %v9630 = vunpack.c.h.b16 %v8319
    %v9631 = vunpack.c.l.b16 %v8320
    %v9632 = vunpack.c.h.b16 %v8320
    %v9633 = vunpack.c.l.b16 %v8321
    %v9634 = vunpack.c.h.b16 %v8321
    %v9635 = vunpack.c.l.b16 %v8322
    %v9636 = vunpack.c.l.b16 %v8323
    %v9637 = vunpack.c.h.b16 %v8323
    %v9638 = vunpack.c.l.b16 %v8324
    %v9639 = vunpack.c.h.b16 %v8324
    %v9640 = vunpack.c.l.b16 %v8325
    %v9641 = vunpack.c.h.b16 %v8325
    %v9642 = vunpack.c.l.b16 %v8326
    %v9643 = vunpack.c.l.b16 %v8327
    %v9644 = vunpack.c.h.b16 %v8327
    %v9645 = vunpack.c.l.b16 %v8328
    %v9646 = vunpack.c.h.b16 %v8328
    %v9647 = vunpack.c.l.b16 %v8329
    %v9648 = vunpack.c.h.b16 %v8329
    %v9649 = vunpack.c.l.b16 %v8330
    %v9650 = vunpack.c.l.b16 %v8331
    %v9651 = vunpack.c.h.b16 %v8331
    %v9652 = vunpack.c.l.b16 %v8332
    %v9653 = vunpack.c.h.b16 %v8332
    %v9654 = vunpack.c.l.b16 %v8333
    %v9655 = vunpack.c.h.b16 %v8333
    %v9656 = vunpack.c.l.b16 %v8334
    %v9657 = vunpack.c.l.b16 %v8335
    %v9658 = vunpack.c.h.b16 %v8335
    %v9659 = vunpack.c.l.b16 %v8336
    %v9660 = vunpack.c.h.b16 %v8336
    %v9661 = vunpack.c.l.b16 %v8337
    %v9662 = vunpack.c.h.b16 %v8337
    %v9663 = vunpack.c.l.b16 %v8338
    %v9664 = vunpack.c.l.b16 %v8339
    %v9665 = vunpack.c.h.b16 %v8339
    %v9666 = vunpack.c.l.b16 %v8340
    %v9667 = vunpack.c.h.b16 %v8340
    %v9668 = vunpack.c.l.b16 %v8341
    %v9669 = vunpack.c.h.b16 %v8341
    %v9670 = vunpack.c.l.b16 %v8342
    %v9671 = vunpack.c.l.b16 %v8343
    %v9672 = vunpack.c.h.b16 %v8343
    %v9673 = vunpack.c.l.b16 %v8344
    %v9674 = vunpack.c.h.b16 %v8344
    %v9675 = vunpack.c.l.b16 %v8345
    %v9676 = vunpack.c.h.b16 %v8345
    %v9677 = vunpack.c.l.b16 %v8346
    %v9678 = vunpack.c.l.b16 %v8347
    %v9679 = vunpack.c.h.b16 %v8347
    %v9680 = vunpack.c.l.b16 %v8348
    %v9681 = vunpack.c.h.b16 %v8348
    %v9682 = vunpack.c.l.b16 %v8349
    %v9683 = vunpack.c.h.b16 %v8349
    %v9684 = vunpack.c.l.b16 %v8350
    %v9685 = vunpack.c.l.b16 %v8351
    %v9686 = vunpack.c.h.b16 %v8351
    %v9687 = vunpack.c.l.b16 %v8352
    %v9688 = vunpack.c.h.b16 %v8352
    %v9689 = vunpack.c.l.b16 %v8353
    %v9690 = vunpack.c.h.b16 %v8353
    %v9691 = vunpack.c.l.b16 %v8354
    %v9692 = vunpack.c.l.b16 %v8355
    %v9693 = vunpack.c.h.b16 %v8355
    %v9694 = vunpack.c.l.b16 %v8356
    %v9695 = vunpack.c.h.b16 %v8356
    %v9696 = vunpack.c.l.b16 %v8357
    %v9697 = vunpack.c.h.b16 %v8357
    %v9698 = vunpack.c.l.b16 %v8358
    %v9699 = vunpack.c.l.b16 %v8359
    %v9700 = vunpack.c.h.b16 %v8359
    %v9701 = vunpack.c.l.b16 %v8360
    %v9702 = vunpack.c.h.b16 %v8360
    %v9703 = vunpack.c.l.b16 %v8361
    %v9704 = vunpack.c.h.b16 %v8361
    %v9705 = vunpack.c.l.b16 %v8362
    %v9706 = vunpack.c.l.b16 %v8363
    %v9707 = vunpack.c.h.b16 %v8363
    %v9708 = vunpack.c.l.b16 %v8364
    %v9709 = vunpack.c.h.b16 %v8364
    %v9710 = vunpack.c.l.b16 %v8365
    %v9711 = vunpack.c.h.b16 %v8365
    %v9712 = vunpack.c.l.b16 %v8366
    %v9713 = vunpack.c.l.b16 %v8367
    %v9714 = vunpack.c.h.b16 %v8367
    %v9715 = vunpack.c.l.b16 %v8368
    %v9716 = vunpack.c.h.b16 %v8368
    %v9717 = vunpack.c.l.b16 %v8369
    %v9718 = vunpack.c.h.b16 %v8369
    %v9719 = vunpack.c.l.b16 %v8370
    %v9720 = vunpack.c.l.b16 %v8371
    %v9721 = vunpack.c.h.b16 %v8371
    %v9722 = vunpack.c.l.b16 %v8372
    %v9723 = vunpack.c.h.b16 %v8372
    %v9724 = vunpack.c.l.b16 %v8373
    %v9725 = vunpack.c.h.b16 %v8373
    %v9726 = vunpack.c.l.b16 %v8374
    %v9727 = vunpack.c.l.b16 %v8375
    %v9728 = vunpack.c.h.b16 %v8375
    %v9729 = vunpack.c.l.b16 %v8376
    %v9730 = vunpack.c.h.b16 %v8376
    %v9731 = vunpack.c.l.b16 %v8377
    %v9732 = vunpack.c.h.b16 %v8377
    %v9733 = vunpack.c.l.b16 %v8378
    %v9734 = vunpack.c.l.b16 %v8379
    %v9735 = vunpack.c.h.b16 %v8379
    %v9736 = vunpack.c.l.b16 %v8380
    %v9737 = vunpack.c.h.b16 %v8380
    %v9738 = vunpack.c.l.b16 %v8381
    %v9739 = vunpack.c.h.b16 %v8381
    %v9740 = vunpack.c.l.b16 %v8382
    %v9741 = vunpack.c.l.b16 %v8383
    %v9742 = vunpack.c.h.b16 %v8383
    %v9743 = vunpack.c.l.b16 %v8384
    %v9744 = vunpack.c.h.b16 %v8384
    %v9745 = vunpack.c.l.b16 %v8385
    %v9746 = vunpack.c.h.b16 %v8385
    %v9747 = vunpack.c.l.b16 %v8386
    %v9748 = vunpack.c.l.b16 %v8387
    %v9749 = vunpack.c.h.b16 %v8387
    %v9750 = vunpack.c.l.b16 %v8388
    %v9751 = vunpack.c.h.b16 %v8388
    %v9752 = vunpack.c.l.b16 %v8389
    %v9753 = vunpack.c.h.b16 %v8389
    %v9754 = vunpack.c.l.b16 %v8390
    %v9755 = vunpack.c.l.b16 %v8391
    %v9756 = vunpack.c.h.b16 %v8391
    %v9757 = vunpack.c.l.b16 %v8392
    %v9758 = vunpack.c.h.b16 %v8392
    %v9759 = vunpack.c.l.b16 %v8393
    %v9760 = vunpack.c.h.b16 %v8393
    %v9761 = vunpack.c.l.b16 %v8394
    %v9762 = vunpack.c.l.b16 %v8395
    %v9763 = vunpack.c.h.b16 %v8395
    %v9764 = vunpack.c.l.b16 %v8396
    %v9765 = vunpack.c.h.b16 %v8396
    %v9766 = vunpack.c.l.b16 %v8397
    %v9767 = vunpack.c.h.b16 %v8397
    %v9768 = vunpack.c.l.b16 %v8398
    %v9769 = vunpack.c.l.b16 %v8399
    %v9770 = vunpack.c.h.b16 %v8399
    %v9771 = vunpack.c.l.b16 %v8400
    %v9772 = vunpack.c.h.b16 %v8400
    %v9773 = vunpack.c.l.b16 %v8401
    %v9774 = vunpack.c.h.b16 %v8401
    %v9775 = vunpack.c.l.b16 %v8402
    %v9776 = vunpack.c.l.b16 %v8403
    %v9777 = vunpack.c.h.b16 %v8403
    %v9778 = vunpack.c.l.b16 %v8404
    %v9779 = vunpack.c.h.b16 %v8404
    %v9780 = vunpack.c.l.b16 %v8405
    %v9781 = vunpack.c.h.b16 %v8405
    %v9782 = vunpack.c.l.b16 %v8406
    %v9783 = vunpack.c.l.b16 %v8407
    %v9784 = vunpack.c.h.b16 %v8407
    %v9785 = vunpack.c.l.b16 %v8408
    %v9786 = vunpack.c.h.b16 %v8408
    %v9787 = vunpack.c.l.b16 %v8409
    %v9788 = vunpack.c.h.b16 %v8409
    %v9789 = vunpack.c.l.b16 %v8410
    %v9790 = vunpack.c.l.b16 %v8411
    %v9791 = vunpack.c.h.b16 %v8411
    %v9792 = vunpack.c.l.b16 %v8412
    %v9793 = vunpack.c.h.b16 %v8412
    %v9794 = vunpack.c.l.b16 %v8413
    %v9795 = vunpack.c.h.b16 %v8413
    %v9796 = vunpack.c.l.b16 %v8414
    %v9797 = vunpack.c.l.b16 %v8415
    %v9798 = vunpack.c.h.b16 %v8415
    %v9799 = vunpack.c.l.b16 %v8416
    %v9800 = vunpack.c.h.b16 %v8416
    %v9801 = vunpack.c.l.b16 %v8417
    %v9802 = vunpack.c.h.b16 %v8417
    %v9803 = vunpack.c.l.b16 %v8418
    %v9804 = vunpack.c.l.b16 %v8419
    %v9805 = vunpack.c.h.b16 %v8419
    %v9806 = vunpack.c.l.b16 %v8420
    %v9807 = vunpack.c.h.b16 %v8420
    %v9808 = vunpack.c.l.b16 %v8421
    %v9809 = vunpack.c.h.b16 %v8421
    %v9810 = vunpack.c.l.b16 %v8422
    %v9811 = vunpack.c.l.b16 %v8423
    %v9812 = vunpack.c.h.b16 %v8423
    %v9813 = vunpack.c.l.b16 %v8424
    %v9814 = vunpack.c.h.b16 %v8424
    %v9815 = vunpack.c.l.b16 %v8425
    %v9816 = vunpack.c.h.b16 %v8425
    %v9817 = vunpack.c.l.b16 %v8426
    %v9818 = vunpack.c.l.b16 %v8427
    %v9819 = vunpack.c.h.b16 %v8427
    %v9820 = vunpack.c.l.b16 %v8428
    %v9821 = vunpack.c.h.b16 %v8428
    %v9822 = vunpack.c.l.b16 %v8429
    %v9823 = vunpack.c.h.b16 %v8429
    %v9824 = vunpack.c.l.b16 %v8430
    %v9825 = vunpack.c.l.b16 %v8431
    %v9826 = vunpack.c.h.b16 %v8431
    %v9827 = vunpack.c.l.b16 %v8432
    %v9828 = vunpack.c.h.b16 %v8432
    %v9829 = vunpack.c.l.b16 %v8433
    %v9830 = vunpack.c.h.b16 %v8433
    %v9831 = vunpack.c.l.b16 %v8434
    %v9832 = vunpack.c.l.b16 %v8435
    %v9833 = vunpack.c.h.b16 %v8435
    %v9834 = vunpack.c.l.b16 %v8436
    %v9835 = vunpack.c.h.b16 %v8436
    %v9836 = vunpack.c.l.b16 %v8437
    %v9837 = vunpack.c.h.b16 %v8437
    %v9838 = vunpack.c.l.b16 %v8438
    %v9839 = vunpack.c.l.b16 %v8439
    %v9840 = vunpack.c.h.b16 %v8439
    %v9841 = vunpack.c.l.b16 %v8440
    %v9842 = vunpack.c.h.b16 %v8440
    %v9843 = vunpack.c.l.b16 %v8441
    %v9844 = vunpack.c.h.b16 %v8441
    %v9845 = vunpack.c.l.b16 %v8442
    %v9846 = vunpack.c.l.b16 %v8443
    %v9847 = vunpack.c.h.b16 %v8443
    %v9848 = vunpack.c.l.b16 %v8444
    %v9849 = vunpack.c.h.b16 %v8444
    %v9850 = vunpack.c.l.b16 %v8445
    %v9851 = vunpack.c.h.b16 %v8445
    %v9852 = vunpack.c.l.b16 %v8446
    %v9853 = vunpack.c.l.b16 %v8447
    %v9854 = vunpack.c.h.b16 %v8447
    %v9855 = vunpack.c.l.b16 %v8448
    %v9856 = vunpack.c.h.b16 %v8448
    %v9857 = vunpack.c.l.b16 %v8449
    %v9858 = vunpack.c.h.b16 %v8449
    %v9859 = vunpack.c.l.b16 %v8450
    %v9860 = vunpack.c.l.b16 %v8451
    %v9861 = vunpack.c.h.b16 %v8451
    %v9862 = vunpack.c.l.b16 %v8452
    %v9863 = vunpack.c.h.b16 %v8452
    %v9864 = vunpack.c.l.b16 %v8453
    %v9865 = vunpack.c.h.b16 %v8453
    %v9866 = vunpack.c.l.b16 %v8454
    %v9867 = vunpack.c.l.b16 %v8455
    %v9868 = vunpack.c.h.b16 %v8455
    %v9869 = vunpack.c.l.b16 %v8456
    %v9870 = vunpack.c.h.b16 %v8456
    %v9871 = vunpack.c.l.b16 %v8457
    %v9872 = vunpack.c.h.b16 %v8457
    %v9873 = vunpack.c.l.b16 %v8458
    %v9874 = vunpack.c.l.b16 %v8459
    %v9875 = vunpack.c.h.b16 %v8459
    %v9876 = vunpack.c.l.b16 %v8460
    %v9877 = vunpack.c.h.b16 %v8460
    %v9878 = vunpack.c.l.b16 %v8461
    %v9879 = vunpack.c.h.b16 %v8461
    %v9880 = vunpack.c.l.b16 %v8462
    %v9881 = vunpack.c.l.b16 %v8463
    %v9882 = vunpack.c.h.b16 %v8463
    %v9883 = vunpack.c.l.b16 %v8464
    %v9884 = vunpack.c.h.b16 %v8464
    %v9885 = vunpack.c.l.b16 %v8465
    %v9886 = vunpack.c.h.b16 %v8465
    %v9887 = vunpack.c.l.b16 %v8466
    %v9888 = vunpack.c.l.b16 %v8467
    %v9889 = vunpack.c.h.b16 %v8467
    %v9890 = vunpack.c.l.b16 %v8468
    %v9891 = vunpack.c.h.b16 %v8468
    %v9892 = vunpack.c.l.b16 %v8469
    %v9893 = vunpack.c.h.b16 %v8469
    %v9894 = vunpack.c.l.b16 %v8470
    %v9895 = vunpack.c.l.b16 %v8471
    %v9896 = vunpack.c.h.b16 %v8471
    %v9897 = vunpack.c.l.b16 %v8472
    %v9898 = vunpack.c.h.b16 %v8472
    %v9899 = vunpack.c.l.b16 %v8473
    %v9900 = vunpack.c.h.b16 %v8473
    %v9901 = vunpack.c.l.b16 %v8474
    %v9902 = vunpack.c.l.b16 %v8475
    %v9903 = vunpack.c.h.b16 %v8475
    %v9904 = vunpack.c.l.b16 %v8476
    %v9905 = vunpack.c.h.b16 %v8476
    %v9906 = vunpack.c.l.b16 %v8477
    %v9907 = vunpack.c.h.b16 %v8477
    %v9908 = vunpack.c.l.b16 %v8478
    %v9909 = vunpack.c.l.b16 %v8479
    %v9910 = vunpack.c.h.b16 %v8479
    %v9911 = vunpack.c.l.b16 %v8480
    %v9912 = vunpack.c.h.b16 %v8480
    %v9913 = vunpack.c.l.b16 %v8481
    %v9914 = vunpack.c.h.b16 %v8481
    %v9915 = vunpack.c.l.b16 %v8482
    %v9916 = vunpack.c.l.b16 %v8483
    %v9917 = vunpack.c.h.b16 %v8483
    %v9918 = vunpack.c.l.b16 %v8484
    %v9919 = vunpack.c.h.b16 %v8484
    %v9920 = vunpack.c.l.b16 %v8485
    %v9921 = vunpack.c.h.b16 %v8485
    %v9922 = vunpack.c.l.b16 %v8486
    %v9923 = vunpack.c.l.b16 %v8487
    %v9924 = vunpack.c.h.b16 %v8487
    %v9925 = vunpack.c.l.b16 %v8488
    %v9926 = vunpack.c.h.b16 %v8488
    %v9927 = vunpack.c.l.b16 %v8489
    %v9928 = vunpack.c.h.b16 %v8489
    %v9929 = vunpack.c.l.b16 %v8490
    %v9930 = vunpack.c.l.b16 %v8491
    %v9931 = vunpack.c.h.b16 %v8491
    %v9932 = vunpack.c.l.b16 %v8492
    %v9933 = vunpack.c.h.b16 %v8492
    %v9934 = vunpack.c.l.b16 %v8493
    %v9935 = vunpack.c.h.b16 %v8493
    %v9936 = vunpack.c.l.b16 %v8494
    %v9937 = vunpack.c.l.b16 %v8495
    %v9938 = vunpack.c.h.b16 %v8495
    %v9939 = vunpack.c.l.b16 %v8496
    %v9940 = vunpack.c.h.b16 %v8496
    %v9941 = vunpack.c.l.b16 %v8497
    %v9942 = vunpack.c.h.b16 %v8497
    %v9943 = vunpack.c.l.b16 %v8498
    %v9944 = vpack.c.b16 %v9055, %v9048
    %v9945 = vpack.c.b16 %v9056, %v9049
    %v9946 = vpack.c.b16 %v9057, %v9050
    %v9947 = vpack.c.b16 %v9058, %v9051
    %v9948 = vpack.c.b16 %v9059, %v9052
    %v9949 = vpack.c.b16 %v9060, %v9053
    %v9950 = vpack.c.b16 %v9061, %v9054
    %v9951 = vpack.c.b16 %v9069, %v9062
    %v9952 = vpack.c.b16 %v9070, %v9063
    %v9953 = vpack.c.b16 %v9071, %v9064
    %v9954 = vpack.c.b16 %v9072, %v9065
    %v9955 = vpack.c.b16 %v9073, %v9066
    %v9956 = vpack.c.b16 %v9074, %v9067
    %v9957 = vpack.c.b16 %v9075, %v9068
    %v9958 = vpack.c.b16 %v9083, %v9076
    %v9959 = vpack.c.b16 %v9084, %v9077
    %v9960 = vpack.c.b16 %v9085, %v9078
    %v9961 = vpack.c.b16 %v9086, %v9079
    %v9962 = vpack.c.b16 %v9087, %v9080
    %v9963 = vpack.c.b16 %v9088, %v9081
    %v9964 = vpack.c.b16 %v9089, %v9082
    %v9965 = vpack.c.b16 %v9097, %v9090
    %v9966 = vpack.c.b16 %v9098, %v9091
    %v9967 = vpack.c.b16 %v9099, %v9092
    %v9968 = vpack.c.b16 %v9100, %v9093
    %v9969 = vpack.c.b16 %v9101, %v9094
    %v9970 = vpack.c.b16 %v9102, %v9095
    %v9971 = vpack.c.b16 %v9103, %v9096
    %v9972 = vpack.c.b16 %v9111, %v9104
    %v9973 = vpack.c.b16 %v9112, %v9105
    %v9974 = vpack.c.b16 %v9113, %v9106
    %v9975 = vpack.c.b16 %v9114, %v9107
    %v9976 = vpack.c.b16 %v9115, %v9108
    %v9977 = vpack.c.b16 %v9116, %v9109
    %v9978 = vpack.c.b16 %v9117, %v9110
    %v9979 = vpack.c.b16 %v9125, %v9118
    %v9980 = vpack.c.b16 %v9126, %v9119
    %v9981 = vpack.c.b16 %v9127, %v9120
    %v9982 = vpack.c.b16 %v9128, %v9121
    %v9983 = vpack.c.b16 %v9129, %v9122
    %v9984 = vpack.c.b16 %v9130, %v9123
    %v9985 = vpack.c.b16 %v9131, %v9124
    %v9986 = vpack.c.b16 %v9139, %v9132
    %v9987 = vpack.c.b16 %v9140, %v9133
    %v9988 = vpack.c.b16 %v9141, %v9134
    %v9989 = vpack.c.b16 %v9142, %v9135
    %v9990 = vpack.c.b16 %v9143, %v9136
    %v9991 = vpack.c.b16 %v9144, %v9137
    %v9992 = vpack.c.b16 %v9145, %v9138
    %v9993 = vpack.c.b16 %v9153, %v9146
    %v9994 = vpack.c.b16 %v9154, %v9147
    %v9995 = vpack.c.b16 %v9155, %v9148
    %v9996 = vpack.c.b16 %v9156, %v9149
    %v9997 = vpack.c.b16 %v9157, %v9150
    %v9998 = vpack.c.b16 %v9158, %v9151
    %v9999 = vpack.c.b16 %v9159, %v9152
    %v10000 = vpack.c.b16 %v9167, %v9160
    %v10001 = vpack.c.b16 %v9168, %v9161
    %v10002 = vpack.c.b16 %v9169, %v9162
    %v10003 = vpack.c.b16 %v9170, %v9163
    %v10004 = vpack.c.b16 %v9171, %v9164
    %v10005 = vpack.c.b16 %v9172, %v9165
    %v10006 = vpack.c.b16 %v9173, %v9166
    %v10007 = vpack.c.b16 %v9181, %v9174
    %v10008 = vpack.c.b16 %v9182, %v9175
    %v10009 = vpack.c.b16 %v9183, %v9176
    %v10010 = vpack.c.b16 %v9184, %v9177
    %v10011 = vpack.c.b16 %v9185, %v9178
    %v10012 = vpack.c.b16 %v9186, %v9179
    %v10013 = vpack.c.b16 %v9187, %v9180
    %v10014 = vpack.c.b16 %v9195, %v9188
    %v10015 = vpack.c.b16 %v9196, %v9189
    %v10016 = vpack.c.b16 %v9197, %v9190
    %v10017 = vpack.c.b16 %v9198, %v9191
    %v10018 = vpack.c.b16 %v9199, %v9192
    %v10019 = vpack.c.b16 %v9200, %v9193
    %v10020 = vpack.c.b16 %v9201, %v9194
    %v10021 = vpack.c.b16 %v9209, %v9202
    %v10022 = vpack.c.b16 %v9210, %v9203
    %v10023 = vpack.c.b16 %v9211, %v9204
    %v10024 = vpack.c.b16 %v9212, %v9205
    %v10025 = vpack.c.b16 %v9213, %v9206
    %v10026 = vpack.c.b16 %v9214, %v9207
    %v10027 = vpack.c.b16 %v9215, %v9208
    %v10028 = vpack.c.b16 %v9223, %v9216
    %v10029 = vpack.c.b16 %v9224, %v9217
    %v10030 = vpack.c.b16 %v9225, %v9218
    %v10031 = vpack.c.b16 %v9226, %v9219
    %v10032 = vpack.c.b16 %v9227, %v9220
    %v10033 = vpack.c.b16 %v9228, %v9221
    %v10034 = vpack.c.b16 %v9229, %v9222
    %v10035 = vpack.c.b16 %v9237, %v9230
    %v10036 = vpack.c.b16 %v9238, %v9231
    %v10037 = vpack.c.b16 %v9239, %v9232
    %v10038 = vpack.c.b16 %v9240, %v9233
    %v10039 = vpack.c.b16 %v9241, %v9234
    %v10040 = vpack.c.b16 %v9242, %v9235
    %v10041 = vpack.c.b16 %v9243, %v9236
    %v10042 = vpack.c.b16 %v9251, %v9244
    %v10043 = vpack.c.b16 %v9252, %v9245
    %v10044 = vpack.c.b16 %v9253, %v9246
    %v10045 = vpack.c.b16 %v9254, %v9247
    %v10046 = vpack.c.b16 %v9255, %v9248
    %v10047 = vpack.c.b16 %v9256, %v9249
    %v10048 = vpack.c.b16 %v9257, %v9250
    %v10049 = vpack.c.b16 %v9265, %v9258
    %v10050 = vpack.c.b16 %v9266, %v9259
    %v10051 = vpack.c.b16 %v9267, %v9260
    %v10052 = vpack.c.b16 %v9268, %v9261
    %v10053 = vpack.c.b16 %v9269, %v9262
    %v10054 = vpack.c.b16 %v9270, %v9263
    %v10055 = vpack.c.b16 %v9271, %v9264
    %v10056 = vpack.c.b16 %v9279, %v9272
    %v10057 = vpack.c.b16 %v9280, %v9273
    %v10058 = vpack.c.b16 %v9281, %v9274
    %v10059 = vpack.c.b16 %v9282, %v9275
    %v10060 = vpack.c.b16 %v9283, %v9276
    %v10061 = vpack.c.b16 %v9284, %v9277
    %v10062 = vpack.c.b16 %v9285, %v9278
    %v10063 = vpack.c.b16 %v9293, %v9286
    %v10064 = vpack.c.b16 %v9294, %v9287
    %v10065 = vpack.c.b16 %v9295, %v9288
    %v10066 = vpack.c.b16 %v9296, %v9289
    %v10067 = vpack.c.b16 %v9297, %v9290
    %v10068 = vpack.c.b16 %v9298, %v9291
    %v10069 = vpack.c.b16 %v9299, %v9292
    %v10070 = vpack.c.b16 %v9307, %v9300
    %v10071 = vpack.c.b16 %v9308, %v9301
    %v10072 = vpack.c.b16 %v9309, %v9302
    %v10073 = vpack.c.b16 %v9310, %v9303
    %v10074 = vpack.c.b16 %v9311, %v9304
    %v10075 = vpack.c.b16 %v9312, %v9305
    %v10076 = vpack.c.b16 %v9313, %v9306
    %v10077 = vpack.c.b16 %v9321, %v9314
    %v10078 = vpack.c.b16 %v9322, %v9315
    %v10079 = vpack.c.b16 %v9323, %v9316
    %v10080 = vpack.c.b16 %v9324, %v9317
    %v10081 = vpack.c.b16 %v9325, %v9318
    %v10082 = vpack.c.b16 %v9326, %v9319
    %v10083 = vpack.c.b16 %v9327, %v9320
    %v10084 = vpack.c.b16 %v9335, %v9328
    %v10085 = vpack.c.b16 %v9336, %v9329
    %v10086 = vpack.c.b16 %v9337, %v9330
    %v10087 = vpack.c.b16 %v9338, %v9331
    %v10088 = vpack.c.b16 %v9339, %v9332
    %v10089 = vpack.c.b16 %v9340, %v9333
    %v10090 = vpack.c.b16 %v9341, %v9334
    %v10091 = vpack.c.b16 %v9349, %v9342
    %v10092 = vpack.c.b16 %v9350, %v9343
    %v10093 = vpack.c.b16 %v9351, %v9344
    %v10094 = vpack.c.b16 %v9352, %v9345
    %v10095 = vpack.c.b16 %v9353, %v9346
    %v10096 = vpack.c.b16 %v9354, %v9347
    %v10097 = vpack.c.b16 %v9355, %v9348
    %v10098 = vpack.c.b16 %v9363, %v9356
    %v10099 = vpack.c.b16 %v9364, %v9357
    %v10100 = vpack.c.b16 %v9365, %v9358
    %v10101 = vpack.c.b16 %v9366, %v9359
    %v10102 = vpack.c.b16 %v9367, %v9360
    %v10103 = vpack.c.b16 %v9368, %v9361
    %v10104 = vpack.c.b16 %v9369, %v9362
    %v10105 = vpack.c.b16 %v9377, %v9370
    %v10106 = vpack.c.b16 %v9378, %v9371
    %v10107 = vpack.c.b16 %v9379, %v9372
    %v10108 = vpack.c.b16 %v9380, %v9373
    %v10109 = vpack.c.b16 %v9381, %v9374
    %v10110 = vpack.c.b16 %v9382, %v9375
    %v10111 = vpack.c.b16 %v9383, %v9376
    %v10112 = vpack.c.b16 %v9391, %v9384
    %v10113 = vpack.c.b16 %v9392, %v9385
    %v10114 = vpack.c.b16 %v9393, %v9386
    %v10115 = vpack.c.b16 %v9394, %v9387
    %v10116 = vpack.c.b16 %v9395, %v9388
    %v10117 = vpack.c.b16 %v9396, %v9389
    %v10118 = vpack.c.b16 %v9397, %v9390
    %v10119 = vpack.c.b16 %v9405, %v9398
    %v10120 = vpack.c.b16 %v9406, %v9399
    %v10121 = vpack.c.b16 %v9407, %v9400
    %v10122 = vpack.c.b16 %v9408, %v9401
    %v10123 = vpack.c.b16 %v9409, %v9402
    %v10124 = vpack.c.b16 %v9410, %v9403
    %v10125 = vpack.c.b16 %v9411, %v9404
    %v10126 = vpack.c.b16 %v9419, %v9412
    %v10127 = vpack.c.b16 %v9420, %v9413
    %v10128 = vpack.c.b16 %v9421, %v9414
    %v10129 = vpack.c.b16 %v9422, %v9415
    %v10130 = vpack.c.b16 %v9423, %v9416
    %v10131 = vpack.c.b16 %v9424, %v9417
    %v10132 = vpack.c.b16 %v9425, %v9418
    %v10133 = vpack.c.b16 %v9433, %v9426
    %v10134 = vpack.c.b16 %v9434, %v9427
    %v10135 = vpack.c.b16 %v9435, %v9428
    %v10136 = vpack.c.b16 %v9436, %v9429
    %v10137 = vpack.c.b16 %v9437, %v9430
    %v10138 = vpack.c.b16 %v9438, %v9431
    %v10139 = vpack.c.b16 %v9439, %v9432
    %v10140 = vpack.c.b16 %v9447, %v9440
    %v10141 = vpack.c.b16 %v9448, %v9441
    %v10142 = vpack.c.b16 %v9449, %v9442
    %v10143 = vpack.c.b16 %v9450, %v9443
    %v10144 = vpack.c.b16 %v9451, %v9444
    %v10145 = vpack.c.b16 %v9452, %v9445
    %v10146 = vpack.c.b16 %v9453, %v9446
    %v10147 = vpack.c.b16 %v9461, %v9454
    %v10148 = vpack.c.b16 %v9462, %v9455
    %v10149 = vpack.c.b16 %v9463, %v9456
    %v10150 = vpack.c.b16 %v9464, %v9457
    %v10151 = vpack.c.b16 %v9465, %v9458
    %v10152 = vpack.c.b16 %v9466, %v9459
    %v10153 = vpack.c.b16 %v9467, %v9460
    %v10154 = vpack.c.b16 %v9475, %v9468
    %v10155 = vpack.c.b16 %v9476, %v9469
    %v10156 = vpack.c.b16 %v9477, %v9470
    %v10157 = vpack.c.b16 %v9478, %v9471
    %v10158 = vpack.c.b16 %v9479, %v9472
    %v10159 = vpack.c.b16 %v9480, %v9473
    %v10160 = vpack.c.b16 %v9481, %v9474
    %v10161 = vpack.c.b16 %v9489, %v9482
    %v10162 = vpack.c.b16 %v9490, %v9483
    %v10163 = vpack.c.b16 %v9491, %v9484
    %v10164 = vpack.c.b16 %v9492, %v9485
    %v10165 = vpack.c.b16 %v9493, %v9486
    %v10166 = vpack.c.b16 %v9494, %v9487
    %v10167 = vpack.c.b16 %v9495, %v9488
    %v10168 = vpack.c.b16 %v9503, %v9496
    %v10169 = vpack.c.b16 %v9504, %v9497
    %v10170 = vpack.c.b16 %v9505, %v9498
    %v10171 = vpack.c.b16 %v9506, %v9499
    %v10172 = vpack.c.b16 %v9507, %v9500
    %v10173 = vpack.c.b16 %v9508, %v9501
    %v10174 = vpack.c.b16 %v9509, %v9502
    %v10175 = vpack.c.b16 %v9517, %v9510
    %v10176 = vpack.c.b16 %v9518, %v9511
    %v10177 = vpack.c.b16 %v9519, %v9512
    %v10178 = vpack.c.b16 %v9520, %v9513
    %v10179 = vpack.c.b16 %v9521, %v9514
    %v10180 = vpack.c.b16 %v9522, %v9515
    %v10181 = vpack.c.b16 %v9523, %v9516
    %v10182 = vpack.c.b16 %v9531, %v9524
    %v10183 = vpack.c.b16 %v9532, %v9525
    %v10184 = vpack.c.b16 %v9533, %v9526
    %v10185 = vpack.c.b16 %v9534, %v9527
    %v10186 = vpack.c.b16 %v9535, %v9528
    %v10187 = vpack.c.b16 %v9536, %v9529
    %v10188 = vpack.c.b16 %v9537, %v9530
    %v10189 = vpack.c.b16 %v9545, %v9538
    %v10190 = vpack.c.b16 %v9546, %v9539
    %v10191 = vpack.c.b16 %v9547, %v9540
    %v10192 = vpack.c.b16 %v9548, %v9541
    %v10193 = vpack.c.b16 %v9549, %v9542
    %v10194 = vpack.c.b16 %v9550, %v9543
    %v10195 = vpack.c.b16 %v9551, %v9544
    %v10196 = vpack.c.b16 %v9559, %v9552
    %v10197 = vpack.c.b16 %v9560, %v9553
    %v10198 = vpack.c.b16 %v9561, %v9554
    %v10199 = vpack.c.b16 %v9562, %v9555
    %v10200 = vpack.c.b16 %v9563, %v9556
    %v10201 = vpack.c.b16 %v9564, %v9557
    %v10202 = vpack.c.b16 %v9565, %v9558
    %v10203 = vpack.c.b16 %v9573, %v9566
    %v10204 = vpack.c.b16 %v9574, %v9567
    %v10205 = vpack.c.b16 %v9575, %v9568
    %v10206 = vpack.c.b16 %v9576, %v9569
    %v10207 = vpack.c.b16 %v9577, %v9570
    %v10208 = vpack.c.b16 %v9578, %v9571
    %v10209 = vpack.c.b16 %v9579, %v9572
    %v10210 = vpack.c.b16 %v9587, %v9580
    %v10211 = vpack.c.b16 %v9588, %v9581
    %v10212 = vpack.c.b16 %v9589, %v9582
    %v10213 = vpack.c.b16 %v9590, %v9583
    %v10214 = vpack.c.b16 %v9591, %v9584
    %v10215 = vpack.c.b16 %v9592, %v9585
    %v10216 = vpack.c.b16 %v9593, %v9586
    %v10217 = vpack.c.b16 %v9601, %v9594
    %v10218 = vpack.c.b16 %v9602, %v9595
    %v10219 = vpack.c.b16 %v9603, %v9596
    %v10220 = vpack.c.b16 %v9604, %v9597
    %v10221 = vpack.c.b16 %v9605, %v9598
    %v10222 = vpack.c.b16 %v9606, %v9599
    %v10223 = vpack.c.b16 %v9607, %v9600
    %v10224 = vpack.c.b16 %v9615, %v9608
    %v10225 = vpack.c.b16 %v9616, %v9609
    %v10226 = vpack.c.b16 %v9617, %v9610
    %v10227 = vpack.c.b16 %v9618, %v9611
    %v10228 = vpack.c.b16 %v9619, %v9612
    %v10229 = vpack.c.b16 %v9620, %v9613
    %v10230 = vpack.c.b16 %v9621, %v9614
    %v10231 = vpack.c.b16 %v9629, %v9622
    %v10232 = vpack.c.b16 %v9630, %v9623
    %v10233 = vpack.c.b16 %v9631, %v9624
    %v10234 = vpack.c.b16 %v9632, %v9625
    %v10235 = vpack.c.b16 %v9633, %v9626
    %v10236 = vpack.c.b16 %v9634, %v9627
    %v10237 = vpack.c.b16 %v9635, %v9628
    %v10238 = vpack.c.b16 %v9643, %v9636
    %v10239 = vpack.c.b16 %v9644, %v9637
    %v10240 = vpack.c.b16 %v9645, %v9638
    %v10241 = vpack.c.b16 %v9646, %v9639
    %v10242 = vpack.c.b16 %v9647, %v9640
    %v10243 = vpack.c.b16 %v9648, %v9641
    %v10244 = vpack.c.b16 %v9649, %v9642
    %v10245 = vpack.c.b16 %v9657, %v9650
    %v10246 = vpack.c.b16 %v9658, %v9651
    %v10247 = vpack.c.b16 %v9659, %v9652
    %v10248 = vpack.c.b16 %v9660, %v9653
    %v10249 = vpack.c.b16 %v9661, %v9654
    %v10250 = vpack.c.b16 %v9662, %v9655
    %v10251 = vpack.c.b16 %v9663, %v9656
    %v10252 = vpack.c.b16 %v9671, %v9664
    %v10253 = vpack.c.b16 %v9672, %v9665
    %v10254 = vpack.c.b16 %v9673, %v9666
    %v10255 = vpack.c.b16 %v9674, %v9667
    %v10256 = vpack.c.b16 %v9675, %v9668
    %v10257 = vpack.c.b16 %v9676, %v9669
    %v10258 = vpack.c.b16 %v9677, %v9670
    %v10259 = vpack.c.b16 %v9685, %v9678
    %v10260 = vpack.c.b16 %v9686, %v9679
    %v10261 = vpack.c.b16 %v9687, %v9680
    %v10262 = vpack.c.b16 %v9688, %v9681
    %v10263 = vpack.c.b16 %v9689, %v9682
    %v10264 = vpack.c.b16 %v9690, %v9683
    %v10265 = vpack.c.b16 %v9691, %v9684
    %v10266 = vpack.c.b16 %v9699, %v9692
    %v10267 = vpack.c.b16 %v9700, %v9693
    %v10268 = vpack.c.b16 %v9701, %v9694
    %v10269 = vpack.c.b16 %v9702, %v9695
    %v10270 = vpack.c.b16 %v9703, %v9696
    %v10271 = vpack.c.b16 %v9704, %v9697
    %v10272 = vpack.c.b16 %v9705, %v9698
    %v10273 = vpack.c.b16 %v9713, %v9706
    %v10274 = vpack.c.b16 %v9714, %v9707
    %v10275 = vpack.c.b16 %v9715, %v9708
    %v10276 = vpack.c.b16 %v9716, %v9709
    %v10277 = vpack.c.b16 %v9717, %v9710
    %v10278 = vpack.c.b16 %v9718, %v9711
    %v10279 = vpack.c.b16 %v9719, %v9712
    %v10280 = vpack.c.b16 %v9727, %v9720
    %v10281 = vpack.c.b16 %v9728, %v9721
    %v10282 = vpack.c.b16 %v9729, %v9722
    %v10283 = vpack.c.b16 %v9730, %v9723
    %v10284 = vpack.c.b16 %v9731, %v9724
    %v10285 = vpack.c.b16 %v9732, %v9725
    %v10286 = vpack.c.b16 %v9733, %v9726
    %v10287 = vpack.c.b16 %v9741, %v9734
    %v10288 = vpack.c.b16 %v9742, %v9735
    %v10289 = vpack.c.b16 %v9743, %v9736
    %v10290 = vpack.c.b16 %v9744, %v9737
    %v10291 = vpack.c.b16 %v9745, %v9738
    %v10292 = vpack.c.b16 %v9746, %v9739
    %v10293 = vpack.c.b16 %v9747, %v9740
    %v10294 = vpack.c.b16 %v9755, %v9748
    %v10295 = vpack.c.b16 %v9756, %v9749
    %v10296 = vpack.c.b16 %v9757, %v9750
    %v10297 = vpack.c.b16 %v9758, %v9751
    %v10298 = vpack.c.b16 %v9759, %v9752
    %v10299 = vpack.c.b16 %v9760, %v9753
    %v10300 = vpack.c.b16 %v9761, %v9754
    %v10301 = vpack.c.b16 %v9769, %v9762
    %v10302 = vpack.c.b16 %v9770, %v9763
    %v10303 = vpack.c.b16 %v9771, %v9764
    %v10304 = vpack.c.b16 %v9772, %v9765
    %v10305 = vpack.c.b16 %v9773, %v9766
    %v10306 = vpack.c.b16 %v9774, %v9767
    %v10307 = vpack.c.b16 %v9775, %v9768
    %v10308 = vpack.c.b16 %v9783, %v9776
    %v10309 = vpack.c.b16 %v9784, %v9777
    %v10310 = vpack.c.b16 %v9785, %v9778
    %v10311 = vpack.c.b16 %v9786, %v9779
    %v10312 = vpack.c.b16 %v9787, %v9780
    %v10313 = vpack.c.b16 %v9788, %v9781
    %v10314 = vpack.c.b16 %v9789, %v9782
    %v10315 = vpack.c.b16 %v9797, %v9790
    %v10316 = vpack.c.b16 %v9798, %v9791
    %v10317 = vpack.c.b16 %v9799, %v9792
    %v10318 = vpack.c.b16 %v9800, %v9793
    %v10319 = vpack.c.b16 %v9801, %v9794
    %v10320 = vpack.c.b16 %v9802, %v9795
    %v10321 = vpack.c.b16 %v9803, %v9796
    %v10322 = vpack.c.b16 %v9811, %v9804
    %v10323 = vpack.c.b16 %v9812, %v9805
    %v10324 = vpack.c.b16 %v9813, %v9806
    %v10325 = vpack.c.b16 %v9814, %v9807
    %v10326 = vpack.c.b16 %v9815, %v9808
    %v10327 = vpack.c.b16 %v9816, %v9809
    %v10328 = vpack.c.b16 %v9817, %v9810
    %v10329 = vpack.c.b16 %v9825, %v9818
    %v10330 = vpack.c.b16 %v9826, %v9819
    %v10331 = vpack.c.b16 %v9827, %v9820
    %v10332 = vpack.c.b16 %v9828, %v9821
    %v10333 = vpack.c.b16 %v9829, %v9822
    %v10334 = vpack.c.b16 %v9830, %v9823
    %v10335 = vpack.c.b16 %v9831, %v9824
    %v10336 = vpack.c.b16 %v9839, %v9832
    %v10337 = vpack.c.b16 %v9840, %v9833
    %v10338 = vpack.c.b16 %v9841, %v9834
    %v10339 = vpack.c.b16 %v9842, %v9835
    %v10340 = vpack.c.b16 %v9843, %v9836
    %v10341 = vpack.c.b16 %v9844, %v9837
    %v10342 = vpack.c.b16 %v9845, %v9838
    %v10343 = vpack.c.b16 %v9853, %v9846
    %v10344 = vpack.c.b16 %v9854, %v9847
    %v10345 = vpack.c.b16 %v9855, %v9848
    %v10346 = vpack.c.b16 %v9856, %v9849
    %v10347 = vpack.c.b16 %v9857, %v9850
    %v10348 = vpack.c.b16 %v9858, %v9851
    %v10349 = vpack.c.b16 %v9859, %v9852
    %v10350 = vpack.c.b16 %v9867, %v9860
    %v10351 = vpack.c.b16 %v9868, %v9861
    %v10352 = vpack.c.b16 %v9869, %v9862
    %v10353 = vpack.c.b16 %v9870, %v9863
    %v10354 = vpack.c.b16 %v9871, %v9864
    %v10355 = vpack.c.b16 %v9872, %v9865
    %v10356 = vpack.c.b16 %v9873, %v9866
    %v10357 = vpack.c.b16 %v9881, %v9874
    %v10358 = vpack.c.b16 %v9882, %v9875
    %v10359 = vpack.c.b16 %v9883, %v9876
    %v10360 = vpack.c.b16 %v9884, %v9877
    %v10361 = vpack.c.b16 %v9885, %v9878
    %v10362 = vpack.c.b16 %v9886, %v9879
    %v10363 = vpack.c.b16 %v9887, %v9880
    %v10364 = vpack.c.b16 %v9895, %v9888
    %v10365 = vpack.c.b16 %v9896, %v9889
    %v10366 = vpack.c.b16 %v9897, %v9890
    %v10367 = vpack.c.b16 %v9898, %v9891
    %v10368 = vpack.c.b16 %v9899, %v9892
    %v10369 = vpack.c.b16 %v9900, %v9893
    %v10370 = vpack.c.b16 %v9901, %v9894
    %v10371 = vpack.c.b16 %v9909, %v9902
    %v10372 = vpack.c.b16 %v9910, %v9903
    %v10373 = vpack.c.b16 %v9911, %v9904
    %v10374 = vpack.c.b16 %v9912, %v9905
    %v10375 = vpack.c.b16 %v9913, %v9906
    %v10376 = vpack.c.b16 %v9914, %v9907
    %v10377 = vpack.c.b16 %v9915, %v9908
    %v10378 = vpack.c.b16 %v9923, %v9916
    %v10379 = vpack.c.b16 %v9924, %v9917
    %v10380 = vpack.c.b16 %v9925, %v9918
    %v10381 = vpack.c.b16 %v9926, %v9919
    %v10382 = vpack.c.b16 %v9927, %v9920
    %v10383 = vpack.c.b16 %v9928, %v9921
    %v10384 = vpack.c.b16 %v9929, %v9922
    %v10385 = vpack.c.b16 %v9937, %v9930
    %v10386 = vpack.c.b16 %v9938, %v9931
    %v10387 = vpack.c.b16 %v9939, %v9932
    %v10388 = vpack.c.b16 %v9940, %v9933
    %v10389 = vpack.c.b16 %v9941, %v9934
    %v10390 = vpack.c.b16 %v9942, %v9935
    %v10391 = vpack.c.b16 %v9943, %v9936
    %10840 = vmatprep.subr.bf16.mxu0 %v9945
    %10841 = vmatpush1.bf16.msra.mxu0 %v9944
    %10842 = vmatprep.subr.bf16.mxu0 %v9952
    %10843 = vmatpush1.bf16.msra.mxu0 %v9951
    %10844 = vmatprep.subr.bf16.mxu0 %v9959
    %10845 = vmatpush1.bf16.msra.mxu0 %v9958
    %10846 = vmatprep.subr.bf16.mxu0 %v9966
    %10847 = vmatpush1.bf16.msra.mxu0 %v9965
    %10848 = vmatprep.subr.bf16.mxu0 %v9973
    %10849 = vmatpush1.bf16.msra.mxu0 %v9972
    %10850 = vmatprep.subr.bf16.mxu0 %v9980
    %10851 = vmatpush1.bf16.msra.mxu0 %v9979
    %10852 = vmatprep.subr.bf16.mxu0 %v9987
    %10853 = vmatpush1.bf16.msra.mxu0 %v9986
    %10854 = vmatprep.subr.bf16.mxu0 %v9994
    %10855 = vmatpush1.bf16.msra.mxu0 %v9993
    %10856 = vmatprep.subr.bf16.mxu0 %v10001
    %10857 = vmatpush1.bf16.msra.mxu0 %v10000
    %10858 = vmatprep.subr.bf16.mxu0 %v10008
    %10859 = vmatpush1.bf16.msra.mxu0 %v10007
    %10860 = vmatprep.subr.bf16.mxu0 %v10015
    %10861 = vmatpush1.bf16.msra.mxu0 %v10014
    %10862 = vmatprep.subr.bf16.mxu0 %v10022
    %10863 = vmatpush1.bf16.msra.mxu0 %v10021
    %10864 = vmatprep.subr.bf16.mxu0 %v10029
    %10865 = vmatpush1.bf16.msra.mxu0 %v10028
    %10866 = vmatprep.subr.bf16.mxu0 %v10036
    %10867 = vmatpush1.bf16.msra.mxu0 %v10035
    %10868 = vmatprep.subr.bf16.mxu0 %v10043
    %10869 = vmatpush1.bf16.msra.mxu0 %v10042
    %10870 = vmatprep.subr.bf16.mxu0 %v10050
    %10871 = vmatpush1.bf16.msra.mxu0 %v10049
    %10872 = vmatprep.mubr.bf16.mxu0 %v7924
    %10873 = vmatmul.mubr.bf16.gmra.mrb[0].mxu0 %v7923
    %v10874 = vpop.f32.mrb[0].mxu0
    %v10875 = vadd.f32 %v8504, %v10874
    %v10876 = vpop.f32.mrb[0].mxu0
    %v10877 = vadd.f32 %v8508, %v10876
    %v10878 = vpop.f32.mrb[0].mxu0
    %v10879 = vadd.f32 %v8504, %v10878
    %v10880 = vpop.f32.mrb[0].mxu0
    %v10881 = vadd.f32 %v8508, %v10880
    %10882 = vmatprep.mubr.bf16.mxu0 %v7932
    %10883 = vmatmul.mubr.bf16.gmra.mrb[0].mxu0 %v7931
    %v10884 = vpop.f32.mrb[0].mxu0
    %v10885 = vadd.f32 %v8504, %v10884
    %v10886 = vpop.f32.mrb[0].mxu0
    %v10887 = vadd.f32 %v8508, %v10886
    %v10888 = vpop.f32.mrb[0].mxu0
    %v10889 = vadd.f32 %v8504, %v10888
    %v10890 = vpop.f32.mrb[0].mxu0
    %v10891 = vadd.f32 %v8508, %v10890
    %10892 = vmatprep.mubr.bf16.mxu0 %v7940
    %10893 = vmatmul.mubr.bf16.gmra.mrb[0].mxu0 %v7939
    %v10894 = vpop.f32.mrb[0].mxu0
    %v10895 = vadd.f32 %v8504, %v10894
    %v10896 = vpop.f32.mrb[0].mxu0
    %v10897 = vadd.f32 %v8508, %v10896
    %v10898 = vpop.f32.mrb[0].mxu0
    %v10899 = vadd.f32 %v8504, %v10898
    %v10900 = vpop.f32.mrb[0].mxu0
    %v10901 = vadd.f32 %v8508, %v10900
    %10902 = vmatprep.mubr.bf16.mxu0 %v7948
    %10903 = vmatmul.mubr.bf16.gmra.mrb[0].mxu0 %v7947
    %v10904 = vpop.f32.mrb[0].mxu0
    %v10905 = vadd.f32 %v8504, %v10904
    %v10906 = vpop.f32.mrb[0].mxu0
    %v10907 = vadd.f32 %v8508, %v10906
    %v10908 = vpop.f32.mrb[0].mxu0
    %v10909 = vadd.f32 %v8504, %v10908
    %v10910 = vpop.f32.mrb[0].mxu0
    %v10911 = vadd.f32 %v8508, %v10910
    %10912 = vmatprep.mubr.bf16.mxu0 %v7956
    %10913 = vmatmul.mubr.bf16.gmra.mrb[0].mxu0 %v7955
    %v10914 = vpop.f32.mrb[0].mxu0
    %v10915 = vadd.f32 %v8504, %v10914
    %v10916 = vpop.f32.mrb[0].mxu0
    %v10917 = vadd.f32 %v8508, %v10916
    %v10918 = vpop.f32.mrb[0].mxu0
    %v10919 = vadd.f32 %v8504, %v10918
    %v10920 = vpop.f32.mrb[0].mxu0
    %v10921 = vadd.f32 %v8508, %v10920
    %10922 = vmatprep.mubr.bf16.mxu0 %v7964
    %10923 = vmatmul.mubr.bf16.gmra.mrb[0].mxu0 %v7963
    %v10924 = vpop.f32.mrb[0].mxu0
    %v10925 = vadd.f32 %v8504, %v10924
    %v10926 = vpop.f32.mrb[0].mxu0
    %v10927 = vadd.f32 %v8508, %v10926
    %v10928 = vpop.f32.mrb[0].mxu0
    %v10929 = vadd.f32 %v8504, %v10928
    %v10930 = vpop.f32.mrb[0].mxu0
    %v10931 = vadd.f32 %v8508, %v10930
    %10932 = vmatprep.mubr.bf16.mxu0 %v7972
    %10933 = vmatmul.mubr.bf16.gmra.mrb[0].mxu0 %v7971
    %v10934 = vpop.f32.mrb[0].mxu0
    %v10935 = vadd.f32 %v8504, %v10934
    %v10936 = vpop.f32.mrb[0].mxu0
    %v10937 = vadd.f32 %v8508, %v10936
    %v10938 = vpop.f32.mrb[0].mxu0
    %v10939 = vadd.f32 %v8504, %v10938
    %v10940 = vpop.f32.mrb[0].mxu0
    %v10941 = vadd.f32 %v8508, %v10940
    %10942 = vmatprep.mubr.bf16.mxu0 %v7980
    %10943 = vmatmul.mubr.bf16.gmra.mrb[0].mxu0 %v7979
    %v10944 = vpop.f32.mrb[0].mxu0
    %v10945 = vadd.f32 %v8504, %v10944
    %v10946 = vpop.f32.mrb[0].mxu0
    %v10947 = vadd.f32 %v8508, %v10946
    %v10948 = vpop.f32.mrb[0].mxu0
    %v10949 = vadd.f32 %v8504, %v10948
    %v10950 = vpop.f32.mrb[0].mxu0
    %v10951 = vadd.f32 %v8508, %v10950
    %10952 = vdwg.mxu0
    %10953 = vmatprep.subr.bf16.mxu0 %v10057
    %10954 = vmatpush1.bf16.msra.mxu0 %v10056
    %10955 = vmatprep.subr.bf16.mxu0 %v10064
    %10956 = vmatpush1.bf16.msra.mxu0 %v10063
    %10957 = vmatprep.subr.bf16.mxu0 %v10071
    %10958 = vmatpush1.bf16.msra.mxu0 %v10070
    %10959 = vmatprep.subr.bf16.mxu0 %v10078
    %10960 = vmatpush1.bf16.msra.mxu0 %v10077
    %10961 = vmatprep.subr.bf16.mxu0 %v10085
    %10962 = vmatpush1.bf16.msra.mxu0 %v10084
    %10963 = vmatprep.subr.bf16.mxu0 %v10092
    %10964 = vmatpush1.bf16.msra.mxu0 %v10091
    %10965 = vmatprep.subr.bf16.mxu0 %v10099
    %10966 = vmatpush1.bf16.msra.mxu0 %v10098
    %10967 = vmatprep.subr.bf16.mxu0 %v10106
    %10968 = vmatpush1.bf16.msra.mxu0 %v10105
    %10969 = vmatprep.subr.bf16.mxu0 %v10113
    %10970 = vmatpush1.bf16.msra.mxu0 %v10112
    %10971 = vmatprep.subr.bf16.mxu0 %v10120
    %10972 = vmatpush1.bf16.msra.mxu0 %v10119
    %10973 = vmatprep.subr.bf16.mxu0 %v10127
    %10974 = vmatpush1.bf16.msra.mxu0 %v10126
    %10975 = vmatprep.subr.bf16.mxu0 %v10134
    %10976 = vmatpush1.bf16.msra.mxu0 %v10133
    %10977 = vmatprep.subr.bf16.mxu0 %v10141
    %10978 = vmatpush1.bf16.msra.mxu0 %v10140
    %10979 = vmatprep.subr.bf16.mxu0 %v10148
    %10980 = vmatpush1.bf16.msra.mxu0 %v10147
    %10981 = vmatprep.subr.bf16.mxu0 %v10155
    %10982 = vmatpush1.bf16.msra.mxu0 %v10154
    %10983 = vmatprep.subr.bf16.mxu0 %v10162
    %10984 = vmatpush1.bf16.msra.mxu0 %v10161
    %10985 = vmatprep.mubr.bf16.mxu0 %v7926
    %10986 = vmatmul.mubr.bf16.gmra.mrb[0].mxu0 %v7925
    %v10987 = vpop.f32.mrb[0].mxu0
    %v10988 = vadd.f32 %v10875, %v10987
    %v10989 = vpop.f32.mrb[0].mxu0
    %v10990 = vadd.f32 %v10877, %v10989
    %v10991 = vpop.f32.mrb[0].mxu0
    %v10992 = vadd.f32 %v10879, %v10991
    %v10993 = vpop.f32.mrb[0].mxu0
    %v10994 = vadd.f32 %v10881, %v10993
    %10995 = vmatprep.mubr.bf16.mxu0 %v7934
    %10996 = vmatmul.mubr.bf16.gmra.mrb[0].mxu0 %v7933
    %v10997 = vpop.f32.mrb[0].mxu0
    %v10998 = vadd.f32 %v10885, %v10997
    %v10999 = vpop.f32.mrb[0].mxu0
    %v11000 = vadd.f32 %v10887, %v10999
    %v11001 = vpop.f32.mrb[0].mxu0
    %v11002 = vadd.f32 %v10889, %v11001
    %v11003 = vpop.f32.mrb[0].mxu0
    %v11004 = vadd.f32 %v10891, %v11003
    %11005 = vmatprep.mubr.bf16.mxu0 %v7942
    %11006 = vmatmul.mubr.bf16.gmra.mrb[0].mxu0 %v7941
    %v11007 = vpop.f32.mrb[0].mxu0
    %v11008 = vadd.f32 %v10895, %v11007
    %v11009 = vpop.f32.mrb[0].mxu0
    %v11010 = vadd.f32 %v10897, %v11009
    %v11011 = vpop.f32.mrb[0].mxu0
    %v11012 = vadd.f32 %v10899, %v11011
    %v11013 = vpop.f32.mrb[0].mxu0
    %v11014 = vadd.f32 %v10901, %v11013
    %11015 = vmatprep.mubr.bf16.mxu0 %v7950
    %11016 = vmatmul.mubr.bf16.gmra.mrb[0].mxu0 %v7949
    %v11017 = vpop.f32.mrb[0].mxu0
    %v11018 = vadd.f32 %v10905, %v11017
    %v11019 = vpop.f32.mrb[0].mxu0
    %v11020 = vadd.f32 %v10907, %v11019
    %v11021 = vpop.f32.mrb[0].mxu0
    %v11022 = vadd.f32 %v10909, %v11021
    %v11023 = vpop.f32.mrb[0].mxu0
    %v11024 = vadd.f32 %v10911, %v11023
    %11025 = vmatprep.mubr.bf16.mxu0 %v7958
    %11026 = vmatmul.mubr.bf16.gmra.mrb[0].mxu0 %v7957
    %v11027 = vpop.f32.mrb[0].mxu0
    %v11028 = vadd.f32 %v10915, %v11027
    %v11029 = vpop.f32.mrb[0].mxu0
    %v11030 = vadd.f32 %v10917, %v11029
    %v11031 = vpop.f32.mrb[0].mxu0
    %v11032 = vadd.f32 %v10919, %v11031
    %v11033 = vpop.f32.mrb[0].mxu0
    %v11034 = vadd.f32 %v10921, %v11033
    %11035 = vmatprep.mubr.bf16.mxu0 %v7966
    %11036 = vmatmul.mubr.bf16.gmra.mrb[0].mxu0 %v7965
    %v11037 = vpop.f32.mrb[0].mxu0
    %v11038 = vadd.f32 %v10925, %v11037
    %v11039 = vpop.f32.mrb[0].mxu0
    %v11040 = vadd.f32 %v10927, %v11039
    %v11041 = vpop.f32.mrb[0].mxu0
    %v11042 = vadd.f32 %v10929, %v11041
    %v11043 = vpop.f32.mrb[0].mxu0
    %v11044 = vadd.f32 %v10931, %v11043
    %11045 = vmatprep.mubr.bf16.mxu0 %v7974
    %11046 = vmatmul.mubr.bf16.gmra.mrb[0].mxu0 %v7973
    %v11047 = vpop.f32.mrb[0].mxu0
    %v11048 = vadd.f32 %v10935, %v11047
    %v11049 = vpop.f32.mrb[0].mxu0
    %v11050 = vadd.f32 %v10937, %v11049
    %v11051 = vpop.f32.mrb[0].mxu0
    %v11052 = vadd.f32 %v10939, %v11051
    %v11053 = vpop.f32.mrb[0].mxu0
    %v11054 = vadd.f32 %v10941, %v11053
    %11055 = vmatprep.mubr.bf16.mxu0 %v7982
    %11056 = vmatmul.mubr.bf16.gmra.mrb[0].mxu0 %v7981
    %v11057 = vpop.f32.mrb[0].mxu0
    %v11058 = vadd.f32 %v10945, %v11057
    %v11059 = vpop.f32.mrb[0].mxu0
    %v11060 = vadd.f32 %v10947, %v11059
    %v11061 = vpop.f32.mrb[0].mxu0
    %v11062 = vadd.f32 %v10949, %v11061
    %v11063 = vpop.f32.mrb[0].mxu0
    %v11064 = vadd.f32 %v10951, %v11063
    %11065 = vdwg.mxu0
    %11066 = vmatprep.subr.bf16.mxu0 %v10169
    %11067 = vmatpush1.bf16.msra.mxu0 %v10168
    %11068 = vmatprep.subr.bf16.mxu0 %v10176
    %11069 = vmatpush1.bf16.msra.mxu0 %v10175
    %11070 = vmatprep.subr.bf16.mxu0 %v10183
    %11071 = vmatpush1.bf16.msra.mxu0 %v10182
    %11072 = vmatprep.subr.bf16.mxu0 %v10190
    %11073 = vmatpush1.bf16.msra.mxu0 %v10189
    %11074 = vmatprep.subr.bf16.mxu0 %v10197
    %11075 = vmatpush1.bf16.msra.mxu0 %v10196
    %11076 = vmatprep.subr.bf16.mxu0 %v10204
    %11077 = vmatpush1.bf16.msra.mxu0 %v10203
    %11078 = vmatprep.subr.bf16.mxu0 %v10211
    %11079 = vmatpush1.bf16.msra.mxu0 %v10210
    %11080 = vmatprep.subr.bf16.mxu0 %v10218
    %11081 = vmatpush1.bf16.msra.mxu0 %v10217
    %11082 = vmatprep.subr.bf16.mxu0 %v10225
    %11083 = vmatpush1.bf16.msra.mxu0 %v10224
    %11084 = vmatprep.subr.bf16.mxu0 %v10232
    %11085 = vmatpush1.bf16.msra.mxu0 %v10231
    %11086 = vmatprep.subr.bf16.mxu0 %v10239
    %11087 = vmatpush1.bf16.msra.mxu0 %v10238
    %11088 = vmatprep.subr.bf16.mxu0 %v10246
    %11089 = vmatpush1.bf16.msra.mxu0 %v10245
    %11090 = vmatprep.subr.bf16.mxu0 %v10253
    %11091 = vmatpush1.bf16.msra.mxu0 %v10252
    %11092 = vmatprep.subr.bf16.mxu0 %v10260
    %11093 = vmatpush1.bf16.msra.mxu0 %v10259
    %11094 = vmatprep.subr.bf16.mxu0 %v10267
    %11095 = vmatpush1.bf16.msra.mxu0 %v10266
    %11096 = vmatprep.subr.bf16.mxu0 %v10274
    %11097 = vmatpush1.bf16.msra.mxu0 %v10273
    %11098 = vmatprep.mubr.bf16.mxu0 %v7928
    %11099 = vmatmul.mubr.bf16.gmra.mrb[0].mxu0 %v7927
    %v11100 = vpop.f32.mrb[0].mxu0
    %v11101 = vadd.f32 %v10988, %v11100
    %v11102 = vpop.f32.mrb[0].mxu0
    %v11103 = vadd.f32 %v10990, %v11102
    %v11104 = vpop.f32.mrb[0].mxu0
    %v11105 = vadd.f32 %v10992, %v11104
    %v11106 = vpop.f32.mrb[0].mxu0
    %v11107 = vadd.f32 %v10994, %v11106
    %11108 = vmatprep.mubr.bf16.mxu0 %v7936
    %11109 = vmatmul.mubr.bf16.gmra.mrb[0].mxu0 %v7935
    %v11110 = vpop.f32.mrb[0].mxu0
    %v11111 = vadd.f32 %v10998, %v11110
    %v11112 = vpop.f32.mrb[0].mxu0
    %v11113 = vadd.f32 %v11000, %v11112
    %v11114 = vpop.f32.mrb[0].mxu0
    %v11115 = vadd.f32 %v11002, %v11114
    %v11116 = vpop.f32.mrb[0].mxu0
    %v11117 = vadd.f32 %v11004, %v11116
    %11118 = vmatprep.mubr.bf16.mxu0 %v7944
    %11119 = vmatmul.mubr.bf16.gmra.mrb[0].mxu0 %v7943
    %v11120 = vpop.f32.mrb[0].mxu0
    %v11121 = vadd.f32 %v11008, %v11120
    %v11122 = vpop.f32.mrb[0].mxu0
    %v11123 = vadd.f32 %v11010, %v11122
    %v11124 = vpop.f32.mrb[0].mxu0
    %v11125 = vadd.f32 %v11012, %v11124
    %v11126 = vpop.f32.mrb[0].mxu0
    %v11127 = vadd.f32 %v11014, %v11126
    %11128 = vmatprep.mubr.bf16.mxu0 %v7952
    %11129 = vmatmul.mubr.bf16.gmra.mrb[0].mxu0 %v7951
    %v11130 = vpop.f32.mrb[0].mxu0
    %v11131 = vadd.f32 %v11018, %v11130
    %v11132 = vpop.f32.mrb[0].mxu0
    %v11133 = vadd.f32 %v11020, %v11132
    %v11134 = vpop.f32.mrb[0].mxu0
    %v11135 = vadd.f32 %v11022, %v11134
    %v11136 = vpop.f32.mrb[0].mxu0
    %v11137 = vadd.f32 %v11024, %v11136
    %11138 = vmatprep.mubr.bf16.mxu0 %v7960
    %11139 = vmatmul.mubr.bf16.gmra.mrb[0].mxu0 %v7959
    %v11140 = vpop.f32.mrb[0].mxu0
    %v11141 = vadd.f32 %v11028, %v11140
    %v11142 = vpop.f32.mrb[0].mxu0
    %v11143 = vadd.f32 %v11030, %v11142
    %v11144 = vpop.f32.mrb[0].mxu0
    %v11145 = vadd.f32 %v11032, %v11144
    %v11146 = vpop.f32.mrb[0].mxu0
    %v11147 = vadd.f32 %v11034, %v11146
    %11148 = vmatprep.mubr.bf16.mxu0 %v7968
    %11149 = vmatmul.mubr.bf16.gmra.mrb[0].mxu0 %v7967
    %v11150 = vpop.f32.mrb[0].mxu0
    %v11151 = vadd.f32 %v11038, %v11150
    %v11152 = vpop.f32.mrb[0].mxu0
    %v11153 = vadd.f32 %v11040, %v11152
    %v11154 = vpop.f32.mrb[0].mxu0
    %v11155 = vadd.f32 %v11042, %v11154
    %v11156 = vpop.f32.mrb[0].mxu0
    %v11157 = vadd.f32 %v11044, %v11156
    %11158 = vmatprep.mubr.bf16.mxu0 %v7976
    %11159 = vmatmul.mubr.bf16.gmra.mrb[0].mxu0 %v7975
    %v11160 = vpop.f32.mrb[0].mxu0
    %v11161 = vadd.f32 %v11048, %v11160
    %v11162 = vpop.f32.mrb[0].mxu0
    %v11163 = vadd.f32 %v11050, %v11162
    %v11164 = vpop.f32.mrb[0].mxu0
    %v11165 = vadd.f32 %v11052, %v11164
    %v11166 = vpop.f32.mrb[0].mxu0
    %v11167 = vadd.f32 %v11054, %v11166
    %11168 = vmatprep.mubr.bf16.mxu0 %v7984
    %11169 = vmatmul.mubr.bf16.gmra.mrb[0].mxu0 %v7983
    %v11170 = vpop.f32.mrb[0].mxu0
    %v11171 = vadd.f32 %v11058, %v11170
    %v11172 = vpop.f32.mrb[0].mxu0
    %v11173 = vadd.f32 %v11060, %v11172
    %v11174 = vpop.f32.mrb[0].mxu0
    %v11175 = vadd.f32 %v11062, %v11174
    %v11176 = vpop.f32.mrb[0].mxu0
    %v11177 = vadd.f32 %v11064, %v11176
    %11178 = vdwg.mxu0
    %11179 = vmatprep.subr.bf16.mxu0 %v10281
    %11180 = vmatpush1.bf16.msra.mxu0 %v10280
    %11181 = vmatprep.subr.bf16.mxu0 %v10288
    %11182 = vmatpush1.bf16.msra.mxu0 %v10287
    %11183 = vmatprep.subr.bf16.mxu0 %v10295
    %11184 = vmatpush1.bf16.msra.mxu0 %v10294
    %11185 = vmatprep.subr.bf16.mxu0 %v10302
    %11186 = vmatpush1.bf16.msra.mxu0 %v10301
    %11187 = vmatprep.subr.bf16.mxu0 %v10309
    %11188 = vmatpush1.bf16.msra.mxu0 %v10308
    %11189 = vmatprep.subr.bf16.mxu0 %v10316
    %11190 = vmatpush1.bf16.msra.mxu0 %v10315
    %11191 = vmatprep.subr.bf16.mxu0 %v10323
    %11192 = vmatpush1.bf16.msra.mxu0 %v10322
    %11193 = vmatprep.subr.bf16.mxu0 %v10330
    %11194 = vmatpush1.bf16.msra.mxu0 %v10329
    %11195 = vmatprep.subr.bf16.mxu0 %v10337
    %11196 = vmatpush1.bf16.msra.mxu0 %v10336
    %11197 = vmatprep.subr.bf16.mxu0 %v10344
    %11198 = vmatpush1.bf16.msra.mxu0 %v10343
    %11199 = vmatprep.subr.bf16.mxu0 %v10351
    %11200 = vmatpush1.bf16.msra.mxu0 %v10350
    %11201 = vmatprep.subr.bf16.mxu0 %v10358
    %11202 = vmatpush1.bf16.msra.mxu0 %v10357
    %11203 = vmatprep.subr.bf16.mxu0 %v10365
    %11204 = vmatpush1.bf16.msra.mxu0 %v10364
    %11205 = vmatprep.subr.bf16.mxu0 %v10372
    %11206 = vmatpush1.bf16.msra.mxu0 %v10371
    %11207 = vmatprep.subr.bf16.mxu0 %v10379
    %11208 = vmatpush1.bf16.msra.mxu0 %v10378
    %11209 = vmatprep.subr.bf16.mxu0 %v10386
    %11210 = vmatpush1.bf16.msra.mxu0 %v10385
    %11211 = vmatprep.mubr.bf16.mxu0 %v7930
    %11212 = vmatmul.mubr.bf16.gmra.mrb[0].mxu0 %v7929
    %v11213 = vpop.f32.mrb[0].mxu0
    %v11214 = vadd.f32 %v11101, %v11213
    %v11215 = vpop.f32.mrb[0].mxu0
    %v11216 = vadd.f32 %v11103, %v11215
    %v11217 = vpop.f32.mrb[0].mxu0
    %v11218 = vadd.f32 %v11105, %v11217
    %v11219 = vpop.f32.mrb[0].mxu0
    %v11220 = vadd.f32 %v11107, %v11219
    %11221 = vmatprep.mubr.bf16.mxu0 %v7938
    %11222 = vmatmul.mubr.bf16.gmra.mrb[0].mxu0 %v7937
    %v11223 = vpop.f32.mrb[0].mxu0
    %v11224 = vadd.f32 %v11111, %v11223
    %v11225 = vpop.f32.mrb[0].mxu0
    %v11226 = vadd.f32 %v11113, %v11225
    %v11227 = vpop.f32.mrb[0].mxu0
    %v11228 = vadd.f32 %v11115, %v11227
    %v11229 = vpop.f32.mrb[0].mxu0
    %v11230 = vadd.f32 %v11117, %v11229
    %11231 = vmatprep.mubr.bf16.mxu0 %v7946
    %11232 = vmatmul.mubr.bf16.gmra.mrb[0].mxu0 %v7945
    %v11233 = vpop.f32.mrb[0].mxu0
    %v11234 = vadd.f32 %v11121, %v11233
    %v11235 = vpop.f32.mrb[0].mxu0
    %v11236 = vadd.f32 %v11123, %v11235
    %v11237 = vpop.f32.mrb[0].mxu0
    %v11238 = vadd.f32 %v11125, %v11237
    %v11239 = vpop.f32.mrb[0].mxu0
    %v11240 = vadd.f32 %v11127, %v11239
    %11241 = vmatprep.mubr.bf16.mxu0 %v7954
    %11242 = vmatmul.mubr.bf16.gmra.mrb[0].mxu0 %v7953
    %v11243 = vpop.f32.mrb[0].mxu0
    %v11244 = vadd.f32 %v11131, %v11243
    %v11245 = vpop.f32.mrb[0].mxu0
    %v11246 = vadd.f32 %v11133, %v11245
    %v11247 = vpop.f32.mrb[0].mxu0
    %v11248 = vadd.f32 %v11135, %v11247
    %v11249 = vpop.f32.mrb[0].mxu0
    %v11250 = vadd.f32 %v11137, %v11249
    %11251 = vmatprep.mubr.bf16.mxu0 %v7962
    %11252 = vmatmul.mubr.bf16.gmra.mrb[0].mxu0 %v7961
    %v11253 = vpop.f32.mrb[0].mxu0
    %v11254 = vadd.f32 %v11141, %v11253
    %v11255 = vpop.f32.mrb[0].mxu0
    %v11256 = vadd.f32 %v11143, %v11255
    %v11257 = vpop.f32.mrb[0].mxu0
    %v11258 = vadd.f32 %v11145, %v11257
    %v11259 = vpop.f32.mrb[0].mxu0
    %v11260 = vadd.f32 %v11147, %v11259
    %11261 = vmatprep.mubr.bf16.mxu0 %v7970
    %11262 = vmatmul.mubr.bf16.gmra.mrb[0].mxu0 %v7969
    %v11263 = vpop.f32.mrb[0].mxu0
    %v11264 = vadd.f32 %v11151, %v11263
    %v11265 = vpop.f32.mrb[0].mxu0
    %v11266 = vadd.f32 %v11153, %v11265
    %v11267 = vpop.f32.mrb[0].mxu0
    %v11268 = vadd.f32 %v11155, %v11267
    %v11269 = vpop.f32.mrb[0].mxu0
    %v11270 = vadd.f32 %v11157, %v11269
    %11271 = vmatprep.mubr.bf16.mxu0 %v7978
    %11272 = vmatmul.mubr.bf16.gmra.mrb[0].mxu0 %v7977
    %v11273 = vpop.f32.mrb[0].mxu0
    %v11274 = vadd.f32 %v11161, %v11273
    %v11275 = vpop.f32.mrb[0].mxu0
    %v11276 = vadd.f32 %v11163, %v11275
    %v11277 = vpop.f32.mrb[0].mxu0
    %v11278 = vadd.f32 %v11165, %v11277
    %v11279 = vpop.f32.mrb[0].mxu0
    %v11280 = vadd.f32 %v11167, %v11279
    %11281 = vmatprep.mubr.bf16.mxu0 %v7986
    %11282 = vmatmul.mubr.bf16.gmra.mrb[0].mxu0 %v7985
    %v11283 = vpop.f32.mrb[0].mxu0
    %v11284 = vadd.f32 %v11171, %v11283
    %v11285 = vpop.f32.mrb[0].mxu0
    %v11286 = vadd.f32 %v11173, %v11285
    %v11287 = vpop.f32.mrb[0].mxu0
    %v11288 = vadd.f32 %v11175, %v11287
    %v11289 = vpop.f32.mrb[0].mxu0
    %v11290 = vadd.f32 %v11177, %v11289
    %11291 = vdwg.mxu0
    %11292 = vmatprep.subr.bf16.mxu0 %v9947
    %11293 = vmatpush1.bf16.msra.mxu0 %v9946
    %11294 = vmatprep.subr.bf16.mxu0 %v9954
    %11295 = vmatpush1.bf16.msra.mxu0 %v9953
    %11296 = vmatprep.subr.bf16.mxu0 %v9961
    %11297 = vmatpush1.bf16.msra.mxu0 %v9960
    %11298 = vmatprep.subr.bf16.mxu0 %v9968
    %11299 = vmatpush1.bf16.msra.mxu0 %v9967
    %11300 = vmatprep.subr.bf16.mxu0 %v9975
    %11301 = vmatpush1.bf16.msra.mxu0 %v9974
    %11302 = vmatprep.subr.bf16.mxu0 %v9982
    %11303 = vmatpush1.bf16.msra.mxu0 %v9981
    %11304 = vmatprep.subr.bf16.mxu0 %v9989
    %11305 = vmatpush1.bf16.msra.mxu0 %v9988
    %11306 = vmatprep.subr.bf16.mxu0 %v9996
    %11307 = vmatpush1.bf16.msra.mxu0 %v9995
    %11308 = vmatprep.subr.bf16.mxu0 %v10003
    %11309 = vmatpush1.bf16.msra.mxu0 %v10002
    %11310 = vmatprep.subr.bf16.mxu0 %v10010
    %11311 = vmatpush1.bf16.msra.mxu0 %v10009
    %11312 = vmatprep.subr.bf16.mxu0 %v10017
    %11313 = vmatpush1.bf16.msra.mxu0 %v10016
    %11314 = vmatprep.subr.bf16.mxu0 %v10024
    %11315 = vmatpush1.bf16.msra.mxu0 %v10023
    %11316 = vmatprep.subr.bf16.mxu0 %v10031
    %11317 = vmatpush1.bf16.msra.mxu0 %v10030
    %11318 = vmatprep.subr.bf16.mxu0 %v10038
    %11319 = vmatpush1.bf16.msra.mxu0 %v10037
    %11320 = vmatprep.subr.bf16.mxu0 %v10045
    %11321 = vmatpush1.bf16.msra.mxu0 %v10044
    %11322 = vmatprep.subr.bf16.mxu0 %v10052
    %11323 = vmatpush1.bf16.msra.mxu0 %v10051
    %11324 = vmatprep.mubr.bf16.mxu0 %v7924
    %11325 = vmatmul.mubr.bf16.gmra.mrb[0].mxu0 %v7923
    %v11326 = vpop.f32.mrb[0].mxu0
    %v11327 = vadd.f32 %v8512, %v11326
    %v11328 = vpop.f32.mrb[0].mxu0
    %v11329 = vadd.f32 %v8516, %v11328
    %v11330 = vpop.f32.mrb[0].mxu0
    %v11331 = vadd.f32 %v8512, %v11330
    %v11332 = vpop.f32.mrb[0].mxu0
    %v11333 = vadd.f32 %v8516, %v11332
    %11334 = vmatprep.mubr.bf16.mxu0 %v7932
    %11335 = vmatmul.mubr.bf16.gmra.mrb[0].mxu0 %v7931
    %v11336 = vpop.f32.mrb[0].mxu0
    %v11337 = vadd.f32 %v8512, %v11336
    %v11338 = vpop.f32.mrb[0].mxu0
    %v11339 = vadd.f32 %v8516, %v11338
    %v11340 = vpop.f32.mrb[0].mxu0
    %v11341 = vadd.f32 %v8512, %v11340
    %v11342 = vpop.f32.mrb[0].mxu0
    %v11343 = vadd.f32 %v8516, %v11342
    %11344 = vmatprep.mubr.bf16.mxu0 %v7940
    %11345 = vmatmul.mubr.bf16.gmra.mrb[0].mxu0 %v7939
    %v11346 = vpop.f32.mrb[0].mxu0
    %v11347 = vadd.f32 %v8512, %v11346
    %v11348 = vpop.f32.mrb[0].mxu0
    %v11349 = vadd.f32 %v8516, %v11348
    %v11350 = vpop.f32.mrb[0].mxu0
    %v11351 = vadd.f32 %v8512, %v11350
    %v11352 = vpop.f32.mrb[0].mxu0
    %v11353 = vadd.f32 %v8516, %v11352
    %11354 = vmatprep.mubr.bf16.mxu0 %v7948
    %11355 = vmatmul.mubr.bf16.gmra.mrb[0].mxu0 %v7947
    %v11356 = vpop.f32.mrb[0].mxu0
    %v11357 = vadd.f32 %v8512, %v11356
    %v11358 = vpop.f32.mrb[0].mxu0
    %v11359 = vadd.f32 %v8516, %v11358
    %v11360 = vpop.f32.mrb[0].mxu0
    %v11361 = vadd.f32 %v8512, %v11360
    %v11362 = vpop.f32.mrb[0].mxu0
    %v11363 = vadd.f32 %v8516, %v11362
    %11364 = vmatprep.mubr.bf16.mxu0 %v7956
    %11365 = vmatmul.mubr.bf16.gmra.mrb[0].mxu0 %v7955
    %v11366 = vpop.f32.mrb[0].mxu0
    %v11367 = vadd.f32 %v8512, %v11366
    %v11368 = vpop.f32.mrb[0].mxu0
    %v11369 = vadd.f32 %v8516, %v11368
    %v11370 = vpop.f32.mrb[0].mxu0
    %v11371 = vadd.f32 %v8512, %v11370
    %v11372 = vpop.f32.mrb[0].mxu0
    %v11373 = vadd.f32 %v8516, %v11372
    %11374 = vmatprep.mubr.bf16.mxu0 %v7964
    %11375 = vmatmul.mubr.bf16.gmra.mrb[0].mxu0 %v7963
    %v11376 = vpop.f32.mrb[0].mxu0
    %v11377 = vadd.f32 %v8512, %v11376
    %v11378 = vpop.f32.mrb[0].mxu0
    %v11379 = vadd.f32 %v8516, %v11378
    %v11380 = vpop.f32.mrb[0].mxu0
    %v11381 = vadd.f32 %v8512, %v11380
    %v11382 = vpop.f32.mrb[0].mxu0
    %v11383 = vadd.f32 %v8516, %v11382
    %11384 = vmatprep.mubr.bf16.mxu0 %v7972
    %11385 = vmatmul.mubr.bf16.gmra.mrb[0].mxu0 %v7971
    %v11386 = vpop.f32.mrb[0].mxu0
    %v11387 = vadd.f32 %v8512, %v11386
    %v11388 = vpop.f32.mrb[0].mxu0
    %v11389 = vadd.f32 %v8516, %v11388
    %v11390 = vpop.f32.mrb[0].mxu0
    %v11391 = vadd.f32 %v8512, %v11390
    %v11392 = vpop.f32.mrb[0].mxu0
    %v11393 = vadd.f32 %v8516, %v11392
    %11394 = vmatprep.mubr.bf16.mxu0 %v7980
    %11395 = vmatmul.mubr.bf16.gmra.mrb[0].mxu0 %v7979
    %v11396 = vpop.f32.mrb[0].mxu0
    %v11397 = vadd.f32 %v8512, %v11396
    %v11398 = vpop.f32.mrb[0].mxu0
    %v11399 = vadd.f32 %v8516, %v11398
    %v11400 = vpop.f32.mrb[0].mxu0
    %v11401 = vadd.f32 %v8512, %v11400
    %v11402 = vpop.f32.mrb[0].mxu0
    %v11403 = vadd.f32 %v8516, %v11402
    %11404 = vdwg.mxu0
    %11405 = vmatprep.subr.bf16.mxu0 %v10059
    %11406 = vmatpush1.bf16.msra.mxu0 %v10058
    %11407 = vmatprep.subr.bf16.mxu0 %v10066
    %11408 = vmatpush1.bf16.msra.mxu0 %v10065
    %11409 = vmatprep.subr.bf16.mxu0 %v10073
    %11410 = vmatpush1.bf16.msra.mxu0 %v10072
    %11411 = vmatprep.subr.bf16.mxu0 %v10080
    %11412 = vmatpush1.bf16.msra.mxu0 %v10079
    %11413 = vmatprep.subr.bf16.mxu0 %v10087
    %11414 = vmatpush1.bf16.msra.mxu0 %v10086
    %11415 = vmatprep.subr.bf16.mxu0 %v10094
    %11416 = vmatpush1.bf16.msra.mxu0 %v10093
    %11417 = vmatprep.subr.bf16.mxu0 %v10101
    %11418 = vmatpush1.bf16.msra.mxu0 %v10100
    %11419 = vmatprep.subr.bf16.mxu0 %v10108
    %11420 = vmatpush1.bf16.msra.mxu0 %v10107
    %11421 = vmatprep.subr.bf16.mxu0 %v10115
    %11422 = vmatpush1.bf16.msra.mxu0 %v10114
    %11423 = vmatprep.subr.bf16.mxu0 %v10122
    %11424 = vmatpush1.bf16.msra.mxu0 %v10121
    %11425 = vmatprep.subr.bf16.mxu0 %v10129
    %11426 = vmatpush1.bf16.msra.mxu0 %v10128
    %11427 = vmatprep.subr.bf16.mxu0 %v10136
    %11428 = vmatpush1.bf16.msra.mxu0 %v10135
    %11429 = vmatprep.subr.bf16.mxu0 %v10143
    %11430 = vmatpush1.bf16.msra.mxu0 %v10142
    %11431 = vmatprep.subr.bf16.mxu0 %v10150
    %11432 = vmatpush1.bf16.msra.mxu0 %v10149
    %11433 = vmatprep.subr.bf16.mxu0 %v10157
    %11434 = vmatpush1.bf16.msra.mxu0 %v10156
    %11435 = vmatprep.subr.bf16.mxu0 %v10164
    %11436 = vmatpush1.bf16.msra.mxu0 %v10163
    %11437 = vmatprep.mubr.bf16.mxu0 %v7926
    %11438 = vmatmul.mubr.bf16.gmra.mrb[0].mxu0 %v7925
    %v11439 = vpop.f32.mrb[0].mxu0
    %v11440 = vadd.f32 %v11327, %v11439
    %v11441 = vpop.f32.mrb[0].mxu0
    %v11442 = vadd.f32 %v11329, %v11441
    %v11443 = vpop.f32.mrb[0].mxu0
    %v11444 = vadd.f32 %v11331, %v11443
    %v11445 = vpop.f32.mrb[0].mxu0
    %v11446 = vadd.f32 %v11333, %v11445
    %11447 = vmatprep.mubr.bf16.mxu0 %v7934
    %11448 = vmatmul.mubr.bf16.gmra.mrb[0].mxu0 %v7933
    %v11449 = vpop.f32.mrb[0].mxu0
    %v11450 = vadd.f32 %v11337, %v11449
    %v11451 = vpop.f32.mrb[0].mxu0
    %v11452 = vadd.f32 %v11339, %v11451
    %v11453 = vpop.f32.mrb[0].mxu0
    %v11454 = vadd.f32 %v11341, %v11453
    %v11455 = vpop.f32.mrb[0].mxu0
    %v11456 = vadd.f32 %v11343, %v11455
    %11457 = vmatprep.mubr.bf16.mxu0 %v7942
    %11458 = vmatmul.mubr.bf16.gmra.mrb[0].mxu0 %v7941
    %v11459 = vpop.f32.mrb[0].mxu0
    %v11460 = vadd.f32 %v11347, %v11459
    %v11461 = vpop.f32.mrb[0].mxu0
    %v11462 = vadd.f32 %v11349, %v11461
    %v11463 = vpop.f32.mrb[0].mxu0
    %v11464 = vadd.f32 %v11351, %v11463
    %v11465 = vpop.f32.mrb[0].mxu0
    %v11466 = vadd.f32 %v11353, %v11465
    %11467 = vmatprep.mubr.bf16.mxu0 %v7950
    %11468 = vmatmul.mubr.bf16.gmra.mrb[0].mxu0 %v7949
    %v11469 = vpop.f32.mrb[0].mxu0
    %v11470 = vadd.f32 %v11357, %v11469
    %v11471 = vpop.f32.mrb[0].mxu0
    %v11472 = vadd.f32 %v11359, %v11471
    %v11473 = vpop.f32.mrb[0].mxu0
    %v11474 = vadd.f32 %v11361, %v11473
    %v11475 = vpop.f32.mrb[0].mxu0
    %v11476 = vadd.f32 %v11363, %v11475
    %11477 = vmatprep.mubr.bf16.mxu0 %v7958
    %11478 = vmatmul.mubr.bf16.gmra.mrb[0].mxu0 %v7957
    %v11479 = vpop.f32.mrb[0].mxu0
    %v11480 = vadd.f32 %v11367, %v11479
    %v11481 = vpop.f32.mrb[0].mxu0
    %v11482 = vadd.f32 %v11369, %v11481
    %v11483 = vpop.f32.mrb[0].mxu0
    %v11484 = vadd.f32 %v11371, %v11483
    %v11485 = vpop.f32.mrb[0].mxu0
    %v11486 = vadd.f32 %v11373, %v11485
    %11487 = vmatprep.mubr.bf16.mxu0 %v7966
    %11488 = vmatmul.mubr.bf16.gmra.mrb[0].mxu0 %v7965
    %v11489 = vpop.f32.mrb[0].mxu0
    %v11490 = vadd.f32 %v11377, %v11489
    %v11491 = vpop.f32.mrb[0].mxu0
    %v11492 = vadd.f32 %v11379, %v11491
    %v11493 = vpop.f32.mrb[0].mxu0
    %v11494 = vadd.f32 %v11381, %v11493
    %v11495 = vpop.f32.mrb[0].mxu0
    %v11496 = vadd.f32 %v11383, %v11495
    %11497 = vmatprep.mubr.bf16.mxu0 %v7974
    %11498 = vmatmul.mubr.bf16.gmra.mrb[0].mxu0 %v7973
    %v11499 = vpop.f32.mrb[0].mxu0
    %v11500 = vadd.f32 %v11387, %v11499
    %v11501 = vpop.f32.mrb[0].mxu0
    %v11502 = vadd.f32 %v11389, %v11501
    %v11503 = vpop.f32.mrb[0].mxu0
    %v11504 = vadd.f32 %v11391, %v11503
    %v11505 = vpop.f32.mrb[0].mxu0
    %v11506 = vadd.f32 %v11393, %v11505
    %11507 = vmatprep.mubr.bf16.mxu0 %v7982
    %11508 = vmatmul.mubr.bf16.gmra.mrb[0].mxu0 %v7981
    %v11509 = vpop.f32.mrb[0].mxu0
    %v11510 = vadd.f32 %v11397, %v11509
    %v11511 = vpop.f32.mrb[0].mxu0
    %v11512 = vadd.f32 %v11399, %v11511
    %v11513 = vpop.f32.mrb[0].mxu0
    %v11514 = vadd.f32 %v11401, %v11513
    %v11515 = vpop.f32.mrb[0].mxu0
    %v11516 = vadd.f32 %v11403, %v11515
    %11517 = vdwg.mxu0
    %11518 = vmatprep.subr.bf16.mxu0 %v10171
    %11519 = vmatpush1.bf16.msra.mxu0 %v10170
    %11520 = vmatprep.subr.bf16.mxu0 %v10178
    %11521 = vmatpush1.bf16.msra.mxu0 %v10177
    %11522 = vmatprep.subr.bf16.mxu0 %v10185
    %11523 = vmatpush1.bf16.msra.mxu0 %v10184
    %11524 = vmatprep.subr.bf16.mxu0 %v10192
    %11525 = vmatpush1.bf16.msra.mxu0 %v10191
    %11526 = vmatprep.subr.bf16.mxu0 %v10199
    %11527 = vmatpush1.bf16.msra.mxu0 %v10198
    %11528 = vmatprep.subr.bf16.mxu0 %v10206
    %11529 = vmatpush1.bf16.msra.mxu0 %v10205
    %11530 = vmatprep.subr.bf16.mxu0 %v10213
    %11531 = vmatpush1.bf16.msra.mxu0 %v10212
    %11532 = vmatprep.subr.bf16.mxu0 %v10220
    %11533 = vmatpush1.bf16.msra.mxu0 %v10219
    %11534 = vmatprep.subr.bf16.mxu0 %v10227
    %11535 = vmatpush1.bf16.msra.mxu0 %v10226
    %11536 = vmatprep.subr.bf16.mxu0 %v10234
    %11537 = vmatpush1.bf16.msra.mxu0 %v10233
    %11538 = vmatprep.subr.bf16.mxu0 %v10241
    %11539 = vmatpush1.bf16.msra.mxu0 %v10240
    %11540 = vmatprep.subr.bf16.mxu0 %v10248
    %11541 = vmatpush1.bf16.msra.mxu0 %v10247
    %11542 = vmatprep.subr.bf16.mxu0 %v10255
    %11543 = vmatpush1.bf16.msra.mxu0 %v10254
    %11544 = vmatprep.subr.bf16.mxu0 %v10262
    %11545 = vmatpush1.bf16.msra.mxu0 %v10261
    %11546 = vmatprep.subr.bf16.mxu0 %v10269
    %11547 = vmatpush1.bf16.msra.mxu0 %v10268
    %11548 = vmatprep.subr.bf16.mxu0 %v10276
    %11549 = vmatpush1.bf16.msra.mxu0 %v10275
    %11550 = vmatprep.mubr.bf16.mxu0 %v7928
    %11551 = vmatmul.mubr.bf16.gmra.mrb[0].mxu0 %v7927
    %v11552 = vpop.f32.mrb[0].mxu0
    %v11553 = vadd.f32 %v11440, %v11552
    %v11554 = vpop.f32.mrb[0].mxu0
    %v11555 = vadd.f32 %v11442, %v11554
    %v11556 = vpop.f32.mrb[0].mxu0
    %v11557 = vadd.f32 %v11444, %v11556
    %v11558 = vpop.f32.mrb[0].mxu0
    %v11559 = vadd.f32 %v11446, %v11558
    %11560 = vmatprep.mubr.bf16.mxu0 %v7936
    %11561 = vmatmul.mubr.bf16.gmra.mrb[0].mxu0 %v7935
    %v11562 = vpop.f32.mrb[0].mxu0
    %v11563 = vadd.f32 %v11450, %v11562
    %v11564 = vpop.f32.mrb[0].mxu0
    %v11565 = vadd.f32 %v11452, %v11564
    %v11566 = vpop.f32.mrb[0].mxu0
    %v11567 = vadd.f32 %v11454, %v11566
    %v11568 = vpop.f32.mrb[0].mxu0
    %v11569 = vadd.f32 %v11456, %v11568
    %11570 = vmatprep.mubr.bf16.mxu0 %v7944
    %11571 = vmatmul.mubr.bf16.gmra.mrb[0].mxu0 %v7943
    %v11572 = vpop.f32.mrb[0].mxu0
    %v11573 = vadd.f32 %v11460, %v11572
    %v11574 = vpop.f32.mrb[0].mxu0
    %v11575 = vadd.f32 %v11462, %v11574
    %v11576 = vpop.f32.mrb[0].mxu0
    %v11577 = vadd.f32 %v11464, %v11576
    %v11578 = vpop.f32.mrb[0].mxu0
    %v11579 = vadd.f32 %v11466, %v11578
    %11580 = vmatprep.mubr.bf16.mxu0 %v7952
    %11581 = vmatmul.mubr.bf16.gmra.mrb[0].mxu0 %v7951
    %v11582 = vpop.f32.mrb[0].mxu0
    %v11583 = vadd.f32 %v11470, %v11582
    %v11584 = vpop.f32.mrb[0].mxu0
    %v11585 = vadd.f32 %v11472, %v11584
    %v11586 = vpop.f32.mrb[0].mxu0
    %v11587 = vadd.f32 %v11474, %v11586
    %v11588 = vpop.f32.mrb[0].mxu0
    %v11589 = vadd.f32 %v11476, %v11588
    %11590 = vmatprep.mubr.bf16.mxu0 %v7960
    %11591 = vmatmul.mubr.bf16.gmra.mrb[0].mxu0 %v7959
    %v11592 = vpop.f32.mrb[0].mxu0
    %v11593 = vadd.f32 %v11480, %v11592
    %v11594 = vpop.f32.mrb[0].mxu0
    %v11595 = vadd.f32 %v11482, %v11594
    %v11596 = vpop.f32.mrb[0].mxu0
    %v11597 = vadd.f32 %v11484, %v11596
    %v11598 = vpop.f32.mrb[0].mxu0
    %v11599 = vadd.f32 %v11486, %v11598
    %11600 = vmatprep.mubr.bf16.mxu0 %v7968
    %11601 = vmatmul.mubr.bf16.gmra.mrb[0].mxu0 %v7967
    %v11602 = vpop.f32.mrb[0].mxu0
    %v11603 = vadd.f32 %v11490, %v11602
    %v11604 = vpop.f32.mrb[0].mxu0
    %v11605 = vadd.f32 %v11492, %v11604
    %v11606 = vpop.f32.mrb[0].mxu0
    %v11607 = vadd.f32 %v11494, %v11606
    %v11608 = vpop.f32.mrb[0].mxu0
    %v11609 = vadd.f32 %v11496, %v11608
    %11610 = vmatprep.mubr.bf16.mxu0 %v7976
    %11611 = vmatmul.mubr.bf16.gmra.mrb[0].mxu0 %v7975
    %v11612 = vpop.f32.mrb[0].mxu0
    %v11613 = vadd.f32 %v11500, %v11612
    %v11614 = vpop.f32.mrb[0].mxu0
    %v11615 = vadd.f32 %v11502, %v11614
    %v11616 = vpop.f32.mrb[0].mxu0
    %v11617 = vadd.f32 %v11504, %v11616
    %v11618 = vpop.f32.mrb[0].mxu0
    %v11619 = vadd.f32 %v11506, %v11618
    %11620 = vmatprep.mubr.bf16.mxu0 %v7984
    %11621 = vmatmul.mubr.bf16.gmra.mrb[0].mxu0 %v7983
    %v11622 = vpop.f32.mrb[0].mxu0
    %v11623 = vadd.f32 %v11510, %v11622
    %v11624 = vpop.f32.mrb[0].mxu0
    %v11625 = vadd.f32 %v11512, %v11624
    %v11626 = vpop.f32.mrb[0].mxu0
    %v11627 = vadd.f32 %v11514, %v11626
    %v11628 = vpop.f32.mrb[0].mxu0
    %v11629 = vadd.f32 %v11516, %v11628
    %11630 = vdwg.mxu0
    %11631 = vmatprep.subr.bf16.mxu0 %v10283
    %11632 = vmatpush1.bf16.msra.mxu0 %v10282
    %11633 = vmatprep.subr.bf16.mxu0 %v10290
    %11634 = vmatpush1.bf16.msra.mxu0 %v10289
    %11635 = vmatprep.subr.bf16.mxu0 %v10297
    %11636 = vmatpush1.bf16.msra.mxu0 %v10296
    %11637 = vmatprep.subr.bf16.mxu0 %v10304
    %11638 = vmatpush1.bf16.msra.mxu0 %v10303
    %11639 = vmatprep.subr.bf16.mxu0 %v10311
    %11640 = vmatpush1.bf16.msra.mxu0 %v10310
    %11641 = vmatprep.subr.bf16.mxu0 %v10318
    %11642 = vmatpush1.bf16.msra.mxu0 %v10317
    %11643 = vmatprep.subr.bf16.mxu0 %v10325
    %11644 = vmatpush1.bf16.msra.mxu0 %v10324
    %11645 = vmatprep.subr.bf16.mxu0 %v10332
    %11646 = vmatpush1.bf16.msra.mxu0 %v10331
    %11647 = vmatprep.subr.bf16.mxu0 %v10339
    %11648 = vmatpush1.bf16.msra.mxu0 %v10338
    %11649 = vmatprep.subr.bf16.mxu0 %v10346
    %11650 = vmatpush1.bf16.msra.mxu0 %v10345
    %11651 = vmatprep.subr.bf16.mxu0 %v10353
    %11652 = vmatpush1.bf16.msra.mxu0 %v10352
    %11653 = vmatprep.subr.bf16.mxu0 %v10360
    %11654 = vmatpush1.bf16.msra.mxu0 %v10359
    %11655 = vmatprep.subr.bf16.mxu0 %v10367
    %11656 = vmatpush1.bf16.msra.mxu0 %v10366
    %11657 = vmatprep.subr.bf16.mxu0 %v10374
    %11658 = vmatpush1.bf16.msra.mxu0 %v10373
    %11659 = vmatprep.subr.bf16.mxu0 %v10381
    %11660 = vmatpush1.bf16.msra.mxu0 %v10380
    %11661 = vmatprep.subr.bf16.mxu0 %v10388
    %11662 = vmatpush1.bf16.msra.mxu0 %v10387
    %11663 = vmatprep.mubr.bf16.mxu0 %v7930
    %11664 = vmatmul.mubr.bf16.gmra.mrb[0].mxu0 %v7929
    %v11665 = vpop.f32.mrb[0].mxu0
    %v11666 = vadd.f32 %v11553, %v11665
    %v11667 = vpop.f32.mrb[0].mxu0
    %v11668 = vadd.f32 %v11555, %v11667
    %v11669 = vpop.f32.mrb[0].mxu0
    %v11670 = vadd.f32 %v11557, %v11669
    %v11671 = vpop.f32.mrb[0].mxu0
    %v11672 = vadd.f32 %v11559, %v11671
    %11673 = vmatprep.mubr.bf16.mxu0 %v7938
    %11674 = vmatmul.mubr.bf16.gmra.mrb[0].mxu0 %v7937
    %v11675 = vpop.f32.mrb[0].mxu0
    %v11676 = vadd.f32 %v11563, %v11675
    %v11677 = vpop.f32.mrb[0].mxu0
    %v11678 = vadd.f32 %v11565, %v11677
    %v11679 = vpop.f32.mrb[0].mxu0
    %v11680 = vadd.f32 %v11567, %v11679
    %v11681 = vpop.f32.mrb[0].mxu0
    %v11682 = vadd.f32 %v11569, %v11681
    %11683 = vmatprep.mubr.bf16.mxu0 %v7946
    %11684 = vmatmul.mubr.bf16.gmra.mrb[0].mxu0 %v7945
    %v11685 = vpop.f32.mrb[0].mxu0
    %v11686 = vadd.f32 %v11573, %v11685
    %v11687 = vpop.f32.mrb[0].mxu0
    %v11688 = vadd.f32 %v11575, %v11687
    %v11689 = vpop.f32.mrb[0].mxu0
    %v11690 = vadd.f32 %v11577, %v11689
    %v11691 = vpop.f32.mrb[0].mxu0
    %v11692 = vadd.f32 %v11579, %v11691
    %11693 = vmatprep.mubr.bf16.mxu0 %v7954
    %11694 = vmatmul.mubr.bf16.gmra.mrb[0].mxu0 %v7953
    %v11695 = vpop.f32.mrb[0].mxu0
    %v11696 = vadd.f32 %v11583, %v11695
    %v11697 = vpop.f32.mrb[0].mxu0
    %v11698 = vadd.f32 %v11585, %v11697
    %v11699 = vpop.f32.mrb[0].mxu0
    %v11700 = vadd.f32 %v11587, %v11699
    %v11701 = vpop.f32.mrb[0].mxu0
    %v11702 = vadd.f32 %v11589, %v11701
    %11703 = vmatprep.mubr.bf16.mxu0 %v7962
    %11704 = vmatmul.mubr.bf16.gmra.mrb[0].mxu0 %v7961
    %v11705 = vpop.f32.mrb[0].mxu0
    %v11706 = vadd.f32 %v11593, %v11705
    %v11707 = vpop.f32.mrb[0].mxu0
    %v11708 = vadd.f32 %v11595, %v11707
    %v11709 = vpop.f32.mrb[0].mxu0
    %v11710 = vadd.f32 %v11597, %v11709
    %v11711 = vpop.f32.mrb[0].mxu0
    %v11712 = vadd.f32 %v11599, %v11711
    %11713 = vmatprep.mubr.bf16.mxu0 %v7970
    %11714 = vmatmul.mubr.bf16.gmra.mrb[0].mxu0 %v7969
    %v11715 = vpop.f32.mrb[0].mxu0
    %v11716 = vadd.f32 %v11603, %v11715
    %v11717 = vpop.f32.mrb[0].mxu0
    %v11718 = vadd.f32 %v11605, %v11717
    %v11719 = vpop.f32.mrb[0].mxu0
    %v11720 = vadd.f32 %v11607, %v11719
    %v11721 = vpop.f32.mrb[0].mxu0
    %v11722 = vadd.f32 %v11609, %v11721
    %11723 = vmatprep.mubr.bf16.mxu0 %v7978
    %11724 = vmatmul.mubr.bf16.gmra.mrb[0].mxu0 %v7977
    %v11725 = vpop.f32.mrb[0].mxu0
    %v11726 = vadd.f32 %v11613, %v11725
    %v11727 = vpop.f32.mrb[0].mxu0
    %v11728 = vadd.f32 %v11615, %v11727
    %v11729 = vpop.f32.mrb[0].mxu0
    %v11730 = vadd.f32 %v11617, %v11729
    %v11731 = vpop.f32.mrb[0].mxu0
    %v11732 = vadd.f32 %v11619, %v11731
    %11733 = vmatprep.mubr.bf16.mxu0 %v7986
    %11734 = vmatmul.mubr.bf16.gmra.mrb[0].mxu0 %v7985
    %v11735 = vpop.f32.mrb[0].mxu0
    %v11736 = vadd.f32 %v11623, %v11735
    %v11737 = vpop.f32.mrb[0].mxu0
    %v11738 = vadd.f32 %v11625, %v11737
    %v11739 = vpop.f32.mrb[0].mxu0
    %v11740 = vadd.f32 %v11627, %v11739
    %v11741 = vpop.f32.mrb[0].mxu0
    %v11742 = vadd.f32 %v11629, %v11741
    %11743 = vdwg.mxu0
    %11744 = vmatprep.subr.bf16.mxu0 %v9949
    %11745 = vmatpush1.bf16.msra.mxu0 %v9948
    %11746 = vmatprep.subr.bf16.mxu0 %v9956
    %11747 = vmatpush1.bf16.msra.mxu0 %v9955
    %11748 = vmatprep.subr.bf16.mxu0 %v9963
    %11749 = vmatpush1.bf16.msra.mxu0 %v9962
    %11750 = vmatprep.subr.bf16.mxu0 %v9970
    %11751 = vmatpush1.bf16.msra.mxu0 %v9969
    %11752 = vmatprep.subr.bf16.mxu0 %v9977
    %11753 = vmatpush1.bf16.msra.mxu0 %v9976
    %11754 = vmatprep.subr.bf16.mxu0 %v9984
    %11755 = vmatpush1.bf16.msra.mxu0 %v9983
    %11756 = vmatprep.subr.bf16.mxu0 %v9991
    %11757 = vmatpush1.bf16.msra.mxu0 %v9990
    %11758 = vmatprep.subr.bf16.mxu0 %v9998
    %11759 = vmatpush1.bf16.msra.mxu0 %v9997
    %11760 = vmatprep.subr.bf16.mxu0 %v10005
    %11761 = vmatpush1.bf16.msra.mxu0 %v10004
    %11762 = vmatprep.subr.bf16.mxu0 %v10012
    %11763 = vmatpush1.bf16.msra.mxu0 %v10011
    %11764 = vmatprep.subr.bf16.mxu0 %v10019
    %11765 = vmatpush1.bf16.msra.mxu0 %v10018
    %11766 = vmatprep.subr.bf16.mxu0 %v10026
    %11767 = vmatpush1.bf16.msra.mxu0 %v10025
    %11768 = vmatprep.subr.bf16.mxu0 %v10033
    %11769 = vmatpush1.bf16.msra.mxu0 %v10032
    %11770 = vmatprep.subr.bf16.mxu0 %v10040
    %11771 = vmatpush1.bf16.msra.mxu0 %v10039
    %11772 = vmatprep.subr.bf16.mxu0 %v10047
    %11773 = vmatpush1.bf16.msra.mxu0 %v10046
    %11774 = vmatprep.subr.bf16.mxu0 %v10054
    %11775 = vmatpush1.bf16.msra.mxu0 %v10053
    %11776 = vmatprep.mubr.bf16.mxu0 %v7924
    %11777 = vmatmul.mubr.bf16.gmra.mrb[0].mxu0 %v7923
    %v11778 = vpop.f32.mrb[0].mxu0
    %v11779 = vadd.f32 %v8520, %v11778
    %v11780 = vpop.f32.mrb[0].mxu0
    %v11781 = vadd.f32 %v8524, %v11780
    %v11782 = vpop.f32.mrb[0].mxu0
    %v11783 = vadd.f32 %v8520, %v11782
    %v11784 = vpop.f32.mrb[0].mxu0
    %v11785 = vadd.f32 %v8524, %v11784
    %11786 = vmatprep.mubr.bf16.mxu0 %v7932
    %11787 = vmatmul.mubr.bf16.gmra.mrb[0].mxu0 %v7931
    %v11788 = vpop.f32.mrb[0].mxu0
    %v11789 = vadd.f32 %v8520, %v11788
    %v11790 = vpop.f32.mrb[0].mxu0
    %v11791 = vadd.f32 %v8524, %v11790
    %v11792 = vpop.f32.mrb[0].mxu0
    %v11793 = vadd.f32 %v8520, %v11792
    %v11794 = vpop.f32.mrb[0].mxu0
    %v11795 = vadd.f32 %v8524, %v11794
    %11796 = vmatprep.mubr.bf16.mxu0 %v7940
    %11797 = vmatmul.mubr.bf16.gmra.mrb[0].mxu0 %v7939
    %v11798 = vpop.f32.mrb[0].mxu0
    %v11799 = vadd.f32 %v8520, %v11798
    %v11800 = vpop.f32.mrb[0].mxu0
    %v11801 = vadd.f32 %v8524, %v11800
    %v11802 = vpop.f32.mrb[0].mxu0
    %v11803 = vadd.f32 %v8520, %v11802
    %v11804 = vpop.f32.mrb[0].mxu0
    %v11805 = vadd.f32 %v8524, %v11804
    %11806 = vmatprep.mubr.bf16.mxu0 %v7948
    %11807 = vmatmul.mubr.bf16.gmra.mrb[0].mxu0 %v7947
    %v11808 = vpop.f32.mrb[0].mxu0
    %v11809 = vadd.f32 %v8520, %v11808
    %v11810 = vpop.f32.mrb[0].mxu0
    %v11811 = vadd.f32 %v8524, %v11810
    %v11812 = vpop.f32.mrb[0].mxu0
    %v11813 = vadd.f32 %v8520, %v11812
    %v11814 = vpop.f32.mrb[0].mxu0
    %v11815 = vadd.f32 %v8524, %v11814
    %11816 = vmatprep.mubr.bf16.mxu0 %v7956
    %11817 = vmatmul.mubr.bf16.gmra.mrb[0].mxu0 %v7955
    %v11818 = vpop.f32.mrb[0].mxu0
    %v11819 = vadd.f32 %v8520, %v11818
    %v11820 = vpop.f32.mrb[0].mxu0
    %v11821 = vadd.f32 %v8524, %v11820
    %v11822 = vpop.f32.mrb[0].mxu0
    %v11823 = vadd.f32 %v8520, %v11822
    %v11824 = vpop.f32.mrb[0].mxu0
    %v11825 = vadd.f32 %v8524, %v11824
    %11826 = vmatprep.mubr.bf16.mxu0 %v7964
    %11827 = vmatmul.mubr.bf16.gmra.mrb[0].mxu0 %v7963
    %v11828 = vpop.f32.mrb[0].mxu0
    %v11829 = vadd.f32 %v8520, %v11828
    %v11830 = vpop.f32.mrb[0].mxu0
    %v11831 = vadd.f32 %v8524, %v11830
    %v11832 = vpop.f32.mrb[0].mxu0
    %v11833 = vadd.f32 %v8520, %v11832
    %v11834 = vpop.f32.mrb[0].mxu0
    %v11835 = vadd.f32 %v8524, %v11834
    %11836 = vmatprep.mubr.bf16.mxu0 %v7972
    %11837 = vmatmul.mubr.bf16.gmra.mrb[0].mxu0 %v7971
    %v11838 = vpop.f32.mrb[0].mxu0
    %v11839 = vadd.f32 %v8520, %v11838
    %v11840 = vpop.f32.mrb[0].mxu0
    %v11841 = vadd.f32 %v8524, %v11840
    %v11842 = vpop.f32.mrb[0].mxu0
    %v11843 = vadd.f32 %v8520, %v11842
    %v11844 = vpop.f32.mrb[0].mxu0
    %v11845 = vadd.f32 %v8524, %v11844
    %11846 = vmatprep.mubr.bf16.mxu0 %v7980
    %11847 = vmatmul.mubr.bf16.gmra.mrb[0].mxu0 %v7979
    %v11848 = vpop.f32.mrb[0].mxu0
    %v11849 = vadd.f32 %v8520, %v11848
    %v11850 = vpop.f32.mrb[0].mxu0
    %v11851 = vadd.f32 %v8524, %v11850
    %v11852 = vpop.f32.mrb[0].mxu0
    %v11853 = vadd.f32 %v8520, %v11852
    %v11854 = vpop.f32.mrb[0].mxu0
    %v11855 = vadd.f32 %v8524, %v11854
    %11856 = vdwg.mxu0
    %11857 = vmatprep.subr.bf16.mxu0 %v10061
    %11858 = vmatpush1.bf16.msra.mxu0 %v10060
    %11859 = vmatprep.subr.bf16.mxu0 %v10068
    %11860 = vmatpush1.bf16.msra.mxu0 %v10067
    %11861 = vmatprep.subr.bf16.mxu0 %v10075
    %11862 = vmatpush1.bf16.msra.mxu0 %v10074
    %11863 = vmatprep.subr.bf16.mxu0 %v10082
    %11864 = vmatpush1.bf16.msra.mxu0 %v10081
    %11865 = vmatprep.subr.bf16.mxu0 %v10089
    %11866 = vmatpush1.bf16.msra.mxu0 %v10088
    %11867 = vmatprep.subr.bf16.mxu0 %v10096
    %11868 = vmatpush1.bf16.msra.mxu0 %v10095
    %11869 = vmatprep.subr.bf16.mxu0 %v10103
    %11870 = vmatpush1.bf16.msra.mxu0 %v10102
    %11871 = vmatprep.subr.bf16.mxu0 %v10110
    %11872 = vmatpush1.bf16.msra.mxu0 %v10109
    %11873 = vmatprep.subr.bf16.mxu0 %v10117
    %11874 = vmatpush1.bf16.msra.mxu0 %v10116
    %11875 = vmatprep.subr.bf16.mxu0 %v10124
    %11876 = vmatpush1.bf16.msra.mxu0 %v10123
    %11877 = vmatprep.subr.bf16.mxu0 %v10131
    %11878 = vmatpush1.bf16.msra.mxu0 %v10130
    %11879 = vmatprep.subr.bf16.mxu0 %v10138
    %11880 = vmatpush1.bf16.msra.mxu0 %v10137
    %11881 = vmatprep.subr.bf16.mxu0 %v10145
    %11882 = vmatpush1.bf16.msra.mxu0 %v10144
    %11883 = vmatprep.subr.bf16.mxu0 %v10152
    %11884 = vmatpush1.bf16.msra.mxu0 %v10151
    %11885 = vmatprep.subr.bf16.mxu0 %v10159
    %11886 = vmatpush1.bf16.msra.mxu0 %v10158
    %11887 = vmatprep.subr.bf16.mxu0 %v10166
    %11888 = vmatpush1.bf16.msra.mxu0 %v10165
    %11889 = vmatprep.mubr.bf16.mxu0 %v7926
    %11890 = vmatmul.mubr.bf16.gmra.mrb[0].mxu0 %v7925
    %v11891 = vpop.f32.mrb[0].mxu0
    %v11892 = vadd.f32 %v11779, %v11891
    %v11893 = vpop.f32.mrb[0].mxu0
    %v11894 = vadd.f32 %v11781, %v11893
    %v11895 = vpop.f32.mrb[0].mxu0
    %v11896 = vadd.f32 %v11783, %v11895
    %v11897 = vpop.f32.mrb[0].mxu0
    %v11898 = vadd.f32 %v11785, %v11897
    %11899 = vmatprep.mubr.bf16.mxu0 %v7934
    %11900 = vmatmul.mubr.bf16.gmra.mrb[0].mxu0 %v7933
    %v11901 = vpop.f32.mrb[0].mxu0
    %v11902 = vadd.f32 %v11789, %v11901
    %v11903 = vpop.f32.mrb[0].mxu0
    %v11904 = vadd.f32 %v11791, %v11903
    %v11905 = vpop.f32.mrb[0].mxu0
    %v11906 = vadd.f32 %v11793, %v11905
    %v11907 = vpop.f32.mrb[0].mxu0
    %v11908 = vadd.f32 %v11795, %v11907
    %11909 = vmatprep.mubr.bf16.mxu0 %v7942
    %11910 = vmatmul.mubr.bf16.gmra.mrb[0].mxu0 %v7941
    %v11911 = vpop.f32.mrb[0].mxu0
    %v11912 = vadd.f32 %v11799, %v11911
    %v11913 = vpop.f32.mrb[0].mxu0
    %v11914 = vadd.f32 %v11801, %v11913
    %v11915 = vpop.f32.mrb[0].mxu0
    %v11916 = vadd.f32 %v11803, %v11915
    %v11917 = vpop.f32.mrb[0].mxu0
    %v11918 = vadd.f32 %v11805, %v11917
    %11919 = vmatprep.mubr.bf16.mxu0 %v7950
    %11920 = vmatmul.mubr.bf16.gmra.mrb[0].mxu0 %v7949
    %v11921 = vpop.f32.mrb[0].mxu0
    %v11922 = vadd.f32 %v11809, %v11921
    %v11923 = vpop.f32.mrb[0].mxu0
    %v11924 = vadd.f32 %v11811, %v11923
    %v11925 = vpop.f32.mrb[0].mxu0
    %v11926 = vadd.f32 %v11813, %v11925
    %v11927 = vpop.f32.mrb[0].mxu0
    %v11928 = vadd.f32 %v11815, %v11927
    %11929 = vmatprep.mubr.bf16.mxu0 %v7958
    %11930 = vmatmul.mubr.bf16.gmra.mrb[0].mxu0 %v7957
    %v11931 = vpop.f32.mrb[0].mxu0
    %v11932 = vadd.f32 %v11819, %v11931
    %v11933 = vpop.f32.mrb[0].mxu0
    %v11934 = vadd.f32 %v11821, %v11933
    %v11935 = vpop.f32.mrb[0].mxu0
    %v11936 = vadd.f32 %v11823, %v11935
    %v11937 = vpop.f32.mrb[0].mxu0
    %v11938 = vadd.f32 %v11825, %v11937
    %11939 = vmatprep.mubr.bf16.mxu0 %v7966
    %11940 = vmatmul.mubr.bf16.gmra.mrb[0].mxu0 %v7965
    %v11941 = vpop.f32.mrb[0].mxu0
    %v11942 = vadd.f32 %v11829, %v11941
    %v11943 = vpop.f32.mrb[0].mxu0
    %v11944 = vadd.f32 %v11831, %v11943
    %v11945 = vpop.f32.mrb[0].mxu0
    %v11946 = vadd.f32 %v11833, %v11945
    %v11947 = vpop.f32.mrb[0].mxu0
    %v11948 = vadd.f32 %v11835, %v11947
    %11949 = vmatprep.mubr.bf16.mxu0 %v7974
    %11950 = vmatmul.mubr.bf16.gmra.mrb[0].mxu0 %v7973
    %v11951 = vpop.f32.mrb[0].mxu0
    %v11952 = vadd.f32 %v11839, %v11951
    %v11953 = vpop.f32.mrb[0].mxu0
    %v11954 = vadd.f32 %v11841, %v11953
    %v11955 = vpop.f32.mrb[0].mxu0
    %v11956 = vadd.f32 %v11843, %v11955
    %v11957 = vpop.f32.mrb[0].mxu0
    %v11958 = vadd.f32 %v11845, %v11957
    %11959 = vmatprep.mubr.bf16.mxu0 %v7982
    %11960 = vmatmul.mubr.bf16.gmra.mrb[0].mxu0 %v7981
    %v11961 = vpop.f32.mrb[0].mxu0
    %v11962 = vadd.f32 %v11849, %v11961
    %v11963 = vpop.f32.mrb[0].mxu0
    %v11964 = vadd.f32 %v11851, %v11963
    %v11965 = vpop.f32.mrb[0].mxu0
    %v11966 = vadd.f32 %v11853, %v11965
    %v11967 = vpop.f32.mrb[0].mxu0
    %v11968 = vadd.f32 %v11855, %v11967
    %11969 = vdwg.mxu0
    %11970 = vmatprep.subr.bf16.mxu0 %v10173
    %11971 = vmatpush1.bf16.msra.mxu0 %v10172
    %11972 = vmatprep.subr.bf16.mxu0 %v10180
    %11973 = vmatpush1.bf16.msra.mxu0 %v10179
    %11974 = vmatprep.subr.bf16.mxu0 %v10187
    %11975 = vmatpush1.bf16.msra.mxu0 %v10186
    %11976 = vmatprep.subr.bf16.mxu0 %v10194
    %11977 = vmatpush1.bf16.msra.mxu0 %v10193
    %11978 = vmatprep.subr.bf16.mxu0 %v10201
    %11979 = vmatpush1.bf16.msra.mxu0 %v10200
    %11980 = vmatprep.subr.bf16.mxu0 %v10208
    %11981 = vmatpush1.bf16.msra.mxu0 %v10207
    %11982 = vmatprep.subr.bf16.mxu0 %v10215
    %11983 = vmatpush1.bf16.msra.mxu0 %v10214
    %11984 = vmatprep.subr.bf16.mxu0 %v10222
    %11985 = vmatpush1.bf16.msra.mxu0 %v10221
    %11986 = vmatprep.subr.bf16.mxu0 %v10229
    %11987 = vmatpush1.bf16.msra.mxu0 %v10228
    %11988 = vmatprep.subr.bf16.mxu0 %v10236
    %11989 = vmatpush1.bf16.msra.mxu0 %v10235
    %11990 = vmatprep.subr.bf16.mxu0 %v10243
    %11991 = vmatpush1.bf16.msra.mxu0 %v10242
    %11992 = vmatprep.subr.bf16.mxu0 %v10250
    %11993 = vmatpush1.bf16.msra.mxu0 %v10249
    %11994 = vmatprep.subr.bf16.mxu0 %v10257
    %11995 = vmatpush1.bf16.msra.mxu0 %v10256
    %11996 = vmatprep.subr.bf16.mxu0 %v10264
    %11997 = vmatpush1.bf16.msra.mxu0 %v10263
    %11998 = vmatprep.subr.bf16.mxu0 %v10271
    %11999 = vmatpush1.bf16.msra.mxu0 %v10270
    %12000 = vmatprep.subr.bf16.mxu0 %v10278
    %12001 = vmatpush1.bf16.msra.mxu0 %v10277
    %12002 = vmatprep.mubr.bf16.mxu0 %v7928
    %12003 = vmatmul.mubr.bf16.gmra.mrb[0].mxu0 %v7927
    %v12004 = vpop.f32.mrb[0].mxu0
    %v12005 = vadd.f32 %v11892, %v12004
    %v12006 = vpop.f32.mrb[0].mxu0
    %v12007 = vadd.f32 %v11894, %v12006
    %v12008 = vpop.f32.mrb[0].mxu0
    %v12009 = vadd.f32 %v11896, %v12008
    %v12010 = vpop.f32.mrb[0].mxu0
    %v12011 = vadd.f32 %v11898, %v12010
    %12012 = vmatprep.mubr.bf16.mxu0 %v7936
    %12013 = vmatmul.mubr.bf16.gmra.mrb[0].mxu0 %v7935
    %v12014 = vpop.f32.mrb[0].mxu0
    %v12015 = vadd.f32 %v11902, %v12014
    %v12016 = vpop.f32.mrb[0].mxu0
    %v12017 = vadd.f32 %v11904, %v12016
    %v12018 = vpop.f32.mrb[0].mxu0
    %v12019 = vadd.f32 %v11906, %v12018
    %v12020 = vpop.f32.mrb[0].mxu0
    %v12021 = vadd.f32 %v11908, %v12020
    %12022 = vmatprep.mubr.bf16.mxu0 %v7944
    %12023 = vmatmul.mubr.bf16.gmra.mrb[0].mxu0 %v7943
    %v12024 = vpop.f32.mrb[0].mxu0
    %v12025 = vadd.f32 %v11912, %v12024
    %v12026 = vpop.f32.mrb[0].mxu0
    %v12027 = vadd.f32 %v11914, %v12026
    %v12028 = vpop.f32.mrb[0].mxu0
    %v12029 = vadd.f32 %v11916, %v12028
    %v12030 = vpop.f32.mrb[0].mxu0
    %v12031 = vadd.f32 %v11918, %v12030
    %12032 = vmatprep.mubr.bf16.mxu0 %v7952
    %12033 = vmatmul.mubr.bf16.gmra.mrb[0].mxu0 %v7951
    %v12034 = vpop.f32.mrb[0].mxu0
    %v12035 = vadd.f32 %v11922, %v12034
    %v12036 = vpop.f32.mrb[0].mxu0
    %v12037 = vadd.f32 %v11924, %v12036
    %v12038 = vpop.f32.mrb[0].mxu0
    %v12039 = vadd.f32 %v11926, %v12038
    %v12040 = vpop.f32.mrb[0].mxu0
    %v12041 = vadd.f32 %v11928, %v12040
    %12042 = vmatprep.mubr.bf16.mxu0 %v7960
    %12043 = vmatmul.mubr.bf16.gmra.mrb[0].mxu0 %v7959
    %v12044 = vpop.f32.mrb[0].mxu0
    %v12045 = vadd.f32 %v11932, %v12044
    %v12046 = vpop.f32.mrb[0].mxu0
    %v12047 = vadd.f32 %v11934, %v12046
    %v12048 = vpop.f32.mrb[0].mxu0
    %v12049 = vadd.f32 %v11936, %v12048
    %v12050 = vpop.f32.mrb[0].mxu0
    %v12051 = vadd.f32 %v11938, %v12050
    %12052 = vmatprep.mubr.bf16.mxu0 %v7968
    %12053 = vmatmul.mubr.bf16.gmra.mrb[0].mxu0 %v7967
    %v12054 = vpop.f32.mrb[0].mxu0
    %v12055 = vadd.f32 %v11942, %v12054
    %v12056 = vpop.f32.mrb[0].mxu0
    %v12057 = vadd.f32 %v11944, %v12056
    %v12058 = vpop.f32.mrb[0].mxu0
    %v12059 = vadd.f32 %v11946, %v12058
    %v12060 = vpop.f32.mrb[0].mxu0
    %v12061 = vadd.f32 %v11948, %v12060
    %12062 = vmatprep.mubr.bf16.mxu0 %v7976
    %12063 = vmatmul.mubr.bf16.gmra.mrb[0].mxu0 %v7975
    %v12064 = vpop.f32.mrb[0].mxu0
    %v12065 = vadd.f32 %v11952, %v12064
    %v12066 = vpop.f32.mrb[0].mxu0
    %v12067 = vadd.f32 %v11954, %v12066
    %v12068 = vpop.f32.mrb[0].mxu0
    %v12069 = vadd.f32 %v11956, %v12068
    %v12070 = vpop.f32.mrb[0].mxu0
    %v12071 = vadd.f32 %v11958, %v12070
    %12072 = vmatprep.mubr.bf16.mxu0 %v7984
    %12073 = vmatmul.mubr.bf16.gmra.mrb[0].mxu0 %v7983
    %v12074 = vpop.f32.mrb[0].mxu0
    %v12075 = vadd.f32 %v11962, %v12074
    %v12076 = vpop.f32.mrb[0].mxu0
    %v12077 = vadd.f32 %v11964, %v12076
    %v12078 = vpop.f32.mrb[0].mxu0
    %v12079 = vadd.f32 %v11966, %v12078
    %v12080 = vpop.f32.mrb[0].mxu0
    %v12081 = vadd.f32 %v11968, %v12080
    %12082 = vdwg.mxu0
    %12083 = vmatprep.subr.bf16.mxu0 %v10285
    %12084 = vmatpush1.bf16.msra.mxu0 %v10284
    %12085 = vmatprep.subr.bf16.mxu0 %v10292
    %12086 = vmatpush1.bf16.msra.mxu0 %v10291
    %12087 = vmatprep.subr.bf16.mxu0 %v10299
    %12088 = vmatpush1.bf16.msra.mxu0 %v10298
    %12089 = vmatprep.subr.bf16.mxu0 %v10306
    %12090 = vmatpush1.bf16.msra.mxu0 %v10305
    %12091 = vmatprep.subr.bf16.mxu0 %v10313
    %12092 = vmatpush1.bf16.msra.mxu0 %v10312
    %12093 = vmatprep.subr.bf16.mxu0 %v10320
    %12094 = vmatpush1.bf16.msra.mxu0 %v10319
    %12095 = vmatprep.subr.bf16.mxu0 %v10327
    %12096 = vmatpush1.bf16.msra.mxu0 %v10326
    %12097 = vmatprep.subr.bf16.mxu0 %v10334
    %12098 = vmatpush1.bf16.msra.mxu0 %v10333
    %12099 = vmatprep.subr.bf16.mxu0 %v10341
    %12100 = vmatpush1.bf16.msra.mxu0 %v10340
    %12101 = vmatprep.subr.bf16.mxu0 %v10348
    %12102 = vmatpush1.bf16.msra.mxu0 %v10347
    %12103 = vmatprep.subr.bf16.mxu0 %v10355
    %12104 = vmatpush1.bf16.msra.mxu0 %v10354
    %12105 = vmatprep.subr.bf16.mxu0 %v10362
    %12106 = vmatpush1.bf16.msra.mxu0 %v10361
    %12107 = vmatprep.subr.bf16.mxu0 %v10369
    %12108 = vmatpush1.bf16.msra.mxu0 %v10368
    %12109 = vmatprep.subr.bf16.mxu0 %v10376
    %12110 = vmatpush1.bf16.msra.mxu0 %v10375
    %12111 = vmatprep.subr.bf16.mxu0 %v10383
    %12112 = vmatpush1.bf16.msra.mxu0 %v10382
    %12113 = vmatprep.subr.bf16.mxu0 %v10390
    %12114 = vmatpush1.bf16.msra.mxu0 %v10389
    %12115 = vmatprep.mubr.bf16.mxu0 %v7930
    %12116 = vmatmul.mubr.bf16.gmra.mrb[0].mxu0 %v7929
    %v12117 = vpop.f32.mrb[0].mxu0
    %v12118 = vadd.f32 %v12005, %v12117
    %v12119 = vpop.f32.mrb[0].mxu0
    %v12120 = vadd.f32 %v12007, %v12119
    %v12121 = vpop.f32.mrb[0].mxu0
    %v12122 = vadd.f32 %v12009, %v12121
    %v12123 = vpop.f32.mrb[0].mxu0
    %v12124 = vadd.f32 %v12011, %v12123
    %12125 = vmatprep.mubr.bf16.mxu0 %v7938
    %12126 = vmatmul.mubr.bf16.gmra.mrb[0].mxu0 %v7937
    %v12127 = vpop.f32.mrb[0].mxu0
    %v12128 = vadd.f32 %v12015, %v12127
    %v12129 = vpop.f32.mrb[0].mxu0
    %v12130 = vadd.f32 %v12017, %v12129
    %v12131 = vpop.f32.mrb[0].mxu0
    %v12132 = vadd.f32 %v12019, %v12131
    %v12133 = vpop.f32.mrb[0].mxu0
    %v12134 = vadd.f32 %v12021, %v12133
    %12135 = vmatprep.mubr.bf16.mxu0 %v7946
    %12136 = vmatmul.mubr.bf16.gmra.mrb[0].mxu0 %v7945
    %v12137 = vpop.f32.mrb[0].mxu0
    %v12138 = vadd.f32 %v12025, %v12137
    %v12139 = vpop.f32.mrb[0].mxu0
    %v12140 = vadd.f32 %v12027, %v12139
    %v12141 = vpop.f32.mrb[0].mxu0
    %v12142 = vadd.f32 %v12029, %v12141
    %v12143 = vpop.f32.mrb[0].mxu0
    %v12144 = vadd.f32 %v12031, %v12143
    %12145 = vmatprep.mubr.bf16.mxu0 %v7954
    %12146 = vmatmul.mubr.bf16.gmra.mrb[0].mxu0 %v7953
    %v12147 = vpop.f32.mrb[0].mxu0
    %v12148 = vadd.f32 %v12035, %v12147
    %v12149 = vpop.f32.mrb[0].mxu0
    %v12150 = vadd.f32 %v12037, %v12149
    %v12151 = vpop.f32.mrb[0].mxu0
    %v12152 = vadd.f32 %v12039, %v12151
    %v12153 = vpop.f32.mrb[0].mxu0
    %v12154 = vadd.f32 %v12041, %v12153
    %12155 = vmatprep.mubr.bf16.mxu0 %v7962
    %12156 = vmatmul.mubr.bf16.gmra.mrb[0].mxu0 %v7961
    %v12157 = vpop.f32.mrb[0].mxu0
    %v12158 = vadd.f32 %v12045, %v12157
    %v12159 = vpop.f32.mrb[0].mxu0
    %v12160 = vadd.f32 %v12047, %v12159
    %v12161 = vpop.f32.mrb[0].mxu0
    %v12162 = vadd.f32 %v12049, %v12161
    %v12163 = vpop.f32.mrb[0].mxu0
    %v12164 = vadd.f32 %v12051, %v12163
    %12165 = vmatprep.mubr.bf16.mxu0 %v7970
    %12166 = vmatmul.mubr.bf16.gmra.mrb[0].mxu0 %v7969
    %v12167 = vpop.f32.mrb[0].mxu0
    %v12168 = vadd.f32 %v12055, %v12167
    %v12169 = vpop.f32.mrb[0].mxu0
    %v12170 = vadd.f32 %v12057, %v12169
    %v12171 = vpop.f32.mrb[0].mxu0
    %v12172 = vadd.f32 %v12059, %v12171
    %v12173 = vpop.f32.mrb[0].mxu0
    %v12174 = vadd.f32 %v12061, %v12173
    %12175 = vmatprep.mubr.bf16.mxu0 %v7978
    %12176 = vmatmul.mubr.bf16.gmra.mrb[0].mxu0 %v7977
    %v12177 = vpop.f32.mrb[0].mxu0
    %v12178 = vadd.f32 %v12065, %v12177
    %v12179 = vpop.f32.mrb[0].mxu0
    %v12180 = vadd.f32 %v12067, %v12179
    %v12181 = vpop.f32.mrb[0].mxu0
    %v12182 = vadd.f32 %v12069, %v12181
    %v12183 = vpop.f32.mrb[0].mxu0
    %v12184 = vadd.f32 %v12071, %v12183
    %12185 = vmatprep.mubr.bf16.mxu0 %v7986
    %12186 = vmatmul.mubr.bf16.gmra.mrb[0].mxu0 %v7985
    %v12187 = vpop.f32.mrb[0].mxu0
    %v12188 = vadd.f32 %v12075, %v12187
    %v12189 = vpop.f32.mrb[0].mxu0
    %v12190 = vadd.f32 %v12077, %v12189
    %v12191 = vpop.f32.mrb[0].mxu0
    %v12192 = vadd.f32 %v12079, %v12191
    %v12193 = vpop.f32.mrb[0].mxu0
    %v12194 = vadd.f32 %v12081, %v12193
    %12195 = vdwg.mxu0
    %12196 = vmatprep.subr.bf16.mxu0 0
    %12197 = vmatpush1.bf16.msra.mxu0 %v9950
    %12198 = vmatprep.subr.bf16.mxu0 0
    %12199 = vmatpush1.bf16.msra.mxu0 %v9957
    %12200 = vmatprep.subr.bf16.mxu0 0
    %12201 = vmatpush1.bf16.msra.mxu0 %v9964
    %12202 = vmatprep.subr.bf16.mxu0 0
    %12203 = vmatpush1.bf16.msra.mxu0 %v9971
    %12204 = vmatprep.subr.bf16.mxu0 0
    %12205 = vmatpush1.bf16.msra.mxu0 %v9978
    %12206 = vmatprep.subr.bf16.mxu0 0
    %12207 = vmatpush1.bf16.msra.mxu0 %v9985
    %12208 = vmatprep.subr.bf16.mxu0 0
    %12209 = vmatpush1.bf16.msra.mxu0 %v9992
    %12210 = vmatprep.subr.bf16.mxu0 0
    %12211 = vmatpush1.bf16.msra.mxu0 %v9999
    %12212 = vmatprep.subr.bf16.mxu0 0
    %12213 = vmatpush1.bf16.msra.mxu0 %v10006
    %12214 = vmatprep.subr.bf16.mxu0 0
    %12215 = vmatpush1.bf16.msra.mxu0 %v10013
    %12216 = vmatprep.subr.bf16.mxu0 0
    %12217 = vmatpush1.bf16.msra.mxu0 %v10020
    %12218 = vmatprep.subr.bf16.mxu0 0
    %12219 = vmatpush1.bf16.msra.mxu0 %v10027
    %12220 = vmatprep.subr.bf16.mxu0 0
    %12221 = vmatpush1.bf16.msra.mxu0 %v10034
    %12222 = vmatprep.subr.bf16.mxu0 0
    %12223 = vmatpush1.bf16.msra.mxu0 %v10041
    %12224 = vmatprep.subr.bf16.mxu0 0
    %12225 = vmatpush1.bf16.msra.mxu0 %v10048
    %12226 = vmatprep.subr.bf16.mxu0 0
    %12227 = vmatpush1.bf16.msra.mxu0 %v10055
    %12228 = vmatprep.mubr.bf16.mxu0 %v7924
    %12229 = vmatmul.mubr.bf16.gmra.mrb[0].mxu0 %v7923
    %v12230 = vpop.f32.mrb[0].mxu0
    %v12231 = vadd.f32 %v8528, %v12230
    %v12232 = vpop.f32.mrb[0].mxu0
    %v12233 = vpop.f32.mrb[0].mxu0
    %v12234 = vadd.f32 %v8528, %v12233
    %v12235 = vpop.f32.mrb[0].mxu0
    %12236 = vmatprep.mubr.bf16.mxu0 %v7932
    %12237 = vmatmul.mubr.bf16.gmra.mrb[0].mxu0 %v7931
    %v12238 = vpop.f32.mrb[0].mxu0
    %v12239 = vadd.f32 %v8528, %v12238
    %v12240 = vpop.f32.mrb[0].mxu0
    %v12241 = vpop.f32.mrb[0].mxu0
    %v12242 = vadd.f32 %v8528, %v12241
    %v12243 = vpop.f32.mrb[0].mxu0
    %12244 = vmatprep.mubr.bf16.mxu0 %v7940
    %12245 = vmatmul.mubr.bf16.gmra.mrb[0].mxu0 %v7939
    %v12246 = vpop.f32.mrb[0].mxu0
    %v12247 = vadd.f32 %v8528, %v12246
    %v12248 = vpop.f32.mrb[0].mxu0
    %v12249 = vpop.f32.mrb[0].mxu0
    %v12250 = vadd.f32 %v8528, %v12249
    %v12251 = vpop.f32.mrb[0].mxu0
    %12252 = vmatprep.mubr.bf16.mxu0 %v7948
    %12253 = vmatmul.mubr.bf16.gmra.mrb[0].mxu0 %v7947
    %v12254 = vpop.f32.mrb[0].mxu0
    %v12255 = vadd.f32 %v8528, %v12254
    %v12256 = vpop.f32.mrb[0].mxu0
    %v12257 = vpop.f32.mrb[0].mxu0
    %v12258 = vadd.f32 %v8528, %v12257
    %v12259 = vpop.f32.mrb[0].mxu0
    %12260 = vmatprep.mubr.bf16.mxu0 %v7956
    %12261 = vmatmul.mubr.bf16.gmra.mrb[0].mxu0 %v7955
    %v12262 = vpop.f32.mrb[0].mxu0
    %v12263 = vadd.f32 %v8528, %v12262
    %v12264 = vpop.f32.mrb[0].mxu0
    %v12265 = vpop.f32.mrb[0].mxu0
    %v12266 = vadd.f32 %v8528, %v12265
    %v12267 = vpop.f32.mrb[0].mxu0
    %12268 = vmatprep.mubr.bf16.mxu0 %v7964
    %12269 = vmatmul.mubr.bf16.gmra.mrb[0].mxu0 %v7963
    %v12270 = vpop.f32.mrb[0].mxu0
    %v12271 = vadd.f32 %v8528, %v12270
    %v12272 = vpop.f32.mrb[0].mxu0
    %v12273 = vpop.f32.mrb[0].mxu0
    %v12274 = vadd.f32 %v8528, %v12273
    %v12275 = vpop.f32.mrb[0].mxu0
    %12276 = vmatprep.mubr.bf16.mxu0 %v7972
    %12277 = vmatmul.mubr.bf16.gmra.mrb[0].mxu0 %v7971
    %v12278 = vpop.f32.mrb[0].mxu0
    %v12279 = vadd.f32 %v8528, %v12278
    %v12280 = vpop.f32.mrb[0].mxu0
    %v12281 = vpop.f32.mrb[0].mxu0
    %v12282 = vadd.f32 %v8528, %v12281
    %v12283 = vpop.f32.mrb[0].mxu0
    %12284 = vmatprep.mubr.bf16.mxu0 %v7980
    %12285 = vmatmul.mubr.bf16.gmra.mrb[0].mxu0 %v7979
    %v12286 = vpop.f32.mrb[0].mxu0
    %v12287 = vadd.f32 %v8528, %v12286
    %v12288 = vpop.f32.mrb[0].mxu0
    %v12289 = vpop.f32.mrb[0].mxu0
    %v12290 = vadd.f32 %v8528, %v12289
    %v12291 = vpop.f32.mrb[0].mxu0
    %12292 = vdwg.mxu0
    %12293 = vmatprep.subr.bf16.mxu0 0
    %12294 = vmatpush1.bf16.msra.mxu0 %v10062
    %12295 = vmatprep.subr.bf16.mxu0 0
    %12296 = vmatpush1.bf16.msra.mxu0 %v10069
    %12297 = vmatprep.subr.bf16.mxu0 0
    %12298 = vmatpush1.bf16.msra.mxu0 %v10076
    %12299 = vmatprep.subr.bf16.mxu0 0
    %12300 = vmatpush1.bf16.msra.mxu0 %v10083
    %12301 = vmatprep.subr.bf16.mxu0 0
    %12302 = vmatpush1.bf16.msra.mxu0 %v10090
    %12303 = vmatprep.subr.bf16.mxu0 0
    %12304 = vmatpush1.bf16.msra.mxu0 %v10097
    %12305 = vmatprep.subr.bf16.mxu0 0
    %12306 = vmatpush1.bf16.msra.mxu0 %v10104
    %12307 = vmatprep.subr.bf16.mxu0 0
    %12308 = vmatpush1.bf16.msra.mxu0 %v10111
    %12309 = vmatprep.subr.bf16.mxu0 0
    %12310 = vmatpush1.bf16.msra.mxu0 %v10118
    %12311 = vmatprep.subr.bf16.mxu0 0
    %12312 = vmatpush1.bf16.msra.mxu0 %v10125
    %12313 = vmatprep.subr.bf16.mxu0 0
    %12314 = vmatpush1.bf16.msra.mxu0 %v10132
    %12315 = vmatprep.subr.bf16.mxu0 0
    %12316 = vmatpush1.bf16.msra.mxu0 %v10139
    %12317 = vmatprep.subr.bf16.mxu0 0
    %12318 = vmatpush1.bf16.msra.mxu0 %v10146
    %12319 = vmatprep.subr.bf16.mxu0 0
    %12320 = vmatpush1.bf16.msra.mxu0 %v10153
    %12321 = vmatprep.subr.bf16.mxu0 0
    %12322 = vmatpush1.bf16.msra.mxu0 %v10160
    %12323 = vmatprep.subr.bf16.mxu0 0
    %12324 = vmatpush1.bf16.msra.mxu0 %v10167
    %12325 = vmatprep.mubr.bf16.mxu0 %v7926
    %12326 = vmatmul.mubr.bf16.gmra.mrb[0].mxu0 %v7925
    %v12327 = vpop.f32.mrb[0].mxu0
    %v12328 = vadd.f32 %v12231, %v12327
    %v12329 = vpop.f32.mrb[0].mxu0
    %v12330 = vpop.f32.mrb[0].mxu0
    %v12331 = vadd.f32 %v12234, %v12330
    %v12332 = vpop.f32.mrb[0].mxu0
    %12333 = vmatprep.mubr.bf16.mxu0 %v7934
    %12334 = vmatmul.mubr.bf16.gmra.mrb[0].mxu0 %v7933
    %v12335 = vpop.f32.mrb[0].mxu0
    %v12336 = vadd.f32 %v12239, %v12335
    %v12337 = vpop.f32.mrb[0].mxu0
    %v12338 = vpop.f32.mrb[0].mxu0
    %v12339 = vadd.f32 %v12242, %v12338
    %v12340 = vpop.f32.mrb[0].mxu0
    %12341 = vmatprep.mubr.bf16.mxu0 %v7942
    %12342 = vmatmul.mubr.bf16.gmra.mrb[0].mxu0 %v7941
    %v12343 = vpop.f32.mrb[0].mxu0
    %v12344 = vadd.f32 %v12247, %v12343
    %v12345 = vpop.f32.mrb[0].mxu0
    %v12346 = vpop.f32.mrb[0].mxu0
    %v12347 = vadd.f32 %v12250, %v12346
    %v12348 = vpop.f32.mrb[0].mxu0
    %12349 = vmatprep.mubr.bf16.mxu0 %v7950
    %12350 = vmatmul.mubr.bf16.gmra.mrb[0].mxu0 %v7949
    %v12351 = vpop.f32.mrb[0].mxu0
    %v12352 = vadd.f32 %v12255, %v12351
    %v12353 = vpop.f32.mrb[0].mxu0
    %v12354 = vpop.f32.mrb[0].mxu0
    %v12355 = vadd.f32 %v12258, %v12354
    %v12356 = vpop.f32.mrb[0].mxu0
    %12357 = vmatprep.mubr.bf16.mxu0 %v7958
    %12358 = vmatmul.mubr.bf16.gmra.mrb[0].mxu0 %v7957
    %v12359 = vpop.f32.mrb[0].mxu0
    %v12360 = vadd.f32 %v12263, %v12359
    %v12361 = vpop.f32.mrb[0].mxu0
    %v12362 = vpop.f32.mrb[0].mxu0
    %v12363 = vadd.f32 %v12266, %v12362
    %v12364 = vpop.f32.mrb[0].mxu0
    %12365 = vmatprep.mubr.bf16.mxu0 %v7966
    %12366 = vmatmul.mubr.bf16.gmra.mrb[0].mxu0 %v7965
    %v12367 = vpop.f32.mrb[0].mxu0
    %v12368 = vadd.f32 %v12271, %v12367
    %v12369 = vpop.f32.mrb[0].mxu0
    %v12370 = vpop.f32.mrb[0].mxu0
    %v12371 = vadd.f32 %v12274, %v12370
    %v12372 = vpop.f32.mrb[0].mxu0
    %12373 = vmatprep.mubr.bf16.mxu0 %v7974
    %12374 = vmatmul.mubr.bf16.gmra.mrb[0].mxu0 %v7973
    %v12375 = vpop.f32.mrb[0].mxu0
    %v12376 = vadd.f32 %v12279, %v12375
    %v12377 = vpop.f32.mrb[0].mxu0
    %v12378 = vpop.f32.mrb[0].mxu0
    %v12379 = vadd.f32 %v12282, %v12378
    %v12380 = vpop.f32.mrb[0].mxu0
    %12381 = vmatprep.mubr.bf16.mxu0 %v7982
    %12382 = vmatmul.mubr.bf16.gmra.mrb[0].mxu0 %v7981
    %v12383 = vpop.f32.mrb[0].mxu0
    %v12384 = vadd.f32 %v12287, %v12383
    %v12385 = vpop.f32.mrb[0].mxu0
    %v12386 = vpop.f32.mrb[0].mxu0
    %v12387 = vadd.f32 %v12290, %v12386
    %v12388 = vpop.f32.mrb[0].mxu0
    %12389 = vdwg.mxu0
    %12390 = vmatprep.subr.bf16.mxu0 0
    %12391 = vmatpush1.bf16.msra.mxu0 %v10174
    %12392 = vmatprep.subr.bf16.mxu0 0
    %12393 = vmatpush1.bf16.msra.mxu0 %v10181
    %12394 = vmatprep.subr.bf16.mxu0 0
    %12395 = vmatpush1.bf16.msra.mxu0 %v10188
    %12396 = vmatprep.subr.bf16.mxu0 0
    %12397 = vmatpush1.bf16.msra.mxu0 %v10195
    %12398 = vmatprep.subr.bf16.mxu0 0
    %12399 = vmatpush1.bf16.msra.mxu0 %v10202
    %12400 = vmatprep.subr.bf16.mxu0 0
    %12401 = vmatpush1.bf16.msra.mxu0 %v10209
    %12402 = vmatprep.subr.bf16.mxu0 0
    %12403 = vmatpush1.bf16.msra.mxu0 %v10216
    %12404 = vmatprep.subr.bf16.mxu0 0
    %12405 = vmatpush1.bf16.msra.mxu0 %v10223
    %12406 = vmatprep.subr.bf16.mxu0 0
    %12407 = vmatpush1.bf16.msra.mxu0 %v10230
    %12408 = vmatprep.subr.bf16.mxu0 0
    %12409 = vmatpush1.bf16.msra.mxu0 %v10237
    %12410 = vmatprep.subr.bf16.mxu0 0
    %12411 = vmatpush1.bf16.msra.mxu0 %v10244
    %12412 = vmatprep.subr.bf16.mxu0 0
    %12413 = vmatpush1.bf16.msra.mxu0 %v10251
    %12414 = vmatprep.subr.bf16.mxu0 0
    %12415 = vmatpush1.bf16.msra.mxu0 %v10258
    %12416 = vmatprep.subr.bf16.mxu0 0
    %12417 = vmatpush1.bf16.msra.mxu0 %v10265
    %12418 = vmatprep.subr.bf16.mxu0 0
    %12419 = vmatpush1.bf16.msra.mxu0 %v10272
    %12420 = vmatprep.subr.bf16.mxu0 0
    %12421 = vmatpush1.bf16.msra.mxu0 %v10279
    %12422 = vmatprep.mubr.bf16.mxu0 %v7928
    %12423 = vmatmul.mubr.bf16.gmra.mrb[0].mxu0 %v7927
    %v12424 = vpop.f32.mrb[0].mxu0
    %v12425 = vadd.f32 %v12328, %v12424
    %v12426 = vpop.f32.mrb[0].mxu0
    %v12427 = vpop.f32.mrb[0].mxu0
    %v12428 = vadd.f32 %v12331, %v12427
    %v12429 = vpop.f32.mrb[0].mxu0
    %12430 = vmatprep.mubr.bf16.mxu0 %v7936
    %12431 = vmatmul.mubr.bf16.gmra.mrb[0].mxu0 %v7935
    %v12432 = vpop.f32.mrb[0].mxu0
    %v12433 = vadd.f32 %v12336, %v12432
    %v12434 = vpop.f32.mrb[0].mxu0
    %v12435 = vpop.f32.mrb[0].mxu0
    %v12436 = vadd.f32 %v12339, %v12435
    %v12437 = vpop.f32.mrb[0].mxu0
    %12438 = vmatprep.mubr.bf16.mxu0 %v7944
    %12439 = vmatmul.mubr.bf16.gmra.mrb[0].mxu0 %v7943
    %v12440 = vpop.f32.mrb[0].mxu0
    %v12441 = vadd.f32 %v12344, %v12440
    %v12442 = vpop.f32.mrb[0].mxu0
    %v12443 = vpop.f32.mrb[0].mxu0
    %v12444 = vadd.f32 %v12347, %v12443
    %v12445 = vpop.f32.mrb[0].mxu0
    %12446 = vmatprep.mubr.bf16.mxu0 %v7952
    %12447 = vmatmul.mubr.bf16.gmra.mrb[0].mxu0 %v7951
    %v12448 = vpop.f32.mrb[0].mxu0
    %v12449 = vadd.f32 %v12352, %v12448
    %v12450 = vpop.f32.mrb[0].mxu0
    %v12451 = vpop.f32.mrb[0].mxu0
    %v12452 = vadd.f32 %v12355, %v12451
    %v12453 = vpop.f32.mrb[0].mxu0
    %12454 = vmatprep.mubr.bf16.mxu0 %v7960
    %12455 = vmatmul.mubr.bf16.gmra.mrb[0].mxu0 %v7959
    %v12456 = vpop.f32.mrb[0].mxu0
    %v12457 = vadd.f32 %v12360, %v12456
    %v12458 = vpop.f32.mrb[0].mxu0
    %v12459 = vpop.f32.mrb[0].mxu0
    %v12460 = vadd.f32 %v12363, %v12459
    %v12461 = vpop.f32.mrb[0].mxu0
    %12462 = vmatprep.mubr.bf16.mxu0 %v7968
    %12463 = vmatmul.mubr.bf16.gmra.mrb[0].mxu0 %v7967
    %v12464 = vpop.f32.mrb[0].mxu0
    %v12465 = vadd.f32 %v12368, %v12464
    %v12466 = vpop.f32.mrb[0].mxu0
    %v12467 = vpop.f32.mrb[0].mxu0
    %v12468 = vadd.f32 %v12371, %v12467
    %v12469 = vpop.f32.mrb[0].mxu0
    %12470 = vmatprep.mubr.bf16.mxu0 %v7976
    %12471 = vmatmul.mubr.bf16.gmra.mrb[0].mxu0 %v7975
    %v12472 = vpop.f32.mrb[0].mxu0
    %v12473 = vadd.f32 %v12376, %v12472
    %v12474 = vpop.f32.mrb[0].mxu0
    %v12475 = vpop.f32.mrb[0].mxu0
    %v12476 = vadd.f32 %v12379, %v12475
    %v12477 = vpop.f32.mrb[0].mxu0
    %12478 = vmatprep.mubr.bf16.mxu0 %v7984
    %12479 = vmatmul.mubr.bf16.gmra.mrb[0].mxu0 %v7983
    %v12480 = vpop.f32.mrb[0].mxu0
    %v12481 = vadd.f32 %v12384, %v12480
    %v12482 = vpop.f32.mrb[0].mxu0
    %v12483 = vpop.f32.mrb[0].mxu0
    %v12484 = vadd.f32 %v12387, %v12483
    %v12485 = vpop.f32.mrb[0].mxu0
    %12486 = vdwg.mxu0
    %12487 = vmatprep.subr.bf16.mxu0 0
    %12488 = vmatpush1.bf16.msra.mxu0 %v10286
    %12489 = vmatprep.subr.bf16.mxu0 0
    %12490 = vmatpush1.bf16.msra.mxu0 %v10293
    %12491 = vmatprep.subr.bf16.mxu0 0
    %12492 = vmatpush1.bf16.msra.mxu0 %v10300
    %12493 = vmatprep.subr.bf16.mxu0 0
    %12494 = vmatpush1.bf16.msra.mxu0 %v10307
    %12495 = vmatprep.subr.bf16.mxu0 0
    %12496 = vmatpush1.bf16.msra.mxu0 %v10314
    %12497 = vmatprep.subr.bf16.mxu0 0
    %12498 = vmatpush1.bf16.msra.mxu0 %v10321
    %12499 = vmatprep.subr.bf16.mxu0 0
    %12500 = vmatpush1.bf16.msra.mxu0 %v10328
    %12501 = vmatprep.subr.bf16.mxu0 0
    %12502 = vmatpush1.bf16.msra.mxu0 %v10335
    %12503 = vmatprep.subr.bf16.mxu0 0
    %12504 = vmatpush1.bf16.msra.mxu0 %v10342
    %12505 = vmatprep.subr.bf16.mxu0 0
    %12506 = vmatpush1.bf16.msra.mxu0 %v10349
    %12507 = vmatprep.subr.bf16.mxu0 0
    %12508 = vmatpush1.bf16.msra.mxu0 %v10356
    %12509 = vmatprep.subr.bf16.mxu0 0
    %12510 = vmatpush1.bf16.msra.mxu0 %v10363
    %12511 = vmatprep.subr.bf16.mxu0 0
    %12512 = vmatpush1.bf16.msra.mxu0 %v10370
    %12513 = vmatprep.subr.bf16.mxu0 0
    %12514 = vmatpush1.bf16.msra.mxu0 %v10377
    %12515 = vmatprep.subr.bf16.mxu0 0
    %12516 = vmatpush1.bf16.msra.mxu0 %v10384
    %12517 = vmatprep.subr.bf16.mxu0 0
    %12518 = vmatpush1.bf16.msra.mxu0 %v10391
    %12519 = vmatprep.mubr.bf16.mxu0 %v7930
    %12520 = vmatmul.mubr.bf16.gmra.mrb[0].mxu0 %v7929
    %v12521 = vpop.f32.mrb[0].mxu0
    %v12522 = vadd.f32 %v12425, %v12521
    %v12523 = vpop.f32.mrb[0].mxu0
    %v12524 = vpop.f32.mrb[0].mxu0
    %v12525 = vadd.f32 %v12428, %v12524
    %v12526 = vpop.f32.mrb[0].mxu0
    %12527 = vmatprep.mubr.bf16.mxu0 %v7938
    %12528 = vmatmul.mubr.bf16.gmra.mrb[0].mxu0 %v7937
    %v12529 = vpop.f32.mrb[0].mxu0
    %v12530 = vadd.f32 %v12433, %v12529
    %v12531 = vpop.f32.mrb[0].mxu0
    %v12532 = vpop.f32.mrb[0].mxu0
    %v12533 = vadd.f32 %v12436, %v12532
    %v12534 = vpop.f32.mrb[0].mxu0
    %12535 = vmatprep.mubr.bf16.mxu0 %v7946
    %12536 = vmatmul.mubr.bf16.gmra.mrb[0].mxu0 %v7945
    %v12537 = vpop.f32.mrb[0].mxu0
    %v12538 = vadd.f32 %v12441, %v12537
    %v12539 = vpop.f32.mrb[0].mxu0
    %v12540 = vpop.f32.mrb[0].mxu0
    %v12541 = vadd.f32 %v12444, %v12540
    %v12542 = vpop.f32.mrb[0].mxu0
    %12543 = vmatprep.mubr.bf16.mxu0 %v7954
    %12544 = vmatmul.mubr.bf16.gmra.mrb[0].mxu0 %v7953
    %v12545 = vpop.f32.mrb[0].mxu0
    %v12546 = vadd.f32 %v12449, %v12545
    %v12547 = vpop.f32.mrb[0].mxu0
    %v12548 = vpop.f32.mrb[0].mxu0
    %v12549 = vadd.f32 %v12452, %v12548
    %v12550 = vpop.f32.mrb[0].mxu0
    %12551 = vmatprep.mubr.bf16.mxu0 %v7962
    %12552 = vmatmul.mubr.bf16.gmra.mrb[0].mxu0 %v7961
    %v12553 = vpop.f32.mrb[0].mxu0
    %v12554 = vadd.f32 %v12457, %v12553
    %v12555 = vpop.f32.mrb[0].mxu0
    %v12556 = vpop.f32.mrb[0].mxu0
    %v12557 = vadd.f32 %v12460, %v12556
    %v12558 = vpop.f32.mrb[0].mxu0
    %12559 = vmatprep.mubr.bf16.mxu0 %v7970
    %12560 = vmatmul.mubr.bf16.gmra.mrb[0].mxu0 %v7969
    %v12561 = vpop.f32.mrb[0].mxu0
    %v12562 = vadd.f32 %v12465, %v12561
    %v12563 = vpop.f32.mrb[0].mxu0
    %v12564 = vpop.f32.mrb[0].mxu0
    %v12565 = vadd.f32 %v12468, %v12564
    %v12566 = vpop.f32.mrb[0].mxu0
    %12567 = vmatprep.mubr.bf16.mxu0 %v7978
    %12568 = vmatmul.mubr.bf16.gmra.mrb[0].mxu0 %v7977
    %v12569 = vpop.f32.mrb[0].mxu0
    %v12570 = vadd.f32 %v12473, %v12569
    %v12571 = vpop.f32.mrb[0].mxu0
    %v12572 = vpop.f32.mrb[0].mxu0
    %v12573 = vadd.f32 %v12476, %v12572
    %v12574 = vpop.f32.mrb[0].mxu0
    %12575 = vmatprep.mubr.bf16.mxu0 %v7986
    %12576 = vmatmul.mubr.bf16.gmra.mrb[0].mxu0 %v7985
    %v12577 = vpop.f32.mrb[0].mxu0
    %v12578 = vadd.f32 %v12481, %v12577
    %v12579 = vpop.f32.mrb[0].mxu0
    %v12580 = vpop.f32.mrb[0].mxu0
    %v12581 = vadd.f32 %v12484, %v12580
    %v12582 = vpop.f32.mrb[0].mxu0
    %12583 = vdwg.mxu0
    %12584 = vst [vmem:[%s7] sm:$0xff] %v11214
    %12585 = vst [vmem:[%s7 + $0x8] sm:$0xff] %v11216
    %12586 = vst [vmem:[%s7 + $0x10] sm:$0xff] %v11666
    %12587 = vst [vmem:[%s7 + $0x18] sm:$0xff] %v11668
    %12588 = vst [vmem:[%s7 + $0x20] sm:$0xff] %v12118
    %12589 = vst [vmem:[%s7 + $0x28] sm:$0xff] %v12120
    %12590 = vst [vmem:[%s7 + $0x30] sm:$0xff] %v12522
    %12591 = vst [vmem:[%s7 + $0x38] sm:$0xff] %v11218
    %12592 = vst [vmem:[%s7 + $0x40] sm:$0xff] %v11220
    %12593 = vst [vmem:[%s7 + $0x48] sm:$0xff] %v11670
    %12594 = vst [vmem:[%s7 + $0x50] sm:$0xff] %v11672
    %12595 = vst [vmem:[%s7 + $0x58] sm:$0xff] %v12122
    %12596 = vst [vmem:[%s7 + $0x60] sm:$0xff] %v12124
    %12597 = vst [vmem:[%s7 + $0x68] sm:$0xff] %v12525
    %12598 = vst [vmem:[%s7 + $0x70] sm:$0xff] %v11224
    %12599 = vst [vmem:[%s7 + $0x78] sm:$0xff] %v11226
    %12600 = vst [vmem:[%s7 + $0x80] sm:$0xff] %v11676
    %12601 = vst [vmem:[%s7 + $0x88] sm:$0xff] %v11678
    %12602 = vst [vmem:[%s7 + $0x90] sm:$0xff] %v12128
    %12603 = vst [vmem:[%s7 + $0x98] sm:$0xff] %v12130
    %12604 = vst [vmem:[%s7 + $0xa0] sm:$0xff] %v12530
    %12605 = vst [vmem:[%s7 + $0xa8] sm:$0xff] %v11228
    %12606 = vst [vmem:[%s7 + $0xb0] sm:$0xff] %v11230
    %12607 = vst [vmem:[%s7 + $0xb8] sm:$0xff] %v11680
    %12608 = vst [vmem:[%s7 + $0xc0] sm:$0xff] %v11682
    %12609 = vst [vmem:[%s7 + $0xc8] sm:$0xff] %v12132
    %12610 = vst [vmem:[%s7 + $0xd0] sm:$0xff] %v12134
    %12611 = vst [vmem:[%s7 + $0xd8] sm:$0xff] %v12533
    %12612 = vst [vmem:[%s7 + $0xe0] sm:$0xff] %v11234
    %12613 = vst [vmem:[%s7 + $0xe8] sm:$0xff] %v11236
    %12614 = vst [vmem:[%s7 + $0xf0] sm:$0xff] %v11686
    %12615 = vst [vmem:[%s7 + $0xf8] sm:$0xff] %v11688
    %12616 = vst [vmem:[%s7 + $0x100] sm:$0xff] %v12138
    %12617 = vst [vmem:[%s7 + $0x108] sm:$0xff] %v12140
    %12618 = vst [vmem:[%s7 + $0x110] sm:$0xff] %v12538
    %12619 = vst [vmem:[%s7 + $0x118] sm:$0xff] %v11238
    %12620 = vst [vmem:[%s7 + $0x120] sm:$0xff] %v11240
    %12621 = vst [vmem:[%s7 + $0x128] sm:$0xff] %v11690
    %12622 = vst [vmem:[%s7 + $0x130] sm:$0xff] %v11692
    %12623 = vst [vmem:[%s7 + $0x138] sm:$0xff] %v12142
    %12624 = vst [vmem:[%s7 + $0x140] sm:$0xff] %v12144
    %12625 = vst [vmem:[%s7 + $0x148] sm:$0xff] %v12541
    %12626 = vst [vmem:[%s7 + $0x150] sm:$0xff] %v11244
    %12627 = vst [vmem:[%s7 + $0x158] sm:$0xff] %v11246
    %12628 = vst [vmem:[%s7 + $0x160] sm:$0xff] %v11696
    %12629 = vst [vmem:[%s7 + $0x168] sm:$0xff] %v11698
    %12630 = vst [vmem:[%s7 + $0x170] sm:$0xff] %v12148
    %12631 = vst [vmem:[%s7 + $0x178] sm:$0xff] %v12150
    %12632 = vst [vmem:[%s7 + $0x180] sm:$0xff] %v12546
    %12633 = vst [vmem:[%s7 + $0x188] sm:$0xff] %v11248
    %12634 = vst [vmem:[%s7 + $0x190] sm:$0xff] %v11250
    %12635 = vst [vmem:[%s7 + $0x198] sm:$0xff] %v11700
    %12636 = vst [vmem:[%s7 + $0x1a0] sm:$0xff] %v11702
    %12637 = vst [vmem:[%s7 + $0x1a8] sm:$0xff] %v12152
    %12638 = vst [vmem:[%s7 + $0x1b0] sm:$0xff] %v12154
    %12639 = vst [vmem:[%s7 + $0x1b8] sm:$0xff] %v12549
    %12640 = vst [vmem:[%s7 + $0x1c0] sm:$0xff] %v11254
    %12641 = vst [vmem:[%s7 + $0x1c8] sm:$0xff] %v11256
    %12642 = vst [vmem:[%s7 + $0x1d0] sm:$0xff] %v11706
    %12643 = vst [vmem:[%s7 + $0x1d8] sm:$0xff] %v11708
    %12644 = vst [vmem:[%s7 + $0x1e0] sm:$0xff] %v12158
    %12645 = vst [vmem:[%s7 + $0x1e8] sm:$0xff] %v12160
    %12646 = vst [vmem:[%s7 + $0x1f0] sm:$0xff] %v12554
    %12647 = vst [vmem:[%s7 + $0x1f8] sm:$0xff] %v11258
    %12648 = vst [vmem:[%s7 + $0x200] sm:$0xff] %v11260
    %12649 = vst [vmem:[%s7 + $0x208] sm:$0xff] %v11710
    %12650 = vst [vmem:[%s7 + $0x210] sm:$0xff] %v11712
    %12651 = vst [vmem:[%s7 + $0x218] sm:$0xff] %v12162
    %12652 = vst [vmem:[%s7 + $0x220] sm:$0xff] %v12164
    %12653 = vst [vmem:[%s7 + $0x228] sm:$0xff] %v12557
    %12654 = vst [vmem:[%s7 + $0x230] sm:$0xff] %v11264
    %12655 = vst [vmem:[%s7 + $0x238] sm:$0xff] %v11266
    %12656 = vst [vmem:[%s7 + $0x240] sm:$0xff] %v11716
    %12657 = vst [vmem:[%s7 + $0x248] sm:$0xff] %v11718
    %12658 = vst [vmem:[%s7 + $0x250] sm:$0xff] %v12168
    %12659 = vst [vmem:[%s7 + $0x258] sm:$0xff] %v12170
    %12660 = vst [vmem:[%s7 + $0x260] sm:$0xff] %v12562
    %12661 = vst [vmem:[%s7 + $0x268] sm:$0xff] %v11268
    %12662 = vst [vmem:[%s7 + $0x270] sm:$0xff] %v11270
    %12663 = vst [vmem:[%s7 + $0x278] sm:$0xff] %v11720
    %12664 = vst [vmem:[%s7 + $0x280] sm:$0xff] %v11722
    %12665 = vst [vmem:[%s7 + $0x288] sm:$0xff] %v12172
    %12666 = vst [vmem:[%s7 + $0x290] sm:$0xff] %v12174
    %12667 = vst [vmem:[%s7 + $0x298] sm:$0xff] %v12565
    %12668 = vst [vmem:[%s7 + $0x2a0] sm:$0xff] %v11274
    %12669 = vst [vmem:[%s7 + $0x2a8] sm:$0xff] %v11276
    %12670 = vst [vmem:[%s7 + $0x2b0] sm:$0xff] %v11726
    %12671 = vst [vmem:[%s7 + $0x2b8] sm:$0xff] %v11728
    %12672 = vst [vmem:[%s7 + $0x2c0] sm:$0xff] %v12178
    %12673 = vst [vmem:[%s7 + $0x2c8] sm:$0xff] %v12180
    %12674 = vst [vmem:[%s7 + $0x2d0] sm:$0xff] %v12570
    %12675 = vst [vmem:[%s7 + $0x2d8] sm:$0xff] %v11278
    %12676 = vst [vmem:[%s7 + $0x2e0] sm:$0xff] %v11280
    %12677 = vst [vmem:[%s7 + $0x2e8] sm:$0xff] %v11730
    %12678 = vst [vmem:[%s7 + $0x2f0] sm:$0xff] %v11732
    %12679 = vst [vmem:[%s7 + $0x2f8] sm:$0xff] %v12182
    %12680 = vst [vmem:[%s7 + $0x300] sm:$0xff] %v12184
    %12681 = vst [vmem:[%s7 + $0x308] sm:$0xff] %v12573
    %12682 = vst [vmem:[%s7 + $0x310] sm:$0xff] %v11284
    %12683 = vst [vmem:[%s7 + $0x318] sm:$0xff] %v11286
    %12684 = vst [vmem:[%s7 + $0x320] sm:$0xff] %v11736
    %12685 = vst [vmem:[%s7 + $0x328] sm:$0xff] %v11738
    %12686 = vst [vmem:[%s7 + $0x330] sm:$0xff] %v12188
    %12687 = vst [vmem:[%s7 + $0x338] sm:$0xff] %v12190
    %12688 = vst [vmem:[%s7 + $0x340] sm:$0xff] %v12578
    %12689 = vst [vmem:[%s7 + $0x348] sm:$0xff] %v11288
    %12690 = vst [vmem:[%s7 + $0x350] sm:$0xff] %v11290
    %12691 = vst [vmem:[%s7 + $0x358] sm:$0xff] %v11740
    %12692 = vst [vmem:[%s7 + $0x360] sm:$0xff] %v11742
    %12693 = vst [vmem:[%s7 + $0x368] sm:$0xff] %v12192
    %12694 = vst [vmem:[%s7 + $0x370] sm:$0xff] %v12194
    %12695 = vst [vmem:[%s7 + $0x378] sm:$0xff] %v12581
    // Predicated region
    $region54: #{gen_model_forward.1} parent=1 // pred_check
      _
    $region55: #{gen_model_forward.1} parent=1 // pred_check_branch
      %12697 = sbr.rel (0) target = $region57
    $region56: #{gen_model_forward.1} parent=1 // pred_region
      _
    $region57: #{gen_model_forward.1} parent=1 // pred_fallthru
      _
    // Predicated region
    $region58: #{gen_model_forward.1} parent=1 // pred_check
      _
    $region59: #{gen_model_forward.1} parent=1 // pred_check_branch
      %12699 = sbr.rel (0) target = $region61
    $region60: #{gen_model_forward.1} parent=1 // pred_region
      _
    $region61: #{gen_model_forward.1} parent=1 // pred_fallthru
      _
    %12700 = vsyncpa [#allocation3], 1
    %12701 = vsyncpa [#allocation5], 1
    %12702 = vsyncpa [#allocation8], 1
    %12703 = vsyncpa [#allocation11], 1

</llo_original>
